<compile_context>
chip_gen: v7x
topology: tpu7x:2x2x1
jax: 0.10.0
libtpu: 0.0.40
codegen_flags: <defaults>
</compile_context>

<pallas_src>
import math

import numpy as np
import jax
import jax.numpy as jnp
from jax.experimental import pallas as pl
from jax.experimental.pallas import tpu as pltpu

# ------------------------- model configuration (small) -----------------------
IMAGE_SIZE = 16
PATCH = 2
EMB = 32
ENC_LAYERS = 2
ENC_HEADS = 4
DEC_LAYERS = 2
DEC_HEADS = 4
MASK_RATIO = 0.75
BATCH = 2

NUM_PATCH_SIDE = IMAGE_SIZE // PATCH              # 8
NUM_PATCHES = NUM_PATCH_SIDE ** 2                 # 64
PATCH_DIM = 3 * PATCH * PATCH                     # 12
MLP_HIDDEN = 4 * EMB                              # 128
REMAIN_T = int(NUM_PATCHES * (1 - MASK_RATIO))    # 16
T_ENC = REMAIN_T + 1                              # 17  (cls + kept tokens)
T_DEC = NUM_PATCHES + 1                           # 65  (cls + all patches)


def _round16(n):
    return ((n + 15) // 16) * 16


T_ENC_PAD = _round16(T_ENC)                       # 32 (bf16 sublane tile = 16)
T_DEC_PAD = _round16(T_DEC)                       # 80
LANES = 128
OUT_LANES = 128                                   # lane-dense head output

# -------------------- packed parameter slab row offsets ----------------------
# per-transformer-layer slab: (BLK_ROWS, 128) f32, every section lane-0 aligned
R_LN1W, R_LN1B, R_BPROJ, R_LN2W, R_LN2B, R_B2, R_B1 = 0, 1, 2, 3, 4, 5, 6
R_WQKV = 8                        # (EMB, 3*EMB)
R_WPROJ = R_WQKV + EMB            # 40   (EMB, EMB)
R_W1 = R_WPROJ + EMB              # 72   (EMB, MLP_HIDDEN)
R_W2 = R_W1 + EMB                 # 104  (MLP_HIDDEN, EMB)
BLK_ROWS = R_W2 + MLP_HIDDEN      # 232

# misc slab: everything that is not a per-layer block weight
M_PATCH_W = 0                     # (PATCH_DIM, EMB)
M_PATCH_B = 16
M_CLS = 17
M_ENC_LNW = 18
M_ENC_LNB = 19
M_MASK_TOK = 20
M_HEAD_B = 21
M_HEAD_W = 24                     # (EMB, PATCH_DIM) -> read full 128 lanes
M_ENC_POS = 56                    # (NUM_PATCHES, EMB)
M_DEC_POS = 120                   # (T_DEC, EMB), zero-padded to T_DEC_PAD rows
MISC_ROWS = M_DEC_POS + T_DEC_PAD  # 200


# ------------------------------ kernel helpers --------------------------------
def _erf(x):
    # Abramowitz & Stegun 7.1.26 rational approximation, |err| <= 1.5e-7.
    a1, a2, a3, a4, a5 = 0.254829592, -0.284496736, 1.421413741, -1.453152027, 1.061405429
    p = 0.3275911
    s = jnp.where(x >= 0.0, 1.0, -1.0)
    ax = jnp.abs(x)
    t = 1.0 / (1.0 + p * ax)
    poly = ((((a5 * t + a4) * t + a3) * t + a2) * t + a1) * t
    return s * (1.0 - poly * jnp.exp(-ax * ax))


def _gelu_exact(x):
    # matches torch.nn.GELU() (erf-based)
    return 0.5 * x * (1.0 + _erf(x * (1.0 / math.sqrt(2.0))))


def _layernorm(x, w, b, eps=1e-5):
    mu = jnp.mean(x, axis=-1, keepdims=True)
    xc = x - mu
    var = jnp.mean(xc * xc, axis=-1, keepdims=True)
    return xc * jax.lax.rsqrt(var + eps) * w + b


def _key_mask(t_pad, t_real):
    """Additive attention key mask (0 for real keys, -1e30 for padded keys)."""
    key_id = jax.lax.broadcasted_iota(jnp.int32, (t_pad, t_pad), 1)
    return jnp.where(key_id < t_real, 0.0, -1e30).astype(jnp.float32)


def _transformer_block(x, slab_ref, l, num_heads, mask_add):
    """One pre-LN ViT block on a single sample x: (Tp, C) f32.
    Padded rows (masked via mask_add as keys) never influence real rows."""
    Tp, C = x.shape
    hd = C // num_heads
    scale = float(hd) ** -0.5
    bf16 = jnp.bfloat16

    ln1w = slab_ref[l, R_LN1W:R_LN1W + 1, 0:C]
    ln1b = slab_ref[l, R_LN1B:R_LN1B + 1, 0:C]
    wqkv = slab_ref[l, R_WQKV:R_WQKV + C, :].astype(bf16)          # (C,128), pad lanes 0
    wproj = slab_ref[l, R_WPROJ:R_WPROJ + C, 0:C].astype(bf16)
    bproj = slab_ref[l, R_BPROJ:R_BPROJ + 1, 0:C]
    ln2w = slab_ref[l, R_LN2W:R_LN2W + 1, 0:C]
    ln2b = slab_ref[l, R_LN2B:R_LN2B + 1, 0:C]
    w1 = slab_ref[l, R_W1:R_W1 + C, 0:MLP_HIDDEN].astype(bf16)
    b1 = slab_ref[l, R_B1:R_B1 + 1, 0:MLP_HIDDEN]
    w2 = slab_ref[l, R_W2:R_W2 + MLP_HIDDEN, 0:C].astype(bf16)
    b2 = slab_ref[l, R_B2:R_B2 + 1, 0:C]

    # ---------------- attention: x + proj(softmax(q k^T) v) ----------------
    xn = _layernorm(x, ln1w, ln1b)
    qkv = jnp.dot(xn.astype(bf16), wqkv,
                  preferred_element_type=jnp.float32)               # (Tp, 128)
    q = qkv[:, 0:C] * scale
    k = qkv[:, C:2 * C]
    v = qkv[:, 2 * C:3 * C]

    # per-head softmax keeps the live (Tp,Tp) intermediates small; the head
    # merge is a single lane concat feeding ONE K=32 projection matmul.
    ctx_parts = []
    for h in range(num_heads):
        sl = slice(h * hd, (h + 1) * hd)
        qh = q[:, sl].astype(bf16)
        kh = k[:, sl].astype(bf16)
        vh = v[:, sl].astype(bf16)
        lg = jnp.einsum("qd,kd->qk", qh, kh,
                        preferred_element_type=jnp.float32) + mask_add      # (Tp,Tp) f32
        p = jnp.exp(lg - jnp.max(lg, axis=-1, keepdims=True))
        ah = p / jnp.sum(p, axis=-1, keepdims=True)
        ctx_parts.append(jnp.dot(ah.astype(bf16), vh,
                                 preferred_element_type=jnp.float32))       # (Tp,hd)
    ctx = jnp.concatenate(ctx_parts, axis=-1)                               # (Tp, C)
    y = jnp.dot(ctx.astype(bf16), wproj,
                preferred_element_type=jnp.float32) + bproj
    x = x + y

    # ---------------- MLP: x + fc2(gelu(fc1(LN(x)))) ----------------
    xn2 = _layernorm(x, ln2w, ln2b)
    h1 = jnp.dot(xn2.astype(bf16), w1, preferred_element_type=jnp.float32) + b1
    h1 = _gelu_exact(h1)
    h2 = jnp.dot(h1.astype(bf16), w2, preferred_element_type=jnp.float32) + b2
    return x + h2


# ------------------------------ fused MAE kernel ------------------------------
def _mae_kernel(xp_ref, enc_sel_ref, dec_sc_ref, misc_ref,
                enc_slab_ref, dec_slab_ref, out_ref):
    bf16 = jnp.bfloat16

    # ---------------- encoder ----------------
    patch_w = misc_ref[M_PATCH_W:M_PATCH_W + PATCH_DIM, 0:EMB]
    patch_b = misc_ref[M_PATCH_B:M_PATCH_B + 1, 0:EMB]
    tok = jnp.dot(xp_ref[0].astype(bf16), patch_w.astype(bf16),
                  preferred_element_type=jnp.float32) + patch_b     # (hw, C)
    tok = tok + misc_ref[M_ENC_POS:M_ENC_POS + NUM_PATCHES, 0:EMB]

    # PatchShuffle "keep" gather as a one-hot matmul; rows 0 and >=T_ENC are 0.
    x = jnp.dot(enc_sel_ref[0], tok.astype(bf16),
                preferred_element_type=jnp.float32)                 # (32, C)
    cls = misc_ref[M_CLS:M_CLS + 1, 0:EMB]
    row_e = jax.lax.broadcasted_iota(jnp.int32, (T_ENC_PAD, 1), 0)
    x = x + (row_e == 0).astype(jnp.float32) * cls                  # cls at row 0

    enc_mask = _key_mask(T_ENC_PAD, T_ENC)                          # built once
    for l in range(ENC_LAYERS):
        x = _transformer_block(x, enc_slab_ref, l, ENC_HEADS, enc_mask)

    x = _layernorm(x, misc_ref[M_ENC_LNW:M_ENC_LNW + 1, 0:EMB],
                      misc_ref[M_ENC_LNB:M_ENC_LNB + 1, 0:EMB])     # (32, C)

    # ---------------- decoder ----------------
    # un-shuffle scatter contracts the FULL padded encoder output; padded
    # encoder rows hit zero columns so they never contribute.
    scat = dec_sc_ref[0]                                            # (80, 32) bf16
    y = jnp.dot(scat, x.astype(bf16),
                preferred_element_type=jnp.float32)                 # (80, C)
    keep = jnp.sum(scat.astype(jnp.float32), axis=-1, keepdims=True)  # (80, 1)
    mask_tok = misc_ref[M_MASK_TOK:M_MASK_TOK + 1, 0:EMB]
    y = y + (1.0 - keep) * mask_tok                                 # masked positions
    y = y + misc_ref[M_DEC_POS:M_DEC_POS + T_DEC_PAD, 0:EMB]        # pad rows are 0

    dec_mask = _key_mask(T_DEC_PAD, T_DEC)                          # built once
    for l in range(DEC_LAYERS):
        y = _transformer_block(y, dec_slab_ref, l, DEC_HEADS, dec_mask)

    y = y[1:1 + NUM_PATCHES, :]                                     # drop cls + pad
    head_w = misc_ref[M_HEAD_W:M_HEAD_W + EMB, :].astype(bf16)      # (C,128), pad lanes 0
    head_b = misc_ref[M_HEAD_B:M_HEAD_B + 1, :]                     # (1,128)
    patches = jnp.dot(y.astype(bf16), head_w,
                      preferred_element_type=jnp.float32) + head_b  # (hw, 128) lane-dense
    out_ref[0] = patches


def _fused_forward_call(xp, enc_sel, dec_scatter, misc, enc_slab, dec_slab):
    return pl.pallas_call(
        _mae_kernel,
        out_shape=jax.ShapeDtypeStruct((BATCH, NUM_PATCHES, OUT_LANES), jnp.float32),
        grid=(BATCH,),
        in_specs=[
            pl.BlockSpec((1, NUM_PATCHES, PATCH_DIM), lambda b: (b, 0, 0)),
            pl.BlockSpec((1, T_ENC_PAD, NUM_PATCHES), lambda b: (b, 0, 0)),
            pl.BlockSpec((1, T_DEC_PAD, T_ENC_PAD), lambda b: (b, 0, 0)),
            # weight slabs: constant index_maps -> stay VMEM-resident across steps
            pl.BlockSpec((MISC_ROWS, LANES), lambda b: (0, 0)),
            pl.BlockSpec((ENC_LAYERS, BLK_ROWS, LANES), lambda b: (0, 0, 0)),
            pl.BlockSpec((DEC_LAYERS, BLK_ROWS, LANES), lambda b: (0, 0, 0)),
        ],
        out_specs=pl.BlockSpec((1, NUM_PATCHES, OUT_LANES), lambda b: (b, 0, 0)),
        compiler_params=pltpu.CompilerParams(dimension_semantics=("parallel",)),
    )(xp, enc_sel, dec_scatter, misc, enc_slab, dec_slab)


# ------------------------------ parameters ------------------------------------
def init_block_params(key, dim, hidden):
    ks = jax.random.split(key, 4)
    s = 0.02
    return dict(
        ln1w=jnp.ones((dim,), jnp.float32),
        ln1b=jnp.zeros((dim,), jnp.float32),
        # weights pre-transposed to (in, out) so kernels compute x @ W
        wqkv=(jax.random.normal(ks[0], (dim, 3 * dim)) * s).astype(jnp.float32),
        wproj=(jax.random.normal(ks[1], (dim, dim)) * s).astype(jnp.float32),
        bproj=jnp.zeros((dim,), jnp.float32),
        ln2w=jnp.ones((dim,), jnp.float32),
        ln2b=jnp.zeros((dim,), jnp.float32),
        w1=(jax.random.normal(ks[2], (dim, hidden)) * s).astype(jnp.float32),
        b1=jnp.zeros((hidden,), jnp.float32),
        w2=(jax.random.normal(ks[3], (hidden, dim)) * s).astype(jnp.float32),
        b2=jnp.zeros((dim,), jnp.float32),
    )


def init_params(key):
    keys = jax.random.split(key, 8 + ENC_LAYERS + DEC_LAYERS)
    s = 0.02
    params = dict(
        # Conv2d(3, EMB, PATCH, PATCH) as a per-patch matmul: (in*kh*kw, out)
        patch_w=(jax.random.normal(keys[0], (PATCH_DIM, EMB)) * s).astype(jnp.float32),
        patch_b=jnp.zeros((EMB,), jnp.float32),
        cls_token=(jax.random.normal(keys[1], (EMB,)) * s).astype(jnp.float32),
        enc_pos=(jax.random.normal(keys[2], (NUM_PATCHES, EMB)) * s).astype(jnp.float32),
        enc_lnw=jnp.ones((EMB,), jnp.float32),
        enc_lnb=jnp.zeros((EMB,), jnp.float32),
        mask_token=(jax.random.normal(keys[3], (EMB,)) * s).astype(jnp.float32),
        dec_pos=(jax.random.normal(keys[4], (T_DEC, EMB)) * s).astype(jnp.float32),
        head_w=(jax.random.normal(keys[5], (EMB, PATCH_DIM)) * s).astype(jnp.float32),
        head_b=jnp.zeros((PATCH_DIM,), jnp.float32),
    )
    params["enc_blocks"] = [init_block_params(keys[8 + i], EMB, MLP_HIDDEN)
                            for i in range(ENC_LAYERS)]
    params["dec_blocks"] = [init_block_params(keys[8 + ENC_LAYERS + i], EMB, MLP_HIDDEN)
                            for i in range(DEC_LAYERS)]
    return params


def pack_block_slab(block_list):
    slab = jnp.zeros((len(block_list), BLK_ROWS, LANES), jnp.float32)
    for l, bp in enumerate(block_list):
        slab = slab.at[l, R_LN1W, :EMB].set(bp["ln1w"])
        slab = slab.at[l, R_LN1B, :EMB].set(bp["ln1b"])
        slab = slab.at[l, R_BPROJ, :EMB].set(bp["bproj"])
        slab = slab.at[l, R_LN2W, :EMB].set(bp["ln2w"])
        slab = slab.at[l, R_LN2B, :EMB].set(bp["ln2b"])
        slab = slab.at[l, R_B2, :EMB].set(bp["b2"])
        slab = slab.at[l, R_B1, :MLP_HIDDEN].set(bp["b1"])
        slab = slab.at[l, R_WQKV:R_WQKV + EMB, :3 * EMB].set(bp["wqkv"])
        slab = slab.at[l, R_WPROJ:R_WPROJ + EMB, :EMB].set(bp["wproj"])
        slab = slab.at[l, R_W1:R_W1 + EMB, :MLP_HIDDEN].set(bp["w1"])
        slab = slab.at[l, R_W2:R_W2 + MLP_HIDDEN, :EMB].set(bp["w2"])
    return slab


def pack_misc(p):
    m = jnp.zeros((MISC_ROWS, LANES), jnp.float32)
    m = m.at[M_PATCH_W:M_PATCH_W + PATCH_DIM, :EMB].set(p["patch_w"])
    m = m.at[M_PATCH_B, :EMB].set(p["patch_b"])
    m = m.at[M_CLS, :EMB].set(p["cls_token"])
    m = m.at[M_ENC_LNW, :EMB].set(p["enc_lnw"])
    m = m.at[M_ENC_LNB, :EMB].set(p["enc_lnb"])
    m = m.at[M_MASK_TOK, :EMB].set(p["mask_token"])
    m = m.at[M_HEAD_B, :PATCH_DIM].set(p["head_b"])
    m = m.at[M_HEAD_W:M_HEAD_W + EMB, :PATCH_DIM].set(p["head_w"])
    m = m.at[M_ENC_POS:M_ENC_POS + NUM_PATCHES, :EMB].set(p["enc_pos"])
    m = m.at[M_DEC_POS:M_DEC_POS + T_DEC, :EMB].set(p["dec_pos"])
    return m


def pack_params(p):
    return dict(misc=pack_misc(p),
                enc_slab=pack_block_slab(p["enc_blocks"]),
                dec_slab=pack_block_slab(p["dec_blocks"]))


# ------------------------------ full forward ----------------------------------
@jax.jit
def mae_forward(img, packed, fwd_idx, bwd_idx):
    B_ = img.shape[0]
    p = PATCH
    hside = IMAGE_SIZE // p

    # patch extraction: 'b c (h p1) (w p2) -> b (h w) (c p1 p2)'   (batch-major)
    xp = img.reshape(B_, 3, hside, p, hside, p)
    xp = xp.transpose(0, 2, 4, 1, 3, 5).reshape(B_, NUM_PATCHES, PATCH_DIM)

    fwd_bt = fwd_idx.T.astype(jnp.int32)          # (B, hw): shuffled order
    bwd_bt = bwd_idx.T.astype(jnp.int32)          # (B, hw): position in shuffle

    # PatchShuffle keep-selection as one-hot rows (row 0 = cls slot, tail = pad)
    enc_keep = jax.nn.one_hot(fwd_bt[:, :REMAIN_T], NUM_PATCHES, dtype=jnp.float32)
    enc_sel = jnp.concatenate(
        [jnp.zeros((B_, 1, NUM_PATCHES), jnp.float32),
         enc_keep,
         jnp.zeros((B_, T_ENC_PAD - T_ENC, NUM_PATCHES), jnp.float32)],
        axis=1).astype(jnp.bfloat16)                                        # (B, 32, 64)

    # decoder un-shuffle: position 0 = cls feature, position j>=1 = original
    # patch j-1 (its encoded feature if kept, otherwise the shared mask token).
    # Columns padded to T_ENC_PAD so the kernel contracts the full padded
    # encoder output (padded rows hit zero columns).
    kept = bwd_bt < REMAIN_T
    scat_idx = jnp.where(kept, bwd_bt + 1, -1)    # -1 -> all-zero one-hot row
    dec_body = jax.nn.one_hot(scat_idx, T_ENC_PAD, dtype=jnp.float32)       # (B, hw, 32)
    cls_row = jax.nn.one_hot(jnp.zeros((B_, 1), jnp.int32), T_ENC_PAD, dtype=jnp.float32)
    dec_scatter = jnp.concatenate(
        [cls_row, dec_body,
         jnp.zeros((B_, T_DEC_PAD - T_DEC, T_ENC_PAD), jnp.float32)],
        axis=1).astype(jnp.bfloat16)                                        # (B, 80, 32)

    patches_pad = _fused_forward_call(
        xp, enc_sel, dec_scatter,
        packed["misc"], packed["enc_slab"], packed["dec_slab"])             # (B, hw, 128)
    patches = patches_pad[:, :, :PATCH_DIM]                                 # (B, hw, 12)

    def patch2img(pt):  # '(b) (h w) (c p1 p2) -> b c (h p1) (w p2)'
        x = pt.reshape(B_, hside, hside, 3, p, p)
        return x.transpose(0, 3, 1, 4, 2, 5).reshape(B_, 3, hside * p, hside * p)

    pred_img = patch2img(patches)
    mask_pat = jnp.broadcast_to(
        (bwd_bt >= REMAIN_T).astype(jnp.float32)[:, :, None],
        (B_, NUM_PATCHES, PATCH_DIM))
    mask_img = patch2img(mask_pat)
    return pred_img, mask_img


# ----------------------------------- main --------------------------------------
if __name__ == "__main__":
    key = jax.random.PRNGKey(0)
    img = jax.random.normal(key, (BATCH, 3, IMAGE_SIZE, IMAGE_SIZE), dtype=jnp.float32)

    params = init_params(jax.random.PRNGKey(1))
    packed = pack_params(params)

    # deterministic replacement for PatchShuffle's np.random.shuffle (host glue)
    rng = np.random.RandomState(0)
    fwd = np.stack([rng.permutation(NUM_PATCHES) for _ in range(BATCH)], axis=-1)
    bwd = np.argsort(fwd, axis=0)
    fwd_idx = jnp.asarray(fwd, dtype=jnp.int32)
    bwd_idx = jnp.asarray(bwd, dtype=jnp.int32)

    pred_img, mask = mae_forward(img, packed, fwd_idx, bwd_idx)
    jax.block_until_ready((pred_img, mask))

    assert pred_img.shape == (BATCH, 3, IMAGE_SIZE, IMAGE_SIZE), pred_img.shape
    assert mask.shape == (BATCH, 3, IMAGE_SIZE, IMAGE_SIZE), mask.shape
    assert pred_img.dtype == jnp.float32 and mask.dtype == jnp.float32
    assert bool(jnp.all(jnp.isfinite(pred_img)))
    print("KERNEL_OK")
</pallas_src>

<mosaic_0001>
module attributes {stable_mosaic.version = 11 : i64} {
  func.func @_mae_kernel(%arg0: i32, %arg1: memref<1x64x12xf32, #tpu.memory_space<vmem>>, %arg2: memref<1x32x64xbf16, #tpu.memory_space<vmem>>, %arg3: memref<1x80x32xbf16, #tpu.memory_space<vmem>>, %arg4: memref<200x128xf32, #tpu.memory_space<vmem>>, %arg5: memref<2x232x128xf32, #tpu.memory_space<vmem>>, %arg6: memref<2x232x128xf32, #tpu.memory_space<vmem>>, %arg7: memref<1x64x128xf32, #tpu.memory_space<vmem>>) attributes {dimension_semantics = [#tpu.dimension_semantics<parallel>], iteration_bounds = array<i64: 2>, scalar_prefetch = 0 : i64, scratch_operands = 0 : i64, tpu.core_type = #tpu.core_type<tc>, window_params = [{transform_indices = @transform_0, window_bounds = array<i64: 1, 64, 12>}, {transform_indices = @transform_1, window_bounds = array<i64: 1, 32, 64>}, {transform_indices = @transform_2, window_bounds = array<i64: 1, 80, 32>}, {pipeline_mode = #tpu.pipeline_mode<synchronous>, transform_indices = @transform_3, window_bounds = array<i64: 200, 128>}, {pipeline_mode = #tpu.pipeline_mode<synchronous>, transform_indices = @transform_4, window_bounds = array<i64: 2, 232, 128>}, {pipeline_mode = #tpu.pipeline_mode<synchronous>, transform_indices = @transform_5, window_bounds = array<i64: 2, 232, 128>}, {transform_indices = @transform_6, window_bounds = array<i64: 1, 64, 128>}]} {
    %c0 = arith.constant 0 : index
    %c0_0 = arith.constant 0 : index
    %0 = vector.load %arg4[%c0, %c0_0] : memref<200x128xf32, #tpu.memory_space<vmem>>, vector<12x32xf32>
    %c16 = arith.constant 16 : index
    %c0_1 = arith.constant 0 : index
    %1 = vector.load %arg4[%c16, %c0_1] : memref<200x128xf32, #tpu.memory_space<vmem>>, vector<1x32xf32>
    %c0_2 = arith.constant 0 : index
    %c0_3 = arith.constant 0 : index
    %c0_4 = arith.constant 0 : index
    %2 = vector.load %arg1[%c0_2, %c0_3, %c0_4] : memref<1x64x12xf32, #tpu.memory_space<vmem>>, vector<1x64x12xf32>
    %3 = vector.shape_cast %2 : vector<1x64x12xf32> to vector<64x12xf32>
    %4 = arith.truncf %3 : vector<64x12xf32> to vector<64x12xbf16>
    %5 = arith.truncf %0 : vector<12x32xf32> to vector<12x32xbf16>
    %cst = arith.constant dense<0.000000e+00> : vector<64x32xf32>
    %6 = tpu.matmul %4, %5, %cst {dimension_numbers = #tpu.dot_dimension_numbers<[1], [0], [0], [1], [0, 0, 1, 1], [], []>} : vector<64x12xbf16>, vector<12x32xbf16>, vector<64x32xf32> -> vector<64x32xf32>
    %7 = vector.broadcast %1 : vector<1x32xf32> to vector<64x32xf32>
    %8 = arith.addf %6, %7 : vector<64x32xf32>
    %c56 = arith.constant 56 : index
    %c0_5 = arith.constant 0 : index
    %9 = vector.load %arg4[%c56, %c0_5] : memref<200x128xf32, #tpu.memory_space<vmem>>, vector<64x32xf32>
    %10 = arith.addf %8, %9 : vector<64x32xf32>
    %c0_6 = arith.constant 0 : index
    %c0_7 = arith.constant 0 : index
    %c0_8 = arith.constant 0 : index
    %11 = vector.load %arg2[%c0_6, %c0_7, %c0_8] : memref<1x32x64xbf16, #tpu.memory_space<vmem>>, vector<1x32x64xbf16>
    %12 = vector.shape_cast %11 : vector<1x32x64xbf16> to vector<32x64xbf16>
    %13 = arith.truncf %10 : vector<64x32xf32> to vector<64x32xbf16>
    %cst_9 = arith.constant dense<0.000000e+00> : vector<32x32xf32>
    %14 = tpu.matmul %12, %13, %cst_9 {dimension_numbers = #tpu.dot_dimension_numbers<[1], [0], [0], [1], [0, 0, 1, 1], [], []>} : vector<32x64xbf16>, vector<64x32xbf16>, vector<32x32xf32> -> vector<32x32xf32>
    %c17 = arith.constant 17 : index
    %c0_10 = arith.constant 0 : index
    %15 = vector.load %arg4[%c17, %c0_10] : memref<200x128xf32, #tpu.memory_space<vmem>>, vector<1x32xf32>
    %16 = tpu.iota {dimensions = array<i32: 0>} : vector<32x1xi32>
    %c0_i32 = arith.constant 0 : i32
    %17 = vector.broadcast %c0_i32 : i32 to vector<32x1xi32>
    %18 = arith.cmpi eq, %16, %17 : vector<32x1xi32>
    %19 = arith.extui %18 : vector<32x1xi1> to vector<32x1xi32>
    %20 = arith.sitofp %19 : vector<32x1xi32> to vector<32x1xf32>
    %21 = vector.broadcast %20 : vector<32x1xf32> to vector<32x32xf32>
    %22 = vector.broadcast %15 : vector<1x32xf32> to vector<32x32xf32>
    %23 = arith.mulf %21, %22 : vector<32x32xf32>
    %24 = arith.addf %14, %23 : vector<32x32xf32>
    %25 = tpu.iota {dimensions = array<i32: 1>} : vector<32x32xi32>
    %c17_i32 = arith.constant 17 : i32
    %26 = vector.broadcast %c17_i32 : i32 to vector<32x32xi32>
    %27 = arith.cmpi slt, %25, %26 : vector<32x32xi32>
    %cst_11 = arith.constant 0.000000e+00 : f32
    %cst_12 = arith.constant -1.000000e+30 : f32
    %28 = vector.broadcast %cst_11 : f32 to vector<32x32xf32>
    %29 = vector.broadcast %cst_12 : f32 to vector<32x32xf32>
    %30 = arith.select %27, %28, %29 : vector<32x32xi1>, vector<32x32xf32>
    %c0_13 = arith.constant 0 : index
    %c0_14 = arith.constant 0 : index
    %c0_15 = arith.constant 0 : index
    %31 = vector.load %arg5[%c0_13, %c0_14, %c0_15] : memref<2x232x128xf32, #tpu.memory_space<vmem>>, vector<1x1x32xf32>
    %32 = vector.shape_cast %31 : vector<1x1x32xf32> to vector<1x32xf32>
    %c0_16 = arith.constant 0 : index
    %c1 = arith.constant 1 : index
    %c0_17 = arith.constant 0 : index
    %33 = vector.load %arg5[%c0_16, %c1, %c0_17] : memref<2x232x128xf32, #tpu.memory_space<vmem>>, vector<1x1x32xf32>
    %34 = vector.shape_cast %33 : vector<1x1x32xf32> to vector<1x32xf32>
    %c0_18 = arith.constant 0 : index
    %c8 = arith.constant 8 : index
    %c0_19 = arith.constant 0 : index
    %35 = vector.load %arg5[%c0_18, %c8, %c0_19] : memref<2x232x128xf32, #tpu.memory_space<vmem>>, vector<1x32x128xf32>
    %36 = vector.shape_cast %35 : vector<1x32x128xf32> to vector<32x128xf32>
    %37 = arith.truncf %36 : vector<32x128xf32> to vector<32x128xbf16>
    %c0_20 = arith.constant 0 : index
    %c40 = arith.constant 40 : index
    %c0_21 = arith.constant 0 : index
    %38 = vector.load %arg5[%c0_20, %c40, %c0_21] : memref<2x232x128xf32, #tpu.memory_space<vmem>>, vector<1x32x32xf32>
    %39 = vector.shape_cast %38 : vector<1x32x32xf32> to vector<32x32xf32>
    %40 = arith.truncf %39 : vector<32x32xf32> to vector<32x32xbf16>
    %c0_22 = arith.constant 0 : index
    %c2 = arith.constant 2 : index
    %c0_23 = arith.constant 0 : index
    %41 = vector.load %arg5[%c0_22, %c2, %c0_23] : memref<2x232x128xf32, #tpu.memory_space<vmem>>, vector<1x1x32xf32>
    %42 = vector.shape_cast %41 : vector<1x1x32xf32> to vector<1x32xf32>
    %c0_24 = arith.constant 0 : index
    %c3 = arith.constant 3 : index
    %c0_25 = arith.constant 0 : index
    %43 = vector.load %arg5[%c0_24, %c3, %c0_25] : memref<2x232x128xf32, #tpu.memory_space<vmem>>, vector<1x1x32xf32>
    %44 = vector.shape_cast %43 : vector<1x1x32xf32> to vector<1x32xf32>
    %c0_26 = arith.constant 0 : index
    %c4 = arith.constant 4 : index
    %c0_27 = arith.constant 0 : index
    %45 = vector.load %arg5[%c0_26, %c4, %c0_27] : memref<2x232x128xf32, #tpu.memory_space<vmem>>, vector<1x1x32xf32>
    %46 = vector.shape_cast %45 : vector<1x1x32xf32> to vector<1x32xf32>
    %c0_28 = arith.constant 0 : index
    %c72 = arith.constant 72 : index
    %c0_29 = arith.constant 0 : index
    %47 = vector.load %arg5[%c0_28, %c72, %c0_29] : memref<2x232x128xf32, #tpu.memory_space<vmem>>, vector<1x32x128xf32>
    %48 = vector.shape_cast %47 : vector<1x32x128xf32> to vector<32x128xf32>
    %49 = arith.truncf %48 : vector<32x128xf32> to vector<32x128xbf16>
    %c0_30 = arith.constant 0 : index
    %c6 = arith.constant 6 : index
    %c0_31 = arith.constant 0 : index
    %50 = vector.load %arg5[%c0_30, %c6, %c0_31] : memref<2x232x128xf32, #tpu.memory_space<vmem>>, vector<1x1x128xf32>
    %51 = vector.shape_cast %50 : vector<1x1x128xf32> to vector<1x128xf32>
    %c0_32 = arith.constant 0 : index
    %c104 = arith.constant 104 : index
    %c0_33 = arith.constant 0 : index
    %52 = vector.load %arg5[%c0_32, %c104, %c0_33] : memref<2x232x128xf32, #tpu.memory_space<vmem>>, vector<1x128x32xf32>
    %53 = vector.shape_cast %52 : vector<1x128x32xf32> to vector<128x32xf32>
    %54 = arith.truncf %53 : vector<128x32xf32> to vector<128x32xbf16>
    %c0_34 = arith.constant 0 : index
    %c5 = arith.constant 5 : index
    %c0_35 = arith.constant 0 : index
    %55 = vector.load %arg5[%c0_34, %c5, %c0_35] : memref<2x232x128xf32, #tpu.memory_space<vmem>>, vector<1x1x32xf32>
    %56 = vector.shape_cast %55 : vector<1x1x32xf32> to vector<1x32xf32>
    %cst_36 = arith.constant dense<0.000000e+00> : vector<32xf32>
    %57 = vector.multi_reduction <add>, %24, %cst_36 [1] : vector<32x32xf32> to vector<32xf32>
    %58 = vector.shape_cast %57 : vector<32xf32> to vector<32x1xf32>
    %cst_37 = arith.constant 3.200000e+01 : f32
    %59 = vector.broadcast %cst_37 : f32 to vector<32x1xf32>
    %60 = arith.divf %58, %59 : vector<32x1xf32>
    %61 = vector.broadcast %60 : vector<32x1xf32> to vector<32x32xf32>
    %62 = arith.subf %24, %61 : vector<32x32xf32>
    %63 = arith.mulf %62, %62 : vector<32x32xf32>
    %cst_38 = arith.constant dense<0.000000e+00> : vector<32xf32>
    %64 = vector.multi_reduction <add>, %63, %cst_38 [1] : vector<32x32xf32> to vector<32xf32>
    %65 = vector.shape_cast %64 : vector<32xf32> to vector<32x1xf32>
    %cst_39 = arith.constant 3.200000e+01 : f32
    %66 = vector.broadcast %cst_39 : f32 to vector<32x1xf32>
    %67 = arith.divf %65, %66 : vector<32x1xf32>
    %cst_40 = arith.constant 9.99999974E-6 : f32
    %68 = vector.broadcast %cst_40 : f32 to vector<32x1xf32>
    %69 = arith.addf %67, %68 : vector<32x1xf32>
    %70 = math.rsqrt %69 : vector<32x1xf32>
    %71 = vector.broadcast %70 : vector<32x1xf32> to vector<32x32xf32>
    %72 = arith.mulf %62, %71 : vector<32x32xf32>
    %73 = vector.broadcast %32 : vector<1x32xf32> to vector<32x32xf32>
    %74 = arith.mulf %72, %73 : vector<32x32xf32>
    %75 = vector.broadcast %34 : vector<1x32xf32> to vector<32x32xf32>
    %76 = arith.addf %74, %75 : vector<32x32xf32>
    %77 = arith.truncf %76 : vector<32x32xf32> to vector<32x32xbf16>
    %cst_41 = arith.constant dense<0.000000e+00> : vector<32x128xf32>
    %78 = tpu.matmul %77, %37, %cst_41 {dimension_numbers = #tpu.dot_dimension_numbers<[1], [0], [0], [1], [0, 0, 1, 1], [], []>} : vector<32x32xbf16>, vector<32x128xbf16>, vector<32x128xf32> -> vector<32x128xf32>
    %79 = vector.extract_strided_slice %78 {offsets = [0, 0], sizes = [32, 32], strides = [1, 1]} : vector<32x128xf32> to vector<32x32xf32>
    %cst_42 = arith.constant 0.353553385 : f32
    %80 = vector.broadcast %cst_42 : f32 to vector<32x32xf32>
    %81 = arith.mulf %79, %80 : vector<32x32xf32>
    %82 = vector.extract_strided_slice %78 {offsets = [0, 32], sizes = [32, 32], strides = [1, 1]} : vector<32x128xf32> to vector<32x32xf32>
    %83 = vector.extract_strided_slice %78 {offsets = [0, 64], sizes = [32, 32], strides = [1, 1]} : vector<32x128xf32> to vector<32x32xf32>
    %84 = vector.extract_strided_slice %81 {offsets = [0, 0], sizes = [32, 8], strides = [1, 1]} : vector<32x32xf32> to vector<32x8xf32>
    %85 = arith.truncf %84 : vector<32x8xf32> to vector<32x8xbf16>
    %86 = vector.extract_strided_slice %82 {offsets = [0, 0], sizes = [32, 8], strides = [1, 1]} : vector<32x32xf32> to vector<32x8xf32>
    %87 = arith.truncf %86 : vector<32x8xf32> to vector<32x8xbf16>
    %88 = vector.extract_strided_slice %83 {offsets = [0, 0], sizes = [32, 8], strides = [1, 1]} : vector<32x32xf32> to vector<32x8xf32>
    %89 = arith.truncf %88 : vector<32x8xf32> to vector<32x8xbf16>
    "tpu.trace_start"() <{level = 10 : i32, message = "qd,kd->qk"}> : () -> ()
    %cst_43 = arith.constant dense<0.000000e+00> : vector<32x32xf32>
    %90 = tpu.matmul %85, %87, %cst_43 {dimension_numbers = #tpu.dot_dimension_numbers<[1], [1], [0], [0], [0, 0, 1, 0], [], []>} : vector<32x8xbf16>, vector<32x8xbf16>, vector<32x32xf32> -> vector<32x32xf32>
    "tpu.trace_stop"() : () -> ()
    %91 = arith.addf %90, %30 : vector<32x32xf32>
    %cst_44 = arith.constant dense<0xFF800000> : vector<32xf32>
    %92 = vector.multi_reduction <maximumf>, %91, %cst_44 [1] : vector<32x32xf32> to vector<32xf32>
    %93 = vector.shape_cast %92 : vector<32xf32> to vector<32x1xf32>
    %94 = vector.broadcast %93 : vector<32x1xf32> to vector<32x32xf32>
    %95 = arith.subf %91, %94 : vector<32x32xf32>
    %96 = math.exp %95 : vector<32x32xf32>
    %cst_45 = arith.constant dense<0.000000e+00> : vector<32xf32>
    %97 = vector.multi_reduction <add>, %96, %cst_45 [1] : vector<32x32xf32> to vector<32xf32>
    %98 = vector.shape_cast %97 : vector<32xf32> to vector<32x1xf32>
    %99 = vector.broadcast %98 : vector<32x1xf32> to vector<32x32xf32>
    %100 = arith.divf %96, %99 : vector<32x32xf32>
    %101 = arith.truncf %100 : vector<32x32xf32> to vector<32x32xbf16>
    %cst_46 = arith.constant dense<0.000000e+00> : vector<32x8xf32>
    %102 = tpu.matmul %101, %89, %cst_46 {dimension_numbers = #tpu.dot_dimension_numbers<[1], [0], [0], [1], [0, 0, 1, 1], [], []>} : vector<32x32xbf16>, vector<32x8xbf16>, vector<32x8xf32> -> vector<32x8xf32>
    %103 = vector.extract_strided_slice %81 {offsets = [0, 8], sizes = [32, 8], strides = [1, 1]} : vector<32x32xf32> to vector<32x8xf32>
    %104 = arith.truncf %103 : vector<32x8xf32> to vector<32x8xbf16>
    %105 = vector.extract_strided_slice %82 {offsets = [0, 8], sizes = [32, 8], strides = [1, 1]} : vector<32x32xf32> to vector<32x8xf32>
    %106 = arith.truncf %105 : vector<32x8xf32> to vector<32x8xbf16>
    %107 = vector.extract_strided_slice %83 {offsets = [0, 8], sizes = [32, 8], strides = [1, 1]} : vector<32x32xf32> to vector<32x8xf32>
    %108 = arith.truncf %107 : vector<32x8xf32> to vector<32x8xbf16>
    "tpu.trace_start"() <{level = 10 : i32, message = "qd,kd->qk"}> : () -> ()
    %cst_47 = arith.constant dense<0.000000e+00> : vector<32x32xf32>
    %109 = tpu.matmul %104, %106, %cst_47 {dimension_numbers = #tpu.dot_dimension_numbers<[1], [1], [0], [0], [0, 0, 1, 0], [], []>} : vector<32x8xbf16>, vector<32x8xbf16>, vector<32x32xf32> -> vector<32x32xf32>
    "tpu.trace_stop"() : () -> ()
    %110 = arith.addf %109, %30 : vector<32x32xf32>
    %cst_48 = arith.constant dense<0xFF800000> : vector<32xf32>
    %111 = vector.multi_reduction <maximumf>, %110, %cst_48 [1] : vector<32x32xf32> to vector<32xf32>
    %112 = vector.shape_cast %111 : vector<32xf32> to vector<32x1xf32>
    %113 = vector.broadcast %112 : vector<32x1xf32> to vector<32x32xf32>
    %114 = arith.subf %110, %113 : vector<32x32xf32>
    %115 = math.exp %114 : vector<32x32xf32>
    %cst_49 = arith.constant dense<0.000000e+00> : vector<32xf32>
    %116 = vector.multi_reduction <add>, %115, %cst_49 [1] : vector<32x32xf32> to vector<32xf32>
    %117 = vector.shape_cast %116 : vector<32xf32> to vector<32x1xf32>
    %118 = vector.broadcast %117 : vector<32x1xf32> to vector<32x32xf32>
    %119 = arith.divf %115, %118 : vector<32x32xf32>
    %120 = arith.truncf %119 : vector<32x32xf32> to vector<32x32xbf16>
    %cst_50 = arith.constant dense<0.000000e+00> : vector<32x8xf32>
    %121 = tpu.matmul %120, %108, %cst_50 {dimension_numbers = #tpu.dot_dimension_numbers<[1], [0], [0], [1], [0, 0, 1, 1], [], []>} : vector<32x32xbf16>, vector<32x8xbf16>, vector<32x8xf32> -> vector<32x8xf32>
    %122 = vector.extract_strided_slice %81 {offsets = [0, 16], sizes = [32, 8], strides = [1, 1]} : vector<32x32xf32> to vector<32x8xf32>
    %123 = arith.truncf %122 : vector<32x8xf32> to vector<32x8xbf16>
    %124 = vector.extract_strided_slice %82 {offsets = [0, 16], sizes = [32, 8], strides = [1, 1]} : vector<32x32xf32> to vector<32x8xf32>
    %125 = arith.truncf %124 : vector<32x8xf32> to vector<32x8xbf16>
    %126 = vector.extract_strided_slice %83 {offsets = [0, 16], sizes = [32, 8], strides = [1, 1]} : vector<32x32xf32> to vector<32x8xf32>
    %127 = arith.truncf %126 : vector<32x8xf32> to vector<32x8xbf16>
    "tpu.trace_start"() <{level = 10 : i32, message = "qd,kd->qk"}> : () -> ()
    %cst_51 = arith.constant dense<0.000000e+00> : vector<32x32xf32>
    %128 = tpu.matmul %123, %125, %cst_51 {dimension_numbers = #tpu.dot_dimension_numbers<[1], [1], [0], [0], [0, 0, 1, 0], [], []>} : vector<32x8xbf16>, vector<32x8xbf16>, vector<32x32xf32> -> vector<32x32xf32>
    "tpu.trace_stop"() : () -> ()
    %129 = arith.addf %128, %30 : vector<32x32xf32>
    %cst_52 = arith.constant dense<0xFF800000> : vector<32xf32>
    %130 = vector.multi_reduction <maximumf>, %129, %cst_52 [1] : vector<32x32xf32> to vector<32xf32>
    %131 = vector.shape_cast %130 : vector<32xf32> to vector<32x1xf32>
    %132 = vector.broadcast %131 : vector<32x1xf32> to vector<32x32xf32>
    %133 = arith.subf %129, %132 : vector<32x32xf32>
    %134 = math.exp %133 : vector<32x32xf32>
    %cst_53 = arith.constant dense<0.000000e+00> : vector<32xf32>
    %135 = vector.multi_reduction <add>, %134, %cst_53 [1] : vector<32x32xf32> to vector<32xf32>
    %136 = vector.shape_cast %135 : vector<32xf32> to vector<32x1xf32>
    %137 = vector.broadcast %136 : vector<32x1xf32> to vector<32x32xf32>
    %138 = arith.divf %134, %137 : vector<32x32xf32>
    %139 = arith.truncf %138 : vector<32x32xf32> to vector<32x32xbf16>
    %cst_54 = arith.constant dense<0.000000e+00> : vector<32x8xf32>
    %140 = tpu.matmul %139, %127, %cst_54 {dimension_numbers = #tpu.dot_dimension_numbers<[1], [0], [0], [1], [0, 0, 1, 1], [], []>} : vector<32x32xbf16>, vector<32x8xbf16>, vector<32x8xf32> -> vector<32x8xf32>
    %141 = vector.extract_strided_slice %81 {offsets = [0, 24], sizes = [32, 8], strides = [1, 1]} : vector<32x32xf32> to vector<32x8xf32>
    %142 = arith.truncf %141 : vector<32x8xf32> to vector<32x8xbf16>
    %143 = vector.extract_strided_slice %82 {offsets = [0, 24], sizes = [32, 8], strides = [1, 1]} : vector<32x32xf32> to vector<32x8xf32>
    %144 = arith.truncf %143 : vector<32x8xf32> to vector<32x8xbf16>
    %145 = vector.extract_strided_slice %83 {offsets = [0, 24], sizes = [32, 8], strides = [1, 1]} : vector<32x32xf32> to vector<32x8xf32>
    %146 = arith.truncf %145 : vector<32x8xf32> to vector<32x8xbf16>
    "tpu.trace_start"() <{level = 10 : i32, message = "qd,kd->qk"}> : () -> ()
    %cst_55 = arith.constant dense<0.000000e+00> : vector<32x32xf32>
    %147 = tpu.matmul %142, %144, %cst_55 {dimension_numbers = #tpu.dot_dimension_numbers<[1], [1], [0], [0], [0, 0, 1, 0], [], []>} : vector<32x8xbf16>, vector<32x8xbf16>, vector<32x32xf32> -> vector<32x32xf32>
    "tpu.trace_stop"() : () -> ()
    %148 = arith.addf %147, %30 : vector<32x32xf32>
    %cst_56 = arith.constant dense<0xFF800000> : vector<32xf32>
    %149 = vector.multi_reduction <maximumf>, %148, %cst_56 [1] : vector<32x32xf32> to vector<32xf32>
    %150 = vector.shape_cast %149 : vector<32xf32> to vector<32x1xf32>
    %151 = vector.broadcast %150 : vector<32x1xf32> to vector<32x32xf32>
    %152 = arith.subf %148, %151 : vector<32x32xf32>
    %153 = math.exp %152 : vector<32x32xf32>
    %cst_57 = arith.constant dense<0.000000e+00> : vector<32xf32>
    %154 = vector.multi_reduction <add>, %153, %cst_57 [1] : vector<32x32xf32> to vector<32xf32>
    %155 = vector.shape_cast %154 : vector<32xf32> to vector<32x1xf32>
    %156 = vector.broadcast %155 : vector<32x1xf32> to vector<32x32xf32>
    %157 = arith.divf %153, %156 : vector<32x32xf32>
    %158 = arith.truncf %157 : vector<32x32xf32> to vector<32x32xbf16>
    %cst_58 = arith.constant dense<0.000000e+00> : vector<32x8xf32>
    %159 = tpu.matmul %158, %146, %cst_58 {dimension_numbers = #tpu.dot_dimension_numbers<[1], [0], [0], [1], [0, 0, 1, 1], [], []>} : vector<32x32xbf16>, vector<32x8xbf16>, vector<32x8xf32> -> vector<32x8xf32>
    %160 = tpu.concatenate %102, %121, %140, %159 in 1 : vector<32x8xf32>, vector<32x8xf32>, vector<32x8xf32>, vector<32x8xf32> -> vector<32x32xf32>
    %161 = arith.truncf %160 : vector<32x32xf32> to vector<32x32xbf16>
    %cst_59 = arith.constant dense<0.000000e+00> : vector<32x32xf32>
    %162 = tpu.matmul %161, %40, %cst_59 {dimension_numbers = #tpu.dot_dimension_numbers<[1], [0], [0], [1], [0, 0, 1, 1], [], []>} : vector<32x32xbf16>, vector<32x32xbf16>, vector<32x32xf32> -> vector<32x32xf32>
    %163 = vector.broadcast %42 : vector<1x32xf32> to vector<32x32xf32>
    %164 = arith.addf %162, %163 : vector<32x32xf32>
    %165 = arith.addf %24, %164 : vector<32x32xf32>
    %cst_60 = arith.constant dense<0.000000e+00> : vector<32xf32>
    %166 = vector.multi_reduction <add>, %165, %cst_60 [1] : vector<32x32xf32> to vector<32xf32>
    %167 = vector.shape_cast %166 : vector<32xf32> to vector<32x1xf32>
    %cst_61 = arith.constant 3.200000e+01 : f32
    %168 = vector.broadcast %cst_61 : f32 to vector<32x1xf32>
    %169 = arith.divf %167, %168 : vector<32x1xf32>
    %170 = vector.broadcast %169 : vector<32x1xf32> to vector<32x32xf32>
    %171 = arith.subf %165, %170 : vector<32x32xf32>
    %172 = arith.mulf %171, %171 : vector<32x32xf32>
    %cst_62 = arith.constant dense<0.000000e+00> : vector<32xf32>
    %173 = vector.multi_reduction <add>, %172, %cst_62 [1] : vector<32x32xf32> to vector<32xf32>
    %174 = vector.shape_cast %173 : vector<32xf32> to vector<32x1xf32>
    %cst_63 = arith.constant 3.200000e+01 : f32
    %175 = vector.broadcast %cst_63 : f32 to vector<32x1xf32>
    %176 = arith.divf %174, %175 : vector<32x1xf32>
    %cst_64 = arith.constant 9.99999974E-6 : f32
    %177 = vector.broadcast %cst_64 : f32 to vector<32x1xf32>
    %178 = arith.addf %176, %177 : vector<32x1xf32>
    %179 = math.rsqrt %178 : vector<32x1xf32>
    %180 = vector.broadcast %179 : vector<32x1xf32> to vector<32x32xf32>
    %181 = arith.mulf %171, %180 : vector<32x32xf32>
    %182 = vector.broadcast %44 : vector<1x32xf32> to vector<32x32xf32>
    %183 = arith.mulf %181, %182 : vector<32x32xf32>
    %184 = vector.broadcast %46 : vector<1x32xf32> to vector<32x32xf32>
    %185 = arith.addf %183, %184 : vector<32x32xf32>
    %186 = arith.truncf %185 : vector<32x32xf32> to vector<32x32xbf16>
    %cst_65 = arith.constant dense<0.000000e+00> : vector<32x128xf32>
    %187 = tpu.matmul %186, %49, %cst_65 {dimension_numbers = #tpu.dot_dimension_numbers<[1], [0], [0], [1], [0, 0, 1, 1], [], []>} : vector<32x32xbf16>, vector<32x128xbf16>, vector<32x128xf32> -> vector<32x128xf32>
    %188 = vector.broadcast %51 : vector<1x128xf32> to vector<32x128xf32>
    %189 = arith.addf %187, %188 : vector<32x128xf32>
    %cst_66 = arith.constant 5.000000e-01 : f32
    %190 = vector.broadcast %cst_66 : f32 to vector<32x128xf32>
    %191 = arith.mulf %190, %189 : vector<32x128xf32>
    %cst_67 = arith.constant 0.707106769 : f32
    %192 = vector.broadcast %cst_67 : f32 to vector<32x128xf32>
    %193 = arith.mulf %189, %192 : vector<32x128xf32>
    %cst_68 = arith.constant 0.000000e+00 : f32
    %194 = vector.broadcast %cst_68 : f32 to vector<32x128xf32>
    %195 = arith.cmpf oge, %193, %194 : vector<32x128xf32>
    %cst_69 = arith.constant 1.000000e+00 : f32
    %cst_70 = arith.constant -1.000000e+00 : f32
    %196 = vector.broadcast %cst_69 : f32 to vector<32x128xf32>
    %197 = vector.broadcast %cst_70 : f32 to vector<32x128xf32>
    %198 = arith.select %195, %196, %197 : vector<32x128xi1>, vector<32x128xf32>
    %199 = math.absf %193 : vector<32x128xf32>
    %cst_71 = arith.constant 0.327591091 : f32
    %200 = vector.broadcast %cst_71 : f32 to vector<32x128xf32>
    %201 = arith.mulf %200, %199 : vector<32x128xf32>
    %cst_72 = arith.constant 1.000000e+00 : f32
    %202 = vector.broadcast %cst_72 : f32 to vector<32x128xf32>
    %203 = arith.addf %202, %201 : vector<32x128xf32>
    %cst_73 = arith.constant 1.000000e+00 : f32
    %204 = vector.broadcast %cst_73 : f32 to vector<32x128xf32>
    %205 = arith.divf %204, %203 : vector<32x128xf32>
    %cst_74 = arith.constant 1.06140542 : f32
    %206 = vector.broadcast %cst_74 : f32 to vector<32x128xf32>
    %207 = arith.mulf %206, %205 : vector<32x128xf32>
    %cst_75 = arith.constant -1.45315206 : f32
    %208 = vector.broadcast %cst_75 : f32 to vector<32x128xf32>
    %209 = arith.addf %207, %208 : vector<32x128xf32>
    %210 = arith.mulf %209, %205 : vector<32x128xf32>
    %cst_76 = arith.constant 1.42141378 : f32
    %211 = vector.broadcast %cst_76 : f32 to vector<32x128xf32>
    %212 = arith.addf %210, %211 : vector<32x128xf32>
    %213 = arith.mulf %212, %205 : vector<32x128xf32>
    %cst_77 = arith.constant -0.284496725 : f32
    %214 = vector.broadcast %cst_77 : f32 to vector<32x128xf32>
    %215 = arith.addf %213, %214 : vector<32x128xf32>
    %216 = arith.mulf %215, %205 : vector<32x128xf32>
    %cst_78 = arith.constant 0.254829586 : f32
    %217 = vector.broadcast %cst_78 : f32 to vector<32x128xf32>
    %218 = arith.addf %216, %217 : vector<32x128xf32>
    %219 = arith.mulf %218, %205 : vector<32x128xf32>
    %cst_79 = arith.constant 0.000000e+00 : f32
    %220 = vector.broadcast %cst_79 : f32 to vector<32x128xf32>
    %221 = arith.subf %220, %199 : vector<32x128xf32>
    %222 = arith.mulf %221, %199 : vector<32x128xf32>
    %223 = math.exp %222 : vector<32x128xf32>
    %224 = arith.mulf %219, %223 : vector<32x128xf32>
    %cst_80 = arith.constant 1.000000e+00 : f32
    %225 = vector.broadcast %cst_80 : f32 to vector<32x128xf32>
    %226 = arith.subf %225, %224 : vector<32x128xf32>
    %227 = arith.mulf %198, %226 : vector<32x128xf32>
    %cst_81 = arith.constant 1.000000e+00 : f32
    %228 = vector.broadcast %cst_81 : f32 to vector<32x128xf32>
    %229 = arith.addf %228, %227 : vector<32x128xf32>
    %230 = arith.mulf %191, %229 : vector<32x128xf32>
    %231 = arith.truncf %230 : vector<32x128xf32> to vector<32x128xbf16>
    %cst_82 = arith.constant dense<0.000000e+00> : vector<32x32xf32>
    %232 = tpu.matmul %231, %54, %cst_82 {dimension_numbers = #tpu.dot_dimension_numbers<[1], [0], [0], [1], [0, 0, 1, 1], [], []>} : vector<32x128xbf16>, vector<128x32xbf16>, vector<32x32xf32> -> vector<32x32xf32>
    %233 = vector.broadcast %56 : vector<1x32xf32> to vector<32x32xf32>
    %234 = arith.addf %232, %233 : vector<32x32xf32>
    %235 = arith.addf %165, %234 : vector<32x32xf32>
    %c1_83 = arith.constant 1 : index
    %c0_84 = arith.constant 0 : index
    %c0_85 = arith.constant 0 : index
    %236 = vector.load %arg5[%c1_83, %c0_84, %c0_85] : memref<2x232x128xf32, #tpu.memory_space<vmem>>, vector<1x1x32xf32>
    %237 = vector.shape_cast %236 : vector<1x1x32xf32> to vector<1x32xf32>
    %c1_86 = arith.constant 1 : index
    %c1_87 = arith.constant 1 : index
    %c0_88 = arith.constant 0 : index
    %238 = vector.load %arg5[%c1_86, %c1_87, %c0_88] : memref<2x232x128xf32, #tpu.memory_space<vmem>>, vector<1x1x32xf32>
    %239 = vector.shape_cast %238 : vector<1x1x32xf32> to vector<1x32xf32>
    %c1_89 = arith.constant 1 : index
    %c8_90 = arith.constant 8 : index
    %c0_91 = arith.constant 0 : index
    %240 = vector.load %arg5[%c1_89, %c8_90, %c0_91] : memref<2x232x128xf32, #tpu.memory_space<vmem>>, vector<1x32x128xf32>
    %241 = vector.shape_cast %240 : vector<1x32x128xf32> to vector<32x128xf32>
    %242 = arith.truncf %241 : vector<32x128xf32> to vector<32x128xbf16>
    %c1_92 = arith.constant 1 : index
    %c40_93 = arith.constant 40 : index
    %c0_94 = arith.constant 0 : index
    %243 = vector.load %arg5[%c1_92, %c40_93, %c0_94] : memref<2x232x128xf32, #tpu.memory_space<vmem>>, vector<1x32x32xf32>
    %244 = vector.shape_cast %243 : vector<1x32x32xf32> to vector<32x32xf32>
    %245 = arith.truncf %244 : vector<32x32xf32> to vector<32x32xbf16>
    %c1_95 = arith.constant 1 : index
    %c2_96 = arith.constant 2 : index
    %c0_97 = arith.constant 0 : index
    %246 = vector.load %arg5[%c1_95, %c2_96, %c0_97] : memref<2x232x128xf32, #tpu.memory_space<vmem>>, vector<1x1x32xf32>
    %247 = vector.shape_cast %246 : vector<1x1x32xf32> to vector<1x32xf32>
    %c1_98 = arith.constant 1 : index
    %c3_99 = arith.constant 3 : index
    %c0_100 = arith.constant 0 : index
    %248 = vector.load %arg5[%c1_98, %c3_99, %c0_100] : memref<2x232x128xf32, #tpu.memory_space<vmem>>, vector<1x1x32xf32>
    %249 = vector.shape_cast %248 : vector<1x1x32xf32> to vector<1x32xf32>
    %c1_101 = arith.constant 1 : index
    %c4_102 = arith.constant 4 : index
    %c0_103 = arith.constant 0 : index
    %250 = vector.load %arg5[%c1_101, %c4_102, %c0_103] : memref<2x232x128xf32, #tpu.memory_space<vmem>>, vector<1x1x32xf32>
    %251 = vector.shape_cast %250 : vector<1x1x32xf32> to vector<1x32xf32>
    %c1_104 = arith.constant 1 : index
    %c72_105 = arith.constant 72 : index
    %c0_106 = arith.constant 0 : index
    %252 = vector.load %arg5[%c1_104, %c72_105, %c0_106] : memref<2x232x128xf32, #tpu.memory_space<vmem>>, vector<1x32x128xf32>
    %253 = vector.shape_cast %252 : vector<1x32x128xf32> to vector<32x128xf32>
    %254 = arith.truncf %253 : vector<32x128xf32> to vector<32x128xbf16>
    %c1_107 = arith.constant 1 : index
    %c6_108 = arith.constant 6 : index
    %c0_109 = arith.constant 0 : index
    %255 = vector.load %arg5[%c1_107, %c6_108, %c0_109] : memref<2x232x128xf32, #tpu.memory_space<vmem>>, vector<1x1x128xf32>
    %256 = vector.shape_cast %255 : vector<1x1x128xf32> to vector<1x128xf32>
    %c1_110 = arith.constant 1 : index
    %c104_111 = arith.constant 104 : index
    %c0_112 = arith.constant 0 : index
    %257 = vector.load %arg5[%c1_110, %c104_111, %c0_112] : memref<2x232x128xf32, #tpu.memory_space<vmem>>, vector<1x128x32xf32>
    %258 = vector.shape_cast %257 : vector<1x128x32xf32> to vector<128x32xf32>
    %259 = arith.truncf %258 : vector<128x32xf32> to vector<128x32xbf16>
    %c1_113 = arith.constant 1 : index
    %c5_114 = arith.constant 5 : index
    %c0_115 = arith.constant 0 : index
    %260 = vector.load %arg5[%c1_113, %c5_114, %c0_115] : memref<2x232x128xf32, #tpu.memory_space<vmem>>, vector<1x1x32xf32>
    %261 = vector.shape_cast %260 : vector<1x1x32xf32> to vector<1x32xf32>
    %cst_116 = arith.constant dense<0.000000e+00> : vector<32xf32>
    %262 = vector.multi_reduction <add>, %235, %cst_116 [1] : vector<32x32xf32> to vector<32xf32>
    %263 = vector.shape_cast %262 : vector<32xf32> to vector<32x1xf32>
    %cst_117 = arith.constant 3.200000e+01 : f32
    %264 = vector.broadcast %cst_117 : f32 to vector<32x1xf32>
    %265 = arith.divf %263, %264 : vector<32x1xf32>
    %266 = vector.broadcast %265 : vector<32x1xf32> to vector<32x32xf32>
    %267 = arith.subf %235, %266 : vector<32x32xf32>
    %268 = arith.mulf %267, %267 : vector<32x32xf32>
    %cst_118 = arith.constant dense<0.000000e+00> : vector<32xf32>
    %269 = vector.multi_reduction <add>, %268, %cst_118 [1] : vector<32x32xf32> to vector<32xf32>
    %270 = vector.shape_cast %269 : vector<32xf32> to vector<32x1xf32>
    %cst_119 = arith.constant 3.200000e+01 : f32
    %271 = vector.broadcast %cst_119 : f32 to vector<32x1xf32>
    %272 = arith.divf %270, %271 : vector<32x1xf32>
    %cst_120 = arith.constant 9.99999974E-6 : f32
    %273 = vector.broadcast %cst_120 : f32 to vector<32x1xf32>
    %274 = arith.addf %272, %273 : vector<32x1xf32>
    %275 = math.rsqrt %274 : vector<32x1xf32>
    %276 = vector.broadcast %275 : vector<32x1xf32> to vector<32x32xf32>
    %277 = arith.mulf %267, %276 : vector<32x32xf32>
    %278 = vector.broadcast %237 : vector<1x32xf32> to vector<32x32xf32>
    %279 = arith.mulf %277, %278 : vector<32x32xf32>
    %280 = vector.broadcast %239 : vector<1x32xf32> to vector<32x32xf32>
    %281 = arith.addf %279, %280 : vector<32x32xf32>
    %282 = arith.truncf %281 : vector<32x32xf32> to vector<32x32xbf16>
    %cst_121 = arith.constant dense<0.000000e+00> : vector<32x128xf32>
    %283 = tpu.matmul %282, %242, %cst_121 {dimension_numbers = #tpu.dot_dimension_numbers<[1], [0], [0], [1], [0, 0, 1, 1], [], []>} : vector<32x32xbf16>, vector<32x128xbf16>, vector<32x128xf32> -> vector<32x128xf32>
    %284 = vector.extract_strided_slice %283 {offsets = [0, 0], sizes = [32, 32], strides = [1, 1]} : vector<32x128xf32> to vector<32x32xf32>
    %cst_122 = arith.constant 0.353553385 : f32
    %285 = vector.broadcast %cst_122 : f32 to vector<32x32xf32>
    %286 = arith.mulf %284, %285 : vector<32x32xf32>
    %287 = vector.extract_strided_slice %283 {offsets = [0, 32], sizes = [32, 32], strides = [1, 1]} : vector<32x128xf32> to vector<32x32xf32>
    %288 = vector.extract_strided_slice %283 {offsets = [0, 64], sizes = [32, 32], strides = [1, 1]} : vector<32x128xf32> to vector<32x32xf32>
    %289 = vector.extract_strided_slice %286 {offsets = [0, 0], sizes = [32, 8], strides = [1, 1]} : vector<32x32xf32> to vector<32x8xf32>
    %290 = arith.truncf %289 : vector<32x8xf32> to vector<32x8xbf16>
    %291 = vector.extract_strided_slice %287 {offsets = [0, 0], sizes = [32, 8], strides = [1, 1]} : vector<32x32xf32> to vector<32x8xf32>
    %292 = arith.truncf %291 : vector<32x8xf32> to vector<32x8xbf16>
    %293 = vector.extract_strided_slice %288 {offsets = [0, 0], sizes = [32, 8], strides = [1, 1]} : vector<32x32xf32> to vector<32x8xf32>
    %294 = arith.truncf %293 : vector<32x8xf32> to vector<32x8xbf16>
    "tpu.trace_start"() <{level = 10 : i32, message = "qd,kd->qk"}> : () -> ()
    %cst_123 = arith.constant dense<0.000000e+00> : vector<32x32xf32>
    %295 = tpu.matmul %290, %292, %cst_123 {dimension_numbers = #tpu.dot_dimension_numbers<[1], [1], [0], [0], [0, 0, 1, 0], [], []>} : vector<32x8xbf16>, vector<32x8xbf16>, vector<32x32xf32> -> vector<32x32xf32>
    "tpu.trace_stop"() : () -> ()
    %296 = arith.addf %295, %30 : vector<32x32xf32>
    %cst_124 = arith.constant dense<0xFF800000> : vector<32xf32>
    %297 = vector.multi_reduction <maximumf>, %296, %cst_124 [1] : vector<32x32xf32> to vector<32xf32>
    %298 = vector.shape_cast %297 : vector<32xf32> to vector<32x1xf32>
    %299 = vector.broadcast %298 : vector<32x1xf32> to vector<32x32xf32>
    %300 = arith.subf %296, %299 : vector<32x32xf32>
    %301 = math.exp %300 : vector<32x32xf32>
    %cst_125 = arith.constant dense<0.000000e+00> : vector<32xf32>
    %302 = vector.multi_reduction <add>, %301, %cst_125 [1] : vector<32x32xf32> to vector<32xf32>
    %303 = vector.shape_cast %302 : vector<32xf32> to vector<32x1xf32>
    %304 = vector.broadcast %303 : vector<32x1xf32> to vector<32x32xf32>
    %305 = arith.divf %301, %304 : vector<32x32xf32>
    %306 = arith.truncf %305 : vector<32x32xf32> to vector<32x32xbf16>
    %cst_126 = arith.constant dense<0.000000e+00> : vector<32x8xf32>
    %307 = tpu.matmul %306, %294, %cst_126 {dimension_numbers = #tpu.dot_dimension_numbers<[1], [0], [0], [1], [0, 0, 1, 1], [], []>} : vector<32x32xbf16>, vector<32x8xbf16>, vector<32x8xf32> -> vector<32x8xf32>
    %308 = vector.extract_strided_slice %286 {offsets = [0, 8], sizes = [32, 8], strides = [1, 1]} : vector<32x32xf32> to vector<32x8xf32>
    %309 = arith.truncf %308 : vector<32x8xf32> to vector<32x8xbf16>
    %310 = vector.extract_strided_slice %287 {offsets = [0, 8], sizes = [32, 8], strides = [1, 1]} : vector<32x32xf32> to vector<32x8xf32>
    %311 = arith.truncf %310 : vector<32x8xf32> to vector<32x8xbf16>
    %312 = vector.extract_strided_slice %288 {offsets = [0, 8], sizes = [32, 8], strides = [1, 1]} : vector<32x32xf32> to vector<32x8xf32>
    %313 = arith.truncf %312 : vector<32x8xf32> to vector<32x8xbf16>
    "tpu.trace_start"() <{level = 10 : i32, message = "qd,kd->qk"}> : () -> ()
    %cst_127 = arith.constant dense<0.000000e+00> : vector<32x32xf32>
    %314 = tpu.matmul %309, %311, %cst_127 {dimension_numbers = #tpu.dot_dimension_numbers<[1], [1], [0], [0], [0, 0, 1, 0], [], []>} : vector<32x8xbf16>, vector<32x8xbf16>, vector<32x32xf32> -> vector<32x32xf32>
    "tpu.trace_stop"() : () -> ()
    %315 = arith.addf %314, %30 : vector<32x32xf32>
    %cst_128 = arith.constant dense<0xFF800000> : vector<32xf32>
    %316 = vector.multi_reduction <maximumf>, %315, %cst_128 [1] : vector<32x32xf32> to vector<32xf32>
    %317 = vector.shape_cast %316 : vector<32xf32> to vector<32x1xf32>
    %318 = vector.broadcast %317 : vector<32x1xf32> to vector<32x32xf32>
    %319 = arith.subf %315, %318 : vector<32x32xf32>
    %320 = math.exp %319 : vector<32x32xf32>
    %cst_129 = arith.constant dense<0.000000e+00> : vector<32xf32>
    %321 = vector.multi_reduction <add>, %320, %cst_129 [1] : vector<32x32xf32> to vector<32xf32>
    %322 = vector.shape_cast %321 : vector<32xf32> to vector<32x1xf32>
    %323 = vector.broadcast %322 : vector<32x1xf32> to vector<32x32xf32>
    %324 = arith.divf %320, %323 : vector<32x32xf32>
    %325 = arith.truncf %324 : vector<32x32xf32> to vector<32x32xbf16>
    %cst_130 = arith.constant dense<0.000000e+00> : vector<32x8xf32>
    %326 = tpu.matmul %325, %313, %cst_130 {dimension_numbers = #tpu.dot_dimension_numbers<[1], [0], [0], [1], [0, 0, 1, 1], [], []>} : vector<32x32xbf16>, vector<32x8xbf16>, vector<32x8xf32> -> vector<32x8xf32>
    %327 = vector.extract_strided_slice %286 {offsets = [0, 16], sizes = [32, 8], strides = [1, 1]} : vector<32x32xf32> to vector<32x8xf32>
    %328 = arith.truncf %327 : vector<32x8xf32> to vector<32x8xbf16>
    %329 = vector.extract_strided_slice %287 {offsets = [0, 16], sizes = [32, 8], strides = [1, 1]} : vector<32x32xf32> to vector<32x8xf32>
    %330 = arith.truncf %329 : vector<32x8xf32> to vector<32x8xbf16>
    %331 = vector.extract_strided_slice %288 {offsets = [0, 16], sizes = [32, 8], strides = [1, 1]} : vector<32x32xf32> to vector<32x8xf32>
    %332 = arith.truncf %331 : vector<32x8xf32> to vector<32x8xbf16>
    "tpu.trace_start"() <{level = 10 : i32, message = "qd,kd->qk"}> : () -> ()
    %cst_131 = arith.constant dense<0.000000e+00> : vector<32x32xf32>
    %333 = tpu.matmul %328, %330, %cst_131 {dimension_numbers = #tpu.dot_dimension_numbers<[1], [1], [0], [0], [0, 0, 1, 0], [], []>} : vector<32x8xbf16>, vector<32x8xbf16>, vector<32x32xf32> -> vector<32x32xf32>
    "tpu.trace_stop"() : () -> ()
    %334 = arith.addf %333, %30 : vector<32x32xf32>
    %cst_132 = arith.constant dense<0xFF800000> : vector<32xf32>
    %335 = vector.multi_reduction <maximumf>, %334, %cst_132 [1] : vector<32x32xf32> to vector<32xf32>
    %336 = vector.shape_cast %335 : vector<32xf32> to vector<32x1xf32>
    %337 = vector.broadcast %336 : vector<32x1xf32> to vector<32x32xf32>
    %338 = arith.subf %334, %337 : vector<32x32xf32>
    %339 = math.exp %338 : vector<32x32xf32>
    %cst_133 = arith.constant dense<0.000000e+00> : vector<32xf32>
    %340 = vector.multi_reduction <add>, %339, %cst_133 [1] : vector<32x32xf32> to vector<32xf32>
    %341 = vector.shape_cast %340 : vector<32xf32> to vector<32x1xf32>
    %342 = vector.broadcast %341 : vector<32x1xf32> to vector<32x32xf32>
    %343 = arith.divf %339, %342 : vector<32x32xf32>
    %344 = arith.truncf %343 : vector<32x32xf32> to vector<32x32xbf16>
    %cst_134 = arith.constant dense<0.000000e+00> : vector<32x8xf32>
    %345 = tpu.matmul %344, %332, %cst_134 {dimension_numbers = #tpu.dot_dimension_numbers<[1], [0], [0], [1], [0, 0, 1, 1], [], []>} : vector<32x32xbf16>, vector<32x8xbf16>, vector<32x8xf32> -> vector<32x8xf32>
    %346 = vector.extract_strided_slice %286 {offsets = [0, 24], sizes = [32, 8], strides = [1, 1]} : vector<32x32xf32> to vector<32x8xf32>
    %347 = arith.truncf %346 : vector<32x8xf32> to vector<32x8xbf16>
    %348 = vector.extract_strided_slice %287 {offsets = [0, 24], sizes = [32, 8], strides = [1, 1]} : vector<32x32xf32> to vector<32x8xf32>
    %349 = arith.truncf %348 : vector<32x8xf32> to vector<32x8xbf16>
    %350 = vector.extract_strided_slice %288 {offsets = [0, 24], sizes = [32, 8], strides = [1, 1]} : vector<32x32xf32> to vector<32x8xf32>
    %351 = arith.truncf %350 : vector<32x8xf32> to vector<32x8xbf16>
    "tpu.trace_start"() <{level = 10 : i32, message = "qd,kd->qk"}> : () -> ()
    %cst_135 = arith.constant dense<0.000000e+00> : vector<32x32xf32>
    %352 = tpu.matmul %347, %349, %cst_135 {dimension_numbers = #tpu.dot_dimension_numbers<[1], [1], [0], [0], [0, 0, 1, 0], [], []>} : vector<32x8xbf16>, vector<32x8xbf16>, vector<32x32xf32> -> vector<32x32xf32>
    "tpu.trace_stop"() : () -> ()
    %353 = arith.addf %352, %30 : vector<32x32xf32>
    %cst_136 = arith.constant dense<0xFF800000> : vector<32xf32>
    %354 = vector.multi_reduction <maximumf>, %353, %cst_136 [1] : vector<32x32xf32> to vector<32xf32>
    %355 = vector.shape_cast %354 : vector<32xf32> to vector<32x1xf32>
    %356 = vector.broadcast %355 : vector<32x1xf32> to vector<32x32xf32>
    %357 = arith.subf %353, %356 : vector<32x32xf32>
    %358 = math.exp %357 : vector<32x32xf32>
    %cst_137 = arith.constant dense<0.000000e+00> : vector<32xf32>
    %359 = vector.multi_reduction <add>, %358, %cst_137 [1] : vector<32x32xf32> to vector<32xf32>
    %360 = vector.shape_cast %359 : vector<32xf32> to vector<32x1xf32>
    %361 = vector.broadcast %360 : vector<32x1xf32> to vector<32x32xf32>
    %362 = arith.divf %358, %361 : vector<32x32xf32>
    %363 = arith.truncf %362 : vector<32x32xf32> to vector<32x32xbf16>
    %cst_138 = arith.constant dense<0.000000e+00> : vector<32x8xf32>
    %364 = tpu.matmul %363, %351, %cst_138 {dimension_numbers = #tpu.dot_dimension_numbers<[1], [0], [0], [1], [0, 0, 1, 1], [], []>} : vector<32x32xbf16>, vector<32x8xbf16>, vector<32x8xf32> -> vector<32x8xf32>
    %365 = tpu.concatenate %307, %326, %345, %364 in 1 : vector<32x8xf32>, vector<32x8xf32>, vector<32x8xf32>, vector<32x8xf32> -> vector<32x32xf32>
    %366 = arith.truncf %365 : vector<32x32xf32> to vector<32x32xbf16>
    %cst_139 = arith.constant dense<0.000000e+00> : vector<32x32xf32>
    %367 = tpu.matmul %366, %245, %cst_139 {dimension_numbers = #tpu.dot_dimension_numbers<[1], [0], [0], [1], [0, 0, 1, 1], [], []>} : vector<32x32xbf16>, vector<32x32xbf16>, vector<32x32xf32> -> vector<32x32xf32>
    %368 = vector.broadcast %247 : vector<1x32xf32> to vector<32x32xf32>
    %369 = arith.addf %367, %368 : vector<32x32xf32>
    %370 = arith.addf %235, %369 : vector<32x32xf32>
    %cst_140 = arith.constant dense<0.000000e+00> : vector<32xf32>
    %371 = vector.multi_reduction <add>, %370, %cst_140 [1] : vector<32x32xf32> to vector<32xf32>
    %372 = vector.shape_cast %371 : vector<32xf32> to vector<32x1xf32>
    %cst_141 = arith.constant 3.200000e+01 : f32
    %373 = vector.broadcast %cst_141 : f32 to vector<32x1xf32>
    %374 = arith.divf %372, %373 : vector<32x1xf32>
    %375 = vector.broadcast %374 : vector<32x1xf32> to vector<32x32xf32>
    %376 = arith.subf %370, %375 : vector<32x32xf32>
    %377 = arith.mulf %376, %376 : vector<32x32xf32>
    %cst_142 = arith.constant dense<0.000000e+00> : vector<32xf32>
    %378 = vector.multi_reduction <add>, %377, %cst_142 [1] : vector<32x32xf32> to vector<32xf32>
    %379 = vector.shape_cast %378 : vector<32xf32> to vector<32x1xf32>
    %cst_143 = arith.constant 3.200000e+01 : f32
    %380 = vector.broadcast %cst_143 : f32 to vector<32x1xf32>
    %381 = arith.divf %379, %380 : vector<32x1xf32>
    %cst_144 = arith.constant 9.99999974E-6 : f32
    %382 = vector.broadcast %cst_144 : f32 to vector<32x1xf32>
    %383 = arith.addf %381, %382 : vector<32x1xf32>
    %384 = math.rsqrt %383 : vector<32x1xf32>
    %385 = vector.broadcast %384 : vector<32x1xf32> to vector<32x32xf32>
    %386 = arith.mulf %376, %385 : vector<32x32xf32>
    %387 = vector.broadcast %249 : vector<1x32xf32> to vector<32x32xf32>
    %388 = arith.mulf %386, %387 : vector<32x32xf32>
    %389 = vector.broadcast %251 : vector<1x32xf32> to vector<32x32xf32>
    %390 = arith.addf %388, %389 : vector<32x32xf32>
    %391 = arith.truncf %390 : vector<32x32xf32> to vector<32x32xbf16>
    %cst_145 = arith.constant dense<0.000000e+00> : vector<32x128xf32>
    %392 = tpu.matmul %391, %254, %cst_145 {dimension_numbers = #tpu.dot_dimension_numbers<[1], [0], [0], [1], [0, 0, 1, 1], [], []>} : vector<32x32xbf16>, vector<32x128xbf16>, vector<32x128xf32> -> vector<32x128xf32>
    %393 = vector.broadcast %256 : vector<1x128xf32> to vector<32x128xf32>
    %394 = arith.addf %392, %393 : vector<32x128xf32>
    %cst_146 = arith.constant 5.000000e-01 : f32
    %395 = vector.broadcast %cst_146 : f32 to vector<32x128xf32>
    %396 = arith.mulf %395, %394 : vector<32x128xf32>
    %cst_147 = arith.constant 0.707106769 : f32
    %397 = vector.broadcast %cst_147 : f32 to vector<32x128xf32>
    %398 = arith.mulf %394, %397 : vector<32x128xf32>
    %cst_148 = arith.constant 0.000000e+00 : f32
    %399 = vector.broadcast %cst_148 : f32 to vector<32x128xf32>
    %400 = arith.cmpf oge, %398, %399 : vector<32x128xf32>
    %cst_149 = arith.constant 1.000000e+00 : f32
    %cst_150 = arith.constant -1.000000e+00 : f32
    %401 = vector.broadcast %cst_149 : f32 to vector<32x128xf32>
    %402 = vector.broadcast %cst_150 : f32 to vector<32x128xf32>
    %403 = arith.select %400, %401, %402 : vector<32x128xi1>, vector<32x128xf32>
    %404 = math.absf %398 : vector<32x128xf32>
    %cst_151 = arith.constant 0.327591091 : f32
    %405 = vector.broadcast %cst_151 : f32 to vector<32x128xf32>
    %406 = arith.mulf %405, %404 : vector<32x128xf32>
    %cst_152 = arith.constant 1.000000e+00 : f32
    %407 = vector.broadcast %cst_152 : f32 to vector<32x128xf32>
    %408 = arith.addf %407, %406 : vector<32x128xf32>
    %cst_153 = arith.constant 1.000000e+00 : f32
    %409 = vector.broadcast %cst_153 : f32 to vector<32x128xf32>
    %410 = arith.divf %409, %408 : vector<32x128xf32>
    %cst_154 = arith.constant 1.06140542 : f32
    %411 = vector.broadcast %cst_154 : f32 to vector<32x128xf32>
    %412 = arith.mulf %411, %410 : vector<32x128xf32>
    %cst_155 = arith.constant -1.45315206 : f32
    %413 = vector.broadcast %cst_155 : f32 to vector<32x128xf32>
    %414 = arith.addf %412, %413 : vector<32x128xf32>
    %415 = arith.mulf %414, %410 : vector<32x128xf32>
    %cst_156 = arith.constant 1.42141378 : f32
    %416 = vector.broadcast %cst_156 : f32 to vector<32x128xf32>
    %417 = arith.addf %415, %416 : vector<32x128xf32>
    %418 = arith.mulf %417, %410 : vector<32x128xf32>
    %cst_157 = arith.constant -0.284496725 : f32
    %419 = vector.broadcast %cst_157 : f32 to vector<32x128xf32>
    %420 = arith.addf %418, %419 : vector<32x128xf32>
    %421 = arith.mulf %420, %410 : vector<32x128xf32>
    %cst_158 = arith.constant 0.254829586 : f32
    %422 = vector.broadcast %cst_158 : f32 to vector<32x128xf32>
    %423 = arith.addf %421, %422 : vector<32x128xf32>
    %424 = arith.mulf %423, %410 : vector<32x128xf32>
    %cst_159 = arith.constant 0.000000e+00 : f32
    %425 = vector.broadcast %cst_159 : f32 to vector<32x128xf32>
    %426 = arith.subf %425, %404 : vector<32x128xf32>
    %427 = arith.mulf %426, %404 : vector<32x128xf32>
    %428 = math.exp %427 : vector<32x128xf32>
    %429 = arith.mulf %424, %428 : vector<32x128xf32>
    %cst_160 = arith.constant 1.000000e+00 : f32
    %430 = vector.broadcast %cst_160 : f32 to vector<32x128xf32>
    %431 = arith.subf %430, %429 : vector<32x128xf32>
    %432 = arith.mulf %403, %431 : vector<32x128xf32>
    %cst_161 = arith.constant 1.000000e+00 : f32
    %433 = vector.broadcast %cst_161 : f32 to vector<32x128xf32>
    %434 = arith.addf %433, %432 : vector<32x128xf32>
    %435 = arith.mulf %396, %434 : vector<32x128xf32>
    %436 = arith.truncf %435 : vector<32x128xf32> to vector<32x128xbf16>
    %cst_162 = arith.constant dense<0.000000e+00> : vector<32x32xf32>
    %437 = tpu.matmul %436, %259, %cst_162 {dimension_numbers = #tpu.dot_dimension_numbers<[1], [0], [0], [1], [0, 0, 1, 1], [], []>} : vector<32x128xbf16>, vector<128x32xbf16>, vector<32x32xf32> -> vector<32x32xf32>
    %438 = vector.broadcast %261 : vector<1x32xf32> to vector<32x32xf32>
    %439 = arith.addf %437, %438 : vector<32x32xf32>
    %440 = arith.addf %370, %439 : vector<32x32xf32>
    %c18 = arith.constant 18 : index
    %c0_163 = arith.constant 0 : index
    %441 = vector.load %arg4[%c18, %c0_163] : memref<200x128xf32, #tpu.memory_space<vmem>>, vector<1x32xf32>
    %c19 = arith.constant 19 : index
    %c0_164 = arith.constant 0 : index
    %442 = vector.load %arg4[%c19, %c0_164] : memref<200x128xf32, #tpu.memory_space<vmem>>, vector<1x32xf32>
    %cst_165 = arith.constant dense<0.000000e+00> : vector<32xf32>
    %443 = vector.multi_reduction <add>, %440, %cst_165 [1] : vector<32x32xf32> to vector<32xf32>
    %444 = vector.shape_cast %443 : vector<32xf32> to vector<32x1xf32>
    %cst_166 = arith.constant 3.200000e+01 : f32
    %445 = vector.broadcast %cst_166 : f32 to vector<32x1xf32>
    %446 = arith.divf %444, %445 : vector<32x1xf32>
    %447 = vector.broadcast %446 : vector<32x1xf32> to vector<32x32xf32>
    %448 = arith.subf %440, %447 : vector<32x32xf32>
    %449 = arith.mulf %448, %448 : vector<32x32xf32>
    %cst_167 = arith.constant dense<0.000000e+00> : vector<32xf32>
    %450 = vector.multi_reduction <add>, %449, %cst_167 [1] : vector<32x32xf32> to vector<32xf32>
    %451 = vector.shape_cast %450 : vector<32xf32> to vector<32x1xf32>
    %cst_168 = arith.constant 3.200000e+01 : f32
    %452 = vector.broadcast %cst_168 : f32 to vector<32x1xf32>
    %453 = arith.divf %451, %452 : vector<32x1xf32>
    %cst_169 = arith.constant 9.99999974E-6 : f32
    %454 = vector.broadcast %cst_169 : f32 to vector<32x1xf32>
    %455 = arith.addf %453, %454 : vector<32x1xf32>
    %456 = math.rsqrt %455 : vector<32x1xf32>
    %457 = vector.broadcast %456 : vector<32x1xf32> to vector<32x32xf32>
    %458 = arith.mulf %448, %457 : vector<32x32xf32>
    %459 = vector.broadcast %441 : vector<1x32xf32> to vector<32x32xf32>
    %460 = arith.mulf %458, %459 : vector<32x32xf32>
    %461 = vector.broadcast %442 : vector<1x32xf32> to vector<32x32xf32>
    %462 = arith.addf %460, %461 : vector<32x32xf32>
    %c0_170 = arith.constant 0 : index
    %c0_171 = arith.constant 0 : index
    %c0_172 = arith.constant 0 : index
    %463 = vector.load %arg3[%c0_170, %c0_171, %c0_172] : memref<1x80x32xbf16, #tpu.memory_space<vmem>>, vector<1x80x32xbf16>
    %464 = vector.shape_cast %463 : vector<1x80x32xbf16> to vector<80x32xbf16>
    %465 = arith.truncf %462 : vector<32x32xf32> to vector<32x32xbf16>
    %cst_173 = arith.constant dense<0.000000e+00> : vector<80x32xf32>
    %466 = tpu.matmul %464, %465, %cst_173 {dimension_numbers = #tpu.dot_dimension_numbers<[1], [0], [0], [1], [0, 0, 1, 1], [], []>} : vector<80x32xbf16>, vector<32x32xbf16>, vector<80x32xf32> -> vector<80x32xf32>
    %467 = arith.extf %464 : vector<80x32xbf16> to vector<80x32xf32>
    %cst_174 = arith.constant dense<0.000000e+00> : vector<80xf32>
    %468 = vector.multi_reduction <add>, %467, %cst_174 [1] : vector<80x32xf32> to vector<80xf32>
    %469 = vector.shape_cast %468 : vector<80xf32> to vector<80x1xf32>
    %c20 = arith.constant 20 : index
    %c0_175 = arith.constant 0 : index
    %470 = vector.load %arg4[%c20, %c0_175] : memref<200x128xf32, #tpu.memory_space<vmem>>, vector<1x32xf32>
    %cst_176 = arith.constant 1.000000e+00 : f32
    %471 = vector.broadcast %cst_176 : f32 to vector<80x1xf32>
    %472 = arith.subf %471, %469 : vector<80x1xf32>
    %473 = vector.broadcast %472 : vector<80x1xf32> to vector<80x32xf32>
    %474 = vector.broadcast %470 : vector<1x32xf32> to vector<80x32xf32>
    %475 = arith.mulf %473, %474 : vector<80x32xf32>
    %476 = arith.addf %466, %475 : vector<80x32xf32>
    %c120 = arith.constant 120 : index
    %c0_177 = arith.constant 0 : index
    %477 = vector.load %arg4[%c120, %c0_177] : memref<200x128xf32, #tpu.memory_space<vmem>>, vector<80x32xf32>
    %478 = arith.addf %476, %477 : vector<80x32xf32>
    %479 = tpu.iota {dimensions = array<i32: 1>} : vector<80x80xi32>
    %c65_i32 = arith.constant 65 : i32
    %480 = vector.broadcast %c65_i32 : i32 to vector<80x80xi32>
    %481 = arith.cmpi slt, %479, %480 : vector<80x80xi32>
    %cst_178 = arith.constant 0.000000e+00 : f32
    %cst_179 = arith.constant -1.000000e+30 : f32
    %482 = vector.broadcast %cst_178 : f32 to vector<80x80xf32>
    %483 = vector.broadcast %cst_179 : f32 to vector<80x80xf32>
    %484 = arith.select %481, %482, %483 : vector<80x80xi1>, vector<80x80xf32>
    %c0_180 = arith.constant 0 : index
    %c0_181 = arith.constant 0 : index
    %c0_182 = arith.constant 0 : index
    %485 = vector.load %arg6[%c0_180, %c0_181, %c0_182] : memref<2x232x128xf32, #tpu.memory_space<vmem>>, vector<1x1x32xf32>
    %486 = vector.shape_cast %485 : vector<1x1x32xf32> to vector<1x32xf32>
    %c0_183 = arith.constant 0 : index
    %c1_184 = arith.constant 1 : index
    %c0_185 = arith.constant 0 : index
    %487 = vector.load %arg6[%c0_183, %c1_184, %c0_185] : memref<2x232x128xf32, #tpu.memory_space<vmem>>, vector<1x1x32xf32>
    %488 = vector.shape_cast %487 : vector<1x1x32xf32> to vector<1x32xf32>
    %c0_186 = arith.constant 0 : index
    %c8_187 = arith.constant 8 : index
    %c0_188 = arith.constant 0 : index
    %489 = vector.load %arg6[%c0_186, %c8_187, %c0_188] : memref<2x232x128xf32, #tpu.memory_space<vmem>>, vector<1x32x128xf32>
    %490 = vector.shape_cast %489 : vector<1x32x128xf32> to vector<32x128xf32>
    %491 = arith.truncf %490 : vector<32x128xf32> to vector<32x128xbf16>
    %c0_189 = arith.constant 0 : index
    %c40_190 = arith.constant 40 : index
    %c0_191 = arith.constant 0 : index
    %492 = vector.load %arg6[%c0_189, %c40_190, %c0_191] : memref<2x232x128xf32, #tpu.memory_space<vmem>>, vector<1x32x32xf32>
    %493 = vector.shape_cast %492 : vector<1x32x32xf32> to vector<32x32xf32>
    %494 = arith.truncf %493 : vector<32x32xf32> to vector<32x32xbf16>
    %c0_192 = arith.constant 0 : index
    %c2_193 = arith.constant 2 : index
    %c0_194 = arith.constant 0 : index
    %495 = vector.load %arg6[%c0_192, %c2_193, %c0_194] : memref<2x232x128xf32, #tpu.memory_space<vmem>>, vector<1x1x32xf32>
    %496 = vector.shape_cast %495 : vector<1x1x32xf32> to vector<1x32xf32>
    %c0_195 = arith.constant 0 : index
    %c3_196 = arith.constant 3 : index
    %c0_197 = arith.constant 0 : index
    %497 = vector.load %arg6[%c0_195, %c3_196, %c0_197] : memref<2x232x128xf32, #tpu.memory_space<vmem>>, vector<1x1x32xf32>
    %498 = vector.shape_cast %497 : vector<1x1x32xf32> to vector<1x32xf32>
    %c0_198 = arith.constant 0 : index
    %c4_199 = arith.constant 4 : index
    %c0_200 = arith.constant 0 : index
    %499 = vector.load %arg6[%c0_198, %c4_199, %c0_200] : memref<2x232x128xf32, #tpu.memory_space<vmem>>, vector<1x1x32xf32>
    %500 = vector.shape_cast %499 : vector<1x1x32xf32> to vector<1x32xf32>
    %c0_201 = arith.constant 0 : index
    %c72_202 = arith.constant 72 : index
    %c0_203 = arith.constant 0 : index
    %501 = vector.load %arg6[%c0_201, %c72_202, %c0_203] : memref<2x232x128xf32, #tpu.memory_space<vmem>>, vector<1x32x128xf32>
    %502 = vector.shape_cast %501 : vector<1x32x128xf32> to vector<32x128xf32>
    %503 = arith.truncf %502 : vector<32x128xf32> to vector<32x128xbf16>
    %c0_204 = arith.constant 0 : index
    %c6_205 = arith.constant 6 : index
    %c0_206 = arith.constant 0 : index
    %504 = vector.load %arg6[%c0_204, %c6_205, %c0_206] : memref<2x232x128xf32, #tpu.memory_space<vmem>>, vector<1x1x128xf32>
    %505 = vector.shape_cast %504 : vector<1x1x128xf32> to vector<1x128xf32>
    %c0_207 = arith.constant 0 : index
    %c104_208 = arith.constant 104 : index
    %c0_209 = arith.constant 0 : index
    %506 = vector.load %arg6[%c0_207, %c104_208, %c0_209] : memref<2x232x128xf32, #tpu.memory_space<vmem>>, vector<1x128x32xf32>
    %507 = vector.shape_cast %506 : vector<1x128x32xf32> to vector<128x32xf32>
    %508 = arith.truncf %507 : vector<128x32xf32> to vector<128x32xbf16>
    %c0_210 = arith.constant 0 : index
    %c5_211 = arith.constant 5 : index
    %c0_212 = arith.constant 0 : index
    %509 = vector.load %arg6[%c0_210, %c5_211, %c0_212] : memref<2x232x128xf32, #tpu.memory_space<vmem>>, vector<1x1x32xf32>
    %510 = vector.shape_cast %509 : vector<1x1x32xf32> to vector<1x32xf32>
    %cst_213 = arith.constant dense<0.000000e+00> : vector<80xf32>
    %511 = vector.multi_reduction <add>, %478, %cst_213 [1] : vector<80x32xf32> to vector<80xf32>
    %512 = vector.shape_cast %511 : vector<80xf32> to vector<80x1xf32>
    %cst_214 = arith.constant 3.200000e+01 : f32
    %513 = vector.broadcast %cst_214 : f32 to vector<80x1xf32>
    %514 = arith.divf %512, %513 : vector<80x1xf32>
    %515 = vector.broadcast %514 : vector<80x1xf32> to vector<80x32xf32>
    %516 = arith.subf %478, %515 : vector<80x32xf32>
    %517 = arith.mulf %516, %516 : vector<80x32xf32>
    %cst_215 = arith.constant dense<0.000000e+00> : vector<80xf32>
    %518 = vector.multi_reduction <add>, %517, %cst_215 [1] : vector<80x32xf32> to vector<80xf32>
    %519 = vector.shape_cast %518 : vector<80xf32> to vector<80x1xf32>
    %cst_216 = arith.constant 3.200000e+01 : f32
    %520 = vector.broadcast %cst_216 : f32 to vector<80x1xf32>
    %521 = arith.divf %519, %520 : vector<80x1xf32>
    %cst_217 = arith.constant 9.99999974E-6 : f32
    %522 = vector.broadcast %cst_217 : f32 to vector<80x1xf32>
    %523 = arith.addf %521, %522 : vector<80x1xf32>
    %524 = math.rsqrt %523 : vector<80x1xf32>
    %525 = vector.broadcast %524 : vector<80x1xf32> to vector<80x32xf32>
    %526 = arith.mulf %516, %525 : vector<80x32xf32>
    %527 = vector.broadcast %486 : vector<1x32xf32> to vector<80x32xf32>
    %528 = arith.mulf %526, %527 : vector<80x32xf32>
    %529 = vector.broadcast %488 : vector<1x32xf32> to vector<80x32xf32>
    %530 = arith.addf %528, %529 : vector<80x32xf32>
    %531 = arith.truncf %530 : vector<80x32xf32> to vector<80x32xbf16>
    %cst_218 = arith.constant dense<0.000000e+00> : vector<80x128xf32>
    %532 = tpu.matmul %531, %491, %cst_218 {dimension_numbers = #tpu.dot_dimension_numbers<[1], [0], [0], [1], [0, 0, 1, 1], [], []>} : vector<80x32xbf16>, vector<32x128xbf16>, vector<80x128xf32> -> vector<80x128xf32>
    %533 = vector.extract_strided_slice %532 {offsets = [0, 0], sizes = [80, 32], strides = [1, 1]} : vector<80x128xf32> to vector<80x32xf32>
    %cst_219 = arith.constant 0.353553385 : f32
    %534 = vector.broadcast %cst_219 : f32 to vector<80x32xf32>
    %535 = arith.mulf %533, %534 : vector<80x32xf32>
    %536 = vector.extract_strided_slice %532 {offsets = [0, 32], sizes = [80, 32], strides = [1, 1]} : vector<80x128xf32> to vector<80x32xf32>
    %537 = vector.extract_strided_slice %532 {offsets = [0, 64], sizes = [80, 32], strides = [1, 1]} : vector<80x128xf32> to vector<80x32xf32>
    %538 = vector.extract_strided_slice %535 {offsets = [0, 0], sizes = [80, 8], strides = [1, 1]} : vector<80x32xf32> to vector<80x8xf32>
    %539 = arith.truncf %538 : vector<80x8xf32> to vector<80x8xbf16>
    %540 = vector.extract_strided_slice %536 {offsets = [0, 0], sizes = [80, 8], strides = [1, 1]} : vector<80x32xf32> to vector<80x8xf32>
    %541 = arith.truncf %540 : vector<80x8xf32> to vector<80x8xbf16>
    %542 = vector.extract_strided_slice %537 {offsets = [0, 0], sizes = [80, 8], strides = [1, 1]} : vector<80x32xf32> to vector<80x8xf32>
    %543 = arith.truncf %542 : vector<80x8xf32> to vector<80x8xbf16>
    "tpu.trace_start"() <{level = 10 : i32, message = "qd,kd->qk"}> : () -> ()
    %cst_220 = arith.constant dense<0.000000e+00> : vector<80x80xf32>
    %544 = tpu.matmul %539, %541, %cst_220 {dimension_numbers = #tpu.dot_dimension_numbers<[1], [1], [0], [0], [0, 0, 1, 0], [], []>} : vector<80x8xbf16>, vector<80x8xbf16>, vector<80x80xf32> -> vector<80x80xf32>
    "tpu.trace_stop"() : () -> ()
    %545 = arith.addf %544, %484 : vector<80x80xf32>
    %cst_221 = arith.constant dense<0xFF800000> : vector<80xf32>
    %546 = vector.multi_reduction <maximumf>, %545, %cst_221 [1] : vector<80x80xf32> to vector<80xf32>
    %547 = vector.shape_cast %546 : vector<80xf32> to vector<80x1xf32>
    %548 = vector.broadcast %547 : vector<80x1xf32> to vector<80x80xf32>
    %549 = arith.subf %545, %548 : vector<80x80xf32>
    %550 = math.exp %549 : vector<80x80xf32>
    %cst_222 = arith.constant dense<0.000000e+00> : vector<80xf32>
    %551 = vector.multi_reduction <add>, %550, %cst_222 [1] : vector<80x80xf32> to vector<80xf32>
    %552 = vector.shape_cast %551 : vector<80xf32> to vector<80x1xf32>
    %553 = vector.broadcast %552 : vector<80x1xf32> to vector<80x80xf32>
    %554 = arith.divf %550, %553 : vector<80x80xf32>
    %555 = arith.truncf %554 : vector<80x80xf32> to vector<80x80xbf16>
    %cst_223 = arith.constant dense<0.000000e+00> : vector<80x8xf32>
    %556 = tpu.matmul %555, %543, %cst_223 {dimension_numbers = #tpu.dot_dimension_numbers<[1], [0], [0], [1], [0, 0, 1, 1], [], []>} : vector<80x80xbf16>, vector<80x8xbf16>, vector<80x8xf32> -> vector<80x8xf32>
    %557 = vector.extract_strided_slice %535 {offsets = [0, 8], sizes = [80, 8], strides = [1, 1]} : vector<80x32xf32> to vector<80x8xf32>
    %558 = arith.truncf %557 : vector<80x8xf32> to vector<80x8xbf16>
    %559 = vector.extract_strided_slice %536 {offsets = [0, 8], sizes = [80, 8], strides = [1, 1]} : vector<80x32xf32> to vector<80x8xf32>
    %560 = arith.truncf %559 : vector<80x8xf32> to vector<80x8xbf16>
    %561 = vector.extract_strided_slice %537 {offsets = [0, 8], sizes = [80, 8], strides = [1, 1]} : vector<80x32xf32> to vector<80x8xf32>
    %562 = arith.truncf %561 : vector<80x8xf32> to vector<80x8xbf16>
    "tpu.trace_start"() <{level = 10 : i32, message = "qd,kd->qk"}> : () -> ()
    %cst_224 = arith.constant dense<0.000000e+00> : vector<80x80xf32>
    %563 = tpu.matmul %558, %560, %cst_224 {dimension_numbers = #tpu.dot_dimension_numbers<[1], [1], [0], [0], [0, 0, 1, 0], [], []>} : vector<80x8xbf16>, vector<80x8xbf16>, vector<80x80xf32> -> vector<80x80xf32>
    "tpu.trace_stop"() : () -> ()
    %564 = arith.addf %563, %484 : vector<80x80xf32>
    %cst_225 = arith.constant dense<0xFF800000> : vector<80xf32>
    %565 = vector.multi_reduction <maximumf>, %564, %cst_225 [1] : vector<80x80xf32> to vector<80xf32>
    %566 = vector.shape_cast %565 : vector<80xf32> to vector<80x1xf32>
    %567 = vector.broadcast %566 : vector<80x1xf32> to vector<80x80xf32>
    %568 = arith.subf %564, %567 : vector<80x80xf32>
    %569 = math.exp %568 : vector<80x80xf32>
    %cst_226 = arith.constant dense<0.000000e+00> : vector<80xf32>
    %570 = vector.multi_reduction <add>, %569, %cst_226 [1] : vector<80x80xf32> to vector<80xf32>
    %571 = vector.shape_cast %570 : vector<80xf32> to vector<80x1xf32>
    %572 = vector.broadcast %571 : vector<80x1xf32> to vector<80x80xf32>
    %573 = arith.divf %569, %572 : vector<80x80xf32>
    %574 = arith.truncf %573 : vector<80x80xf32> to vector<80x80xbf16>
    %cst_227 = arith.constant dense<0.000000e+00> : vector<80x8xf32>
    %575 = tpu.matmul %574, %562, %cst_227 {dimension_numbers = #tpu.dot_dimension_numbers<[1], [0], [0], [1], [0, 0, 1, 1], [], []>} : vector<80x80xbf16>, vector<80x8xbf16>, vector<80x8xf32> -> vector<80x8xf32>
    %576 = vector.extract_strided_slice %535 {offsets = [0, 16], sizes = [80, 8], strides = [1, 1]} : vector<80x32xf32> to vector<80x8xf32>
    %577 = arith.truncf %576 : vector<80x8xf32> to vector<80x8xbf16>
    %578 = vector.extract_strided_slice %536 {offsets = [0, 16], sizes = [80, 8], strides = [1, 1]} : vector<80x32xf32> to vector<80x8xf32>
    %579 = arith.truncf %578 : vector<80x8xf32> to vector<80x8xbf16>
    %580 = vector.extract_strided_slice %537 {offsets = [0, 16], sizes = [80, 8], strides = [1, 1]} : vector<80x32xf32> to vector<80x8xf32>
    %581 = arith.truncf %580 : vector<80x8xf32> to vector<80x8xbf16>
    "tpu.trace_start"() <{level = 10 : i32, message = "qd,kd->qk"}> : () -> ()
    %cst_228 = arith.constant dense<0.000000e+00> : vector<80x80xf32>
    %582 = tpu.matmul %577, %579, %cst_228 {dimension_numbers = #tpu.dot_dimension_numbers<[1], [1], [0], [0], [0, 0, 1, 0], [], []>} : vector<80x8xbf16>, vector<80x8xbf16>, vector<80x80xf32> -> vector<80x80xf32>
    "tpu.trace_stop"() : () -> ()
    %583 = arith.addf %582, %484 : vector<80x80xf32>
    %cst_229 = arith.constant dense<0xFF800000> : vector<80xf32>
    %584 = vector.multi_reduction <maximumf>, %583, %cst_229 [1] : vector<80x80xf32> to vector<80xf32>
    %585 = vector.shape_cast %584 : vector<80xf32> to vector<80x1xf32>
    %586 = vector.broadcast %585 : vector<80x1xf32> to vector<80x80xf32>
    %587 = arith.subf %583, %586 : vector<80x80xf32>
    %588 = math.exp %587 : vector<80x80xf32>
    %cst_230 = arith.constant dense<0.000000e+00> : vector<80xf32>
    %589 = vector.multi_reduction <add>, %588, %cst_230 [1] : vector<80x80xf32> to vector<80xf32>
    %590 = vector.shape_cast %589 : vector<80xf32> to vector<80x1xf32>
    %591 = vector.broadcast %590 : vector<80x1xf32> to vector<80x80xf32>
    %592 = arith.divf %588, %591 : vector<80x80xf32>
    %593 = arith.truncf %592 : vector<80x80xf32> to vector<80x80xbf16>
    %cst_231 = arith.constant dense<0.000000e+00> : vector<80x8xf32>
    %594 = tpu.matmul %593, %581, %cst_231 {dimension_numbers = #tpu.dot_dimension_numbers<[1], [0], [0], [1], [0, 0, 1, 1], [], []>} : vector<80x80xbf16>, vector<80x8xbf16>, vector<80x8xf32> -> vector<80x8xf32>
    %595 = vector.extract_strided_slice %535 {offsets = [0, 24], sizes = [80, 8], strides = [1, 1]} : vector<80x32xf32> to vector<80x8xf32>
    %596 = arith.truncf %595 : vector<80x8xf32> to vector<80x8xbf16>
    %597 = vector.extract_strided_slice %536 {offsets = [0, 24], sizes = [80, 8], strides = [1, 1]} : vector<80x32xf32> to vector<80x8xf32>
    %598 = arith.truncf %597 : vector<80x8xf32> to vector<80x8xbf16>
    %599 = vector.extract_strided_slice %537 {offsets = [0, 24], sizes = [80, 8], strides = [1, 1]} : vector<80x32xf32> to vector<80x8xf32>
    %600 = arith.truncf %599 : vector<80x8xf32> to vector<80x8xbf16>
    "tpu.trace_start"() <{level = 10 : i32, message = "qd,kd->qk"}> : () -> ()
    %cst_232 = arith.constant dense<0.000000e+00> : vector<80x80xf32>
    %601 = tpu.matmul %596, %598, %cst_232 {dimension_numbers = #tpu.dot_dimension_numbers<[1], [1], [0], [0], [0, 0, 1, 0], [], []>} : vector<80x8xbf16>, vector<80x8xbf16>, vector<80x80xf32> -> vector<80x80xf32>
    "tpu.trace_stop"() : () -> ()
    %602 = arith.addf %601, %484 : vector<80x80xf32>
    %cst_233 = arith.constant dense<0xFF800000> : vector<80xf32>
    %603 = vector.multi_reduction <maximumf>, %602, %cst_233 [1] : vector<80x80xf32> to vector<80xf32>
    %604 = vector.shape_cast %603 : vector<80xf32> to vector<80x1xf32>
    %605 = vector.broadcast %604 : vector<80x1xf32> to vector<80x80xf32>
    %606 = arith.subf %602, %605 : vector<80x80xf32>
    %607 = math.exp %606 : vector<80x80xf32>
    %cst_234 = arith.constant dense<0.000000e+00> : vector<80xf32>
    %608 = vector.multi_reduction <add>, %607, %cst_234 [1] : vector<80x80xf32> to vector<80xf32>
    %609 = vector.shape_cast %608 : vector<80xf32> to vector<80x1xf32>
    %610 = vector.broadcast %609 : vector<80x1xf32> to vector<80x80xf32>
    %611 = arith.divf %607, %610 : vector<80x80xf32>
    %612 = arith.truncf %611 : vector<80x80xf32> to vector<80x80xbf16>
    %cst_235 = arith.constant dense<0.000000e+00> : vector<80x8xf32>
    %613 = tpu.matmul %612, %600, %cst_235 {dimension_numbers = #tpu.dot_dimension_numbers<[1], [0], [0], [1], [0, 0, 1, 1], [], []>} : vector<80x80xbf16>, vector<80x8xbf16>, vector<80x8xf32> -> vector<80x8xf32>
    %614 = tpu.concatenate %556, %575, %594, %613 in 1 : vector<80x8xf32>, vector<80x8xf32>, vector<80x8xf32>, vector<80x8xf32> -> vector<80x32xf32>
    %615 = arith.truncf %614 : vector<80x32xf32> to vector<80x32xbf16>
    %cst_236 = arith.constant dense<0.000000e+00> : vector<80x32xf32>
    %616 = tpu.matmul %615, %494, %cst_236 {dimension_numbers = #tpu.dot_dimension_numbers<[1], [0], [0], [1], [0, 0, 1, 1], [], []>} : vector<80x32xbf16>, vector<32x32xbf16>, vector<80x32xf32> -> vector<80x32xf32>
    %617 = vector.broadcast %496 : vector<1x32xf32> to vector<80x32xf32>
    %618 = arith.addf %616, %617 : vector<80x32xf32>
    %619 = arith.addf %478, %618 : vector<80x32xf32>
    %cst_237 = arith.constant dense<0.000000e+00> : vector<80xf32>
    %620 = vector.multi_reduction <add>, %619, %cst_237 [1] : vector<80x32xf32> to vector<80xf32>
    %621 = vector.shape_cast %620 : vector<80xf32> to vector<80x1xf32>
    %cst_238 = arith.constant 3.200000e+01 : f32
    %622 = vector.broadcast %cst_238 : f32 to vector<80x1xf32>
    %623 = arith.divf %621, %622 : vector<80x1xf32>
    %624 = vector.broadcast %623 : vector<80x1xf32> to vector<80x32xf32>
    %625 = arith.subf %619, %624 : vector<80x32xf32>
    %626 = arith.mulf %625, %625 : vector<80x32xf32>
    %cst_239 = arith.constant dense<0.000000e+00> : vector<80xf32>
    %627 = vector.multi_reduction <add>, %626, %cst_239 [1] : vector<80x32xf32> to vector<80xf32>
    %628 = vector.shape_cast %627 : vector<80xf32> to vector<80x1xf32>
    %cst_240 = arith.constant 3.200000e+01 : f32
    %629 = vector.broadcast %cst_240 : f32 to vector<80x1xf32>
    %630 = arith.divf %628, %629 : vector<80x1xf32>
    %cst_241 = arith.constant 9.99999974E-6 : f32
    %631 = vector.broadcast %cst_241 : f32 to vector<80x1xf32>
    %632 = arith.addf %630, %631 : vector<80x1xf32>
    %633 = math.rsqrt %632 : vector<80x1xf32>
    %634 = vector.broadcast %633 : vector<80x1xf32> to vector<80x32xf32>
    %635 = arith.mulf %625, %634 : vector<80x32xf32>
    %636 = vector.broadcast %498 : vector<1x32xf32> to vector<80x32xf32>
    %637 = arith.mulf %635, %636 : vector<80x32xf32>
    %638 = vector.broadcast %500 : vector<1x32xf32> to vector<80x32xf32>
    %639 = arith.addf %637, %638 : vector<80x32xf32>
    %640 = arith.truncf %639 : vector<80x32xf32> to vector<80x32xbf16>
    %cst_242 = arith.constant dense<0.000000e+00> : vector<80x128xf32>
    %641 = tpu.matmul %640, %503, %cst_242 {dimension_numbers = #tpu.dot_dimension_numbers<[1], [0], [0], [1], [0, 0, 1, 1], [], []>} : vector<80x32xbf16>, vector<32x128xbf16>, vector<80x128xf32> -> vector<80x128xf32>
    %642 = vector.broadcast %505 : vector<1x128xf32> to vector<80x128xf32>
    %643 = arith.addf %641, %642 : vector<80x128xf32>
    %cst_243 = arith.constant 5.000000e-01 : f32
    %644 = vector.broadcast %cst_243 : f32 to vector<80x128xf32>
    %645 = arith.mulf %644, %643 : vector<80x128xf32>
    %cst_244 = arith.constant 0.707106769 : f32
    %646 = vector.broadcast %cst_244 : f32 to vector<80x128xf32>
    %647 = arith.mulf %643, %646 : vector<80x128xf32>
    %cst_245 = arith.constant 0.000000e+00 : f32
    %648 = vector.broadcast %cst_245 : f32 to vector<80x128xf32>
    %649 = arith.cmpf oge, %647, %648 : vector<80x128xf32>
    %cst_246 = arith.constant 1.000000e+00 : f32
    %cst_247 = arith.constant -1.000000e+00 : f32
    %650 = vector.broadcast %cst_246 : f32 to vector<80x128xf32>
    %651 = vector.broadcast %cst_247 : f32 to vector<80x128xf32>
    %652 = arith.select %649, %650, %651 : vector<80x128xi1>, vector<80x128xf32>
    %653 = math.absf %647 : vector<80x128xf32>
    %cst_248 = arith.constant 0.327591091 : f32
    %654 = vector.broadcast %cst_248 : f32 to vector<80x128xf32>
    %655 = arith.mulf %654, %653 : vector<80x128xf32>
    %cst_249 = arith.constant 1.000000e+00 : f32
    %656 = vector.broadcast %cst_249 : f32 to vector<80x128xf32>
    %657 = arith.addf %656, %655 : vector<80x128xf32>
    %cst_250 = arith.constant 1.000000e+00 : f32
    %658 = vector.broadcast %cst_250 : f32 to vector<80x128xf32>
    %659 = arith.divf %658, %657 : vector<80x128xf32>
    %cst_251 = arith.constant 1.06140542 : f32
    %660 = vector.broadcast %cst_251 : f32 to vector<80x128xf32>
    %661 = arith.mulf %660, %659 : vector<80x128xf32>
    %cst_252 = arith.constant -1.45315206 : f32
    %662 = vector.broadcast %cst_252 : f32 to vector<80x128xf32>
    %663 = arith.addf %661, %662 : vector<80x128xf32>
    %664 = arith.mulf %663, %659 : vector<80x128xf32>
    %cst_253 = arith.constant 1.42141378 : f32
    %665 = vector.broadcast %cst_253 : f32 to vector<80x128xf32>
    %666 = arith.addf %664, %665 : vector<80x128xf32>
    %667 = arith.mulf %666, %659 : vector<80x128xf32>
    %cst_254 = arith.constant -0.284496725 : f32
    %668 = vector.broadcast %cst_254 : f32 to vector<80x128xf32>
    %669 = arith.addf %667, %668 : vector<80x128xf32>
    %670 = arith.mulf %669, %659 : vector<80x128xf32>
    %cst_255 = arith.constant 0.254829586 : f32
    %671 = vector.broadcast %cst_255 : f32 to vector<80x128xf32>
    %672 = arith.addf %670, %671 : vector<80x128xf32>
    %673 = arith.mulf %672, %659 : vector<80x128xf32>
    %cst_256 = arith.constant 0.000000e+00 : f32
    %674 = vector.broadcast %cst_256 : f32 to vector<80x128xf32>
    %675 = arith.subf %674, %653 : vector<80x128xf32>
    %676 = arith.mulf %675, %653 : vector<80x128xf32>
    %677 = math.exp %676 : vector<80x128xf32>
    %678 = arith.mulf %673, %677 : vector<80x128xf32>
    %cst_257 = arith.constant 1.000000e+00 : f32
    %679 = vector.broadcast %cst_257 : f32 to vector<80x128xf32>
    %680 = arith.subf %679, %678 : vector<80x128xf32>
    %681 = arith.mulf %652, %680 : vector<80x128xf32>
    %cst_258 = arith.constant 1.000000e+00 : f32
    %682 = vector.broadcast %cst_258 : f32 to vector<80x128xf32>
    %683 = arith.addf %682, %681 : vector<80x128xf32>
    %684 = arith.mulf %645, %683 : vector<80x128xf32>
    %685 = arith.truncf %684 : vector<80x128xf32> to vector<80x128xbf16>
    %cst_259 = arith.constant dense<0.000000e+00> : vector<80x32xf32>
    %686 = tpu.matmul %685, %508, %cst_259 {dimension_numbers = #tpu.dot_dimension_numbers<[1], [0], [0], [1], [0, 0, 1, 1], [], []>} : vector<80x128xbf16>, vector<128x32xbf16>, vector<80x32xf32> -> vector<80x32xf32>
    %687 = vector.broadcast %510 : vector<1x32xf32> to vector<80x32xf32>
    %688 = arith.addf %686, %687 : vector<80x32xf32>
    %689 = arith.addf %619, %688 : vector<80x32xf32>
    %c1_260 = arith.constant 1 : index
    %c0_261 = arith.constant 0 : index
    %c0_262 = arith.constant 0 : index
    %690 = vector.load %arg6[%c1_260, %c0_261, %c0_262] : memref<2x232x128xf32, #tpu.memory_space<vmem>>, vector<1x1x32xf32>
    %691 = vector.shape_cast %690 : vector<1x1x32xf32> to vector<1x32xf32>
    %c1_263 = arith.constant 1 : index
    %c1_264 = arith.constant 1 : index
    %c0_265 = arith.constant 0 : index
    %692 = vector.load %arg6[%c1_263, %c1_264, %c0_265] : memref<2x232x128xf32, #tpu.memory_space<vmem>>, vector<1x1x32xf32>
    %693 = vector.shape_cast %692 : vector<1x1x32xf32> to vector<1x32xf32>
    %c1_266 = arith.constant 1 : index
    %c8_267 = arith.constant 8 : index
    %c0_268 = arith.constant 0 : index
    %694 = vector.load %arg6[%c1_266, %c8_267, %c0_268] : memref<2x232x128xf32, #tpu.memory_space<vmem>>, vector<1x32x128xf32>
    %695 = vector.shape_cast %694 : vector<1x32x128xf32> to vector<32x128xf32>
    %696 = arith.truncf %695 : vector<32x128xf32> to vector<32x128xbf16>
    %c1_269 = arith.constant 1 : index
    %c40_270 = arith.constant 40 : index
    %c0_271 = arith.constant 0 : index
    %697 = vector.load %arg6[%c1_269, %c40_270, %c0_271] : memref<2x232x128xf32, #tpu.memory_space<vmem>>, vector<1x32x32xf32>
    %698 = vector.shape_cast %697 : vector<1x32x32xf32> to vector<32x32xf32>
    %699 = arith.truncf %698 : vector<32x32xf32> to vector<32x32xbf16>
    %c1_272 = arith.constant 1 : index
    %c2_273 = arith.constant 2 : index
    %c0_274 = arith.constant 0 : index
    %700 = vector.load %arg6[%c1_272, %c2_273, %c0_274] : memref<2x232x128xf32, #tpu.memory_space<vmem>>, vector<1x1x32xf32>
    %701 = vector.shape_cast %700 : vector<1x1x32xf32> to vector<1x32xf32>
    %c1_275 = arith.constant 1 : index
    %c3_276 = arith.constant 3 : index
    %c0_277 = arith.constant 0 : index
    %702 = vector.load %arg6[%c1_275, %c3_276, %c0_277] : memref<2x232x128xf32, #tpu.memory_space<vmem>>, vector<1x1x32xf32>
    %703 = vector.shape_cast %702 : vector<1x1x32xf32> to vector<1x32xf32>
    %c1_278 = arith.constant 1 : index
    %c4_279 = arith.constant 4 : index
    %c0_280 = arith.constant 0 : index
    %704 = vector.load %arg6[%c1_278, %c4_279, %c0_280] : memref<2x232x128xf32, #tpu.memory_space<vmem>>, vector<1x1x32xf32>
    %705 = vector.shape_cast %704 : vector<1x1x32xf32> to vector<1x32xf32>
    %c1_281 = arith.constant 1 : index
    %c72_282 = arith.constant 72 : index
    %c0_283 = arith.constant 0 : index
    %706 = vector.load %arg6[%c1_281, %c72_282, %c0_283] : memref<2x232x128xf32, #tpu.memory_space<vmem>>, vector<1x32x128xf32>
    %707 = vector.shape_cast %706 : vector<1x32x128xf32> to vector<32x128xf32>
    %708 = arith.truncf %707 : vector<32x128xf32> to vector<32x128xbf16>
    %c1_284 = arith.constant 1 : index
    %c6_285 = arith.constant 6 : index
    %c0_286 = arith.constant 0 : index
    %709 = vector.load %arg6[%c1_284, %c6_285, %c0_286] : memref<2x232x128xf32, #tpu.memory_space<vmem>>, vector<1x1x128xf32>
    %710 = vector.shape_cast %709 : vector<1x1x128xf32> to vector<1x128xf32>
    %c1_287 = arith.constant 1 : index
    %c104_288 = arith.constant 104 : index
    %c0_289 = arith.constant 0 : index
    %711 = vector.load %arg6[%c1_287, %c104_288, %c0_289] : memref<2x232x128xf32, #tpu.memory_space<vmem>>, vector<1x128x32xf32>
    %712 = vector.shape_cast %711 : vector<1x128x32xf32> to vector<128x32xf32>
    %713 = arith.truncf %712 : vector<128x32xf32> to vector<128x32xbf16>
    %c1_290 = arith.constant 1 : index
    %c5_291 = arith.constant 5 : index
    %c0_292 = arith.constant 0 : index
    %714 = vector.load %arg6[%c1_290, %c5_291, %c0_292] : memref<2x232x128xf32, #tpu.memory_space<vmem>>, vector<1x1x32xf32>
    %715 = vector.shape_cast %714 : vector<1x1x32xf32> to vector<1x32xf32>
    %cst_293 = arith.constant dense<0.000000e+00> : vector<80xf32>
    %716 = vector.multi_reduction <add>, %689, %cst_293 [1] : vector<80x32xf32> to vector<80xf32>
    %717 = vector.shape_cast %716 : vector<80xf32> to vector<80x1xf32>
    %cst_294 = arith.constant 3.200000e+01 : f32
    %718 = vector.broadcast %cst_294 : f32 to vector<80x1xf32>
    %719 = arith.divf %717, %718 : vector<80x1xf32>
    %720 = vector.broadcast %719 : vector<80x1xf32> to vector<80x32xf32>
    %721 = arith.subf %689, %720 : vector<80x32xf32>
    %722 = arith.mulf %721, %721 : vector<80x32xf32>
    %cst_295 = arith.constant dense<0.000000e+00> : vector<80xf32>
    %723 = vector.multi_reduction <add>, %722, %cst_295 [1] : vector<80x32xf32> to vector<80xf32>
    %724 = vector.shape_cast %723 : vector<80xf32> to vector<80x1xf32>
    %cst_296 = arith.constant 3.200000e+01 : f32
    %725 = vector.broadcast %cst_296 : f32 to vector<80x1xf32>
    %726 = arith.divf %724, %725 : vector<80x1xf32>
    %cst_297 = arith.constant 9.99999974E-6 : f32
    %727 = vector.broadcast %cst_297 : f32 to vector<80x1xf32>
    %728 = arith.addf %726, %727 : vector<80x1xf32>
    %729 = math.rsqrt %728 : vector<80x1xf32>
    %730 = vector.broadcast %729 : vector<80x1xf32> to vector<80x32xf32>
    %731 = arith.mulf %721, %730 : vector<80x32xf32>
    %732 = vector.broadcast %691 : vector<1x32xf32> to vector<80x32xf32>
    %733 = arith.mulf %731, %732 : vector<80x32xf32>
    %734 = vector.broadcast %693 : vector<1x32xf32> to vector<80x32xf32>
    %735 = arith.addf %733, %734 : vector<80x32xf32>
    %736 = arith.truncf %735 : vector<80x32xf32> to vector<80x32xbf16>
    %cst_298 = arith.constant dense<0.000000e+00> : vector<80x128xf32>
    %737 = tpu.matmul %736, %696, %cst_298 {dimension_numbers = #tpu.dot_dimension_numbers<[1], [0], [0], [1], [0, 0, 1, 1], [], []>} : vector<80x32xbf16>, vector<32x128xbf16>, vector<80x128xf32> -> vector<80x128xf32>
    %738 = vector.extract_strided_slice %737 {offsets = [0, 0], sizes = [80, 32], strides = [1, 1]} : vector<80x128xf32> to vector<80x32xf32>
    %cst_299 = arith.constant 0.353553385 : f32
    %739 = vector.broadcast %cst_299 : f32 to vector<80x32xf32>
    %740 = arith.mulf %738, %739 : vector<80x32xf32>
    %741 = vector.extract_strided_slice %737 {offsets = [0, 32], sizes = [80, 32], strides = [1, 1]} : vector<80x128xf32> to vector<80x32xf32>
    %742 = vector.extract_strided_slice %737 {offsets = [0, 64], sizes = [80, 32], strides = [1, 1]} : vector<80x128xf32> to vector<80x32xf32>
    %743 = vector.extract_strided_slice %740 {offsets = [0, 0], sizes = [80, 8], strides = [1, 1]} : vector<80x32xf32> to vector<80x8xf32>
    %744 = arith.truncf %743 : vector<80x8xf32> to vector<80x8xbf16>
    %745 = vector.extract_strided_slice %741 {offsets = [0, 0], sizes = [80, 8], strides = [1, 1]} : vector<80x32xf32> to vector<80x8xf32>
    %746 = arith.truncf %745 : vector<80x8xf32> to vector<80x8xbf16>
    %747 = vector.extract_strided_slice %742 {offsets = [0, 0], sizes = [80, 8], strides = [1, 1]} : vector<80x32xf32> to vector<80x8xf32>
    %748 = arith.truncf %747 : vector<80x8xf32> to vector<80x8xbf16>
    "tpu.trace_start"() <{level = 10 : i32, message = "qd,kd->qk"}> : () -> ()
    %cst_300 = arith.constant dense<0.000000e+00> : vector<80x80xf32>
    %749 = tpu.matmul %744, %746, %cst_300 {dimension_numbers = #tpu.dot_dimension_numbers<[1], [1], [0], [0], [0, 0, 1, 0], [], []>} : vector<80x8xbf16>, vector<80x8xbf16>, vector<80x80xf32> -> vector<80x80xf32>
    "tpu.trace_stop"() : () -> ()
    %750 = arith.addf %749, %484 : vector<80x80xf32>
    %cst_301 = arith.constant dense<0xFF800000> : vector<80xf32>
    %751 = vector.multi_reduction <maximumf>, %750, %cst_301 [1] : vector<80x80xf32> to vector<80xf32>
    %752 = vector.shape_cast %751 : vector<80xf32> to vector<80x1xf32>
    %753 = vector.broadcast %752 : vector<80x1xf32> to vector<80x80xf32>
    %754 = arith.subf %750, %753 : vector<80x80xf32>
    %755 = math.exp %754 : vector<80x80xf32>
    %cst_302 = arith.constant dense<0.000000e+00> : vector<80xf32>
    %756 = vector.multi_reduction <add>, %755, %cst_302 [1] : vector<80x80xf32> to vector<80xf32>
    %757 = vector.shape_cast %756 : vector<80xf32> to vector<80x1xf32>
    %758 = vector.broadcast %757 : vector<80x1xf32> to vector<80x80xf32>
    %759 = arith.divf %755, %758 : vector<80x80xf32>
    %760 = arith.truncf %759 : vector<80x80xf32> to vector<80x80xbf16>
    %cst_303 = arith.constant dense<0.000000e+00> : vector<80x8xf32>
    %761 = tpu.matmul %760, %748, %cst_303 {dimension_numbers = #tpu.dot_dimension_numbers<[1], [0], [0], [1], [0, 0, 1, 1], [], []>} : vector<80x80xbf16>, vector<80x8xbf16>, vector<80x8xf32> -> vector<80x8xf32>
    %762 = vector.extract_strided_slice %740 {offsets = [0, 8], sizes = [80, 8], strides = [1, 1]} : vector<80x32xf32> to vector<80x8xf32>
    %763 = arith.truncf %762 : vector<80x8xf32> to vector<80x8xbf16>
    %764 = vector.extract_strided_slice %741 {offsets = [0, 8], sizes = [80, 8], strides = [1, 1]} : vector<80x32xf32> to vector<80x8xf32>
    %765 = arith.truncf %764 : vector<80x8xf32> to vector<80x8xbf16>
    %766 = vector.extract_strided_slice %742 {offsets = [0, 8], sizes = [80, 8], strides = [1, 1]} : vector<80x32xf32> to vector<80x8xf32>
    %767 = arith.truncf %766 : vector<80x8xf32> to vector<80x8xbf16>
    "tpu.trace_start"() <{level = 10 : i32, message = "qd,kd->qk"}> : () -> ()
    %cst_304 = arith.constant dense<0.000000e+00> : vector<80x80xf32>
    %768 = tpu.matmul %763, %765, %cst_304 {dimension_numbers = #tpu.dot_dimension_numbers<[1], [1], [0], [0], [0, 0, 1, 0], [], []>} : vector<80x8xbf16>, vector<80x8xbf16>, vector<80x80xf32> -> vector<80x80xf32>
    "tpu.trace_stop"() : () -> ()
    %769 = arith.addf %768, %484 : vector<80x80xf32>
    %cst_305 = arith.constant dense<0xFF800000> : vector<80xf32>
    %770 = vector.multi_reduction <maximumf>, %769, %cst_305 [1] : vector<80x80xf32> to vector<80xf32>
    %771 = vector.shape_cast %770 : vector<80xf32> to vector<80x1xf32>
    %772 = vector.broadcast %771 : vector<80x1xf32> to vector<80x80xf32>
    %773 = arith.subf %769, %772 : vector<80x80xf32>
    %774 = math.exp %773 : vector<80x80xf32>
    %cst_306 = arith.constant dense<0.000000e+00> : vector<80xf32>
    %775 = vector.multi_reduction <add>, %774, %cst_306 [1] : vector<80x80xf32> to vector<80xf32>
    %776 = vector.shape_cast %775 : vector<80xf32> to vector<80x1xf32>
    %777 = vector.broadcast %776 : vector<80x1xf32> to vector<80x80xf32>
    %778 = arith.divf %774, %777 : vector<80x80xf32>
    %779 = arith.truncf %778 : vector<80x80xf32> to vector<80x80xbf16>
    %cst_307 = arith.constant dense<0.000000e+00> : vector<80x8xf32>
    %780 = tpu.matmul %779, %767, %cst_307 {dimension_numbers = #tpu.dot_dimension_numbers<[1], [0], [0], [1], [0, 0, 1, 1], [], []>} : vector<80x80xbf16>, vector<80x8xbf16>, vector<80x8xf32> -> vector<80x8xf32>
    %781 = vector.extract_strided_slice %740 {offsets = [0, 16], sizes = [80, 8], strides = [1, 1]} : vector<80x32xf32> to vector<80x8xf32>
    %782 = arith.truncf %781 : vector<80x8xf32> to vector<80x8xbf16>
    %783 = vector.extract_strided_slice %741 {offsets = [0, 16], sizes = [80, 8], strides = [1, 1]} : vector<80x32xf32> to vector<80x8xf32>
    %784 = arith.truncf %783 : vector<80x8xf32> to vector<80x8xbf16>
    %785 = vector.extract_strided_slice %742 {offsets = [0, 16], sizes = [80, 8], strides = [1, 1]} : vector<80x32xf32> to vector<80x8xf32>
    %786 = arith.truncf %785 : vector<80x8xf32> to vector<80x8xbf16>
    "tpu.trace_start"() <{level = 10 : i32, message = "qd,kd->qk"}> : () -> ()
    %cst_308 = arith.constant dense<0.000000e+00> : vector<80x80xf32>
    %787 = tpu.matmul %782, %784, %cst_308 {dimension_numbers = #tpu.dot_dimension_numbers<[1], [1], [0], [0], [0, 0, 1, 0], [], []>} : vector<80x8xbf16>, vector<80x8xbf16>, vector<80x80xf32> -> vector<80x80xf32>
    "tpu.trace_stop"() : () -> ()
    %788 = arith.addf %787, %484 : vector<80x80xf32>
    %cst_309 = arith.constant dense<0xFF800000> : vector<80xf32>
    %789 = vector.multi_reduction <maximumf>, %788, %cst_309 [1] : vector<80x80xf32> to vector<80xf32>
    %790 = vector.shape_cast %789 : vector<80xf32> to vector<80x1xf32>
    %791 = vector.broadcast %790 : vector<80x1xf32> to vector<80x80xf32>
    %792 = arith.subf %788, %791 : vector<80x80xf32>
    %793 = math.exp %792 : vector<80x80xf32>
    %cst_310 = arith.constant dense<0.000000e+00> : vector<80xf32>
    %794 = vector.multi_reduction <add>, %793, %cst_310 [1] : vector<80x80xf32> to vector<80xf32>
    %795 = vector.shape_cast %794 : vector<80xf32> to vector<80x1xf32>
    %796 = vector.broadcast %795 : vector<80x1xf32> to vector<80x80xf32>
    %797 = arith.divf %793, %796 : vector<80x80xf32>
    %798 = arith.truncf %797 : vector<80x80xf32> to vector<80x80xbf16>
    %cst_311 = arith.constant dense<0.000000e+00> : vector<80x8xf32>
    %799 = tpu.matmul %798, %786, %cst_311 {dimension_numbers = #tpu.dot_dimension_numbers<[1], [0], [0], [1], [0, 0, 1, 1], [], []>} : vector<80x80xbf16>, vector<80x8xbf16>, vector<80x8xf32> -> vector<80x8xf32>
    %800 = vector.extract_strided_slice %740 {offsets = [0, 24], sizes = [80, 8], strides = [1, 1]} : vector<80x32xf32> to vector<80x8xf32>
    %801 = arith.truncf %800 : vector<80x8xf32> to vector<80x8xbf16>
    %802 = vector.extract_strided_slice %741 {offsets = [0, 24], sizes = [80, 8], strides = [1, 1]} : vector<80x32xf32> to vector<80x8xf32>
    %803 = arith.truncf %802 : vector<80x8xf32> to vector<80x8xbf16>
    %804 = vector.extract_strided_slice %742 {offsets = [0, 24], sizes = [80, 8], strides = [1, 1]} : vector<80x32xf32> to vector<80x8xf32>
    %805 = arith.truncf %804 : vector<80x8xf32> to vector<80x8xbf16>
    "tpu.trace_start"() <{level = 10 : i32, message = "qd,kd->qk"}> : () -> ()
    %cst_312 = arith.constant dense<0.000000e+00> : vector<80x80xf32>
    %806 = tpu.matmul %801, %803, %cst_312 {dimension_numbers = #tpu.dot_dimension_numbers<[1], [1], [0], [0], [0, 0, 1, 0], [], []>} : vector<80x8xbf16>, vector<80x8xbf16>, vector<80x80xf32> -> vector<80x80xf32>
    "tpu.trace_stop"() : () -> ()
    %807 = arith.addf %806, %484 : vector<80x80xf32>
    %cst_313 = arith.constant dense<0xFF800000> : vector<80xf32>
    %808 = vector.multi_reduction <maximumf>, %807, %cst_313 [1] : vector<80x80xf32> to vector<80xf32>
    %809 = vector.shape_cast %808 : vector<80xf32> to vector<80x1xf32>
    %810 = vector.broadcast %809 : vector<80x1xf32> to vector<80x80xf32>
    %811 = arith.subf %807, %810 : vector<80x80xf32>
    %812 = math.exp %811 : vector<80x80xf32>
    %cst_314 = arith.constant dense<0.000000e+00> : vector<80xf32>
    %813 = vector.multi_reduction <add>, %812, %cst_314 [1] : vector<80x80xf32> to vector<80xf32>
    %814 = vector.shape_cast %813 : vector<80xf32> to vector<80x1xf32>
    %815 = vector.broadcast %814 : vector<80x1xf32> to vector<80x80xf32>
    %816 = arith.divf %812, %815 : vector<80x80xf32>
    %817 = arith.truncf %816 : vector<80x80xf32> to vector<80x80xbf16>
    %cst_315 = arith.constant dense<0.000000e+00> : vector<80x8xf32>
    %818 = tpu.matmul %817, %805, %cst_315 {dimension_numbers = #tpu.dot_dimension_numbers<[1], [0], [0], [1], [0, 0, 1, 1], [], []>} : vector<80x80xbf16>, vector<80x8xbf16>, vector<80x8xf32> -> vector<80x8xf32>
    %819 = tpu.concatenate %761, %780, %799, %818 in 1 : vector<80x8xf32>, vector<80x8xf32>, vector<80x8xf32>, vector<80x8xf32> -> vector<80x32xf32>
    %820 = arith.truncf %819 : vector<80x32xf32> to vector<80x32xbf16>
    %cst_316 = arith.constant dense<0.000000e+00> : vector<80x32xf32>
    %821 = tpu.matmul %820, %699, %cst_316 {dimension_numbers = #tpu.dot_dimension_numbers<[1], [0], [0], [1], [0, 0, 1, 1], [], []>} : vector<80x32xbf16>, vector<32x32xbf16>, vector<80x32xf32> -> vector<80x32xf32>
    %822 = vector.broadcast %701 : vector<1x32xf32> to vector<80x32xf32>
    %823 = arith.addf %821, %822 : vector<80x32xf32>
    %824 = arith.addf %689, %823 : vector<80x32xf32>
    %cst_317 = arith.constant dense<0.000000e+00> : vector<80xf32>
    %825 = vector.multi_reduction <add>, %824, %cst_317 [1] : vector<80x32xf32> to vector<80xf32>
    %826 = vector.shape_cast %825 : vector<80xf32> to vector<80x1xf32>
    %cst_318 = arith.constant 3.200000e+01 : f32
    %827 = vector.broadcast %cst_318 : f32 to vector<80x1xf32>
    %828 = arith.divf %826, %827 : vector<80x1xf32>
    %829 = vector.broadcast %828 : vector<80x1xf32> to vector<80x32xf32>
    %830 = arith.subf %824, %829 : vector<80x32xf32>
    %831 = arith.mulf %830, %830 : vector<80x32xf32>
    %cst_319 = arith.constant dense<0.000000e+00> : vector<80xf32>
    %832 = vector.multi_reduction <add>, %831, %cst_319 [1] : vector<80x32xf32> to vector<80xf32>
    %833 = vector.shape_cast %832 : vector<80xf32> to vector<80x1xf32>
    %cst_320 = arith.constant 3.200000e+01 : f32
    %834 = vector.broadcast %cst_320 : f32 to vector<80x1xf32>
    %835 = arith.divf %833, %834 : vector<80x1xf32>
    %cst_321 = arith.constant 9.99999974E-6 : f32
    %836 = vector.broadcast %cst_321 : f32 to vector<80x1xf32>
    %837 = arith.addf %835, %836 : vector<80x1xf32>
    %838 = math.rsqrt %837 : vector<80x1xf32>
    %839 = vector.broadcast %838 : vector<80x1xf32> to vector<80x32xf32>
    %840 = arith.mulf %830, %839 : vector<80x32xf32>
    %841 = vector.broadcast %703 : vector<1x32xf32> to vector<80x32xf32>
    %842 = arith.mulf %840, %841 : vector<80x32xf32>
    %843 = vector.broadcast %705 : vector<1x32xf32> to vector<80x32xf32>
    %844 = arith.addf %842, %843 : vector<80x32xf32>
    %845 = arith.truncf %844 : vector<80x32xf32> to vector<80x32xbf16>
    %cst_322 = arith.constant dense<0.000000e+00> : vector<80x128xf32>
    %846 = tpu.matmul %845, %708, %cst_322 {dimension_numbers = #tpu.dot_dimension_numbers<[1], [0], [0], [1], [0, 0, 1, 1], [], []>} : vector<80x32xbf16>, vector<32x128xbf16>, vector<80x128xf32> -> vector<80x128xf32>
    %847 = vector.broadcast %710 : vector<1x128xf32> to vector<80x128xf32>
    %848 = arith.addf %846, %847 : vector<80x128xf32>
    %cst_323 = arith.constant 5.000000e-01 : f32
    %849 = vector.broadcast %cst_323 : f32 to vector<80x128xf32>
    %850 = arith.mulf %849, %848 : vector<80x128xf32>
    %cst_324 = arith.constant 0.707106769 : f32
    %851 = vector.broadcast %cst_324 : f32 to vector<80x128xf32>
    %852 = arith.mulf %848, %851 : vector<80x128xf32>
    %cst_325 = arith.constant 0.000000e+00 : f32
    %853 = vector.broadcast %cst_325 : f32 to vector<80x128xf32>
    %854 = arith.cmpf oge, %852, %853 : vector<80x128xf32>
    %cst_326 = arith.constant 1.000000e+00 : f32
    %cst_327 = arith.constant -1.000000e+00 : f32
    %855 = vector.broadcast %cst_326 : f32 to vector<80x128xf32>
    %856 = vector.broadcast %cst_327 : f32 to vector<80x128xf32>
    %857 = arith.select %854, %855, %856 : vector<80x128xi1>, vector<80x128xf32>
    %858 = math.absf %852 : vector<80x128xf32>
    %cst_328 = arith.constant 0.327591091 : f32
    %859 = vector.broadcast %cst_328 : f32 to vector<80x128xf32>
    %860 = arith.mulf %859, %858 : vector<80x128xf32>
    %cst_329 = arith.constant 1.000000e+00 : f32
    %861 = vector.broadcast %cst_329 : f32 to vector<80x128xf32>
    %862 = arith.addf %861, %860 : vector<80x128xf32>
    %cst_330 = arith.constant 1.000000e+00 : f32
    %863 = vector.broadcast %cst_330 : f32 to vector<80x128xf32>
    %864 = arith.divf %863, %862 : vector<80x128xf32>
    %cst_331 = arith.constant 1.06140542 : f32
    %865 = vector.broadcast %cst_331 : f32 to vector<80x128xf32>
    %866 = arith.mulf %865, %864 : vector<80x128xf32>
    %cst_332 = arith.constant -1.45315206 : f32
    %867 = vector.broadcast %cst_332 : f32 to vector<80x128xf32>
    %868 = arith.addf %866, %867 : vector<80x128xf32>
    %869 = arith.mulf %868, %864 : vector<80x128xf32>
    %cst_333 = arith.constant 1.42141378 : f32
    %870 = vector.broadcast %cst_333 : f32 to vector<80x128xf32>
    %871 = arith.addf %869, %870 : vector<80x128xf32>
    %872 = arith.mulf %871, %864 : vector<80x128xf32>
    %cst_334 = arith.constant -0.284496725 : f32
    %873 = vector.broadcast %cst_334 : f32 to vector<80x128xf32>
    %874 = arith.addf %872, %873 : vector<80x128xf32>
    %875 = arith.mulf %874, %864 : vector<80x128xf32>
    %cst_335 = arith.constant 0.254829586 : f32
    %876 = vector.broadcast %cst_335 : f32 to vector<80x128xf32>
    %877 = arith.addf %875, %876 : vector<80x128xf32>
    %878 = arith.mulf %877, %864 : vector<80x128xf32>
    %cst_336 = arith.constant 0.000000e+00 : f32
    %879 = vector.broadcast %cst_336 : f32 to vector<80x128xf32>
    %880 = arith.subf %879, %858 : vector<80x128xf32>
    %881 = arith.mulf %880, %858 : vector<80x128xf32>
    %882 = math.exp %881 : vector<80x128xf32>
    %883 = arith.mulf %878, %882 : vector<80x128xf32>
    %cst_337 = arith.constant 1.000000e+00 : f32
    %884 = vector.broadcast %cst_337 : f32 to vector<80x128xf32>
    %885 = arith.subf %884, %883 : vector<80x128xf32>
    %886 = arith.mulf %857, %885 : vector<80x128xf32>
    %cst_338 = arith.constant 1.000000e+00 : f32
    %887 = vector.broadcast %cst_338 : f32 to vector<80x128xf32>
    %888 = arith.addf %887, %886 : vector<80x128xf32>
    %889 = arith.mulf %850, %888 : vector<80x128xf32>
    %890 = arith.truncf %889 : vector<80x128xf32> to vector<80x128xbf16>
    %cst_339 = arith.constant dense<0.000000e+00> : vector<80x32xf32>
    %891 = tpu.matmul %890, %713, %cst_339 {dimension_numbers = #tpu.dot_dimension_numbers<[1], [0], [0], [1], [0, 0, 1, 1], [], []>} : vector<80x128xbf16>, vector<128x32xbf16>, vector<80x32xf32> -> vector<80x32xf32>
    %892 = vector.broadcast %715 : vector<1x32xf32> to vector<80x32xf32>
    %893 = arith.addf %891, %892 : vector<80x32xf32>
    %894 = arith.addf %824, %893 : vector<80x32xf32>
    %895 = vector.extract_strided_slice %894 {offsets = [1, 0], sizes = [64, 32], strides = [1, 1]} : vector<80x32xf32> to vector<64x32xf32>
    %c24 = arith.constant 24 : index
    %c0_340 = arith.constant 0 : index
    %896 = vector.load %arg4[%c24, %c0_340] : memref<200x128xf32, #tpu.memory_space<vmem>>, vector<32x128xf32>
    %897 = arith.truncf %896 : vector<32x128xf32> to vector<32x128xbf16>
    %c21 = arith.constant 21 : index
    %c0_341 = arith.constant 0 : index
    %898 = vector.load %arg4[%c21, %c0_341] : memref<200x128xf32, #tpu.memory_space<vmem>>, vector<1x128xf32>
    %899 = arith.truncf %895 : vector<64x32xf32> to vector<64x32xbf16>
    %cst_342 = arith.constant dense<0.000000e+00> : vector<64x128xf32>
    %900 = tpu.matmul %899, %897, %cst_342 {dimension_numbers = #tpu.dot_dimension_numbers<[1], [0], [0], [1], [0, 0, 1, 1], [], []>} : vector<64x32xbf16>, vector<32x128xbf16>, vector<64x128xf32> -> vector<64x128xf32>
    %901 = vector.broadcast %898 : vector<1x128xf32> to vector<64x128xf32>
    %902 = arith.addf %900, %901 : vector<64x128xf32>
    %c0_343 = arith.constant 0 : index
    %c0_344 = arith.constant 0 : index
    %c0_345 = arith.constant 0 : index
    %903 = vector.load %arg7[%c0_343, %c0_344, %c0_345] : memref<1x64x128xf32, #tpu.memory_space<vmem>>, vector<1x64x128xf32>
    %904 = vector.shape_cast %903 : vector<1x64x128xf32> to vector<64x128xf32>
    %905 = vector.shape_cast %902 : vector<64x128xf32> to vector<1x64x128xf32>
    tpu.vector_store %arg7[%c0_343, %c0_344, %c0_345], %905 {strides = array<i32>} : memref<1x64x128xf32, #tpu.memory_space<vmem>>, vector<1x64x128xf32>,
    return
  }
  func.func @transform_0(%arg0: i32) -> (i32, i32, i32) {
    %c0_i32 = arith.constant 0 : i32
    %c0_i32_0 = arith.constant 0 : i32
    %c0_i32_1 = arith.constant 0 : i32
    return %arg0, %c0_i32, %c0_i32_0 : i32, i32, i32
  }
  func.func @transform_1(%arg0: i32) -> (i32, i32, i32) {
    %c0_i32 = arith.constant 0 : i32
    %c0_i32_0 = arith.constant 0 : i32
    %c0_i32_1 = arith.constant 0 : i32
    return %arg0, %c0_i32, %c0_i32_0 : i32, i32, i32
  }
  func.func @transform_2(%arg0: i32) -> (i32, i32, i32) {
    %c0_i32 = arith.constant 0 : i32
    %c0_i32_0 = arith.constant 0 : i32
    %c0_i32_1 = arith.constant 0 : i32
    return %arg0, %c0_i32, %c0_i32_0 : i32, i32, i32
  }
  func.func @transform_3(%arg0: i32) -> (i32, i32) {
    %c0_i32 = arith.constant 0 : i32
    %c0_i32_0 = arith.constant 0 : i32
    %c0_i32_1 = arith.constant 0 : i32
    return %c0_i32, %c0_i32_0 : i32, i32
  }
  func.func @transform_4(%arg0: i32) -> (i32, i32, i32) {
    %c0_i32 = arith.constant 0 : i32
    %c0_i32_0 = arith.constant 0 : i32
    %c0_i32_1 = arith.constant 0 : i32
    %c0_i32_2 = arith.constant 0 : i32
    return %c0_i32, %c0_i32_0, %c0_i32_1 : i32, i32, i32
  }
  func.func @transform_5(%arg0: i32) -> (i32, i32, i32) {
    %c0_i32 = arith.constant 0 : i32
    %c0_i32_0 = arith.constant 0 : i32
    %c0_i32_1 = arith.constant 0 : i32
    %c0_i32_2 = arith.constant 0 : i32
    return %c0_i32, %c0_i32_0, %c0_i32_1 : i32, i32, i32
  }
  func.func @transform_6(%arg0: i32) -> (i32, i32, i32) {
    %c0_i32 = arith.constant 0 : i32
    %c0_i32_0 = arith.constant 0 : i32
    %c0_i32_1 = arith.constant 0 : i32
    return %arg0, %c0_i32, %c0_i32_0 : i32, i32, i32
  }
}

</mosaic_0001>

<llo_original>
// kernel: mae_forward.1
$region0: #{mae_forward.1}
  #allocation0 [shape = 'u32[]', space=smem, size = 0x4, offset = 0x4, fixed_abs, tag = 'smem constant byte address 0x4 - core index']
  #allocation1 [shape = 'u32[144,128]{1,0:T(1,128)}', space=vmem, size = 0x12000, scoped, tag = 'internal scratch']
  %s0 = inlined_call_operand.vmem [shape: f32[2,64,12], index: 0, kind: input, shape index: {}]
  %s1 = inlined_call_operand.vmem [shape: bf16[2,32,64], index: 1, kind: input, shape index: {}]
  %s2 = inlined_call_operand.vmem [shape: bf16[2,80,32], index: 2, kind: input, shape index: {}]
  %s3 = inlined_call_operand.vmem [shape: f32[200,128], index: 3, kind: input, shape index: {}]
  %s4 = inlined_call_operand.vmem [shape: f32[2,232,128], index: 4, kind: input, shape index: {}]
  %s5 = inlined_call_operand.vmem [shape: f32[2,232,128], index: 5, kind: input, shape index: {}]
  %s6 = inlined_call_operand.vmem [shape: f32[2,64,128], index: 6, kind: output, shape index: {}]
  %s7 = sld [smem:[#allocation0]]
  $region57: #{mae_forward.1} parent=0
    _
  %s9 = ssub.s32 1, %s7
  %s10 = scalar_select 0, %s9, %s7
  loop: start=0, step=1, limit=4
  $region2: #{mae_forward.1} parent=0 // loop_pre_header
    _
  $region3: #{mae_forward.1} parent=0 // loop_header
    %s12 = sphi 0, %s16
    %p13 = scmp.ge.s32.totalorder %s12, 4
    %s22 = sphi 0, %s24
    %s25 = sphi 0, %s22
    %s26 = sphi 0, %s25
    %s42 = sphi 0, %s26
    %s48 = sphi 0, %s50
    %s51 = sphi 0, %s48
    %s52 = sphi 0, %s51
    %s68 = sphi 0, %s52
    %s74 = sphi 0, %s76
    %s77 = sphi 0, %s74
    %s78 = sphi 0, %s77
    %s94 = sphi 0, %s78
    %s98 = sphi 0, %s98
    %s100 = sphi 0, %s98
    %s101 = sphi 0, %s100
    %s115 = sphi 0, %s101
    %s119 = sphi 0, %s119
    %s121 = sphi 0, %s119
    %s122 = sphi 0, %s121
    %s136 = sphi 0, %s122
    %s140 = sphi 0, %s140
    %s142 = sphi 0, %s140
    %s143 = sphi 0, %s142
    %s157 = sphi 0, %s143
    %s163 = sphi 0, %s165
    %s166 = sphi 0, %s163
    %s167 = sphi 0, %s166
    %s183 = sphi 0, %s167
  $region4: #{mae_forward.1} parent=0 // loop_header_branch
    %15 = sbr.rel (%p13) target = $region8
  $region5: #{mae_forward.1} parent=0 // loop_body
    %s17 = ssub.s32 %s12, 1
    %s18 = ssub.s32 %s12, 2
    %s19 = sadd.s32 %s12, 1
    %s20 = ssub.s32 %s12, %s19
    %p21 = scmp.eq.s32.totalorder %s20, 0
    %s23 = sadd.s32 %s22, 1
    %s24 = scalar_select %p21, %s22, %s23
    %p27 = pneg %p21
    %p28 = scmp.eq.s32.totalorder %s12, 1
    %p29 = por %p27, %p28
    %p30 = scmp.ne.s32.totalorder %s22, %s25
    %p31 = scmp.eq.s32.totalorder %s12, 0
    %p32 = por %p30, %p31
    %p33 = scmp.ne.s32.totalorder %s22, %s25
    %p34 = scmp.eq.s32.totalorder %s17, 1
    %p35 = por %p33, %p34
    %p36 = scmp.ne.s32.totalorder %s25, %s26
    %p37 = scmp.eq.s32.totalorder %s17, 0
    %p38 = por %p36, %p37
    %p39 = scmp.ne.s32.totalorder %s25, %s26
    %p40 = scmp.eq.s32.totalorder %s18, 1
    %p41 = por %p39, %p40
    %p43 = scmp.ne.s32.totalorder %s26, %s42
    %p44 = scmp.eq.s32.totalorder %s18, 0
    %p45 = por %p43, %p44
    %s46 = ssub.s32 %s12, %s19
    %p47 = scmp.eq.s32.totalorder %s46, 0
    %s49 = sadd.s32 %s48, 1
    %s50 = scalar_select %p47, %s48, %s49
    %p53 = pneg %p47
    %p54 = scmp.eq.s32.totalorder %s12, 1
    %p55 = por %p53, %p54
    %p56 = scmp.ne.s32.totalorder %s48, %s51
    %p57 = scmp.eq.s32.totalorder %s12, 0
    %p58 = por %p56, %p57
    %p59 = scmp.ne.s32.totalorder %s48, %s51
    %p60 = scmp.eq.s32.totalorder %s17, 1
    %p61 = por %p59, %p60
    %p62 = scmp.ne.s32.totalorder %s51, %s52
    %p63 = scmp.eq.s32.totalorder %s17, 0
    %p64 = por %p62, %p63
    %p65 = scmp.ne.s32.totalorder %s51, %s52
    %p66 = scmp.eq.s32.totalorder %s18, 1
    %p67 = por %p65, %p66
    %p69 = scmp.ne.s32.totalorder %s52, %s68
    %p70 = scmp.eq.s32.totalorder %s18, 0
    %p71 = por %p69, %p70
    %s72 = ssub.s32 %s12, %s19
    %p73 = scmp.eq.s32.totalorder %s72, 0
    %s75 = sadd.s32 %s74, 1
    %s76 = scalar_select %p73, %s74, %s75
    %p79 = pneg %p73
    %p80 = scmp.eq.s32.totalorder %s12, 1
    %p81 = por %p79, %p80
    %p82 = scmp.ne.s32.totalorder %s74, %s77
    %p83 = scmp.eq.s32.totalorder %s12, 0
    %p84 = por %p82, %p83
    %p85 = scmp.ne.s32.totalorder %s74, %s77
    %p86 = scmp.eq.s32.totalorder %s17, 1
    %p87 = por %p85, %p86
    %p88 = scmp.ne.s32.totalorder %s77, %s78
    %p89 = scmp.eq.s32.totalorder %s17, 0
    %p90 = por %p88, %p89
    %p91 = scmp.ne.s32.totalorder %s77, %s78
    %p92 = scmp.eq.s32.totalorder %s18, 1
    %p93 = por %p91, %p92
    %p95 = scmp.ne.s32.totalorder %s78, %s94
    %p96 = scmp.eq.s32.totalorder %s18, 0
    %p97 = por %p95, %p96
    %s99 = sadd.s32 %s98, 1
    %p102 = scmp.eq.s32.totalorder %s12, 1
    %p103 = scmp.ne.s32.totalorder %s98, %s100
    %p104 = scmp.eq.s32.totalorder %s12, 0
    %p105 = por %p103, %p104
    %p106 = scmp.ne.s32.totalorder %s98, %s100
    %p107 = scmp.eq.s32.totalorder %s17, 1
    %p108 = por %p106, %p107
    %p109 = scmp.ne.s32.totalorder %s100, %s101
    %p110 = scmp.eq.s32.totalorder %s17, 0
    %p111 = por %p109, %p110
    %p112 = scmp.ne.s32.totalorder %s100, %s101
    %p113 = scmp.eq.s32.totalorder %s18, 1
    %p114 = por %p112, %p113
    %p116 = scmp.ne.s32.totalorder %s101, %s115
    %p117 = scmp.eq.s32.totalorder %s18, 0
    %p118 = por %p116, %p117
    %s120 = sadd.s32 %s119, 1
    %p123 = scmp.eq.s32.totalorder %s12, 1
    %p124 = scmp.ne.s32.totalorder %s119, %s121
    %p125 = scmp.eq.s32.totalorder %s12, 0
    %p126 = por %p124, %p125
    %p127 = scmp.ne.s32.totalorder %s119, %s121
    %p128 = scmp.eq.s32.totalorder %s17, 1
    %p129 = por %p127, %p128
    %p130 = scmp.ne.s32.totalorder %s121, %s122
    %p131 = scmp.eq.s32.totalorder %s17, 0
    %p132 = por %p130, %p131
    %p133 = scmp.ne.s32.totalorder %s121, %s122
    %p134 = scmp.eq.s32.totalorder %s18, 1
    %p135 = por %p133, %p134
    %p137 = scmp.ne.s32.totalorder %s122, %s136
    %p138 = scmp.eq.s32.totalorder %s18, 0
    %p139 = por %p137, %p138
    %s141 = sadd.s32 %s140, 1
    %p144 = scmp.eq.s32.totalorder %s12, 1
    %p145 = scmp.ne.s32.totalorder %s140, %s142
    %p146 = scmp.eq.s32.totalorder %s12, 0
    %p147 = por %p145, %p146
    %p148 = scmp.ne.s32.totalorder %s140, %s142
    %p149 = scmp.eq.s32.totalorder %s17, 1
    %p150 = por %p148, %p149
    %p151 = scmp.ne.s32.totalorder %s142, %s143
    %p152 = scmp.eq.s32.totalorder %s17, 0
    %p153 = por %p151, %p152
    %p154 = scmp.ne.s32.totalorder %s142, %s143
    %p155 = scmp.eq.s32.totalorder %s18, 1
    %p156 = por %p154, %p155
    %p158 = scmp.ne.s32.totalorder %s143, %s157
    %p159 = scmp.eq.s32.totalorder %s18, 0
    %p160 = por %p158, %p159
    %s161 = ssub.s32 %s12, %s19
    %p162 = scmp.eq.s32.totalorder %s161, 0
    %s164 = sadd.s32 %s163, 1
    %s165 = scalar_select %p162, %s163, %s164
    %p168 = pneg %p162
    %p169 = scmp.eq.s32.totalorder %s12, 1
    %p170 = por %p168, %p169
    %p171 = scmp.ne.s32.totalorder %s163, %s166
    %p172 = scmp.eq.s32.totalorder %s12, 0
    %p173 = por %p171, %p172
    %p174 = scmp.ne.s32.totalorder %s163, %s166
    %p175 = scmp.eq.s32.totalorder %s17, 1
    %p176 = por %p174, %p175
    %p177 = scmp.ne.s32.totalorder %s166, %s167
    %p178 = scmp.eq.s32.totalorder %s17, 0
    %p179 = por %p177, %p178
    %p180 = scmp.ne.s32.totalorder %s166, %s167
    %p181 = scmp.eq.s32.totalorder %s18, 1
    %p182 = por %p180, %p181
    %p184 = scmp.ne.s32.totalorder %s167, %s183
    %p185 = scmp.eq.s32.totalorder %s18, 0
    %p186 = por %p184, %p185
    %p187 = scmp.le.s32.totalorder 1, %s12
    %p188 = scmp.lt.s32.totalorder %s12, 3
    %p189 = pnand %p187, %p188
    %p190 = pneg %p189
    // Predicated region
    $region9: #{mae_forward.1} parent=5 // pred_check
      _
    $region10: #{mae_forward.1} parent=5 // pred_check_branch
      %192 = sbr.rel (%p189) target = $region12
    $region11: #{mae_forward.1} parent=5 // pred_region
      %s193 = ssub.s32 %s12, 1
      // Predicated region
      $region13: #{mae_forward.1} parent=11 // pred_check
        %p194 = pneg %p111
      $region14: #{mae_forward.1} parent=11 // pred_check_branch
        %196 = sbr.rel (%p194) target = $region16
      $region15: #{mae_forward.1} parent=11 // pred_region
        _
      $region16: #{mae_forward.1} parent=11 // pred_fallthru
        _
      // Predicated region
      $region17: #{mae_forward.1} parent=11 // pred_check
        %p197 = pneg %p132
      $region18: #{mae_forward.1} parent=11 // pred_check_branch
        %199 = sbr.rel (%p197) target = $region20
      $region19: #{mae_forward.1} parent=11 // pred_region
        _
      $region20: #{mae_forward.1} parent=11 // pred_fallthru
        _
      // Predicated region
      $region21: #{mae_forward.1} parent=11 // pred_check
        %p200 = pneg %p153
      $region22: #{mae_forward.1} parent=11 // pred_check_branch
        %202 = sbr.rel (%p200) target = $region24
      $region23: #{mae_forward.1} parent=11 // pred_region
        _
      $region24: #{mae_forward.1} parent=11 // pred_fallthru
        _
    $region12: #{mae_forward.1} parent=5 // pred_fallthru
      _
    %p203 = scmp.lt.s32.totalorder %s12, 2
    // Predicated region
    $region25: #{mae_forward.1} parent=5 // pred_check
      %p204 = pneg %p203
    $region26: #{mae_forward.1} parent=5 // pred_check_branch
      %206 = sbr.rel (%p204) target = $region28
    $region27: #{mae_forward.1} parent=5 // pred_region
      // Predicated region
      $region29: #{mae_forward.1} parent=27 // pred_check
        %p207 = pneg %p32
      $region30: #{mae_forward.1} parent=27 // pred_check_branch
        %209 = sbr.rel (%p207) target = $region32
      $region31: #{mae_forward.1} parent=27 // pred_region
        %p210 = scmp.lt.s32.totalorder %s12, 1
        %s211 = scalar_select %p210, %s12, 1
        %s212 = smul.addr %s211, 8
        %s213 = smul.addr %s212, 8
        %s214 = scalar_lea.vmem %s0, %s213
      $region32: #{mae_forward.1} parent=27 // pred_fallthru
        _
      // Predicated region
      $region33: #{mae_forward.1} parent=27 // pred_check
        %p215 = pneg %p58
      $region34: #{mae_forward.1} parent=27 // pred_check_branch
        %217 = sbr.rel (%p215) target = $region36
      $region35: #{mae_forward.1} parent=27 // pred_region
        %p218 = scmp.lt.s32.totalorder %s12, 1
        %s219 = scalar_select %p218, %s12, 1
        %s220 = smul.addr %s219, 4
        %s221 = smul.addr %s220, 4
        %s222 = scalar_lea.vmem %s1, %s221
      $region36: #{mae_forward.1} parent=27 // pred_fallthru
        _
      // Predicated region
      $region37: #{mae_forward.1} parent=27 // pred_check
        %p223 = pneg %p84
      $region38: #{mae_forward.1} parent=27 // pred_check_branch
        %225 = sbr.rel (%p223) target = $region40
      $region39: #{mae_forward.1} parent=27 // pred_region
        %p226 = scmp.lt.s32.totalorder %s12, 1
        %s227 = scalar_select %p226, %s12, 1
        %s228 = smul.addr %s227, 10
        %s229 = smul.addr %s228, 4
        %s230 = scalar_lea.vmem %s2, %s229
      $region40: #{mae_forward.1} parent=27 // pred_fallthru
        _
    $region28: #{mae_forward.1} parent=5 // pred_fallthru
      _
    %p231 = scmp.le.s32.totalorder 1, %s12
    %p232 = scmp.lt.s32.totalorder %s12, 3
    %p233 = pnand %p231, %p232
    %p234 = pneg %p233
    // Predicated region
    $region41: #{mae_forward.1} parent=5 // pred_check
      _
    $region42: #{mae_forward.1} parent=5 // pred_check_branch
      %236 = sbr.rel (%p233) target = $region44
    $region43: #{mae_forward.1} parent=5 // pred_region
      %s237 = ssub.s32 %s12, 1
      %p238 = scmp.lt.s32.totalorder %s17, 1
      %s239 = scalar_select %p238, %s17, 1
      %s240 = smul.addr %s239, 8
      %s241 = smul.addr %s240, 8
      %s242 = scalar_lea.vmem %s0, %s241
      %p243 = pneg %p38
      %p244 = pneg %p35
      %p245 = scmp.lt.s32.totalorder %s17, 1
      %s246 = scalar_select %p245, %s17, 1
      %s247 = smul.addr %s246, 4
      %s248 = smul.addr %s247, 4
      %s249 = scalar_lea.vmem %s1, %s248
      %p250 = pneg %p64
      %p251 = pneg %p61
      %p252 = scmp.lt.s32.totalorder %s17, 1
      %s253 = scalar_select %p252, %s17, 1
      %s254 = smul.addr %s253, 10
      %s255 = smul.addr %s254, 4
      %s256 = scalar_lea.vmem %s2, %s255
      %p257 = pneg %p90
      %p258 = pneg %p87
      %p259 = pneg %p111
      %p260 = pneg %p108
      %p261 = pneg %p132
      %p262 = pneg %p129
      %p263 = pneg %p153
      %p264 = pneg %p150
      %p265 = pneg %p179
      %p266 = pneg %p176
      %p267 = scmp.lt.s32.totalorder %s17, 1
      %s268 = scalar_select %p267, %s17, 1
      %s269 = smul.addr %s268, 8
      %s270 = smul.addr %s269, 8
      %s271 = scalar_lea.vmem %s6, %s270
      %p272 = scmp.lt.s32.totalorder %s17, 1
      %s273 = scalar_select %p272, %s17, 1
      %s274 = smul.addr %s273, 8
      %s275 = smul.addr %s274, 8
      %s276 = scalar_lea.vmem %s0, %s275
      %p277 = scmp.lt.s32.totalorder %s17, 1
      %s278 = scalar_select %p277, %s17, 1
      %s279 = smul.addr %s278, 4
      %s280 = smul.addr %s279, 4
      %s281 = scalar_lea.vmem %s1, %s280
      %p282 = scmp.lt.s32.totalorder %s17, 1
      %s283 = scalar_select %p282, %s17, 1
      %s284 = smul.addr %s283, 10
      %s285 = smul.addr %s284, 4
      %s286 = scalar_lea.vmem %s2, %s285
      %p287 = scmp.lt.s32.totalorder %s17, 1
      %s288 = scalar_select %p287, %s17, 1
      %s289 = smul.addr %s288, 8
      %s290 = smul.addr %s289, 8
      %s291 = scalar_lea.vmem %s6, %s290
      %v293 = vld [vmem:[%s3] sm:$0xff]
      %v294 = vld [vmem:[%s3 + $0x8] sm:$0xf]
      %v295 = vld [vmem:[%s3 + $0x10] sm:$0x1]
      %v296 = vld [vmem:[%s276] sm:$0xff]
      %v297 = vld [vmem:[%s276 + $0x8] sm:$0xff]
      %v298 = vld [vmem:[%s276 + $0x10] sm:$0xff]
      %v299 = vld [vmem:[%s276 + $0x18] sm:$0xff]
      %v300 = vld [vmem:[%s276 + $0x20] sm:$0xff]
      %v301 = vld [vmem:[%s276 + $0x28] sm:$0xff]
      %v302 = vld [vmem:[%s276 + $0x30] sm:$0xff]
      %v303 = vld [vmem:[%s276 + $0x38] sm:$0xff]
      %v304 = vpack.c.bf16 %v297, %v296
      %v305 = vpack.c.bf16 %v299, %v298
      %v306 = vpack.c.bf16 %v301, %v300
      %v307 = vpack.c.bf16 %v303, %v302
      %v308 = vpack.c.bf16 %v294, %v293
      %v309 = vlaneseq
      %v310 = vshrl.u32 %v309, 7
      %v311 = vsub.s32 0, %v310
      %v312 = vrot.slane %v295, %v311
      %vm313 = vcmask 97280
      %v315 = vsel %vm313, %v304, 0
      %v318 = vsel %vm313, %v305, 0
      %v321 = vsel %vm313, %v306, 0
      %v324 = vsel %vm313, %v307, 0
      %vm326 = vcmask 1045504
      %v328 = vsel %vm326, %v308, 0
      %330 = vmatprep.subr.bf16.mxu0 0
      %331 = vmatpush1.bf16.msra.mxu0 %v328
      %332 = vmatprep.subr.bf16.mxu0 0
      %333 = vmatpush1.bf16.msra.mxu0 0
      %334 = vmatprep.subr.bf16.mxu0 0
      %335 = vmatpush1.bf16.msra.mxu0 0
      %336 = vmatprep.subr.bf16.mxu0 0
      %337 = vmatpush1.bf16.msra.mxu0 0
      %338 = vmatprep.subr.bf16.mxu0 0
      %339 = vmatpush1.bf16.msra.mxu0 0
      %340 = vmatprep.subr.bf16.mxu0 0
      %341 = vmatpush1.bf16.msra.mxu0 0
      %342 = vmatprep.subr.bf16.mxu0 0
      %343 = vmatpush1.bf16.msra.mxu0 0
      %344 = vmatprep.subr.bf16.mxu0 0
      %345 = vmatpush1.bf16.msra.mxu0 0
      %346 = vmatprep.subr.bf16.mxu0 0
      %347 = vmatpush1.bf16.msra.mxu0 0
      %348 = vmatprep.subr.bf16.mxu0 0
      %349 = vmatpush1.bf16.msra.mxu0 0
      %350 = vmatprep.subr.bf16.mxu0 0
      %351 = vmatpush1.bf16.msra.mxu0 0
      %352 = vmatprep.subr.bf16.mxu0 0
      %353 = vmatpush1.bf16.msra.mxu0 0
      %354 = vmatprep.subr.bf16.mxu0 0
      %355 = vmatpush1.bf16.msra.mxu0 0
      %356 = vmatprep.subr.bf16.mxu0 0
      %357 = vmatpush1.bf16.msra.mxu0 0
      %358 = vmatprep.subr.bf16.mxu0 0
      %359 = vmatpush1.bf16.msra.mxu0 0
      %360 = vmatprep.subr.bf16.mxu0 0
      %361 = vmatpush1.bf16.msra.mxu0 0
      %362 = vmatprep.mubr.bf16.mxu0 0
      %363 = vmatmul.mubr.bf16.gmra.mrb[0].mxu0 %v315
      %v364 = vpop.f32.mrb[0].mxu0
      %v365 = vadd.f32 %v312, %v364
      %v366 = vpop.f32.mrb[0].mxu0
      %v367 = vpop.f32.mrb[0].mxu0
      %v368 = vadd.f32 %v312, %v367
      %v369 = vpop.f32.mrb[0].mxu0
      %370 = vmatprep.mubr.bf16.mxu0 0
      %371 = vmatmul.mubr.bf16.gmra.mrb[0].mxu0 %v318
      %v372 = vpop.f32.mrb[0].mxu0
      %v373 = vadd.f32 %v312, %v372
      %v374 = vpop.f32.mrb[0].mxu0
      %v375 = vpop.f32.mrb[0].mxu0
      %v376 = vadd.f32 %v312, %v375
      %v377 = vpop.f32.mrb[0].mxu0
      %378 = vmatprep.mubr.bf16.mxu0 0
      %379 = vmatmul.mubr.bf16.gmra.mrb[0].mxu0 %v321
      %v380 = vpop.f32.mrb[0].mxu0
      %v381 = vadd.f32 %v312, %v380
      %v382 = vpop.f32.mrb[0].mxu0
      %v383 = vpop.f32.mrb[0].mxu0
      %v384 = vadd.f32 %v312, %v383
      %v385 = vpop.f32.mrb[0].mxu0
      %386 = vmatprep.mubr.bf16.mxu0 0
      %387 = vmatmul.mubr.bf16.gmra.mrb[0].mxu0 %v324
      %v388 = vpop.f32.mrb[0].mxu0
      %v389 = vadd.f32 %v312, %v388
      %v390 = vpop.f32.mrb[0].mxu0
      %v391 = vpop.f32.mrb[0].mxu0
      %v392 = vadd.f32 %v312, %v391
      %v393 = vpop.f32.mrb[0].mxu0
      %394 = vdwg.mxu0
      %v395 = vld [vmem:[%s3 + $0x38] sm:$0xff]
      %v396 = vld [vmem:[%s3 + $0x40] sm:$0xff]
      %v397 = vld [vmem:[%s3 + $0x48] sm:$0xff]
      %v398 = vld [vmem:[%s3 + $0x50] sm:$0xff]
      %v399 = vld [vmem:[%s3 + $0x58] sm:$0xff]
      %v400 = vld [vmem:[%s3 + $0x60] sm:$0xff]
      %v401 = vld [vmem:[%s3 + $0x68] sm:$0xff]
      %v402 = vld [vmem:[%s3 + $0x70] sm:$0xff]
      %v403 = vadd.f32 %v365, %v395
      %v404 = vadd.f32 %v368, %v396
      %v405 = vadd.f32 %v373, %v397
      %v406 = vadd.f32 %v376, %v398
      %v407 = vadd.f32 %v381, %v399
      %v408 = vadd.f32 %v384, %v400
      %v409 = vadd.f32 %v389, %v401
      %v410 = vadd.f32 %v392, %v402
      %v411 = vld [vmem:[%s281] sm:$0xf]
      %v412 = vld [vmem:[%s281 + $0x4] sm:$0xf]
      %v413 = vld [vmem:[%s281 + $0x8] sm:$0xf]
      %v414 = vld [vmem:[%s281 + $0xc] sm:$0xf]
      %v415 = vpack.c.bf16 %v404, %v403
      %v416 = vpack.c.bf16 %v406, %v405
      %v417 = vpack.c.bf16 %v408, %v407
      %v418 = vpack.c.bf16 %v410, %v409
      %v419 = vld [vmem:[%s3 + $0x11] sm:$0x1]
      %v420 = vlaneseq
      %v421 = vshrl.u32 %v420, 7
      %v422 = vadd.s32 %v421, 8
      %v423 = vadd.s32 %v421, 16
      %v424 = vadd.s32 %v421, 24
      %vm425 = vcmp.eq.s32.totalorder %v421, 0
      %vm426 = vcmp.eq.s32.totalorder %v422, 0
      %vm427 = vcmp.eq.s32.totalorder %v423, 0
      %vm428 = vcmp.eq.s32.totalorder %v424, 0
      %v429 = vsel %vm425, 1, 0
      %v430 = vsel %vm426, 1, 0
      %v431 = vsel %vm427, 1, 0
      %v432 = vsel %vm428, 1, 0
      %v433 = vcvt.s32.f32 %v429
      %v434 = vcvt.s32.f32 %v430
      %v435 = vcvt.s32.f32 %v431
      %v436 = vcvt.s32.f32 %v432
      %v437 = vlaneseq
      %v438 = vshrl.u32 %v437, 7
      %v439 = vsub.s32 0, %v438
      %v440 = vrot.slane %v419, %v439
      %v441 = vmul.f32 %v433, %v440
      %v442 = vmul.f32 %v434, %v440
      %v443 = vmul.f32 %v435, %v440
      %v444 = vmul.f32 %v436, %v440
      %v449 = vunpack.c.l.b16 %v411
      %v450 = vunpack.c.l.b16 %v412
      %v451 = vunpack.c.l.b16 %v413
      %v452 = vunpack.c.l.b16 %v414
      %v453 = vpack.c.b16 %v450, %v449
      %v454 = vpack.c.b16 %v452, %v451
      %vm455 = vcmask 523264
      %v457 = vsel %vm455, %v453, 0
      %v460 = vsel %vm455, %v454, 0
      %462 = vmatprep.subr.bf16.mxu0 0
      %463 = vmatpush1.bf16.msra.mxu0 %v415
      %464 = vmatprep.subr.bf16.mxu0 0
      %465 = vmatpush1.bf16.msra.mxu0 %v416
      %466 = vmatprep.subr.bf16.mxu0 0
      %467 = vmatpush1.bf16.msra.mxu0 %v417
      %468 = vmatprep.subr.bf16.mxu0 0
      %469 = vmatpush1.bf16.msra.mxu0 %v418
      %470 = vmatprep.subr.bf16.mxu0 0
      %471 = vmatpush1.bf16.msra.mxu0 0
      %472 = vmatprep.subr.bf16.mxu0 0
      %473 = vmatpush1.bf16.msra.mxu0 0
      %474 = vmatprep.subr.bf16.mxu0 0
      %475 = vmatpush1.bf16.msra.mxu0 0
      %476 = vmatprep.subr.bf16.mxu0 0
      %477 = vmatpush1.bf16.msra.mxu0 0
      %478 = vmatprep.subr.bf16.mxu0 0
      %479 = vmatpush1.bf16.msra.mxu0 0
      %480 = vmatprep.subr.bf16.mxu0 0
      %481 = vmatpush1.bf16.msra.mxu0 0
      %482 = vmatprep.subr.bf16.mxu0 0
      %483 = vmatpush1.bf16.msra.mxu0 0
      %484 = vmatprep.subr.bf16.mxu0 0
      %485 = vmatpush1.bf16.msra.mxu0 0
      %486 = vmatprep.subr.bf16.mxu0 0
      %487 = vmatpush1.bf16.msra.mxu0 0
      %488 = vmatprep.subr.bf16.mxu0 0
      %489 = vmatpush1.bf16.msra.mxu0 0
      %490 = vmatprep.subr.bf16.mxu0 0
      %491 = vmatpush1.bf16.msra.mxu0 0
      %492 = vmatprep.subr.bf16.mxu0 0
      %493 = vmatpush1.bf16.msra.mxu0 0
      %494 = vmatprep.mubr.bf16.mxu0 0
      %495 = vmatmul.mubr.bf16.gmra.mrb[0].mxu0 %v457
      %v496 = vpop.f32.mrb[0].mxu0
      %v497 = vadd.f32 %v441, %v496
      %v498 = vpop.f32.mrb[0].mxu0
      %v499 = vpop.f32.mrb[0].mxu0
      %v500 = vadd.f32 %v442, %v499
      %v501 = vpop.f32.mrb[0].mxu0
      %502 = vmatprep.mubr.bf16.mxu0 0
      %503 = vmatmul.mubr.bf16.gmra.mrb[0].mxu0 %v460
      %v504 = vpop.f32.mrb[0].mxu0
      %v505 = vadd.f32 %v443, %v504
      %v506 = vpop.f32.mrb[0].mxu0
      %v507 = vpop.f32.mrb[0].mxu0
      %v508 = vadd.f32 %v444, %v507
      %v509 = vpop.f32.mrb[0].mxu0
      %510 = vdwg.mxu0
      %v511 = vlaneseq
      %v512 = vand.u32 %v511, 127
      %vm513 = vcmp.lt.s32.totalorder %v512, 17
      %v514 = vsel %vm513, 0.0, -1e+30
      %v515 = vld [vmem:[%s4] sm:$0x1]
      %v516 = vld [vmem:[%s4 + $0x1] sm:$0x1]
      %v517 = vld [vmem:[%s4 + $0x8] sm:$0xff]
      %v518 = vld [vmem:[%s4 + $0x10] sm:$0xff]
      %v519 = vld [vmem:[%s4 + $0x18] sm:$0xff]
      %v520 = vld [vmem:[%s4 + $0x20] sm:$0xff]
      %v521 = vpack.c.bf16 %v518, %v517
      %v522 = vpack.c.bf16 %v520, %v519
      %v523 = vld [vmem:[%s4 + $0x28] sm:$0xff]
      %v524 = vld [vmem:[%s4 + $0x30] sm:$0xff]
      %v525 = vld [vmem:[%s4 + $0x38] sm:$0xff]
      %v526 = vld [vmem:[%s4 + $0x40] sm:$0xff]
      %v527 = vpack.c.bf16 %v524, %v523
      %v528 = vpack.c.bf16 %v526, %v525
      %v529 = vld [vmem:[%s4 + $0x2] sm:$0x1]
      %v530 = vld [vmem:[%s4 + $0x3] sm:$0x1]
      %v531 = vld [vmem:[%s4 + $0x4] sm:$0x1]
      %v532 = vld [vmem:[%s4 + $0x48] sm:$0xff]
      %v533 = vld [vmem:[%s4 + $0x50] sm:$0xff]
      %v534 = vld [vmem:[%s4 + $0x58] sm:$0xff]
      %v535 = vld [vmem:[%s4 + $0x60] sm:$0xff]
      %v536 = vpack.c.bf16 %v533, %v532
      %v537 = vpack.c.bf16 %v535, %v534
      %v538 = vld [vmem:[%s4 + $0x6] sm:$0x1]
      %v539 = vld [vmem:[%s4 + $0x68] sm:$0xff]
      %v540 = vld [vmem:[%s4 + $0x70] sm:$0xff]
      %v541 = vld [vmem:[%s4 + $0x78] sm:$0xff]
      %v542 = vld [vmem:[%s4 + $0x80] sm:$0xff]
      %v543 = vld [vmem:[%s4 + $0x88] sm:$0xff]
      %v544 = vld [vmem:[%s4 + $0x90] sm:$0xff]
      %v545 = vld [vmem:[%s4 + $0x98] sm:$0xff]
      %v546 = vld [vmem:[%s4 + $0xa0] sm:$0xff]
      %v547 = vld [vmem:[%s4 + $0xa8] sm:$0xff]
      %v548 = vld [vmem:[%s4 + $0xb0] sm:$0xff]
      %v549 = vld [vmem:[%s4 + $0xb8] sm:$0xff]
      %v550 = vld [vmem:[%s4 + $0xc0] sm:$0xff]
      %v551 = vld [vmem:[%s4 + $0xc8] sm:$0xff]
      %v552 = vld [vmem:[%s4 + $0xd0] sm:$0xff]
      %v553 = vld [vmem:[%s4 + $0xd8] sm:$0xff]
      %v554 = vld [vmem:[%s4 + $0xe0] sm:$0xff]
      %v555 = vpack.c.bf16 %v540, %v539
      %v556 = vpack.c.bf16 %v542, %v541
      %v557 = vpack.c.bf16 %v544, %v543
      %v558 = vpack.c.bf16 %v546, %v545
      %v559 = vpack.c.bf16 %v548, %v547
      %v560 = vpack.c.bf16 %v550, %v549
      %v561 = vpack.c.bf16 %v552, %v551
      %v562 = vpack.c.bf16 %v554, %v553
      %v563 = vld [vmem:[%s4 + $0x5] sm:$0x1]
      %vm564 = vcmask 261120
      %v565 = vsel %vm564, %v497, 0.0
      %566 = vadd.xlane.f32.xlu0 %v565
      %v567 = vpop.xlane.xlu0 %566
      %v568 = vsel %vm564, %v500, 0.0
      %569 = vadd.xlane.f32.xlu0 %v568
      %v570 = vpop.xlane.xlu0 %569
      %v571 = vsel %vm564, %v505, 0.0
      %572 = vadd.xlane.f32.xlu0 %v571
      %v573 = vpop.xlane.xlu0 %572
      %v574 = vsel %vm564, %v508, 0.0
      %575 = vadd.xlane.f32.xlu0 %v574
      %v576 = vpop.xlane.xlu0 %575
      %v577 = vrcp.pop 32.0
      %v578 = vmul.f32 %v567, %v577
      %v579 = vmul.f32 %v570, %v577
      %v580 = vmul.f32 %v573, %v577
      %v581 = vmul.f32 %v576, %v577
      %v582 = vsub.f32 %v497, %v578
      %v583 = vsub.f32 %v500, %v579
      %v584 = vsub.f32 %v505, %v580
      %v585 = vsub.f32 %v508, %v581
      %v586 = vmul.f32 %v582, %v582
      %v587 = vmul.f32 %v583, %v583
      %v588 = vmul.f32 %v584, %v584
      %v589 = vmul.f32 %v585, %v585
      %v590 = vsel %vm564, %v586, 0.0
      %591 = vadd.xlane.f32.xlu0 %v590
      %v592 = vpop.xlane.xlu0 %591
      %v593 = vsel %vm564, %v587, 0.0
      %594 = vadd.xlane.f32.xlu0 %v593
      %v595 = vpop.xlane.xlu0 %594
      %v596 = vsel %vm564, %v588, 0.0
      %597 = vadd.xlane.f32.xlu0 %v596
      %v598 = vpop.xlane.xlu0 %597
      %v599 = vsel %vm564, %v589, 0.0
      %600 = vadd.xlane.f32.xlu0 %v599
      %v601 = vpop.xlane.xlu0 %600
      %v602 = vmul.f32 %v592, %v577
      %v603 = vmul.f32 %v595, %v577
      %v604 = vmul.f32 %v598, %v577
      %v605 = vmul.f32 %v601, %v577
      %v606 = vadd.f32 %v602, 1e-05
      %v607 = vadd.f32 %v603, 1e-05
      %v608 = vadd.f32 %v604, 1e-05
      %v609 = vadd.f32 %v605, 1e-05
      %v610 = vrsqrt.pop %v606
      %v611 = vrsqrt.pop %v607
      %v612 = vrsqrt.pop %v608
      %v613 = vrsqrt.pop %v609
      %v614 = vmul.f32 %v582, %v610
      %v615 = vmul.f32 %v583, %v611
      %v616 = vmul.f32 %v584, %v612
      %v617 = vmul.f32 %v585, %v613
      %v618 = vlaneseq
      %v619 = vshrl.u32 %v618, 7
      %v620 = vsub.s32 0, %v619
      %v621 = vrot.slane %v515, %v620
      %v622 = vmul.f32 %v614, %v621
      %v623 = vmul.f32 %v615, %v621
      %v624 = vmul.f32 %v616, %v621
      %v625 = vmul.f32 %v617, %v621
      %v626 = vlaneseq
      %v627 = vshrl.u32 %v626, 7
      %v628 = vsub.s32 0, %v627
      %v629 = vrot.slane %v516, %v628
      %v630 = vadd.f32 %v622, %v629
      %v631 = vadd.f32 %v623, %v629
      %v632 = vadd.f32 %v624, %v629
      %v633 = vadd.f32 %v625, %v629
      %v634 = vpack.c.bf16 %v631, %v630
      %v635 = vpack.c.bf16 %v633, %v632
      %v637 = vsel %vm564, %v634, 0
      %v640 = vsel %vm564, %v635, 0
      %642 = vmatprep.subr.bf16.mxu0 0
      %643 = vmatpush1.bf16.msra.mxu0 %v521
      %644 = vmatprep.subr.bf16.mxu0 0
      %645 = vmatpush1.bf16.msra.mxu0 %v522
      %646 = vmatprep.subr.bf16.mxu0 0
      %647 = vmatpush1.bf16.msra.mxu0 0
      %648 = vmatprep.subr.bf16.mxu0 0
      %649 = vmatpush1.bf16.msra.mxu0 0
      %650 = vmatprep.subr.bf16.mxu0 0
      %651 = vmatpush1.bf16.msra.mxu0 0
      %652 = vmatprep.subr.bf16.mxu0 0
      %653 = vmatpush1.bf16.msra.mxu0 0
      %654 = vmatprep.subr.bf16.mxu0 0
      %655 = vmatpush1.bf16.msra.mxu0 0
      %656 = vmatprep.subr.bf16.mxu0 0
      %657 = vmatpush1.bf16.msra.mxu0 0
      %658 = vmatprep.subr.bf16.mxu0 0
      %659 = vmatpush1.bf16.msra.mxu0 0
      %660 = vmatprep.subr.bf16.mxu0 0
      %661 = vmatpush1.bf16.msra.mxu0 0
      %662 = vmatprep.subr.bf16.mxu0 0
      %663 = vmatpush1.bf16.msra.mxu0 0
      %664 = vmatprep.subr.bf16.mxu0 0
      %665 = vmatpush1.bf16.msra.mxu0 0
      %666 = vmatprep.subr.bf16.mxu0 0
      %667 = vmatpush1.bf16.msra.mxu0 0
      %668 = vmatprep.subr.bf16.mxu0 0
      %669 = vmatpush1.bf16.msra.mxu0 0
      %670 = vmatprep.subr.bf16.mxu0 0
      %671 = vmatpush1.bf16.msra.mxu0 0
      %672 = vmatprep.subr.bf16.mxu0 0
      %673 = vmatpush1.bf16.msra.mxu0 0
      %674 = vmatprep.mubr.bf16.mxu0 0
      %675 = vmatmul.mubr.bf16.gmra.mrb[0].mxu0 %v637
      %v676 = vpop.f32.mrb[0].mxu0
      %v677 = vadd.f32 0.0, %v676
      %v678 = vpop.f32.mrb[0].mxu0
      %v679 = vpop.f32.mrb[0].mxu0
      %v680 = vadd.f32 0.0, %v679
      %v681 = vpop.f32.mrb[0].mxu0
      %682 = vmatprep.mubr.bf16.mxu0 0
      %683 = vmatmul.mubr.bf16.gmra.mrb[0].mxu0 %v640
      %v684 = vpop.f32.mrb[0].mxu0
      %v685 = vadd.f32 0.0, %v684
      %v686 = vpop.f32.mrb[0].mxu0
      %v687 = vpop.f32.mrb[0].mxu0
      %v688 = vadd.f32 0.0, %v687
      %v689 = vpop.f32.mrb[0].mxu0
      %690 = vdwg.mxu0
      %v691 = vmul.f32 %v677, 0.35355338
      %v692 = vmul.f32 %v680, 0.35355338
      %v693 = vmul.f32 %v685, 0.35355338
      %v694 = vmul.f32 %v688, 0.35355338
      %v695 = vpack.c.bf16 %v692, %v691
      %v696 = vpack.c.bf16 %v694, %v693
      %v697 = vpack.c.bf16 %v680, %v677
      %v698 = vpack.c.bf16 %v688, %v685
      %701 = vrot.lane.b32.xlu0 %v697, 96
      %v702 = vpop.permute.xlu0 %701
      %703 = vrot.lane.b32.xlu0 %v698, 96
      %v704 = vpop.permute.xlu0 %703
      %vm705 = vcmask 64512
      %v707 = vsel %vm705, %v695, 0
      %v710 = vsel %vm705, %v696, 0
      %v713 = vsel %vm705, %v702, 0
      %v716 = vsel %vm705, %v704, 0
      %718 = vmatprep.subr.bf16.mxu0 0
      %719 = vmatpush1.bf16.xpose.msra.mxu0 %v713
      %720 = vmatprep.subr.bf16.mxu0 0
      %721 = vmatpush1.bf16.xpose.msra.mxu0 %v716
      %722 = vmatprep.subr.bf16.mxu0 0
      %723 = vmatpush1.bf16.xpose.msra.mxu0 0
      %724 = vmatprep.subr.bf16.mxu0 0
      %725 = vmatpush1.bf16.xpose.msra.mxu0 0
      %726 = vmatprep.subr.bf16.mxu0 0
      %727 = vmatpush1.bf16.xpose.msra.mxu0 0
      %728 = vmatprep.subr.bf16.mxu0 0
      %729 = vmatpush1.bf16.xpose.msra.mxu0 0
      %730 = vmatprep.subr.bf16.mxu0 0
      %731 = vmatpush1.bf16.xpose.msra.mxu0 0
      %732 = vmatprep.subr.bf16.mxu0 0
      %733 = vmatpush1.bf16.xpose.msra.mxu0 0
      %734 = vmatprep.subr.bf16.mxu0 0
      %735 = vmatpush1.bf16.xpose.msra.mxu0 0
      %736 = vmatprep.subr.bf16.mxu0 0
      %737 = vmatpush1.bf16.xpose.msra.mxu0 0
      %738 = vmatprep.subr.bf16.mxu0 0
      %739 = vmatpush1.bf16.xpose.msra.mxu0 0
      %740 = vmatprep.subr.bf16.mxu0 0
      %741 = vmatpush1.bf16.xpose.msra.mxu0 0
      %742 = vmatprep.subr.bf16.mxu0 0
      %743 = vmatpush1.bf16.xpose.msra.mxu0 0
      %744 = vmatprep.subr.bf16.mxu0 0
      %745 = vmatpush1.bf16.xpose.msra.mxu0 0
      %746 = vmatprep.subr.bf16.mxu0 0
      %747 = vmatpush1.bf16.xpose.msra.mxu0 0
      %748 = vmatprep.subr.bf16.mxu0 0
      %749 = vmatpush1.bf16.xpose.msra.mxu0 0
      %750 = vmatprep.mubr.bf16.mxu0 0
      %751 = vmatmul.mubr.bf16.gmra.mrb[0].mxu0 %v707
      %v752 = vpop.f32.mrb[0].mxu0
      %v753 = vadd.f32 %v514, %v752
      %v754 = vpop.f32.mrb[0].mxu0
      %v755 = vpop.f32.mrb[0].mxu0
      %v756 = vadd.f32 %v514, %v755
      %v757 = vpop.f32.mrb[0].mxu0
      %758 = vmatprep.mubr.bf16.mxu0 0
      %759 = vmatmul.mubr.bf16.gmra.mrb[0].mxu0 %v710
      %v760 = vpop.f32.mrb[0].mxu0
      %v761 = vadd.f32 %v514, %v760
      %v762 = vpop.f32.mrb[0].mxu0
      %v763 = vpop.f32.mrb[0].mxu0
      %v764 = vadd.f32 %v514, %v763
      %v765 = vpop.f32.mrb[0].mxu0
      %766 = vdwg.mxu0
      %v767 = vsel %vm564, %v753, -inf
      %768 = vmax.xlane.f32.xlu0 %v767
      %v769 = vpop.xlane.xlu0 %768
      %v770 = vsel %vm564, %v756, -inf
      %771 = vmax.xlane.f32.xlu0 %v770
      %v772 = vpop.xlane.xlu0 %771
      %v773 = vsel %vm564, %v761, -inf
      %774 = vmax.xlane.f32.xlu0 %v773
      %v775 = vpop.xlane.xlu0 %774
      %v776 = vsel %vm564, %v764, -inf
      %777 = vmax.xlane.f32.xlu0 %v776
      %v778 = vpop.xlane.xlu0 %777
      %v779 = vsub.f32 %v753, %v769
      %v780 = vsub.f32 %v756, %v772
      %v781 = vsub.f32 %v761, %v775
      %v782 = vsub.f32 %v764, %v778
      %v783 = vmul.f32 %v779, 1.442695
      %v784 = vpow.pop %v783
      %v785 = vmul.f32 %v780, 1.442695
      %v786 = vpow.pop %v785
      %v787 = vmul.f32 %v781, 1.442695
      %v788 = vpow.pop %v787
      %v789 = vmul.f32 %v782, 1.442695
      %v790 = vpow.pop %v789
      %v791 = vsel %vm564, %v784, 0.0
      %792 = vadd.xlane.f32.xlu0 %v791
      %v793 = vpop.xlane.xlu0 %792
      %v794 = vsel %vm564, %v786, 0.0
      %795 = vadd.xlane.f32.xlu0 %v794
      %v796 = vpop.xlane.xlu0 %795
      %v797 = vsel %vm564, %v788, 0.0
      %798 = vadd.xlane.f32.xlu0 %v797
      %v799 = vpop.xlane.xlu0 %798
      %v800 = vsel %vm564, %v790, 0.0
      %801 = vadd.xlane.f32.xlu0 %v800
      %v802 = vpop.xlane.xlu0 %801
      %v803 = vrcp.pop %v793
      %v804 = vmul.f32 %v784, %v803
      %v805 = vrcp.pop %v796
      %v806 = vmul.f32 %v786, %v805
      %v807 = vrcp.pop %v799
      %v808 = vmul.f32 %v788, %v807
      %v809 = vrcp.pop %v802
      %v810 = vmul.f32 %v790, %v809
      %v811 = vpack.c.bf16 %v806, %v804
      %v812 = vpack.c.bf16 %v810, %v808
      %813 = vrot.lane.b32.xlu0 %v697, 64
      %v814 = vpop.permute.xlu0 %813
      %815 = vrot.lane.b32.xlu0 %v698, 64
      %v816 = vpop.permute.xlu0 %815
      %v820 = vsel %vm564, %v811, 0
      %v823 = vsel %vm564, %v812, 0
      %825 = vmatprep.subr.bf16.mxu0 0
      %826 = vmatpush1.bf16.msra.mxu0 %v814
      %827 = vmatprep.subr.bf16.mxu0 0
      %828 = vmatpush1.bf16.msra.mxu0 %v816
      %829 = vmatprep.subr.bf16.mxu0 0
      %830 = vmatpush1.bf16.msra.mxu0 0
      %831 = vmatprep.subr.bf16.mxu0 0
      %832 = vmatpush1.bf16.msra.mxu0 0
      %833 = vmatprep.subr.bf16.mxu0 0
      %834 = vmatpush1.bf16.msra.mxu0 0
      %835 = vmatprep.subr.bf16.mxu0 0
      %836 = vmatpush1.bf16.msra.mxu0 0
      %837 = vmatprep.subr.bf16.mxu0 0
      %838 = vmatpush1.bf16.msra.mxu0 0
      %839 = vmatprep.subr.bf16.mxu0 0
      %840 = vmatpush1.bf16.msra.mxu0 0
      %841 = vmatprep.subr.bf16.mxu0 0
      %842 = vmatpush1.bf16.msra.mxu0 0
      %843 = vmatprep.subr.bf16.mxu0 0
      %844 = vmatpush1.bf16.msra.mxu0 0
      %845 = vmatprep.subr.bf16.mxu0 0
      %846 = vmatpush1.bf16.msra.mxu0 0
      %847 = vmatprep.subr.bf16.mxu0 0
      %848 = vmatpush1.bf16.msra.mxu0 0
      %849 = vmatprep.subr.bf16.mxu0 0
      %850 = vmatpush1.bf16.msra.mxu0 0
      %851 = vmatprep.subr.bf16.mxu0 0
      %852 = vmatpush1.bf16.msra.mxu0 0
      %853 = vmatprep.subr.bf16.mxu0 0
      %854 = vmatpush1.bf16.msra.mxu0 0
      %855 = vmatprep.subr.bf16.mxu0 0
      %856 = vmatpush1.bf16.msra.mxu0 0
      %857 = vmatprep.mubr.bf16.mxu0 0
      %858 = vmatmul.mubr.bf16.gmra.mrb[0].mxu0 %v820
      %v859 = vpop.f32.mrb[0].mxu0
      %v860 = vadd.f32 0.0, %v859
      %v861 = vpop.f32.mrb[0].mxu0
      %v862 = vpop.f32.mrb[0].mxu0
      %v863 = vadd.f32 0.0, %v862
      %v864 = vpop.f32.mrb[0].mxu0
      %865 = vmatprep.mubr.bf16.mxu0 0
      %866 = vmatmul.mubr.bf16.gmra.mrb[0].mxu0 %v823
      %v867 = vpop.f32.mrb[0].mxu0
      %v868 = vadd.f32 0.0, %v867
      %v869 = vpop.f32.mrb[0].mxu0
      %v870 = vpop.f32.mrb[0].mxu0
      %v871 = vadd.f32 0.0, %v870
      %v872 = vpop.f32.mrb[0].mxu0
      %873 = vdwg.mxu0
      %876 = vrot.lane.b32.xlu0 %v695, 120
      %v877 = vpop.permute.xlu0 %876
      %878 = vrot.lane.b32.xlu0 %v696, 120
      %v879 = vpop.permute.xlu0 %878
      %880 = vrot.lane.b32.xlu0 %v697, 88
      %v881 = vpop.permute.xlu0 %880
      %882 = vrot.lane.b32.xlu0 %v698, 88
      %v883 = vpop.permute.xlu0 %882
      %v885 = vsel %vm705, %v877, 0
      %v888 = vsel %vm705, %v879, 0
      %v891 = vsel %vm705, %v881, 0
      %v894 = vsel %vm705, %v883, 0
      %896 = vmatprep.subr.bf16.mxu0 0
      %897 = vmatpush1.bf16.xpose.msra.mxu0 %v891
      %898 = vmatprep.subr.bf16.mxu0 0
      %899 = vmatpush1.bf16.xpose.msra.mxu0 %v894
      %900 = vmatprep.subr.bf16.mxu0 0
      %901 = vmatpush1.bf16.xpose.msra.mxu0 0
      %902 = vmatprep.subr.bf16.mxu0 0
      %903 = vmatpush1.bf16.xpose.msra.mxu0 0
      %904 = vmatprep.subr.bf16.mxu0 0
      %905 = vmatpush1.bf16.xpose.msra.mxu0 0
      %906 = vmatprep.subr.bf16.mxu0 0
      %907 = vmatpush1.bf16.xpose.msra.mxu0 0
      %908 = vmatprep.subr.bf16.mxu0 0
      %909 = vmatpush1.bf16.xpose.msra.mxu0 0
      %910 = vmatprep.subr.bf16.mxu0 0
      %911 = vmatpush1.bf16.xpose.msra.mxu0 0
      %912 = vmatprep.subr.bf16.mxu0 0
      %913 = vmatpush1.bf16.xpose.msra.mxu0 0
      %914 = vmatprep.subr.bf16.mxu0 0
      %915 = vmatpush1.bf16.xpose.msra.mxu0 0
      %916 = vmatprep.subr.bf16.mxu0 0
      %917 = vmatpush1.bf16.xpose.msra.mxu0 0
      %918 = vmatprep.subr.bf16.mxu0 0
      %919 = vmatpush1.bf16.xpose.msra.mxu0 0
      %920 = vmatprep.subr.bf16.mxu0 0
      %921 = vmatpush1.bf16.xpose.msra.mxu0 0
      %922 = vmatprep.subr.bf16.mxu0 0
      %923 = vmatpush1.bf16.xpose.msra.mxu0 0
      %924 = vmatprep.subr.bf16.mxu0 0
      %925 = vmatpush1.bf16.xpose.msra.mxu0 0
      %926 = vmatprep.subr.bf16.mxu0 0
      %927 = vmatpush1.bf16.xpose.msra.mxu0 0
      %928 = vmatprep.mubr.bf16.mxu0 0
      %929 = vmatmul.mubr.bf16.gmra.mrb[0].mxu0 %v885
      %v930 = vpop.f32.mrb[0].mxu0
      %v931 = vadd.f32 %v514, %v930
      %v932 = vpop.f32.mrb[0].mxu0
      %v933 = vpop.f32.mrb[0].mxu0
      %v934 = vadd.f32 %v514, %v933
      %v935 = vpop.f32.mrb[0].mxu0
      %936 = vmatprep.mubr.bf16.mxu0 0
      %937 = vmatmul.mubr.bf16.gmra.mrb[0].mxu0 %v888
      %v938 = vpop.f32.mrb[0].mxu0
      %v939 = vadd.f32 %v514, %v938
      %v940 = vpop.f32.mrb[0].mxu0
      %v941 = vpop.f32.mrb[0].mxu0
      %v942 = vadd.f32 %v514, %v941
      %v943 = vpop.f32.mrb[0].mxu0
      %944 = vdwg.mxu0
      %v945 = vsel %vm564, %v931, -inf
      %946 = vmax.xlane.f32.xlu0 %v945
      %v947 = vpop.xlane.xlu0 %946
      %v948 = vsel %vm564, %v934, -inf
      %949 = vmax.xlane.f32.xlu0 %v948
      %v950 = vpop.xlane.xlu0 %949
      %v951 = vsel %vm564, %v939, -inf
      %952 = vmax.xlane.f32.xlu0 %v951
      %v953 = vpop.xlane.xlu0 %952
      %v954 = vsel %vm564, %v942, -inf
      %955 = vmax.xlane.f32.xlu0 %v954
      %v956 = vpop.xlane.xlu0 %955
      %v957 = vsub.f32 %v931, %v947
      %v958 = vsub.f32 %v934, %v950
      %v959 = vsub.f32 %v939, %v953
      %v960 = vsub.f32 %v942, %v956
      %v961 = vmul.f32 %v957, 1.442695
      %v962 = vpow.pop %v961
      %v963 = vmul.f32 %v958, 1.442695
      %v964 = vpow.pop %v963
      %v965 = vmul.f32 %v959, 1.442695
      %v966 = vpow.pop %v965
      %v967 = vmul.f32 %v960, 1.442695
      %v968 = vpow.pop %v967
      %v969 = vsel %vm564, %v962, 0.0
      %970 = vadd.xlane.f32.xlu0 %v969
      %v971 = vpop.xlane.xlu0 %970
      %v972 = vsel %vm564, %v964, 0.0
      %973 = vadd.xlane.f32.xlu0 %v972
      %v974 = vpop.xlane.xlu0 %973
      %v975 = vsel %vm564, %v966, 0.0
      %976 = vadd.xlane.f32.xlu0 %v975
      %v977 = vpop.xlane.xlu0 %976
      %v978 = vsel %vm564, %v968, 0.0
      %979 = vadd.xlane.f32.xlu0 %v978
      %v980 = vpop.xlane.xlu0 %979
      %v981 = vrcp.pop %v971
      %v982 = vmul.f32 %v962, %v981
      %v983 = vrcp.pop %v974
      %v984 = vmul.f32 %v964, %v983
      %v985 = vrcp.pop %v977
      %v986 = vmul.f32 %v966, %v985
      %v987 = vrcp.pop %v980
      %v988 = vmul.f32 %v968, %v987
      %v989 = vpack.c.bf16 %v984, %v982
      %v990 = vpack.c.bf16 %v988, %v986
      %991 = vrot.lane.b32.xlu0 %v697, 56
      %v992 = vpop.permute.xlu0 %991
      %993 = vrot.lane.b32.xlu0 %v698, 56
      %v994 = vpop.permute.xlu0 %993
      %v998 = vsel %vm564, %v989, 0
      %v1001 = vsel %vm564, %v990, 0
      %1003 = vmatprep.subr.bf16.mxu0 0
      %1004 = vmatpush1.bf16.msra.mxu0 %v992
      %1005 = vmatprep.subr.bf16.mxu0 0
      %1006 = vmatpush1.bf16.msra.mxu0 %v994
      %1007 = vmatprep.subr.bf16.mxu0 0
      %1008 = vmatpush1.bf16.msra.mxu0 0
      %1009 = vmatprep.subr.bf16.mxu0 0
      %1010 = vmatpush1.bf16.msra.mxu0 0
      %1011 = vmatprep.subr.bf16.mxu0 0
      %1012 = vmatpush1.bf16.msra.mxu0 0
      %1013 = vmatprep.subr.bf16.mxu0 0
      %1014 = vmatpush1.bf16.msra.mxu0 0
      %1015 = vmatprep.subr.bf16.mxu0 0
      %1016 = vmatpush1.bf16.msra.mxu0 0
      %1017 = vmatprep.subr.bf16.mxu0 0
      %1018 = vmatpush1.bf16.msra.mxu0 0
      %1019 = vmatprep.subr.bf16.mxu0 0
      %1020 = vmatpush1.bf16.msra.mxu0 0
      %1021 = vmatprep.subr.bf16.mxu0 0
      %1022 = vmatpush1.bf16.msra.mxu0 0
      %1023 = vmatprep.subr.bf16.mxu0 0
      %1024 = vmatpush1.bf16.msra.mxu0 0
      %1025 = vmatprep.subr.bf16.mxu0 0
      %1026 = vmatpush1.bf16.msra.mxu0 0
      %1027 = vmatprep.subr.bf16.mxu0 0
      %1028 = vmatpush1.bf16.msra.mxu0 0
      %1029 = vmatprep.subr.bf16.mxu0 0
      %1030 = vmatpush1.bf16.msra.mxu0 0
      %1031 = vmatprep.subr.bf16.mxu0 0
      %1032 = vmatpush1.bf16.msra.mxu0 0
      %1033 = vmatprep.subr.bf16.mxu0 0
      %1034 = vmatpush1.bf16.msra.mxu0 0
      %1035 = vmatprep.mubr.bf16.mxu0 0
      %1036 = vmatmul.mubr.bf16.gmra.mrb[0].mxu0 %v998
      %v1037 = vpop.f32.mrb[0].mxu0
      %v1038 = vadd.f32 0.0, %v1037
      %v1039 = vpop.f32.mrb[0].mxu0
      %v1040 = vpop.f32.mrb[0].mxu0
      %v1041 = vadd.f32 0.0, %v1040
      %v1042 = vpop.f32.mrb[0].mxu0
      %1043 = vmatprep.mubr.bf16.mxu0 0
      %1044 = vmatmul.mubr.bf16.gmra.mrb[0].mxu0 %v1001
      %v1045 = vpop.f32.mrb[0].mxu0
      %v1046 = vadd.f32 0.0, %v1045
      %v1047 = vpop.f32.mrb[0].mxu0
      %v1048 = vpop.f32.mrb[0].mxu0
      %v1049 = vadd.f32 0.0, %v1048
      %v1050 = vpop.f32.mrb[0].mxu0
      %1051 = vdwg.mxu0
      %1052 = vrot.lane.b32.xlu0 %v695, 112
      %v1053 = vpop.permute.xlu0 %1052
      %1054 = vrot.lane.b32.xlu0 %v696, 112
      %v1055 = vpop.permute.xlu0 %1054
      %1056 = vrot.lane.b32.xlu0 %v697, 80
      %v1057 = vpop.permute.xlu0 %1056
      %1058 = vrot.lane.b32.xlu0 %v698, 80
      %v1059 = vpop.permute.xlu0 %1058
      %v1061 = vsel %vm705, %v1053, 0
      %v1064 = vsel %vm705, %v1055, 0
      %v1067 = vsel %vm705, %v1057, 0
      %v1070 = vsel %vm705, %v1059, 0
      %1072 = vmatprep.subr.bf16.mxu0 0
      %1073 = vmatpush1.bf16.xpose.msra.mxu0 %v1067
      %1074 = vmatprep.subr.bf16.mxu0 0
      %1075 = vmatpush1.bf16.xpose.msra.mxu0 %v1070
      %1076 = vmatprep.subr.bf16.mxu0 0
      %1077 = vmatpush1.bf16.xpose.msra.mxu0 0
      %1078 = vmatprep.subr.bf16.mxu0 0
      %1079 = vmatpush1.bf16.xpose.msra.mxu0 0
      %1080 = vmatprep.subr.bf16.mxu0 0
      %1081 = vmatpush1.bf16.xpose.msra.mxu0 0
      %1082 = vmatprep.subr.bf16.mxu0 0
      %1083 = vmatpush1.bf16.xpose.msra.mxu0 0
      %1084 = vmatprep.subr.bf16.mxu0 0
      %1085 = vmatpush1.bf16.xpose.msra.mxu0 0
      %1086 = vmatprep.subr.bf16.mxu0 0
      %1087 = vmatpush1.bf16.xpose.msra.mxu0 0
      %1088 = vmatprep.subr.bf16.mxu0 0
      %1089 = vmatpush1.bf16.xpose.msra.mxu0 0
      %1090 = vmatprep.subr.bf16.mxu0 0
      %1091 = vmatpush1.bf16.xpose.msra.mxu0 0
      %1092 = vmatprep.subr.bf16.mxu0 0
      %1093 = vmatpush1.bf16.xpose.msra.mxu0 0
      %1094 = vmatprep.subr.bf16.mxu0 0
      %1095 = vmatpush1.bf16.xpose.msra.mxu0 0
      %1096 = vmatprep.subr.bf16.mxu0 0
      %1097 = vmatpush1.bf16.xpose.msra.mxu0 0
      %1098 = vmatprep.subr.bf16.mxu0 0
      %1099 = vmatpush1.bf16.xpose.msra.mxu0 0
      %1100 = vmatprep.subr.bf16.mxu0 0
      %1101 = vmatpush1.bf16.xpose.msra.mxu0 0
      %1102 = vmatprep.subr.bf16.mxu0 0
      %1103 = vmatpush1.bf16.xpose.msra.mxu0 0
      %1104 = vmatprep.mubr.bf16.mxu0 0
      %1105 = vmatmul.mubr.bf16.gmra.mrb[0].mxu0 %v1061
      %v1106 = vpop.f32.mrb[0].mxu0
      %v1107 = vadd.f32 %v514, %v1106
      %v1108 = vpop.f32.mrb[0].mxu0
      %v1109 = vpop.f32.mrb[0].mxu0
      %v1110 = vadd.f32 %v514, %v1109
      %v1111 = vpop.f32.mrb[0].mxu0
      %1112 = vmatprep.mubr.bf16.mxu0 0
      %1113 = vmatmul.mubr.bf16.gmra.mrb[0].mxu0 %v1064
      %v1114 = vpop.f32.mrb[0].mxu0
      %v1115 = vadd.f32 %v514, %v1114
      %v1116 = vpop.f32.mrb[0].mxu0
      %v1117 = vpop.f32.mrb[0].mxu0
      %v1118 = vadd.f32 %v514, %v1117
      %v1119 = vpop.f32.mrb[0].mxu0
      %1120 = vdwg.mxu0
      %v1121 = vsel %vm564, %v1107, -inf
      %1122 = vmax.xlane.f32.xlu0 %v1121
      %v1123 = vpop.xlane.xlu0 %1122
      %v1124 = vsel %vm564, %v1110, -inf
      %1125 = vmax.xlane.f32.xlu0 %v1124
      %v1126 = vpop.xlane.xlu0 %1125
      %v1127 = vsel %vm564, %v1115, -inf
      %1128 = vmax.xlane.f32.xlu0 %v1127
      %v1129 = vpop.xlane.xlu0 %1128
      %v1130 = vsel %vm564, %v1118, -inf
      %1131 = vmax.xlane.f32.xlu0 %v1130
      %v1132 = vpop.xlane.xlu0 %1131
      %v1133 = vsub.f32 %v1107, %v1123
      %v1134 = vsub.f32 %v1110, %v1126
      %v1135 = vsub.f32 %v1115, %v1129
      %v1136 = vsub.f32 %v1118, %v1132
      %v1137 = vmul.f32 %v1133, 1.442695
      %v1138 = vpow.pop %v1137
      %v1139 = vmul.f32 %v1134, 1.442695
      %v1140 = vpow.pop %v1139
      %v1141 = vmul.f32 %v1135, 1.442695
      %v1142 = vpow.pop %v1141
      %v1143 = vmul.f32 %v1136, 1.442695
      %v1144 = vpow.pop %v1143
      %v1145 = vsel %vm564, %v1138, 0.0
      %1146 = vadd.xlane.f32.xlu0 %v1145
      %v1147 = vpop.xlane.xlu0 %1146
      %v1148 = vsel %vm564, %v1140, 0.0
      %1149 = vadd.xlane.f32.xlu0 %v1148
      %v1150 = vpop.xlane.xlu0 %1149
      %v1151 = vsel %vm564, %v1142, 0.0
      %1152 = vadd.xlane.f32.xlu0 %v1151
      %v1153 = vpop.xlane.xlu0 %1152
      %v1154 = vsel %vm564, %v1144, 0.0
      %1155 = vadd.xlane.f32.xlu0 %v1154
      %v1156 = vpop.xlane.xlu0 %1155
      %v1157 = vrcp.pop %v1147
      %v1158 = vmul.f32 %v1138, %v1157
      %v1159 = vrcp.pop %v1150
      %v1160 = vmul.f32 %v1140, %v1159
      %v1161 = vrcp.pop %v1153
      %v1162 = vmul.f32 %v1142, %v1161
      %v1163 = vrcp.pop %v1156
      %v1164 = vmul.f32 %v1144, %v1163
      %v1165 = vpack.c.bf16 %v1160, %v1158
      %v1166 = vpack.c.bf16 %v1164, %v1162
      %1167 = vrot.lane.b32.xlu0 %v697, 48
      %v1168 = vpop.permute.xlu0 %1167
      %1169 = vrot.lane.b32.xlu0 %v698, 48
      %v1170 = vpop.permute.xlu0 %1169
      %v1174 = vsel %vm564, %v1165, 0
      %v1177 = vsel %vm564, %v1166, 0
      %1179 = vmatprep.subr.bf16.mxu0 0
      %1180 = vmatpush1.bf16.msra.mxu0 %v1168
      %1181 = vmatprep.subr.bf16.mxu0 0
      %1182 = vmatpush1.bf16.msra.mxu0 %v1170
      %1183 = vmatprep.subr.bf16.mxu0 0
      %1184 = vmatpush1.bf16.msra.mxu0 0
      %1185 = vmatprep.subr.bf16.mxu0 0
      %1186 = vmatpush1.bf16.msra.mxu0 0
      %1187 = vmatprep.subr.bf16.mxu0 0
      %1188 = vmatpush1.bf16.msra.mxu0 0
      %1189 = vmatprep.subr.bf16.mxu0 0
      %1190 = vmatpush1.bf16.msra.mxu0 0
      %1191 = vmatprep.subr.bf16.mxu0 0
      %1192 = vmatpush1.bf16.msra.mxu0 0
      %1193 = vmatprep.subr.bf16.mxu0 0
      %1194 = vmatpush1.bf16.msra.mxu0 0
      %1195 = vmatprep.subr.bf16.mxu0 0
      %1196 = vmatpush1.bf16.msra.mxu0 0
      %1197 = vmatprep.subr.bf16.mxu0 0
      %1198 = vmatpush1.bf16.msra.mxu0 0
      %1199 = vmatprep.subr.bf16.mxu0 0
      %1200 = vmatpush1.bf16.msra.mxu0 0
      %1201 = vmatprep.subr.bf16.mxu0 0
      %1202 = vmatpush1.bf16.msra.mxu0 0
      %1203 = vmatprep.subr.bf16.mxu0 0
      %1204 = vmatpush1.bf16.msra.mxu0 0
      %1205 = vmatprep.subr.bf16.mxu0 0
      %1206 = vmatpush1.bf16.msra.mxu0 0
      %1207 = vmatprep.subr.bf16.mxu0 0
      %1208 = vmatpush1.bf16.msra.mxu0 0
      %1209 = vmatprep.subr.bf16.mxu0 0
      %1210 = vmatpush1.bf16.msra.mxu0 0
      %1211 = vmatprep.mubr.bf16.mxu0 0
      %1212 = vmatmul.mubr.bf16.gmra.mrb[0].mxu0 %v1174
      %v1213 = vpop.f32.mrb[0].mxu0
      %v1214 = vadd.f32 0.0, %v1213
      %v1215 = vpop.f32.mrb[0].mxu0
      %v1216 = vpop.f32.mrb[0].mxu0
      %v1217 = vadd.f32 0.0, %v1216
      %v1218 = vpop.f32.mrb[0].mxu0
      %1219 = vmatprep.mubr.bf16.mxu0 0
      %1220 = vmatmul.mubr.bf16.gmra.mrb[0].mxu0 %v1177
      %v1221 = vpop.f32.mrb[0].mxu0
      %v1222 = vadd.f32 0.0, %v1221
      %v1223 = vpop.f32.mrb[0].mxu0
      %v1224 = vpop.f32.mrb[0].mxu0
      %v1225 = vadd.f32 0.0, %v1224
      %v1226 = vpop.f32.mrb[0].mxu0
      %1227 = vdwg.mxu0
      %1228 = vrot.lane.b32.xlu0 %v695, 104
      %v1229 = vpop.permute.xlu0 %1228
      %1230 = vrot.lane.b32.xlu0 %v696, 104
      %v1231 = vpop.permute.xlu0 %1230
      %1232 = vrot.lane.b32.xlu0 %v697, 72
      %v1233 = vpop.permute.xlu0 %1232
      %1234 = vrot.lane.b32.xlu0 %v698, 72
      %v1235 = vpop.permute.xlu0 %1234
      %v1237 = vsel %vm705, %v1229, 0
      %v1240 = vsel %vm705, %v1231, 0
      %v1243 = vsel %vm705, %v1233, 0
      %v1246 = vsel %vm705, %v1235, 0
      %1248 = vmatprep.subr.bf16.mxu0 0
      %1249 = vmatpush1.bf16.xpose.msra.mxu0 %v1243
      %1250 = vmatprep.subr.bf16.mxu0 0
      %1251 = vmatpush1.bf16.xpose.msra.mxu0 %v1246
      %1252 = vmatprep.subr.bf16.mxu0 0
      %1253 = vmatpush1.bf16.xpose.msra.mxu0 0
      %1254 = vmatprep.subr.bf16.mxu0 0
      %1255 = vmatpush1.bf16.xpose.msra.mxu0 0
      %1256 = vmatprep.subr.bf16.mxu0 0
      %1257 = vmatpush1.bf16.xpose.msra.mxu0 0
      %1258 = vmatprep.subr.bf16.mxu0 0
      %1259 = vmatpush1.bf16.xpose.msra.mxu0 0
      %1260 = vmatprep.subr.bf16.mxu0 0
      %1261 = vmatpush1.bf16.xpose.msra.mxu0 0
      %1262 = vmatprep.subr.bf16.mxu0 0
      %1263 = vmatpush1.bf16.xpose.msra.mxu0 0
      %1264 = vmatprep.subr.bf16.mxu0 0
      %1265 = vmatpush1.bf16.xpose.msra.mxu0 0
      %1266 = vmatprep.subr.bf16.mxu0 0
      %1267 = vmatpush1.bf16.xpose.msra.mxu0 0
      %1268 = vmatprep.subr.bf16.mxu0 0
      %1269 = vmatpush1.bf16.xpose.msra.mxu0 0
      %1270 = vmatprep.subr.bf16.mxu0 0
      %1271 = vmatpush1.bf16.xpose.msra.mxu0 0
      %1272 = vmatprep.subr.bf16.mxu0 0
      %1273 = vmatpush1.bf16.xpose.msra.mxu0 0
      %1274 = vmatprep.subr.bf16.mxu0 0
      %1275 = vmatpush1.bf16.xpose.msra.mxu0 0
      %1276 = vmatprep.subr.bf16.mxu0 0
      %1277 = vmatpush1.bf16.xpose.msra.mxu0 0
      %1278 = vmatprep.subr.bf16.mxu0 0
      %1279 = vmatpush1.bf16.xpose.msra.mxu0 0
      %1280 = vmatprep.mubr.bf16.mxu0 0
      %1281 = vmatmul.mubr.bf16.gmra.mrb[0].mxu0 %v1237
      %v1282 = vpop.f32.mrb[0].mxu0
      %v1283 = vadd.f32 %v514, %v1282
      %v1284 = vpop.f32.mrb[0].mxu0
      %v1285 = vpop.f32.mrb[0].mxu0
      %v1286 = vadd.f32 %v514, %v1285
      %v1287 = vpop.f32.mrb[0].mxu0
      %1288 = vmatprep.mubr.bf16.mxu0 0
      %1289 = vmatmul.mubr.bf16.gmra.mrb[0].mxu0 %v1240
      %v1290 = vpop.f32.mrb[0].mxu0
      %v1291 = vadd.f32 %v514, %v1290
      %v1292 = vpop.f32.mrb[0].mxu0
      %v1293 = vpop.f32.mrb[0].mxu0
      %v1294 = vadd.f32 %v514, %v1293
      %v1295 = vpop.f32.mrb[0].mxu0
      %1296 = vdwg.mxu0
      %v1297 = vsel %vm564, %v1283, -inf
      %1298 = vmax.xlane.f32.xlu0 %v1297
      %v1299 = vpop.xlane.xlu0 %1298
      %v1300 = vsel %vm564, %v1286, -inf
      %1301 = vmax.xlane.f32.xlu0 %v1300
      %v1302 = vpop.xlane.xlu0 %1301
      %v1303 = vsel %vm564, %v1291, -inf
      %1304 = vmax.xlane.f32.xlu0 %v1303
      %v1305 = vpop.xlane.xlu0 %1304
      %v1306 = vsel %vm564, %v1294, -inf
      %1307 = vmax.xlane.f32.xlu0 %v1306
      %v1308 = vpop.xlane.xlu0 %1307
      %v1309 = vsub.f32 %v1283, %v1299
      %v1310 = vsub.f32 %v1286, %v1302
      %v1311 = vsub.f32 %v1291, %v1305
      %v1312 = vsub.f32 %v1294, %v1308
      %v1313 = vmul.f32 %v1309, 1.442695
      %v1314 = vpow.pop %v1313
      %v1315 = vmul.f32 %v1310, 1.442695
      %v1316 = vpow.pop %v1315
      %v1317 = vmul.f32 %v1311, 1.442695
      %v1318 = vpow.pop %v1317
      %v1319 = vmul.f32 %v1312, 1.442695
      %v1320 = vpow.pop %v1319
      %v1321 = vsel %vm564, %v1314, 0.0
      %1322 = vadd.xlane.f32.xlu0 %v1321
      %v1323 = vpop.xlane.xlu0 %1322
      %v1324 = vsel %vm564, %v1316, 0.0
      %1325 = vadd.xlane.f32.xlu0 %v1324
      %v1326 = vpop.xlane.xlu0 %1325
      %v1327 = vsel %vm564, %v1318, 0.0
      %1328 = vadd.xlane.f32.xlu0 %v1327
      %v1329 = vpop.xlane.xlu0 %1328
      %v1330 = vsel %vm564, %v1320, 0.0
      %1331 = vadd.xlane.f32.xlu0 %v1330
      %v1332 = vpop.xlane.xlu0 %1331
      %v1333 = vrcp.pop %v1323
      %v1334 = vmul.f32 %v1314, %v1333
      %v1335 = vrcp.pop %v1326
      %v1336 = vmul.f32 %v1316, %v1335
      %v1337 = vrcp.pop %v1329
      %v1338 = vmul.f32 %v1318, %v1337
      %v1339 = vrcp.pop %v1332
      %v1340 = vmul.f32 %v1320, %v1339
      %v1341 = vpack.c.bf16 %v1336, %v1334
      %v1342 = vpack.c.bf16 %v1340, %v1338
      %1343 = vrot.lane.b32.xlu0 %v697, 40
      %v1344 = vpop.permute.xlu0 %1343
      %1345 = vrot.lane.b32.xlu0 %v698, 40
      %v1346 = vpop.permute.xlu0 %1345
      %v1350 = vsel %vm564, %v1341, 0
      %v1353 = vsel %vm564, %v1342, 0
      %1355 = vmatprep.subr.bf16.mxu0 0
      %1356 = vmatpush1.bf16.msra.mxu0 %v1344
      %1357 = vmatprep.subr.bf16.mxu0 0
      %1358 = vmatpush1.bf16.msra.mxu0 %v1346
      %1359 = vmatprep.subr.bf16.mxu0 0
      %1360 = vmatpush1.bf16.msra.mxu0 0
      %1361 = vmatprep.subr.bf16.mxu0 0
      %1362 = vmatpush1.bf16.msra.mxu0 0
      %1363 = vmatprep.subr.bf16.mxu0 0
      %1364 = vmatpush1.bf16.msra.mxu0 0
      %1365 = vmatprep.subr.bf16.mxu0 0
      %1366 = vmatpush1.bf16.msra.mxu0 0
      %1367 = vmatprep.subr.bf16.mxu0 0
      %1368 = vmatpush1.bf16.msra.mxu0 0
      %1369 = vmatprep.subr.bf16.mxu0 0
      %1370 = vmatpush1.bf16.msra.mxu0 0
      %1371 = vmatprep.subr.bf16.mxu0 0
      %1372 = vmatpush1.bf16.msra.mxu0 0
      %1373 = vmatprep.subr.bf16.mxu0 0
      %1374 = vmatpush1.bf16.msra.mxu0 0
      %1375 = vmatprep.subr.bf16.mxu0 0
      %1376 = vmatpush1.bf16.msra.mxu0 0
      %1377 = vmatprep.subr.bf16.mxu0 0
      %1378 = vmatpush1.bf16.msra.mxu0 0
      %1379 = vmatprep.subr.bf16.mxu0 0
      %1380 = vmatpush1.bf16.msra.mxu0 0
      %1381 = vmatprep.subr.bf16.mxu0 0
      %1382 = vmatpush1.bf16.msra.mxu0 0
      %1383 = vmatprep.subr.bf16.mxu0 0
      %1384 = vmatpush1.bf16.msra.mxu0 0
      %1385 = vmatprep.subr.bf16.mxu0 0
      %1386 = vmatpush1.bf16.msra.mxu0 0
      %1387 = vmatprep.mubr.bf16.mxu0 0
      %1388 = vmatmul.mubr.bf16.gmra.mrb[0].mxu0 %v1350
      %v1389 = vpop.f32.mrb[0].mxu0
      %v1390 = vadd.f32 0.0, %v1389
      %v1391 = vpop.f32.mrb[0].mxu0
      %v1392 = vpop.f32.mrb[0].mxu0
      %v1393 = vadd.f32 0.0, %v1392
      %v1394 = vpop.f32.mrb[0].mxu0
      %1395 = vmatprep.mubr.bf16.mxu0 0
      %1396 = vmatmul.mubr.bf16.gmra.mrb[0].mxu0 %v1353
      %v1397 = vpop.f32.mrb[0].mxu0
      %v1398 = vadd.f32 0.0, %v1397
      %v1399 = vpop.f32.mrb[0].mxu0
      %v1400 = vpop.f32.mrb[0].mxu0
      %v1401 = vadd.f32 0.0, %v1400
      %v1402 = vpop.f32.mrb[0].mxu0
      %1403 = vdwg.mxu0
      %1408 = vrot.lane.b32.xlu0 %v1038, 8
      %v1409 = vpop.permute.xlu0 %1408
      %1410 = vrot.lane.b32.xlu0 %v1041, 8
      %v1411 = vpop.permute.xlu0 %1410
      %1412 = vrot.lane.b32.xlu0 %v1046, 8
      %v1413 = vpop.permute.xlu0 %1412
      %1414 = vrot.lane.b32.xlu0 %v1049, 8
      %v1415 = vpop.permute.xlu0 %1414
      %1424 = vrot.lane.b32.xlu0 %v1214, 16
      %v1425 = vpop.permute.xlu0 %1424
      %1426 = vrot.lane.b32.xlu0 %v1217, 16
      %v1427 = vpop.permute.xlu0 %1426
      %1428 = vrot.lane.b32.xlu0 %v1222, 16
      %v1429 = vpop.permute.xlu0 %1428
      %1430 = vrot.lane.b32.xlu0 %v1225, 16
      %v1431 = vpop.permute.xlu0 %1430
      %1440 = vrot.lane.b32.xlu0 %v1390, 24
      %v1441 = vpop.permute.xlu0 %1440
      %1442 = vrot.lane.b32.xlu0 %v1393, 24
      %v1443 = vpop.permute.xlu0 %1442
      %1444 = vrot.lane.b32.xlu0 %v1398, 24
      %v1445 = vpop.permute.xlu0 %1444
      %1446 = vrot.lane.b32.xlu0 %v1401, 24
      %v1447 = vpop.permute.xlu0 %1446
      %v1452 = vsel %vm705, %v860, %v1409
      %v1453 = vsel %vm705, %v863, %v1411
      %v1454 = vsel %vm705, %v868, %v1413
      %v1455 = vsel %vm705, %v871, %v1415
      %vm1456 = vcmask 130048
      %v1457 = vsel %vm1456, %v1452, %v1425
      %v1458 = vsel %vm1456, %v1453, %v1427
      %v1459 = vsel %vm1456, %v1454, %v1429
      %v1460 = vsel %vm1456, %v1455, %v1431
      %vm1461 = vcmask 195584
      %v1462 = vsel %vm1461, %v1457, %v1441
      %v1463 = vsel %vm1461, %v1458, %v1443
      %v1464 = vsel %vm1461, %v1459, %v1445
      %v1465 = vsel %vm1461, %v1460, %v1447
      %v1466 = vpack.c.bf16 %v1463, %v1462
      %v1467 = vpack.c.bf16 %v1465, %v1464
      %v1468 = vlaneseq
      %v1469 = vshrl.u32 %v1468, 7
      %v1470 = vsub.s32 0, %v1469
      %v1471 = vrot.slane %v529, %v1470
      %v1473 = vsel %vm564, %v1466, 0
      %v1476 = vsel %vm564, %v1467, 0
      %1478 = vmatprep.subr.bf16.mxu0 0
      %1479 = vmatpush1.bf16.msra.mxu0 %v527
      %1480 = vmatprep.subr.bf16.mxu0 0
      %1481 = vmatpush1.bf16.msra.mxu0 %v528
      %1482 = vmatprep.subr.bf16.mxu0 0
      %1483 = vmatpush1.bf16.msra.mxu0 0
      %1484 = vmatprep.subr.bf16.mxu0 0
      %1485 = vmatpush1.bf16.msra.mxu0 0
      %1486 = vmatprep.subr.bf16.mxu0 0
      %1487 = vmatpush1.bf16.msra.mxu0 0
      %1488 = vmatprep.subr.bf16.mxu0 0
      %1489 = vmatpush1.bf16.msra.mxu0 0
      %1490 = vmatprep.subr.bf16.mxu0 0
      %1491 = vmatpush1.bf16.msra.mxu0 0
      %1492 = vmatprep.subr.bf16.mxu0 0
      %1493 = vmatpush1.bf16.msra.mxu0 0
      %1494 = vmatprep.subr.bf16.mxu0 0
      %1495 = vmatpush1.bf16.msra.mxu0 0
      %1496 = vmatprep.subr.bf16.mxu0 0
      %1497 = vmatpush1.bf16.msra.mxu0 0
      %1498 = vmatprep.subr.bf16.mxu0 0
      %1499 = vmatpush1.bf16.msra.mxu0 0
      %1500 = vmatprep.subr.bf16.mxu0 0
      %1501 = vmatpush1.bf16.msra.mxu0 0
      %1502 = vmatprep.subr.bf16.mxu0 0
      %1503 = vmatpush1.bf16.msra.mxu0 0
      %1504 = vmatprep.subr.bf16.mxu0 0
      %1505 = vmatpush1.bf16.msra.mxu0 0
      %1506 = vmatprep.subr.bf16.mxu0 0
      %1507 = vmatpush1.bf16.msra.mxu0 0
      %1508 = vmatprep.subr.bf16.mxu0 0
      %1509 = vmatpush1.bf16.msra.mxu0 0
      %1510 = vmatprep.mubr.bf16.mxu0 0
      %1511 = vmatmul.mubr.bf16.gmra.mrb[0].mxu0 %v1473
      %v1512 = vpop.f32.mrb[0].mxu0
      %v1513 = vadd.f32 %v1471, %v1512
      %v1514 = vpop.f32.mrb[0].mxu0
      %v1515 = vpop.f32.mrb[0].mxu0
      %v1516 = vadd.f32 %v1471, %v1515
      %v1517 = vpop.f32.mrb[0].mxu0
      %1518 = vmatprep.mubr.bf16.mxu0 0
      %1519 = vmatmul.mubr.bf16.gmra.mrb[0].mxu0 %v1476
      %v1520 = vpop.f32.mrb[0].mxu0
      %v1521 = vadd.f32 %v1471, %v1520
      %v1522 = vpop.f32.mrb[0].mxu0
      %v1523 = vpop.f32.mrb[0].mxu0
      %v1524 = vadd.f32 %v1471, %v1523
      %v1525 = vpop.f32.mrb[0].mxu0
      %1526 = vdwg.mxu0
      %v1527 = vadd.f32 %v497, %v1513
      %v1528 = vadd.f32 %v500, %v1516
      %v1529 = vadd.f32 %v505, %v1521
      %v1530 = vadd.f32 %v508, %v1524
      %v1531 = vsel %vm564, %v1527, 0.0
      %1532 = vadd.xlane.f32.xlu0 %v1531
      %v1533 = vpop.xlane.xlu0 %1532
      %v1534 = vsel %vm564, %v1528, 0.0
      %1535 = vadd.xlane.f32.xlu0 %v1534
      %v1536 = vpop.xlane.xlu0 %1535
      %v1537 = vsel %vm564, %v1529, 0.0
      %1538 = vadd.xlane.f32.xlu0 %v1537
      %v1539 = vpop.xlane.xlu0 %1538
      %v1540 = vsel %vm564, %v1530, 0.0
      %1541 = vadd.xlane.f32.xlu0 %v1540
      %v1542 = vpop.xlane.xlu0 %1541
      %v1543 = vmul.f32 %v1533, %v577
      %v1544 = vmul.f32 %v1536, %v577
      %v1545 = vmul.f32 %v1539, %v577
      %v1546 = vmul.f32 %v1542, %v577
      %v1547 = vsub.f32 %v1527, %v1543
      %v1548 = vsub.f32 %v1528, %v1544
      %v1549 = vsub.f32 %v1529, %v1545
      %v1550 = vsub.f32 %v1530, %v1546
      %v1551 = vmul.f32 %v1547, %v1547
      %v1552 = vmul.f32 %v1548, %v1548
      %v1553 = vmul.f32 %v1549, %v1549
      %v1554 = vmul.f32 %v1550, %v1550
      %v1555 = vsel %vm564, %v1551, 0.0
      %1556 = vadd.xlane.f32.xlu0 %v1555
      %v1557 = vpop.xlane.xlu0 %1556
      %v1558 = vsel %vm564, %v1552, 0.0
      %1559 = vadd.xlane.f32.xlu0 %v1558
      %v1560 = vpop.xlane.xlu0 %1559
      %v1561 = vsel %vm564, %v1553, 0.0
      %1562 = vadd.xlane.f32.xlu0 %v1561
      %v1563 = vpop.xlane.xlu0 %1562
      %v1564 = vsel %vm564, %v1554, 0.0
      %1565 = vadd.xlane.f32.xlu0 %v1564
      %v1566 = vpop.xlane.xlu0 %1565
      %v1567 = vmul.f32 %v1557, %v577
      %v1568 = vmul.f32 %v1560, %v577
      %v1569 = vmul.f32 %v1563, %v577
      %v1570 = vmul.f32 %v1566, %v577
      %v1571 = vadd.f32 %v1567, 1e-05
      %v1572 = vadd.f32 %v1568, 1e-05
      %v1573 = vadd.f32 %v1569, 1e-05
      %v1574 = vadd.f32 %v1570, 1e-05
      %v1575 = vrsqrt.pop %v1571
      %v1576 = vrsqrt.pop %v1572
      %v1577 = vrsqrt.pop %v1573
      %v1578 = vrsqrt.pop %v1574
      %v1579 = vmul.f32 %v1547, %v1575
      %v1580 = vmul.f32 %v1548, %v1576
      %v1581 = vmul.f32 %v1549, %v1577
      %v1582 = vmul.f32 %v1550, %v1578
      %v1583 = vlaneseq
      %v1584 = vshrl.u32 %v1583, 7
      %v1585 = vsub.s32 0, %v1584
      %v1586 = vrot.slane %v530, %v1585
      %v1587 = vmul.f32 %v1579, %v1586
      %v1588 = vmul.f32 %v1580, %v1586
      %v1589 = vmul.f32 %v1581, %v1586
      %v1590 = vmul.f32 %v1582, %v1586
      %v1591 = vlaneseq
      %v1592 = vshrl.u32 %v1591, 7
      %v1593 = vsub.s32 0, %v1592
      %v1594 = vrot.slane %v531, %v1593
      %v1595 = vadd.f32 %v1587, %v1594
      %v1596 = vadd.f32 %v1588, %v1594
      %v1597 = vadd.f32 %v1589, %v1594
      %v1598 = vadd.f32 %v1590, %v1594
      %v1599 = vpack.c.bf16 %v1596, %v1595
      %v1600 = vpack.c.bf16 %v1598, %v1597
      %v1601 = vlaneseq
      %v1602 = vshrl.u32 %v1601, 7
      %v1603 = vsub.s32 0, %v1602
      %v1604 = vrot.slane %v538, %v1603
      %v1606 = vsel %vm564, %v1599, 0
      %v1609 = vsel %vm564, %v1600, 0
      %1611 = vmatprep.subr.bf16.mxu0 0
      %1612 = vmatpush1.bf16.msra.mxu0 %v536
      %1613 = vmatprep.subr.bf16.mxu0 0
      %1614 = vmatpush1.bf16.msra.mxu0 %v537
      %1615 = vmatprep.subr.bf16.mxu0 0
      %1616 = vmatpush1.bf16.msra.mxu0 0
      %1617 = vmatprep.subr.bf16.mxu0 0
      %1618 = vmatpush1.bf16.msra.mxu0 0
      %1619 = vmatprep.subr.bf16.mxu0 0
      %1620 = vmatpush1.bf16.msra.mxu0 0
      %1621 = vmatprep.subr.bf16.mxu0 0
      %1622 = vmatpush1.bf16.msra.mxu0 0
      %1623 = vmatprep.subr.bf16.mxu0 0
      %1624 = vmatpush1.bf16.msra.mxu0 0
      %1625 = vmatprep.subr.bf16.mxu0 0
      %1626 = vmatpush1.bf16.msra.mxu0 0
      %1627 = vmatprep.subr.bf16.mxu0 0
      %1628 = vmatpush1.bf16.msra.mxu0 0
      %1629 = vmatprep.subr.bf16.mxu0 0
      %1630 = vmatpush1.bf16.msra.mxu0 0
      %1631 = vmatprep.subr.bf16.mxu0 0
      %1632 = vmatpush1.bf16.msra.mxu0 0
      %1633 = vmatprep.subr.bf16.mxu0 0
      %1634 = vmatpush1.bf16.msra.mxu0 0
      %1635 = vmatprep.subr.bf16.mxu0 0
      %1636 = vmatpush1.bf16.msra.mxu0 0
      %1637 = vmatprep.subr.bf16.mxu0 0
      %1638 = vmatpush1.bf16.msra.mxu0 0
      %1639 = vmatprep.subr.bf16.mxu0 0
      %1640 = vmatpush1.bf16.msra.mxu0 0
      %1641 = vmatprep.subr.bf16.mxu0 0
      %1642 = vmatpush1.bf16.msra.mxu0 0
      %1643 = vmatprep.mubr.bf16.mxu0 0
      %1644 = vmatmul.mubr.bf16.gmra.mrb[0].mxu0 %v1606
      %v1645 = vpop.f32.mrb[0].mxu0
      %v1646 = vadd.f32 %v1604, %v1645
      %v1647 = vpop.f32.mrb[0].mxu0
      %v1648 = vpop.f32.mrb[0].mxu0
      %v1649 = vadd.f32 %v1604, %v1648
      %v1650 = vpop.f32.mrb[0].mxu0
      %1651 = vmatprep.mubr.bf16.mxu0 0
      %1652 = vmatmul.mubr.bf16.gmra.mrb[0].mxu0 %v1609
      %v1653 = vpop.f32.mrb[0].mxu0
      %v1654 = vadd.f32 %v1604, %v1653
      %v1655 = vpop.f32.mrb[0].mxu0
      %v1656 = vpop.f32.mrb[0].mxu0
      %v1657 = vadd.f32 %v1604, %v1656
      %v1658 = vpop.f32.mrb[0].mxu0
      %1659 = vdwg.mxu0
      %v1660 = vmul.f32 %v1646, 0.5
      %v1661 = vmul.f32 %v1649, 0.5
      %v1662 = vmul.f32 %v1654, 0.5
      %v1663 = vmul.f32 %v1657, 0.5
      %v1664 = vmul.f32 %v1646, 0.70710677
      %v1665 = vmul.f32 %v1649, 0.70710677
      %v1666 = vmul.f32 %v1654, 0.70710677
      %v1667 = vmul.f32 %v1657, 0.70710677
      %vm1668 = vcmp.ge.f32.partialorder %v1664, 0.0
      %vm1669 = vcmp.ge.f32.partialorder %v1665, 0.0
      %vm1670 = vcmp.ge.f32.partialorder %v1666, 0.0
      %vm1671 = vcmp.ge.f32.partialorder %v1667, 0.0
      %v1672 = vsel %vm1668, 1.0, -1.0
      %v1673 = vsel %vm1669, 1.0, -1.0
      %v1674 = vsel %vm1670, 1.0, -1.0
      %v1675 = vsel %vm1671, 1.0, -1.0
      %v1676 = vand.u32 2147483647, %v1664
      %v1677 = vand.u32 2147483647, %v1665
      %v1678 = vand.u32 2147483647, %v1666
      %v1679 = vand.u32 2147483647, %v1667
      %v1680 = vmul.f32 %v1676, 0.3275911
      %v1681 = vmul.f32 %v1677, 0.3275911
      %v1682 = vmul.f32 %v1678, 0.3275911
      %v1683 = vmul.f32 %v1679, 0.3275911
      %v1684 = vadd.f32 %v1680, 1.0
      %v1685 = vadd.f32 %v1681, 1.0
      %v1686 = vadd.f32 %v1682, 1.0
      %v1687 = vadd.f32 %v1683, 1.0
      %v1688 = vrcp.pop %v1684
      %v1689 = vmul.f32 1.0, %v1688
      %v1690 = vrcp.pop %v1685
      %v1691 = vmul.f32 1.0, %v1690
      %v1692 = vrcp.pop %v1686
      %v1693 = vmul.f32 1.0, %v1692
      %v1694 = vrcp.pop %v1687
      %v1695 = vmul.f32 1.0, %v1694
      %v1696 = vmul.f32 %v1689, 1.0614054
      %v1697 = vmul.f32 %v1691, 1.0614054
      %v1698 = vmul.f32 %v1693, 1.0614054
      %v1699 = vmul.f32 %v1695, 1.0614054
      %v1700 = vadd.f32 %v1696, -1.4531521
      %v1701 = vadd.f32 %v1697, -1.4531521
      %v1702 = vadd.f32 %v1698, -1.4531521
      %v1703 = vadd.f32 %v1699, -1.4531521
      %v1704 = vmul.f32 %v1700, %v1689
      %v1705 = vmul.f32 %v1701, %v1691
      %v1706 = vmul.f32 %v1702, %v1693
      %v1707 = vmul.f32 %v1703, %v1695
      %v1708 = vadd.f32 %v1704, 1.4214138
      %v1709 = vadd.f32 %v1705, 1.4214138
      %v1710 = vadd.f32 %v1706, 1.4214138
      %v1711 = vadd.f32 %v1707, 1.4214138
      %v1712 = vmul.f32 %v1708, %v1689
      %v1713 = vmul.f32 %v1709, %v1691
      %v1714 = vmul.f32 %v1710, %v1693
      %v1715 = vmul.f32 %v1711, %v1695
      %v1716 = vadd.f32 %v1712, -0.28449672
      %v1717 = vadd.f32 %v1713, -0.28449672
      %v1718 = vadd.f32 %v1714, -0.28449672
      %v1719 = vadd.f32 %v1715, -0.28449672
      %v1720 = vmul.f32 %v1716, %v1689
      %v1721 = vmul.f32 %v1717, %v1691
      %v1722 = vmul.f32 %v1718, %v1693
      %v1723 = vmul.f32 %v1719, %v1695
      %v1724 = vadd.f32 %v1720, 0.2548296
      %v1725 = vadd.f32 %v1721, 0.2548296
      %v1726 = vadd.f32 %v1722, 0.2548296
      %v1727 = vadd.f32 %v1723, 0.2548296
      %v1728 = vmul.f32 %v1724, %v1689
      %v1729 = vmul.f32 %v1725, %v1691
      %v1730 = vmul.f32 %v1726, %v1693
      %v1731 = vmul.f32 %v1727, %v1695
      %v1732 = vsub.f32 0.0, %v1676
      %v1733 = vsub.f32 0.0, %v1677
      %v1734 = vsub.f32 0.0, %v1678
      %v1735 = vsub.f32 0.0, %v1679
      %v1736 = vmul.f32 %v1732, %v1676
      %v1737 = vmul.f32 %v1733, %v1677
      %v1738 = vmul.f32 %v1734, %v1678
      %v1739 = vmul.f32 %v1735, %v1679
      %v1740 = vmul.f32 %v1736, 1.442695
      %v1741 = vpow.pop %v1740
      %v1742 = vmul.f32 %v1737, 1.442695
      %v1743 = vpow.pop %v1742
      %v1744 = vmul.f32 %v1738, 1.442695
      %v1745 = vpow.pop %v1744
      %v1746 = vmul.f32 %v1739, 1.442695
      %v1747 = vpow.pop %v1746
      %v1748 = vmul.f32 %v1728, %v1741
      %v1749 = vmul.f32 %v1729, %v1743
      %v1750 = vmul.f32 %v1730, %v1745
      %v1751 = vmul.f32 %v1731, %v1747
      %v1752 = vsub.f32 1.0, %v1748
      %v1753 = vsub.f32 1.0, %v1749
      %v1754 = vsub.f32 1.0, %v1750
      %v1755 = vsub.f32 1.0, %v1751
      %v1756 = vmul.f32 %v1672, %v1752
      %v1757 = vmul.f32 %v1673, %v1753
      %v1758 = vmul.f32 %v1674, %v1754
      %v1759 = vmul.f32 %v1675, %v1755
      %v1760 = vadd.f32 %v1756, 1.0
      %v1761 = vadd.f32 %v1757, 1.0
      %v1762 = vadd.f32 %v1758, 1.0
      %v1763 = vadd.f32 %v1759, 1.0
      %v1764 = vmul.f32 %v1660, %v1760
      %v1765 = vmul.f32 %v1661, %v1761
      %v1766 = vmul.f32 %v1662, %v1762
      %v1767 = vmul.f32 %v1663, %v1763
      %v1768 = vpack.c.bf16 %v1765, %v1764
      %v1769 = vpack.c.bf16 %v1767, %v1766
      %v1770 = vlaneseq
      %v1771 = vshrl.u32 %v1770, 7
      %v1772 = vsub.s32 0, %v1771
      %v1773 = vrot.slane %v563, %v1772
      %1774 = vmatprep.subr.bf16.mxu0 0
      %1775 = vmatpush1.bf16.msra.mxu0 %v555
      %1776 = vmatprep.subr.bf16.mxu0 0
      %1777 = vmatpush1.bf16.msra.mxu0 %v556
      %1778 = vmatprep.subr.bf16.mxu0 0
      %1779 = vmatpush1.bf16.msra.mxu0 %v557
      %1780 = vmatprep.subr.bf16.mxu0 0
      %1781 = vmatpush1.bf16.msra.mxu0 %v558
      %1782 = vmatprep.subr.bf16.mxu0 0
      %1783 = vmatpush1.bf16.msra.mxu0 %v559
      %1784 = vmatprep.subr.bf16.mxu0 0
      %1785 = vmatpush1.bf16.msra.mxu0 %v560
      %1786 = vmatprep.subr.bf16.mxu0 0
      %1787 = vmatpush1.bf16.msra.mxu0 %v561
      %1788 = vmatprep.subr.bf16.mxu0 0
      %1789 = vmatpush1.bf16.msra.mxu0 %v562
      %1790 = vmatprep.subr.bf16.mxu0 0
      %1791 = vmatpush1.bf16.msra.mxu0 0
      %1792 = vmatprep.subr.bf16.mxu0 0
      %1793 = vmatpush1.bf16.msra.mxu0 0
      %1794 = vmatprep.subr.bf16.mxu0 0
      %1795 = vmatpush1.bf16.msra.mxu0 0
      %1796 = vmatprep.subr.bf16.mxu0 0
      %1797 = vmatpush1.bf16.msra.mxu0 0
      %1798 = vmatprep.subr.bf16.mxu0 0
      %1799 = vmatpush1.bf16.msra.mxu0 0
      %1800 = vmatprep.subr.bf16.mxu0 0
      %1801 = vmatpush1.bf16.msra.mxu0 0
      %1802 = vmatprep.subr.bf16.mxu0 0
      %1803 = vmatpush1.bf16.msra.mxu0 0
      %1804 = vmatprep.subr.bf16.mxu0 0
      %1805 = vmatpush1.bf16.msra.mxu0 0
      %1806 = vmatprep.mubr.bf16.mxu0 0
      %1807 = vmatmul.mubr.bf16.gmra.mrb[0].mxu0 %v1768
      %v1808 = vpop.f32.mrb[0].mxu0
      %v1809 = vadd.f32 %v1773, %v1808
      %v1810 = vpop.f32.mrb[0].mxu0
      %v1811 = vpop.f32.mrb[0].mxu0
      %v1812 = vadd.f32 %v1773, %v1811
      %v1813 = vpop.f32.mrb[0].mxu0
      %1814 = vmatprep.mubr.bf16.mxu0 0
      %1815 = vmatmul.mubr.bf16.gmra.mrb[0].mxu0 %v1769
      %v1816 = vpop.f32.mrb[0].mxu0
      %v1817 = vadd.f32 %v1773, %v1816
      %v1818 = vpop.f32.mrb[0].mxu0
      %v1819 = vpop.f32.mrb[0].mxu0
      %v1820 = vadd.f32 %v1773, %v1819
      %v1821 = vpop.f32.mrb[0].mxu0
      %1822 = vdwg.mxu0
      %v1823 = vadd.f32 %v1527, %v1809
      %v1824 = vadd.f32 %v1528, %v1812
      %v1825 = vadd.f32 %v1529, %v1817
      %v1826 = vadd.f32 %v1530, %v1820
      %s1827 = scalar_lea.vmem %s4, 232
      %v1828 = vld [vmem:[%s1827] sm:$0x1]
      %v1829 = vld [vmem:[%s1827 + $0x1] sm:$0x1]
      %v1830 = vld [vmem:[%s1827 + $0x8] sm:$0xff]
      %v1831 = vld [vmem:[%s1827 + $0x10] sm:$0xff]
      %v1832 = vld [vmem:[%s1827 + $0x18] sm:$0xff]
      %v1833 = vld [vmem:[%s1827 + $0x20] sm:$0xff]
      %v1834 = vpack.c.bf16 %v1831, %v1830
      %v1835 = vpack.c.bf16 %v1833, %v1832
      %v1836 = vld [vmem:[%s1827 + $0x28] sm:$0xff]
      %v1837 = vld [vmem:[%s1827 + $0x30] sm:$0xff]
      %v1838 = vld [vmem:[%s1827 + $0x38] sm:$0xff]
      %v1839 = vld [vmem:[%s1827 + $0x40] sm:$0xff]
      %v1840 = vpack.c.bf16 %v1837, %v1836
      %v1841 = vpack.c.bf16 %v1839, %v1838
      %v1842 = vld [vmem:[%s1827 + $0x2] sm:$0x1]
      %v1843 = vld [vmem:[%s1827 + $0x3] sm:$0x1]
      %v1844 = vld [vmem:[%s1827 + $0x4] sm:$0x1]
      %v1845 = vld [vmem:[%s1827 + $0x48] sm:$0xff]
      %v1846 = vld [vmem:[%s1827 + $0x50] sm:$0xff]
      %v1847 = vld [vmem:[%s1827 + $0x58] sm:$0xff]
      %v1848 = vld [vmem:[%s1827 + $0x60] sm:$0xff]
      %v1849 = vpack.c.bf16 %v1846, %v1845
      %v1850 = vpack.c.bf16 %v1848, %v1847
      %v1851 = vld [vmem:[%s1827 + $0x6] sm:$0x1]
      %v1852 = vld [vmem:[%s1827 + $0x68] sm:$0xff]
      %v1853 = vld [vmem:[%s1827 + $0x70] sm:$0xff]
      %v1854 = vld [vmem:[%s1827 + $0x78] sm:$0xff]
      %v1855 = vld [vmem:[%s1827 + $0x80] sm:$0xff]
      %v1856 = vld [vmem:[%s1827 + $0x88] sm:$0xff]
      %v1857 = vld [vmem:[%s1827 + $0x90] sm:$0xff]
      %v1858 = vld [vmem:[%s1827 + $0x98] sm:$0xff]
      %v1859 = vld [vmem:[%s1827 + $0xa0] sm:$0xff]
      %v1860 = vld [vmem:[%s1827 + $0xa8] sm:$0xff]
      %v1861 = vld [vmem:[%s1827 + $0xb0] sm:$0xff]
      %v1862 = vld [vmem:[%s1827 + $0xb8] sm:$0xff]
      %v1863 = vld [vmem:[%s1827 + $0xc0] sm:$0xff]
      %v1864 = vld [vmem:[%s1827 + $0xc8] sm:$0xff]
      %v1865 = vld [vmem:[%s1827 + $0xd0] sm:$0xff]
      %v1866 = vld [vmem:[%s1827 + $0xd8] sm:$0xff]
      %v1867 = vld [vmem:[%s1827 + $0xe0] sm:$0xff]
      %v1868 = vpack.c.bf16 %v1853, %v1852
      %v1869 = vpack.c.bf16 %v1855, %v1854
      %v1870 = vpack.c.bf16 %v1857, %v1856
      %v1871 = vpack.c.bf16 %v1859, %v1858
      %v1872 = vpack.c.bf16 %v1861, %v1860
      %v1873 = vpack.c.bf16 %v1863, %v1862
      %v1874 = vpack.c.bf16 %v1865, %v1864
      %v1875 = vpack.c.bf16 %v1867, %v1866
      %v1876 = vld [vmem:[%s1827 + $0x5] sm:$0x1]
      %v1877 = vsel %vm564, %v1823, 0.0
      %1878 = vadd.xlane.f32.xlu0 %v1877
      %v1879 = vpop.xlane.xlu0 %1878
      %v1880 = vsel %vm564, %v1824, 0.0
      %1881 = vadd.xlane.f32.xlu0 %v1880
      %v1882 = vpop.xlane.xlu0 %1881
      %v1883 = vsel %vm564, %v1825, 0.0
      %1884 = vadd.xlane.f32.xlu0 %v1883
      %v1885 = vpop.xlane.xlu0 %1884
      %v1886 = vsel %vm564, %v1826, 0.0
      %1887 = vadd.xlane.f32.xlu0 %v1886
      %v1888 = vpop.xlane.xlu0 %1887
      %v1889 = vmul.f32 %v1879, %v577
      %v1890 = vmul.f32 %v1882, %v577
      %v1891 = vmul.f32 %v1885, %v577
      %v1892 = vmul.f32 %v1888, %v577
      %v1893 = vsub.f32 %v1823, %v1889
      %v1894 = vsub.f32 %v1824, %v1890
      %v1895 = vsub.f32 %v1825, %v1891
      %v1896 = vsub.f32 %v1826, %v1892
      %v1897 = vmul.f32 %v1893, %v1893
      %v1898 = vmul.f32 %v1894, %v1894
      %v1899 = vmul.f32 %v1895, %v1895
      %v1900 = vmul.f32 %v1896, %v1896
      %v1901 = vsel %vm564, %v1897, 0.0
      %1902 = vadd.xlane.f32.xlu0 %v1901
      %v1903 = vpop.xlane.xlu0 %1902
      %v1904 = vsel %vm564, %v1898, 0.0
      %1905 = vadd.xlane.f32.xlu0 %v1904
      %v1906 = vpop.xlane.xlu0 %1905
      %v1907 = vsel %vm564, %v1899, 0.0
      %1908 = vadd.xlane.f32.xlu0 %v1907
      %v1909 = vpop.xlane.xlu0 %1908
      %v1910 = vsel %vm564, %v1900, 0.0
      %1911 = vadd.xlane.f32.xlu0 %v1910
      %v1912 = vpop.xlane.xlu0 %1911
      %v1913 = vmul.f32 %v1903, %v577
      %v1914 = vmul.f32 %v1906, %v577
      %v1915 = vmul.f32 %v1909, %v577
      %v1916 = vmul.f32 %v1912, %v577
      %v1917 = vadd.f32 %v1913, 1e-05
      %v1918 = vadd.f32 %v1914, 1e-05
      %v1919 = vadd.f32 %v1915, 1e-05
      %v1920 = vadd.f32 %v1916, 1e-05
      %v1921 = vrsqrt.pop %v1917
      %v1922 = vrsqrt.pop %v1918
      %v1923 = vrsqrt.pop %v1919
      %v1924 = vrsqrt.pop %v1920
      %v1925 = vmul.f32 %v1893, %v1921
      %v1926 = vmul.f32 %v1894, %v1922
      %v1927 = vmul.f32 %v1895, %v1923
      %v1928 = vmul.f32 %v1896, %v1924
      %v1929 = vlaneseq
      %v1930 = vshrl.u32 %v1929, 7
      %v1931 = vsub.s32 0, %v1930
      %v1932 = vrot.slane %v1828, %v1931
      %v1933 = vmul.f32 %v1925, %v1932
      %v1934 = vmul.f32 %v1926, %v1932
      %v1935 = vmul.f32 %v1927, %v1932
      %v1936 = vmul.f32 %v1928, %v1932
      %v1937 = vlaneseq
      %v1938 = vshrl.u32 %v1937, 7
      %v1939 = vsub.s32 0, %v1938
      %v1940 = vrot.slane %v1829, %v1939
      %v1941 = vadd.f32 %v1933, %v1940
      %v1942 = vadd.f32 %v1934, %v1940
      %v1943 = vadd.f32 %v1935, %v1940
      %v1944 = vadd.f32 %v1936, %v1940
      %v1945 = vpack.c.bf16 %v1942, %v1941
      %v1946 = vpack.c.bf16 %v1944, %v1943
      %v1948 = vsel %vm564, %v1945, 0
      %v1951 = vsel %vm564, %v1946, 0
      %1953 = vmatprep.subr.bf16.mxu0 0
      %1954 = vmatpush1.bf16.msra.mxu0 %v1834
      %1955 = vmatprep.subr.bf16.mxu0 0
      %1956 = vmatpush1.bf16.msra.mxu0 %v1835
      %1957 = vmatprep.subr.bf16.mxu0 0
      %1958 = vmatpush1.bf16.msra.mxu0 0
      %1959 = vmatprep.subr.bf16.mxu0 0
      %1960 = vmatpush1.bf16.msra.mxu0 0
      %1961 = vmatprep.subr.bf16.mxu0 0
      %1962 = vmatpush1.bf16.msra.mxu0 0
      %1963 = vmatprep.subr.bf16.mxu0 0
      %1964 = vmatpush1.bf16.msra.mxu0 0
      %1965 = vmatprep.subr.bf16.mxu0 0
      %1966 = vmatpush1.bf16.msra.mxu0 0
      %1967 = vmatprep.subr.bf16.mxu0 0
      %1968 = vmatpush1.bf16.msra.mxu0 0
      %1969 = vmatprep.subr.bf16.mxu0 0
      %1970 = vmatpush1.bf16.msra.mxu0 0
      %1971 = vmatprep.subr.bf16.mxu0 0
      %1972 = vmatpush1.bf16.msra.mxu0 0
      %1973 = vmatprep.subr.bf16.mxu0 0
      %1974 = vmatpush1.bf16.msra.mxu0 0
      %1975 = vmatprep.subr.bf16.mxu0 0
      %1976 = vmatpush1.bf16.msra.mxu0 0
      %1977 = vmatprep.subr.bf16.mxu0 0
      %1978 = vmatpush1.bf16.msra.mxu0 0
      %1979 = vmatprep.subr.bf16.mxu0 0
      %1980 = vmatpush1.bf16.msra.mxu0 0
      %1981 = vmatprep.subr.bf16.mxu0 0
      %1982 = vmatpush1.bf16.msra.mxu0 0
      %1983 = vmatprep.subr.bf16.mxu0 0
      %1984 = vmatpush1.bf16.msra.mxu0 0
      %1985 = vmatprep.mubr.bf16.mxu0 0
      %1986 = vmatmul.mubr.bf16.gmra.mrb[0].mxu0 %v1948
      %v1987 = vpop.f32.mrb[0].mxu0
      %v1988 = vadd.f32 0.0, %v1987
      %v1989 = vpop.f32.mrb[0].mxu0
      %v1990 = vpop.f32.mrb[0].mxu0
      %v1991 = vadd.f32 0.0, %v1990
      %v1992 = vpop.f32.mrb[0].mxu0
      %1993 = vmatprep.mubr.bf16.mxu0 0
      %1994 = vmatmul.mubr.bf16.gmra.mrb[0].mxu0 %v1951
      %v1995 = vpop.f32.mrb[0].mxu0
      %v1996 = vadd.f32 0.0, %v1995
      %v1997 = vpop.f32.mrb[0].mxu0
      %v1998 = vpop.f32.mrb[0].mxu0
      %v1999 = vadd.f32 0.0, %v1998
      %v2000 = vpop.f32.mrb[0].mxu0
      %2001 = vdwg.mxu0
      %v2002 = vmul.f32 %v1988, 0.35355338
      %v2003 = vmul.f32 %v1991, 0.35355338
      %v2004 = vmul.f32 %v1996, 0.35355338
      %v2005 = vmul.f32 %v1999, 0.35355338
      %v2006 = vpack.c.bf16 %v2003, %v2002
      %v2007 = vpack.c.bf16 %v2005, %v2004
      %v2008 = vpack.c.bf16 %v1991, %v1988
      %v2009 = vpack.c.bf16 %v1999, %v1996
      %2012 = vrot.lane.b32.xlu0 %v2008, 96
      %v2013 = vpop.permute.xlu0 %2012
      %2014 = vrot.lane.b32.xlu0 %v2009, 96
      %v2015 = vpop.permute.xlu0 %2014
      %v2017 = vsel %vm705, %v2006, 0
      %v2020 = vsel %vm705, %v2007, 0
      %v2023 = vsel %vm705, %v2013, 0
      %v2026 = vsel %vm705, %v2015, 0
      %2028 = vmatprep.subr.bf16.mxu0 0
      %2029 = vmatpush1.bf16.xpose.msra.mxu0 %v2023
      %2030 = vmatprep.subr.bf16.mxu0 0
      %2031 = vmatpush1.bf16.xpose.msra.mxu0 %v2026
      %2032 = vmatprep.subr.bf16.mxu0 0
      %2033 = vmatpush1.bf16.xpose.msra.mxu0 0
      %2034 = vmatprep.subr.bf16.mxu0 0
      %2035 = vmatpush1.bf16.xpose.msra.mxu0 0
      %2036 = vmatprep.subr.bf16.mxu0 0
      %2037 = vmatpush1.bf16.xpose.msra.mxu0 0
      %2038 = vmatprep.subr.bf16.mxu0 0
      %2039 = vmatpush1.bf16.xpose.msra.mxu0 0
      %2040 = vmatprep.subr.bf16.mxu0 0
      %2041 = vmatpush1.bf16.xpose.msra.mxu0 0
      %2042 = vmatprep.subr.bf16.mxu0 0
      %2043 = vmatpush1.bf16.xpose.msra.mxu0 0
      %2044 = vmatprep.subr.bf16.mxu0 0
      %2045 = vmatpush1.bf16.xpose.msra.mxu0 0
      %2046 = vmatprep.subr.bf16.mxu0 0
      %2047 = vmatpush1.bf16.xpose.msra.mxu0 0
      %2048 = vmatprep.subr.bf16.mxu0 0
      %2049 = vmatpush1.bf16.xpose.msra.mxu0 0
      %2050 = vmatprep.subr.bf16.mxu0 0
      %2051 = vmatpush1.bf16.xpose.msra.mxu0 0
      %2052 = vmatprep.subr.bf16.mxu0 0
      %2053 = vmatpush1.bf16.xpose.msra.mxu0 0
      %2054 = vmatprep.subr.bf16.mxu0 0
      %2055 = vmatpush1.bf16.xpose.msra.mxu0 0
      %2056 = vmatprep.subr.bf16.mxu0 0
      %2057 = vmatpush1.bf16.xpose.msra.mxu0 0
      %2058 = vmatprep.subr.bf16.mxu0 0
      %2059 = vmatpush1.bf16.xpose.msra.mxu0 0
      %2060 = vmatprep.mubr.bf16.mxu0 0
      %2061 = vmatmul.mubr.bf16.gmra.mrb[0].mxu0 %v2017
      %v2062 = vpop.f32.mrb[0].mxu0
      %v2063 = vadd.f32 %v514, %v2062
      %v2064 = vpop.f32.mrb[0].mxu0
      %v2065 = vpop.f32.mrb[0].mxu0
      %v2066 = vadd.f32 %v514, %v2065
      %v2067 = vpop.f32.mrb[0].mxu0
      %2068 = vmatprep.mubr.bf16.mxu0 0
      %2069 = vmatmul.mubr.bf16.gmra.mrb[0].mxu0 %v2020
      %v2070 = vpop.f32.mrb[0].mxu0
      %v2071 = vadd.f32 %v514, %v2070
      %v2072 = vpop.f32.mrb[0].mxu0
      %v2073 = vpop.f32.mrb[0].mxu0
      %v2074 = vadd.f32 %v514, %v2073
      %v2075 = vpop.f32.mrb[0].mxu0
      %2076 = vdwg.mxu0
      %v2077 = vsel %vm564, %v2063, -inf
      %2078 = vmax.xlane.f32.xlu0 %v2077
      %v2079 = vpop.xlane.xlu0 %2078
      %v2080 = vsel %vm564, %v2066, -inf
      %2081 = vmax.xlane.f32.xlu0 %v2080
      %v2082 = vpop.xlane.xlu0 %2081
      %v2083 = vsel %vm564, %v2071, -inf
      %2084 = vmax.xlane.f32.xlu0 %v2083
      %v2085 = vpop.xlane.xlu0 %2084
      %v2086 = vsel %vm564, %v2074, -inf
      %2087 = vmax.xlane.f32.xlu0 %v2086
      %v2088 = vpop.xlane.xlu0 %2087
      %v2089 = vsub.f32 %v2063, %v2079
      %v2090 = vsub.f32 %v2066, %v2082
      %v2091 = vsub.f32 %v2071, %v2085
      %v2092 = vsub.f32 %v2074, %v2088
      %v2093 = vmul.f32 %v2089, 1.442695
      %v2094 = vpow.pop %v2093
      %v2095 = vmul.f32 %v2090, 1.442695
      %v2096 = vpow.pop %v2095
      %v2097 = vmul.f32 %v2091, 1.442695
      %v2098 = vpow.pop %v2097
      %v2099 = vmul.f32 %v2092, 1.442695
      %v2100 = vpow.pop %v2099
      %v2101 = vsel %vm564, %v2094, 0.0
      %2102 = vadd.xlane.f32.xlu0 %v2101
      %v2103 = vpop.xlane.xlu0 %2102
      %v2104 = vsel %vm564, %v2096, 0.0
      %2105 = vadd.xlane.f32.xlu0 %v2104
      %v2106 = vpop.xlane.xlu0 %2105
      %v2107 = vsel %vm564, %v2098, 0.0
      %2108 = vadd.xlane.f32.xlu0 %v2107
      %v2109 = vpop.xlane.xlu0 %2108
      %v2110 = vsel %vm564, %v2100, 0.0
      %2111 = vadd.xlane.f32.xlu0 %v2110
      %v2112 = vpop.xlane.xlu0 %2111
      %v2113 = vrcp.pop %v2103
      %v2114 = vmul.f32 %v2094, %v2113
      %v2115 = vrcp.pop %v2106
      %v2116 = vmul.f32 %v2096, %v2115
      %v2117 = vrcp.pop %v2109
      %v2118 = vmul.f32 %v2098, %v2117
      %v2119 = vrcp.pop %v2112
      %v2120 = vmul.f32 %v2100, %v2119
      %v2121 = vpack.c.bf16 %v2116, %v2114
      %v2122 = vpack.c.bf16 %v2120, %v2118
      %2123 = vrot.lane.b32.xlu0 %v2008, 64
      %v2124 = vpop.permute.xlu0 %2123
      %2125 = vrot.lane.b32.xlu0 %v2009, 64
      %v2126 = vpop.permute.xlu0 %2125
      %v2130 = vsel %vm564, %v2121, 0
      %v2133 = vsel %vm564, %v2122, 0
      %2135 = vmatprep.subr.bf16.mxu0 0
      %2136 = vmatpush1.bf16.msra.mxu0 %v2124
      %2137 = vmatprep.subr.bf16.mxu0 0
      %2138 = vmatpush1.bf16.msra.mxu0 %v2126
      %2139 = vmatprep.subr.bf16.mxu0 0
      %2140 = vmatpush1.bf16.msra.mxu0 0
      %2141 = vmatprep.subr.bf16.mxu0 0
      %2142 = vmatpush1.bf16.msra.mxu0 0
      %2143 = vmatprep.subr.bf16.mxu0 0
      %2144 = vmatpush1.bf16.msra.mxu0 0
      %2145 = vmatprep.subr.bf16.mxu0 0
      %2146 = vmatpush1.bf16.msra.mxu0 0
      %2147 = vmatprep.subr.bf16.mxu0 0
      %2148 = vmatpush1.bf16.msra.mxu0 0
      %2149 = vmatprep.subr.bf16.mxu0 0
      %2150 = vmatpush1.bf16.msra.mxu0 0
      %2151 = vmatprep.subr.bf16.mxu0 0
      %2152 = vmatpush1.bf16.msra.mxu0 0
      %2153 = vmatprep.subr.bf16.mxu0 0
      %2154 = vmatpush1.bf16.msra.mxu0 0
      %2155 = vmatprep.subr.bf16.mxu0 0
      %2156 = vmatpush1.bf16.msra.mxu0 0
      %2157 = vmatprep.subr.bf16.mxu0 0
      %2158 = vmatpush1.bf16.msra.mxu0 0
      %2159 = vmatprep.subr.bf16.mxu0 0
      %2160 = vmatpush1.bf16.msra.mxu0 0
      %2161 = vmatprep.subr.bf16.mxu0 0
      %2162 = vmatpush1.bf16.msra.mxu0 0
      %2163 = vmatprep.subr.bf16.mxu0 0
      %2164 = vmatpush1.bf16.msra.mxu0 0
      %2165 = vmatprep.subr.bf16.mxu0 0
      %2166 = vmatpush1.bf16.msra.mxu0 0
      %2167 = vmatprep.mubr.bf16.mxu0 0
      %2168 = vmatmul.mubr.bf16.gmra.mrb[0].mxu0 %v2130
      %v2169 = vpop.f32.mrb[0].mxu0
      %v2170 = vadd.f32 0.0, %v2169
      %v2171 = vpop.f32.mrb[0].mxu0
      %v2172 = vpop.f32.mrb[0].mxu0
      %v2173 = vadd.f32 0.0, %v2172
      %v2174 = vpop.f32.mrb[0].mxu0
      %2175 = vmatprep.mubr.bf16.mxu0 0
      %2176 = vmatmul.mubr.bf16.gmra.mrb[0].mxu0 %v2133
      %v2177 = vpop.f32.mrb[0].mxu0
      %v2178 = vadd.f32 0.0, %v2177
      %v2179 = vpop.f32.mrb[0].mxu0
      %v2180 = vpop.f32.mrb[0].mxu0
      %v2181 = vadd.f32 0.0, %v2180
      %v2182 = vpop.f32.mrb[0].mxu0
      %2183 = vdwg.mxu0
      %2186 = vrot.lane.b32.xlu0 %v2006, 120
      %v2187 = vpop.permute.xlu0 %2186
      %2188 = vrot.lane.b32.xlu0 %v2007, 120
      %v2189 = vpop.permute.xlu0 %2188
      %2190 = vrot.lane.b32.xlu0 %v2008, 88
      %v2191 = vpop.permute.xlu0 %2190
      %2192 = vrot.lane.b32.xlu0 %v2009, 88
      %v2193 = vpop.permute.xlu0 %2192
      %v2195 = vsel %vm705, %v2187, 0
      %v2198 = vsel %vm705, %v2189, 0
      %v2201 = vsel %vm705, %v2191, 0
      %v2204 = vsel %vm705, %v2193, 0
      %2206 = vmatprep.subr.bf16.mxu0 0
      %2207 = vmatpush1.bf16.xpose.msra.mxu0 %v2201
      %2208 = vmatprep.subr.bf16.mxu0 0
      %2209 = vmatpush1.bf16.xpose.msra.mxu0 %v2204
      %2210 = vmatprep.subr.bf16.mxu0 0
      %2211 = vmatpush1.bf16.xpose.msra.mxu0 0
      %2212 = vmatprep.subr.bf16.mxu0 0
      %2213 = vmatpush1.bf16.xpose.msra.mxu0 0
      %2214 = vmatprep.subr.bf16.mxu0 0
      %2215 = vmatpush1.bf16.xpose.msra.mxu0 0
      %2216 = vmatprep.subr.bf16.mxu0 0
      %2217 = vmatpush1.bf16.xpose.msra.mxu0 0
      %2218 = vmatprep.subr.bf16.mxu0 0
      %2219 = vmatpush1.bf16.xpose.msra.mxu0 0
      %2220 = vmatprep.subr.bf16.mxu0 0
      %2221 = vmatpush1.bf16.xpose.msra.mxu0 0
      %2222 = vmatprep.subr.bf16.mxu0 0
      %2223 = vmatpush1.bf16.xpose.msra.mxu0 0
      %2224 = vmatprep.subr.bf16.mxu0 0
      %2225 = vmatpush1.bf16.xpose.msra.mxu0 0
      %2226 = vmatprep.subr.bf16.mxu0 0
      %2227 = vmatpush1.bf16.xpose.msra.mxu0 0
      %2228 = vmatprep.subr.bf16.mxu0 0
      %2229 = vmatpush1.bf16.xpose.msra.mxu0 0
      %2230 = vmatprep.subr.bf16.mxu0 0
      %2231 = vmatpush1.bf16.xpose.msra.mxu0 0
      %2232 = vmatprep.subr.bf16.mxu0 0
      %2233 = vmatpush1.bf16.xpose.msra.mxu0 0
      %2234 = vmatprep.subr.bf16.mxu0 0
      %2235 = vmatpush1.bf16.xpose.msra.mxu0 0
      %2236 = vmatprep.subr.bf16.mxu0 0
      %2237 = vmatpush1.bf16.xpose.msra.mxu0 0
      %2238 = vmatprep.mubr.bf16.mxu0 0
      %2239 = vmatmul.mubr.bf16.gmra.mrb[0].mxu0 %v2195
      %v2240 = vpop.f32.mrb[0].mxu0
      %v2241 = vadd.f32 %v514, %v2240
      %v2242 = vpop.f32.mrb[0].mxu0
      %v2243 = vpop.f32.mrb[0].mxu0
      %v2244 = vadd.f32 %v514, %v2243
      %v2245 = vpop.f32.mrb[0].mxu0
      %2246 = vmatprep.mubr.bf16.mxu0 0
      %2247 = vmatmul.mubr.bf16.gmra.mrb[0].mxu0 %v2198
      %v2248 = vpop.f32.mrb[0].mxu0
      %v2249 = vadd.f32 %v514, %v2248
      %v2250 = vpop.f32.mrb[0].mxu0
      %v2251 = vpop.f32.mrb[0].mxu0
      %v2252 = vadd.f32 %v514, %v2251
      %v2253 = vpop.f32.mrb[0].mxu0
      %2254 = vdwg.mxu0
      %v2255 = vsel %vm564, %v2241, -inf
      %2256 = vmax.xlane.f32.xlu0 %v2255
      %v2257 = vpop.xlane.xlu0 %2256
      %v2258 = vsel %vm564, %v2244, -inf
      %2259 = vmax.xlane.f32.xlu0 %v2258
      %v2260 = vpop.xlane.xlu0 %2259
      %v2261 = vsel %vm564, %v2249, -inf
      %2262 = vmax.xlane.f32.xlu0 %v2261
      %v2263 = vpop.xlane.xlu0 %2262
      %v2264 = vsel %vm564, %v2252, -inf
      %2265 = vmax.xlane.f32.xlu0 %v2264
      %v2266 = vpop.xlane.xlu0 %2265
      %v2267 = vsub.f32 %v2241, %v2257
      %v2268 = vsub.f32 %v2244, %v2260
      %v2269 = vsub.f32 %v2249, %v2263
      %v2270 = vsub.f32 %v2252, %v2266
      %v2271 = vmul.f32 %v2267, 1.442695
      %v2272 = vpow.pop %v2271
      %v2273 = vmul.f32 %v2268, 1.442695
      %v2274 = vpow.pop %v2273
      %v2275 = vmul.f32 %v2269, 1.442695
      %v2276 = vpow.pop %v2275
      %v2277 = vmul.f32 %v2270, 1.442695
      %v2278 = vpow.pop %v2277
      %v2279 = vsel %vm564, %v2272, 0.0
      %2280 = vadd.xlane.f32.xlu0 %v2279
      %v2281 = vpop.xlane.xlu0 %2280
      %v2282 = vsel %vm564, %v2274, 0.0
      %2283 = vadd.xlane.f32.xlu0 %v2282
      %v2284 = vpop.xlane.xlu0 %2283
      %v2285 = vsel %vm564, %v2276, 0.0
      %2286 = vadd.xlane.f32.xlu0 %v2285
      %v2287 = vpop.xlane.xlu0 %2286
      %v2288 = vsel %vm564, %v2278, 0.0
      %2289 = vadd.xlane.f32.xlu0 %v2288
      %v2290 = vpop.xlane.xlu0 %2289
      %v2291 = vrcp.pop %v2281
      %v2292 = vmul.f32 %v2272, %v2291
      %v2293 = vrcp.pop %v2284
      %v2294 = vmul.f32 %v2274, %v2293
      %v2295 = vrcp.pop %v2287
      %v2296 = vmul.f32 %v2276, %v2295
      %v2297 = vrcp.pop %v2290
      %v2298 = vmul.f32 %v2278, %v2297
      %v2299 = vpack.c.bf16 %v2294, %v2292
      %v2300 = vpack.c.bf16 %v2298, %v2296
      %2301 = vrot.lane.b32.xlu0 %v2008, 56
      %v2302 = vpop.permute.xlu0 %2301
      %2303 = vrot.lane.b32.xlu0 %v2009, 56
      %v2304 = vpop.permute.xlu0 %2303
      %v2308 = vsel %vm564, %v2299, 0
      %v2311 = vsel %vm564, %v2300, 0
      %2313 = vmatprep.subr.bf16.mxu0 0
      %2314 = vmatpush1.bf16.msra.mxu0 %v2302
      %2315 = vmatprep.subr.bf16.mxu0 0
      %2316 = vmatpush1.bf16.msra.mxu0 %v2304
      %2317 = vmatprep.subr.bf16.mxu0 0
      %2318 = vmatpush1.bf16.msra.mxu0 0
      %2319 = vmatprep.subr.bf16.mxu0 0
      %2320 = vmatpush1.bf16.msra.mxu0 0
      %2321 = vmatprep.subr.bf16.mxu0 0
      %2322 = vmatpush1.bf16.msra.mxu0 0
      %2323 = vmatprep.subr.bf16.mxu0 0
      %2324 = vmatpush1.bf16.msra.mxu0 0
      %2325 = vmatprep.subr.bf16.mxu0 0
      %2326 = vmatpush1.bf16.msra.mxu0 0
      %2327 = vmatprep.subr.bf16.mxu0 0
      %2328 = vmatpush1.bf16.msra.mxu0 0
      %2329 = vmatprep.subr.bf16.mxu0 0
      %2330 = vmatpush1.bf16.msra.mxu0 0
      %2331 = vmatprep.subr.bf16.mxu0 0
      %2332 = vmatpush1.bf16.msra.mxu0 0
      %2333 = vmatprep.subr.bf16.mxu0 0
      %2334 = vmatpush1.bf16.msra.mxu0 0
      %2335 = vmatprep.subr.bf16.mxu0 0
      %2336 = vmatpush1.bf16.msra.mxu0 0
      %2337 = vmatprep.subr.bf16.mxu0 0
      %2338 = vmatpush1.bf16.msra.mxu0 0
      %2339 = vmatprep.subr.bf16.mxu0 0
      %2340 = vmatpush1.bf16.msra.mxu0 0
      %2341 = vmatprep.subr.bf16.mxu0 0
      %2342 = vmatpush1.bf16.msra.mxu0 0
      %2343 = vmatprep.subr.bf16.mxu0 0
      %2344 = vmatpush1.bf16.msra.mxu0 0
      %2345 = vmatprep.mubr.bf16.mxu0 0
      %2346 = vmatmul.mubr.bf16.gmra.mrb[0].mxu0 %v2308
      %v2347 = vpop.f32.mrb[0].mxu0
      %v2348 = vadd.f32 0.0, %v2347
      %v2349 = vpop.f32.mrb[0].mxu0
      %v2350 = vpop.f32.mrb[0].mxu0
      %v2351 = vadd.f32 0.0, %v2350
      %v2352 = vpop.f32.mrb[0].mxu0
      %2353 = vmatprep.mubr.bf16.mxu0 0
      %2354 = vmatmul.mubr.bf16.gmra.mrb[0].mxu0 %v2311
      %v2355 = vpop.f32.mrb[0].mxu0
      %v2356 = vadd.f32 0.0, %v2355
      %v2357 = vpop.f32.mrb[0].mxu0
      %v2358 = vpop.f32.mrb[0].mxu0
      %v2359 = vadd.f32 0.0, %v2358
      %v2360 = vpop.f32.mrb[0].mxu0
      %2361 = vdwg.mxu0
      %2362 = vrot.lane.b32.xlu0 %v2006, 112
      %v2363 = vpop.permute.xlu0 %2362
      %2364 = vrot.lane.b32.xlu0 %v2007, 112
      %v2365 = vpop.permute.xlu0 %2364
      %2366 = vrot.lane.b32.xlu0 %v2008, 80
      %v2367 = vpop.permute.xlu0 %2366
      %2368 = vrot.lane.b32.xlu0 %v2009, 80
      %v2369 = vpop.permute.xlu0 %2368
      %v2371 = vsel %vm705, %v2363, 0
      %v2374 = vsel %vm705, %v2365, 0
      %v2377 = vsel %vm705, %v2367, 0
      %v2380 = vsel %vm705, %v2369, 0
      %2382 = vmatprep.subr.bf16.mxu0 0
      %2383 = vmatpush1.bf16.xpose.msra.mxu0 %v2377
      %2384 = vmatprep.subr.bf16.mxu0 0
      %2385 = vmatpush1.bf16.xpose.msra.mxu0 %v2380
      %2386 = vmatprep.subr.bf16.mxu0 0
      %2387 = vmatpush1.bf16.xpose.msra.mxu0 0
      %2388 = vmatprep.subr.bf16.mxu0 0
      %2389 = vmatpush1.bf16.xpose.msra.mxu0 0
      %2390 = vmatprep.subr.bf16.mxu0 0
      %2391 = vmatpush1.bf16.xpose.msra.mxu0 0
      %2392 = vmatprep.subr.bf16.mxu0 0
      %2393 = vmatpush1.bf16.xpose.msra.mxu0 0
      %2394 = vmatprep.subr.bf16.mxu0 0
      %2395 = vmatpush1.bf16.xpose.msra.mxu0 0
      %2396 = vmatprep.subr.bf16.mxu0 0
      %2397 = vmatpush1.bf16.xpose.msra.mxu0 0
      %2398 = vmatprep.subr.bf16.mxu0 0
      %2399 = vmatpush1.bf16.xpose.msra.mxu0 0
      %2400 = vmatprep.subr.bf16.mxu0 0
      %2401 = vmatpush1.bf16.xpose.msra.mxu0 0
      %2402 = vmatprep.subr.bf16.mxu0 0
      %2403 = vmatpush1.bf16.xpose.msra.mxu0 0
      %2404 = vmatprep.subr.bf16.mxu0 0
      %2405 = vmatpush1.bf16.xpose.msra.mxu0 0
      %2406 = vmatprep.subr.bf16.mxu0 0
      %2407 = vmatpush1.bf16.xpose.msra.mxu0 0
      %2408 = vmatprep.subr.bf16.mxu0 0
      %2409 = vmatpush1.bf16.xpose.msra.mxu0 0
      %2410 = vmatprep.subr.bf16.mxu0 0
      %2411 = vmatpush1.bf16.xpose.msra.mxu0 0
      %2412 = vmatprep.subr.bf16.mxu0 0
      %2413 = vmatpush1.bf16.xpose.msra.mxu0 0
      %2414 = vmatprep.mubr.bf16.mxu0 0
      %2415 = vmatmul.mubr.bf16.gmra.mrb[0].mxu0 %v2371
      %v2416 = vpop.f32.mrb[0].mxu0
      %v2417 = vadd.f32 %v514, %v2416
      %v2418 = vpop.f32.mrb[0].mxu0
      %v2419 = vpop.f32.mrb[0].mxu0
      %v2420 = vadd.f32 %v514, %v2419
      %v2421 = vpop.f32.mrb[0].mxu0
      %2422 = vmatprep.mubr.bf16.mxu0 0
      %2423 = vmatmul.mubr.bf16.gmra.mrb[0].mxu0 %v2374
      %v2424 = vpop.f32.mrb[0].mxu0
      %v2425 = vadd.f32 %v514, %v2424
      %v2426 = vpop.f32.mrb[0].mxu0
      %v2427 = vpop.f32.mrb[0].mxu0
      %v2428 = vadd.f32 %v514, %v2427
      %v2429 = vpop.f32.mrb[0].mxu0
      %2430 = vdwg.mxu0
      %v2431 = vsel %vm564, %v2417, -inf
      %2432 = vmax.xlane.f32.xlu0 %v2431
      %v2433 = vpop.xlane.xlu0 %2432
      %v2434 = vsel %vm564, %v2420, -inf
      %2435 = vmax.xlane.f32.xlu0 %v2434
      %v2436 = vpop.xlane.xlu0 %2435
      %v2437 = vsel %vm564, %v2425, -inf
      %2438 = vmax.xlane.f32.xlu0 %v2437
      %v2439 = vpop.xlane.xlu0 %2438
      %v2440 = vsel %vm564, %v2428, -inf
      %2441 = vmax.xlane.f32.xlu0 %v2440
      %v2442 = vpop.xlane.xlu0 %2441
      %v2443 = vsub.f32 %v2417, %v2433
      %v2444 = vsub.f32 %v2420, %v2436
      %v2445 = vsub.f32 %v2425, %v2439
      %v2446 = vsub.f32 %v2428, %v2442
      %v2447 = vmul.f32 %v2443, 1.442695
      %v2448 = vpow.pop %v2447
      %v2449 = vmul.f32 %v2444, 1.442695
      %v2450 = vpow.pop %v2449
      %v2451 = vmul.f32 %v2445, 1.442695
      %v2452 = vpow.pop %v2451
      %v2453 = vmul.f32 %v2446, 1.442695
      %v2454 = vpow.pop %v2453
      %v2455 = vsel %vm564, %v2448, 0.0
      %2456 = vadd.xlane.f32.xlu0 %v2455
      %v2457 = vpop.xlane.xlu0 %2456
      %v2458 = vsel %vm564, %v2450, 0.0
      %2459 = vadd.xlane.f32.xlu0 %v2458
      %v2460 = vpop.xlane.xlu0 %2459
      %v2461 = vsel %vm564, %v2452, 0.0
      %2462 = vadd.xlane.f32.xlu0 %v2461
      %v2463 = vpop.xlane.xlu0 %2462
      %v2464 = vsel %vm564, %v2454, 0.0
      %2465 = vadd.xlane.f32.xlu0 %v2464
      %v2466 = vpop.xlane.xlu0 %2465
      %v2467 = vrcp.pop %v2457
      %v2468 = vmul.f32 %v2448, %v2467
      %v2469 = vrcp.pop %v2460
      %v2470 = vmul.f32 %v2450, %v2469
      %v2471 = vrcp.pop %v2463
      %v2472 = vmul.f32 %v2452, %v2471
      %v2473 = vrcp.pop %v2466
      %v2474 = vmul.f32 %v2454, %v2473
      %v2475 = vpack.c.bf16 %v2470, %v2468
      %v2476 = vpack.c.bf16 %v2474, %v2472
      %2477 = vrot.lane.b32.xlu0 %v2008, 48
      %v2478 = vpop.permute.xlu0 %2477
      %2479 = vrot.lane.b32.xlu0 %v2009, 48
      %v2480 = vpop.permute.xlu0 %2479
      %v2484 = vsel %vm564, %v2475, 0
      %v2487 = vsel %vm564, %v2476, 0
      %2489 = vmatprep.subr.bf16.mxu0 0
      %2490 = vmatpush1.bf16.msra.mxu0 %v2478
      %2491 = vmatprep.subr.bf16.mxu0 0
      %2492 = vmatpush1.bf16.msra.mxu0 %v2480
      %2493 = vmatprep.subr.bf16.mxu0 0
      %2494 = vmatpush1.bf16.msra.mxu0 0
      %2495 = vmatprep.subr.bf16.mxu0 0
      %2496 = vmatpush1.bf16.msra.mxu0 0
      %2497 = vmatprep.subr.bf16.mxu0 0
      %2498 = vmatpush1.bf16.msra.mxu0 0
      %2499 = vmatprep.subr.bf16.mxu0 0
      %2500 = vmatpush1.bf16.msra.mxu0 0
      %2501 = vmatprep.subr.bf16.mxu0 0
      %2502 = vmatpush1.bf16.msra.mxu0 0
      %2503 = vmatprep.subr.bf16.mxu0 0
      %2504 = vmatpush1.bf16.msra.mxu0 0
      %2505 = vmatprep.subr.bf16.mxu0 0
      %2506 = vmatpush1.bf16.msra.mxu0 0
      %2507 = vmatprep.subr.bf16.mxu0 0
      %2508 = vmatpush1.bf16.msra.mxu0 0
      %2509 = vmatprep.subr.bf16.mxu0 0
      %2510 = vmatpush1.bf16.msra.mxu0 0
      %2511 = vmatprep.subr.bf16.mxu0 0
      %2512 = vmatpush1.bf16.msra.mxu0 0
      %2513 = vmatprep.subr.bf16.mxu0 0
      %2514 = vmatpush1.bf16.msra.mxu0 0
      %2515 = vmatprep.subr.bf16.mxu0 0
      %2516 = vmatpush1.bf16.msra.mxu0 0
      %2517 = vmatprep.subr.bf16.mxu0 0
      %2518 = vmatpush1.bf16.msra.mxu0 0
      %2519 = vmatprep.subr.bf16.mxu0 0
      %2520 = vmatpush1.bf16.msra.mxu0 0
      %2521 = vmatprep.mubr.bf16.mxu0 0
      %2522 = vmatmul.mubr.bf16.gmra.mrb[0].mxu0 %v2484
      %v2523 = vpop.f32.mrb[0].mxu0
      %v2524 = vadd.f32 0.0, %v2523
      %v2525 = vpop.f32.mrb[0].mxu0
      %v2526 = vpop.f32.mrb[0].mxu0
      %v2527 = vadd.f32 0.0, %v2526
      %v2528 = vpop.f32.mrb[0].mxu0
      %2529 = vmatprep.mubr.bf16.mxu0 0
      %2530 = vmatmul.mubr.bf16.gmra.mrb[0].mxu0 %v2487
      %v2531 = vpop.f32.mrb[0].mxu0
      %v2532 = vadd.f32 0.0, %v2531
      %v2533 = vpop.f32.mrb[0].mxu0
      %v2534 = vpop.f32.mrb[0].mxu0
      %v2535 = vadd.f32 0.0, %v2534
      %v2536 = vpop.f32.mrb[0].mxu0
      %2537 = vdwg.mxu0
      %2538 = vrot.lane.b32.xlu0 %v2006, 104
      %v2539 = vpop.permute.xlu0 %2538
      %2540 = vrot.lane.b32.xlu0 %v2007, 104
      %v2541 = vpop.permute.xlu0 %2540
      %2542 = vrot.lane.b32.xlu0 %v2008, 72
      %v2543 = vpop.permute.xlu0 %2542
      %2544 = vrot.lane.b32.xlu0 %v2009, 72
      %v2545 = vpop.permute.xlu0 %2544
      %v2547 = vsel %vm705, %v2539, 0
      %v2550 = vsel %vm705, %v2541, 0
      %v2553 = vsel %vm705, %v2543, 0
      %v2556 = vsel %vm705, %v2545, 0
      %2558 = vmatprep.subr.bf16.mxu0 0
      %2559 = vmatpush1.bf16.xpose.msra.mxu0 %v2553
      %2560 = vmatprep.subr.bf16.mxu0 0
      %2561 = vmatpush1.bf16.xpose.msra.mxu0 %v2556
      %2562 = vmatprep.subr.bf16.mxu0 0
      %2563 = vmatpush1.bf16.xpose.msra.mxu0 0
      %2564 = vmatprep.subr.bf16.mxu0 0
      %2565 = vmatpush1.bf16.xpose.msra.mxu0 0
      %2566 = vmatprep.subr.bf16.mxu0 0
      %2567 = vmatpush1.bf16.xpose.msra.mxu0 0
      %2568 = vmatprep.subr.bf16.mxu0 0
      %2569 = vmatpush1.bf16.xpose.msra.mxu0 0
      %2570 = vmatprep.subr.bf16.mxu0 0
      %2571 = vmatpush1.bf16.xpose.msra.mxu0 0
      %2572 = vmatprep.subr.bf16.mxu0 0
      %2573 = vmatpush1.bf16.xpose.msra.mxu0 0
      %2574 = vmatprep.subr.bf16.mxu0 0
      %2575 = vmatpush1.bf16.xpose.msra.mxu0 0
      %2576 = vmatprep.subr.bf16.mxu0 0
      %2577 = vmatpush1.bf16.xpose.msra.mxu0 0
      %2578 = vmatprep.subr.bf16.mxu0 0
      %2579 = vmatpush1.bf16.xpose.msra.mxu0 0
      %2580 = vmatprep.subr.bf16.mxu0 0
      %2581 = vmatpush1.bf16.xpose.msra.mxu0 0
      %2582 = vmatprep.subr.bf16.mxu0 0
      %2583 = vmatpush1.bf16.xpose.msra.mxu0 0
      %2584 = vmatprep.subr.bf16.mxu0 0
      %2585 = vmatpush1.bf16.xpose.msra.mxu0 0
      %2586 = vmatprep.subr.bf16.mxu0 0
      %2587 = vmatpush1.bf16.xpose.msra.mxu0 0
      %2588 = vmatprep.subr.bf16.mxu0 0
      %2589 = vmatpush1.bf16.xpose.msra.mxu0 0
      %2590 = vmatprep.mubr.bf16.mxu0 0
      %2591 = vmatmul.mubr.bf16.gmra.mrb[0].mxu0 %v2547
      %v2592 = vpop.f32.mrb[0].mxu0
      %v2593 = vadd.f32 %v514, %v2592
      %v2594 = vpop.f32.mrb[0].mxu0
      %v2595 = vpop.f32.mrb[0].mxu0
      %v2596 = vadd.f32 %v514, %v2595
      %v2597 = vpop.f32.mrb[0].mxu0
      %2598 = vmatprep.mubr.bf16.mxu0 0
      %2599 = vmatmul.mubr.bf16.gmra.mrb[0].mxu0 %v2550
      %v2600 = vpop.f32.mrb[0].mxu0
      %v2601 = vadd.f32 %v514, %v2600
      %v2602 = vpop.f32.mrb[0].mxu0
      %v2603 = vpop.f32.mrb[0].mxu0
      %v2604 = vadd.f32 %v514, %v2603
      %v2605 = vpop.f32.mrb[0].mxu0
      %2606 = vdwg.mxu0
      %v2607 = vsel %vm564, %v2593, -inf
      %2608 = vmax.xlane.f32.xlu0 %v2607
      %v2609 = vpop.xlane.xlu0 %2608
      %v2610 = vsel %vm564, %v2596, -inf
      %2611 = vmax.xlane.f32.xlu0 %v2610
      %v2612 = vpop.xlane.xlu0 %2611
      %v2613 = vsel %vm564, %v2601, -inf
      %2614 = vmax.xlane.f32.xlu0 %v2613
      %v2615 = vpop.xlane.xlu0 %2614
      %v2616 = vsel %vm564, %v2604, -inf
      %2617 = vmax.xlane.f32.xlu0 %v2616
      %v2618 = vpop.xlane.xlu0 %2617
      %v2619 = vsub.f32 %v2593, %v2609
      %v2620 = vsub.f32 %v2596, %v2612
      %v2621 = vsub.f32 %v2601, %v2615
      %v2622 = vsub.f32 %v2604, %v2618
      %v2623 = vmul.f32 %v2619, 1.442695
      %v2624 = vpow.pop %v2623
      %v2625 = vmul.f32 %v2620, 1.442695
      %v2626 = vpow.pop %v2625
      %v2627 = vmul.f32 %v2621, 1.442695
      %v2628 = vpow.pop %v2627
      %v2629 = vmul.f32 %v2622, 1.442695
      %v2630 = vpow.pop %v2629
      %v2631 = vsel %vm564, %v2624, 0.0
      %2632 = vadd.xlane.f32.xlu0 %v2631
      %v2633 = vpop.xlane.xlu0 %2632
      %v2634 = vsel %vm564, %v2626, 0.0
      %2635 = vadd.xlane.f32.xlu0 %v2634
      %v2636 = vpop.xlane.xlu0 %2635
      %v2637 = vsel %vm564, %v2628, 0.0
      %2638 = vadd.xlane.f32.xlu0 %v2637
      %v2639 = vpop.xlane.xlu0 %2638
      %v2640 = vsel %vm564, %v2630, 0.0
      %2641 = vadd.xlane.f32.xlu0 %v2640
      %v2642 = vpop.xlane.xlu0 %2641
      %v2643 = vrcp.pop %v2633
      %v2644 = vmul.f32 %v2624, %v2643
      %v2645 = vrcp.pop %v2636
      %v2646 = vmul.f32 %v2626, %v2645
      %v2647 = vrcp.pop %v2639
      %v2648 = vmul.f32 %v2628, %v2647
      %v2649 = vrcp.pop %v2642
      %v2650 = vmul.f32 %v2630, %v2649
      %v2651 = vpack.c.bf16 %v2646, %v2644
      %v2652 = vpack.c.bf16 %v2650, %v2648
      %2653 = vrot.lane.b32.xlu0 %v2008, 40
      %v2654 = vpop.permute.xlu0 %2653
      %2655 = vrot.lane.b32.xlu0 %v2009, 40
      %v2656 = vpop.permute.xlu0 %2655
      %v2660 = vsel %vm564, %v2651, 0
      %v2663 = vsel %vm564, %v2652, 0
      %2665 = vmatprep.subr.bf16.mxu0 0
      %2666 = vmatpush1.bf16.msra.mxu0 %v2654
      %2667 = vmatprep.subr.bf16.mxu0 0
      %2668 = vmatpush1.bf16.msra.mxu0 %v2656
      %2669 = vmatprep.subr.bf16.mxu0 0
      %2670 = vmatpush1.bf16.msra.mxu0 0
      %2671 = vmatprep.subr.bf16.mxu0 0
      %2672 = vmatpush1.bf16.msra.mxu0 0
      %2673 = vmatprep.subr.bf16.mxu0 0
      %2674 = vmatpush1.bf16.msra.mxu0 0
      %2675 = vmatprep.subr.bf16.mxu0 0
      %2676 = vmatpush1.bf16.msra.mxu0 0
      %2677 = vmatprep.subr.bf16.mxu0 0
      %2678 = vmatpush1.bf16.msra.mxu0 0
      %2679 = vmatprep.subr.bf16.mxu0 0
      %2680 = vmatpush1.bf16.msra.mxu0 0
      %2681 = vmatprep.subr.bf16.mxu0 0
      %2682 = vmatpush1.bf16.msra.mxu0 0
      %2683 = vmatprep.subr.bf16.mxu0 0
      %2684 = vmatpush1.bf16.msra.mxu0 0
      %2685 = vmatprep.subr.bf16.mxu0 0
      %2686 = vmatpush1.bf16.msra.mxu0 0
      %2687 = vmatprep.subr.bf16.mxu0 0
      %2688 = vmatpush1.bf16.msra.mxu0 0
      %2689 = vmatprep.subr.bf16.mxu0 0
      %2690 = vmatpush1.bf16.msra.mxu0 0
      %2691 = vmatprep.subr.bf16.mxu0 0
      %2692 = vmatpush1.bf16.msra.mxu0 0
      %2693 = vmatprep.subr.bf16.mxu0 0
      %2694 = vmatpush1.bf16.msra.mxu0 0
      %2695 = vmatprep.subr.bf16.mxu0 0
      %2696 = vmatpush1.bf16.msra.mxu0 0
      %2697 = vmatprep.mubr.bf16.mxu0 0
      %2698 = vmatmul.mubr.bf16.gmra.mrb[0].mxu0 %v2660
      %v2699 = vpop.f32.mrb[0].mxu0
      %v2700 = vadd.f32 0.0, %v2699
      %v2701 = vpop.f32.mrb[0].mxu0
      %v2702 = vpop.f32.mrb[0].mxu0
      %v2703 = vadd.f32 0.0, %v2702
      %v2704 = vpop.f32.mrb[0].mxu0
      %2705 = vmatprep.mubr.bf16.mxu0 0
      %2706 = vmatmul.mubr.bf16.gmra.mrb[0].mxu0 %v2663
      %v2707 = vpop.f32.mrb[0].mxu0
      %v2708 = vadd.f32 0.0, %v2707
      %v2709 = vpop.f32.mrb[0].mxu0
      %v2710 = vpop.f32.mrb[0].mxu0
      %v2711 = vadd.f32 0.0, %v2710
      %v2712 = vpop.f32.mrb[0].mxu0
      %2713 = vdwg.mxu0
      %2718 = vrot.lane.b32.xlu0 %v2348, 8
      %v2719 = vpop.permute.xlu0 %2718
      %2720 = vrot.lane.b32.xlu0 %v2351, 8
      %v2721 = vpop.permute.xlu0 %2720
      %2722 = vrot.lane.b32.xlu0 %v2356, 8
      %v2723 = vpop.permute.xlu0 %2722
      %2724 = vrot.lane.b32.xlu0 %v2359, 8
      %v2725 = vpop.permute.xlu0 %2724
      %2734 = vrot.lane.b32.xlu0 %v2524, 16
      %v2735 = vpop.permute.xlu0 %2734
      %2736 = vrot.lane.b32.xlu0 %v2527, 16
      %v2737 = vpop.permute.xlu0 %2736
      %2738 = vrot.lane.b32.xlu0 %v2532, 16
      %v2739 = vpop.permute.xlu0 %2738
      %2740 = vrot.lane.b32.xlu0 %v2535, 16
      %v2741 = vpop.permute.xlu0 %2740
      %2750 = vrot.lane.b32.xlu0 %v2700, 24
      %v2751 = vpop.permute.xlu0 %2750
      %2752 = vrot.lane.b32.xlu0 %v2703, 24
      %v2753 = vpop.permute.xlu0 %2752
      %2754 = vrot.lane.b32.xlu0 %v2708, 24
      %v2755 = vpop.permute.xlu0 %2754
      %2756 = vrot.lane.b32.xlu0 %v2711, 24
      %v2757 = vpop.permute.xlu0 %2756
      %v2762 = vsel %vm705, %v2170, %v2719
      %v2763 = vsel %vm705, %v2173, %v2721
      %v2764 = vsel %vm705, %v2178, %v2723
      %v2765 = vsel %vm705, %v2181, %v2725
      %v2766 = vsel %vm1456, %v2762, %v2735
      %v2767 = vsel %vm1456, %v2763, %v2737
      %v2768 = vsel %vm1456, %v2764, %v2739
      %v2769 = vsel %vm1456, %v2765, %v2741
      %v2770 = vsel %vm1461, %v2766, %v2751
      %v2771 = vsel %vm1461, %v2767, %v2753
      %v2772 = vsel %vm1461, %v2768, %v2755
      %v2773 = vsel %vm1461, %v2769, %v2757
      %v2774 = vpack.c.bf16 %v2771, %v2770
      %v2775 = vpack.c.bf16 %v2773, %v2772
      %v2776 = vlaneseq
      %v2777 = vshrl.u32 %v2776, 7
      %v2778 = vsub.s32 0, %v2777
      %v2779 = vrot.slane %v1842, %v2778
      %v2781 = vsel %vm564, %v2774, 0
      %v2784 = vsel %vm564, %v2775, 0
      %2786 = vmatprep.subr.bf16.mxu0 0
      %2787 = vmatpush1.bf16.msra.mxu0 %v1840
      %2788 = vmatprep.subr.bf16.mxu0 0
      %2789 = vmatpush1.bf16.msra.mxu0 %v1841
      %2790 = vmatprep.subr.bf16.mxu0 0
      %2791 = vmatpush1.bf16.msra.mxu0 0
      %2792 = vmatprep.subr.bf16.mxu0 0
      %2793 = vmatpush1.bf16.msra.mxu0 0
      %2794 = vmatprep.subr.bf16.mxu0 0
      %2795 = vmatpush1.bf16.msra.mxu0 0
      %2796 = vmatprep.subr.bf16.mxu0 0
      %2797 = vmatpush1.bf16.msra.mxu0 0
      %2798 = vmatprep.subr.bf16.mxu0 0
      %2799 = vmatpush1.bf16.msra.mxu0 0
      %2800 = vmatprep.subr.bf16.mxu0 0
      %2801 = vmatpush1.bf16.msra.mxu0 0
      %2802 = vmatprep.subr.bf16.mxu0 0
      %2803 = vmatpush1.bf16.msra.mxu0 0
      %2804 = vmatprep.subr.bf16.mxu0 0
      %2805 = vmatpush1.bf16.msra.mxu0 0
      %2806 = vmatprep.subr.bf16.mxu0 0
      %2807 = vmatpush1.bf16.msra.mxu0 0
      %2808 = vmatprep.subr.bf16.mxu0 0
      %2809 = vmatpush1.bf16.msra.mxu0 0
      %2810 = vmatprep.subr.bf16.mxu0 0
      %2811 = vmatpush1.bf16.msra.mxu0 0
      %2812 = vmatprep.subr.bf16.mxu0 0
      %2813 = vmatpush1.bf16.msra.mxu0 0
      %2814 = vmatprep.subr.bf16.mxu0 0
      %2815 = vmatpush1.bf16.msra.mxu0 0
      %2816 = vmatprep.subr.bf16.mxu0 0
      %2817 = vmatpush1.bf16.msra.mxu0 0
      %2818 = vmatprep.mubr.bf16.mxu0 0
      %2819 = vmatmul.mubr.bf16.gmra.mrb[0].mxu0 %v2781
      %v2820 = vpop.f32.mrb[0].mxu0
      %v2821 = vadd.f32 %v2779, %v2820
      %v2822 = vpop.f32.mrb[0].mxu0
      %v2823 = vpop.f32.mrb[0].mxu0
      %v2824 = vadd.f32 %v2779, %v2823
      %v2825 = vpop.f32.mrb[0].mxu0
      %2826 = vmatprep.mubr.bf16.mxu0 0
      %2827 = vmatmul.mubr.bf16.gmra.mrb[0].mxu0 %v2784
      %v2828 = vpop.f32.mrb[0].mxu0
      %v2829 = vadd.f32 %v2779, %v2828
      %v2830 = vpop.f32.mrb[0].mxu0
      %v2831 = vpop.f32.mrb[0].mxu0
      %v2832 = vadd.f32 %v2779, %v2831
      %v2833 = vpop.f32.mrb[0].mxu0
      %2834 = vdwg.mxu0
      %v2835 = vadd.f32 %v1823, %v2821
      %v2836 = vadd.f32 %v1824, %v2824
      %v2837 = vadd.f32 %v1825, %v2829
      %v2838 = vadd.f32 %v1826, %v2832
      %v2839 = vsel %vm564, %v2835, 0.0
      %2840 = vadd.xlane.f32.xlu0 %v2839
      %v2841 = vpop.xlane.xlu0 %2840
      %v2842 = vsel %vm564, %v2836, 0.0
      %2843 = vadd.xlane.f32.xlu0 %v2842
      %v2844 = vpop.xlane.xlu0 %2843
      %v2845 = vsel %vm564, %v2837, 0.0
      %2846 = vadd.xlane.f32.xlu0 %v2845
      %v2847 = vpop.xlane.xlu0 %2846
      %v2848 = vsel %vm564, %v2838, 0.0
      %2849 = vadd.xlane.f32.xlu0 %v2848
      %v2850 = vpop.xlane.xlu0 %2849
      %v2851 = vmul.f32 %v2841, %v577
      %v2852 = vmul.f32 %v2844, %v577
      %v2853 = vmul.f32 %v2847, %v577
      %v2854 = vmul.f32 %v2850, %v577
      %v2855 = vsub.f32 %v2835, %v2851
      %v2856 = vsub.f32 %v2836, %v2852
      %v2857 = vsub.f32 %v2837, %v2853
      %v2858 = vsub.f32 %v2838, %v2854
      %v2859 = vmul.f32 %v2855, %v2855
      %v2860 = vmul.f32 %v2856, %v2856
      %v2861 = vmul.f32 %v2857, %v2857
      %v2862 = vmul.f32 %v2858, %v2858
      %v2863 = vsel %vm564, %v2859, 0.0
      %2864 = vadd.xlane.f32.xlu0 %v2863
      %v2865 = vpop.xlane.xlu0 %2864
      %v2866 = vsel %vm564, %v2860, 0.0
      %2867 = vadd.xlane.f32.xlu0 %v2866
      %v2868 = vpop.xlane.xlu0 %2867
      %v2869 = vsel %vm564, %v2861, 0.0
      %2870 = vadd.xlane.f32.xlu0 %v2869
      %v2871 = vpop.xlane.xlu0 %2870
      %v2872 = vsel %vm564, %v2862, 0.0
      %2873 = vadd.xlane.f32.xlu0 %v2872
      %v2874 = vpop.xlane.xlu0 %2873
      %v2875 = vmul.f32 %v2865, %v577
      %v2876 = vmul.f32 %v2868, %v577
      %v2877 = vmul.f32 %v2871, %v577
      %v2878 = vmul.f32 %v2874, %v577
      %v2879 = vadd.f32 %v2875, 1e-05
      %v2880 = vadd.f32 %v2876, 1e-05
      %v2881 = vadd.f32 %v2877, 1e-05
      %v2882 = vadd.f32 %v2878, 1e-05
      %v2883 = vrsqrt.pop %v2879
      %v2884 = vrsqrt.pop %v2880
      %v2885 = vrsqrt.pop %v2881
      %v2886 = vrsqrt.pop %v2882
      %v2887 = vmul.f32 %v2855, %v2883
      %v2888 = vmul.f32 %v2856, %v2884
      %v2889 = vmul.f32 %v2857, %v2885
      %v2890 = vmul.f32 %v2858, %v2886
      %v2891 = vlaneseq
      %v2892 = vshrl.u32 %v2891, 7
      %v2893 = vsub.s32 0, %v2892
      %v2894 = vrot.slane %v1843, %v2893
      %v2895 = vmul.f32 %v2887, %v2894
      %v2896 = vmul.f32 %v2888, %v2894
      %v2897 = vmul.f32 %v2889, %v2894
      %v2898 = vmul.f32 %v2890, %v2894
      %v2899 = vlaneseq
      %v2900 = vshrl.u32 %v2899, 7
      %v2901 = vsub.s32 0, %v2900
      %v2902 = vrot.slane %v1844, %v2901
      %v2903 = vadd.f32 %v2895, %v2902
      %v2904 = vadd.f32 %v2896, %v2902
      %v2905 = vadd.f32 %v2897, %v2902
      %v2906 = vadd.f32 %v2898, %v2902
      %v2907 = vpack.c.bf16 %v2904, %v2903
      %v2908 = vpack.c.bf16 %v2906, %v2905
      %v2909 = vlaneseq
      %v2910 = vshrl.u32 %v2909, 7
      %v2911 = vsub.s32 0, %v2910
      %v2912 = vrot.slane %v1851, %v2911
      %v2914 = vsel %vm564, %v2907, 0
      %v2917 = vsel %vm564, %v2908, 0
      %2919 = vmatprep.subr.bf16.mxu0 0
      %2920 = vmatpush1.bf16.msra.mxu0 %v1849
      %2921 = vmatprep.subr.bf16.mxu0 0
      %2922 = vmatpush1.bf16.msra.mxu0 %v1850
      %2923 = vmatprep.subr.bf16.mxu0 0
      %2924 = vmatpush1.bf16.msra.mxu0 0
      %2925 = vmatprep.subr.bf16.mxu0 0
      %2926 = vmatpush1.bf16.msra.mxu0 0
      %2927 = vmatprep.subr.bf16.mxu0 0
      %2928 = vmatpush1.bf16.msra.mxu0 0
      %2929 = vmatprep.subr.bf16.mxu0 0
      %2930 = vmatpush1.bf16.msra.mxu0 0
      %2931 = vmatprep.subr.bf16.mxu0 0
      %2932 = vmatpush1.bf16.msra.mxu0 0
      %2933 = vmatprep.subr.bf16.mxu0 0
      %2934 = vmatpush1.bf16.msra.mxu0 0
      %2935 = vmatprep.subr.bf16.mxu0 0
      %2936 = vmatpush1.bf16.msra.mxu0 0
      %2937 = vmatprep.subr.bf16.mxu0 0
      %2938 = vmatpush1.bf16.msra.mxu0 0
      %2939 = vmatprep.subr.bf16.mxu0 0
      %2940 = vmatpush1.bf16.msra.mxu0 0
      %2941 = vmatprep.subr.bf16.mxu0 0
      %2942 = vmatpush1.bf16.msra.mxu0 0
      %2943 = vmatprep.subr.bf16.mxu0 0
      %2944 = vmatpush1.bf16.msra.mxu0 0
      %2945 = vmatprep.subr.bf16.mxu0 0
      %2946 = vmatpush1.bf16.msra.mxu0 0
      %2947 = vmatprep.subr.bf16.mxu0 0
      %2948 = vmatpush1.bf16.msra.mxu0 0
      %2949 = vmatprep.subr.bf16.mxu0 0
      %2950 = vmatpush1.bf16.msra.mxu0 0
      %2951 = vmatprep.mubr.bf16.mxu0 0
      %2952 = vmatmul.mubr.bf16.gmra.mrb[0].mxu0 %v2914
      %v2953 = vpop.f32.mrb[0].mxu0
      %v2954 = vadd.f32 %v2912, %v2953
      %v2955 = vpop.f32.mrb[0].mxu0
      %v2956 = vpop.f32.mrb[0].mxu0
      %v2957 = vadd.f32 %v2912, %v2956
      %v2958 = vpop.f32.mrb[0].mxu0
      %2959 = vmatprep.mubr.bf16.mxu0 0
      %2960 = vmatmul.mubr.bf16.gmra.mrb[0].mxu0 %v2917
      %v2961 = vpop.f32.mrb[0].mxu0
      %v2962 = vadd.f32 %v2912, %v2961
      %v2963 = vpop.f32.mrb[0].mxu0
      %v2964 = vpop.f32.mrb[0].mxu0
      %v2965 = vadd.f32 %v2912, %v2964
      %v2966 = vpop.f32.mrb[0].mxu0
      %2967 = vdwg.mxu0
      %v2968 = vmul.f32 %v2954, 0.5
      %v2969 = vmul.f32 %v2957, 0.5
      %v2970 = vmul.f32 %v2962, 0.5
      %v2971 = vmul.f32 %v2965, 0.5
      %v2972 = vmul.f32 %v2954, 0.70710677
      %v2973 = vmul.f32 %v2957, 0.70710677
      %v2974 = vmul.f32 %v2962, 0.70710677
      %v2975 = vmul.f32 %v2965, 0.70710677
      %vm2976 = vcmp.ge.f32.partialorder %v2972, 0.0
      %vm2977 = vcmp.ge.f32.partialorder %v2973, 0.0
      %vm2978 = vcmp.ge.f32.partialorder %v2974, 0.0
      %vm2979 = vcmp.ge.f32.partialorder %v2975, 0.0
      %v2980 = vsel %vm2976, 1.0, -1.0
      %v2981 = vsel %vm2977, 1.0, -1.0
      %v2982 = vsel %vm2978, 1.0, -1.0
      %v2983 = vsel %vm2979, 1.0, -1.0
      %v2984 = vand.u32 2147483647, %v2972
      %v2985 = vand.u32 2147483647, %v2973
      %v2986 = vand.u32 2147483647, %v2974
      %v2987 = vand.u32 2147483647, %v2975
      %v2988 = vmul.f32 %v2984, 0.3275911
      %v2989 = vmul.f32 %v2985, 0.3275911
      %v2990 = vmul.f32 %v2986, 0.3275911
      %v2991 = vmul.f32 %v2987, 0.3275911
      %v2992 = vadd.f32 %v2988, 1.0
      %v2993 = vadd.f32 %v2989, 1.0
      %v2994 = vadd.f32 %v2990, 1.0
      %v2995 = vadd.f32 %v2991, 1.0
      %v2996 = vrcp.pop %v2992
      %v2997 = vmul.f32 1.0, %v2996
      %v2998 = vrcp.pop %v2993
      %v2999 = vmul.f32 1.0, %v2998
      %v3000 = vrcp.pop %v2994
      %v3001 = vmul.f32 1.0, %v3000
      %v3002 = vrcp.pop %v2995
      %v3003 = vmul.f32 1.0, %v3002
      %v3004 = vmul.f32 %v2997, 1.0614054
      %v3005 = vmul.f32 %v2999, 1.0614054
      %v3006 = vmul.f32 %v3001, 1.0614054
      %v3007 = vmul.f32 %v3003, 1.0614054
      %v3008 = vadd.f32 %v3004, -1.4531521
      %v3009 = vadd.f32 %v3005, -1.4531521
      %v3010 = vadd.f32 %v3006, -1.4531521
      %v3011 = vadd.f32 %v3007, -1.4531521
      %v3012 = vmul.f32 %v3008, %v2997
      %v3013 = vmul.f32 %v3009, %v2999
      %v3014 = vmul.f32 %v3010, %v3001
      %v3015 = vmul.f32 %v3011, %v3003
      %v3016 = vadd.f32 %v3012, 1.4214138
      %v3017 = vadd.f32 %v3013, 1.4214138
      %v3018 = vadd.f32 %v3014, 1.4214138
      %v3019 = vadd.f32 %v3015, 1.4214138
      %v3020 = vmul.f32 %v3016, %v2997
      %v3021 = vmul.f32 %v3017, %v2999
      %v3022 = vmul.f32 %v3018, %v3001
      %v3023 = vmul.f32 %v3019, %v3003
      %v3024 = vadd.f32 %v3020, -0.28449672
      %v3025 = vadd.f32 %v3021, -0.28449672
      %v3026 = vadd.f32 %v3022, -0.28449672
      %v3027 = vadd.f32 %v3023, -0.28449672
      %v3028 = vmul.f32 %v3024, %v2997
      %v3029 = vmul.f32 %v3025, %v2999
      %v3030 = vmul.f32 %v3026, %v3001
      %v3031 = vmul.f32 %v3027, %v3003
      %v3032 = vadd.f32 %v3028, 0.2548296
      %v3033 = vadd.f32 %v3029, 0.2548296
      %v3034 = vadd.f32 %v3030, 0.2548296
      %v3035 = vadd.f32 %v3031, 0.2548296
      %v3036 = vmul.f32 %v3032, %v2997
      %v3037 = vmul.f32 %v3033, %v2999
      %v3038 = vmul.f32 %v3034, %v3001
      %v3039 = vmul.f32 %v3035, %v3003
      %v3040 = vsub.f32 0.0, %v2984
      %v3041 = vsub.f32 0.0, %v2985
      %v3042 = vsub.f32 0.0, %v2986
      %v3043 = vsub.f32 0.0, %v2987
      %v3044 = vmul.f32 %v3040, %v2984
      %v3045 = vmul.f32 %v3041, %v2985
      %v3046 = vmul.f32 %v3042, %v2986
      %v3047 = vmul.f32 %v3043, %v2987
      %v3048 = vmul.f32 %v3044, 1.442695
      %v3049 = vpow.pop %v3048
      %v3050 = vmul.f32 %v3045, 1.442695
      %v3051 = vpow.pop %v3050
      %v3052 = vmul.f32 %v3046, 1.442695
      %v3053 = vpow.pop %v3052
      %v3054 = vmul.f32 %v3047, 1.442695
      %v3055 = vpow.pop %v3054
      %v3056 = vmul.f32 %v3036, %v3049
      %v3057 = vmul.f32 %v3037, %v3051
      %v3058 = vmul.f32 %v3038, %v3053
      %v3059 = vmul.f32 %v3039, %v3055
      %v3060 = vsub.f32 1.0, %v3056
      %v3061 = vsub.f32 1.0, %v3057
      %v3062 = vsub.f32 1.0, %v3058
      %v3063 = vsub.f32 1.0, %v3059
      %v3064 = vmul.f32 %v2980, %v3060
      %v3065 = vmul.f32 %v2981, %v3061
      %v3066 = vmul.f32 %v2982, %v3062
      %v3067 = vmul.f32 %v2983, %v3063
      %v3068 = vadd.f32 %v3064, 1.0
      %v3069 = vadd.f32 %v3065, 1.0
      %v3070 = vadd.f32 %v3066, 1.0
      %v3071 = vadd.f32 %v3067, 1.0
      %v3072 = vmul.f32 %v2968, %v3068
      %v3073 = vmul.f32 %v2969, %v3069
      %v3074 = vmul.f32 %v2970, %v3070
      %v3075 = vmul.f32 %v2971, %v3071
      %v3076 = vpack.c.bf16 %v3073, %v3072
      %v3077 = vpack.c.bf16 %v3075, %v3074
      %v3078 = vlaneseq
      %v3079 = vshrl.u32 %v3078, 7
      %v3080 = vsub.s32 0, %v3079
      %v3081 = vrot.slane %v1876, %v3080
      %3082 = vmatprep.subr.bf16.mxu0 0
      %3083 = vmatpush1.bf16.msra.mxu0 %v1868
      %3084 = vmatprep.subr.bf16.mxu0 0
      %3085 = vmatpush1.bf16.msra.mxu0 %v1869
      %3086 = vmatprep.subr.bf16.mxu0 0
      %3087 = vmatpush1.bf16.msra.mxu0 %v1870
      %3088 = vmatprep.subr.bf16.mxu0 0
      %3089 = vmatpush1.bf16.msra.mxu0 %v1871
      %3090 = vmatprep.subr.bf16.mxu0 0
      %3091 = vmatpush1.bf16.msra.mxu0 %v1872
      %3092 = vmatprep.subr.bf16.mxu0 0
      %3093 = vmatpush1.bf16.msra.mxu0 %v1873
      %3094 = vmatprep.subr.bf16.mxu0 0
      %3095 = vmatpush1.bf16.msra.mxu0 %v1874
      %3096 = vmatprep.subr.bf16.mxu0 0
      %3097 = vmatpush1.bf16.msra.mxu0 %v1875
      %3098 = vmatprep.subr.bf16.mxu0 0
      %3099 = vmatpush1.bf16.msra.mxu0 0
      %3100 = vmatprep.subr.bf16.mxu0 0
      %3101 = vmatpush1.bf16.msra.mxu0 0
      %3102 = vmatprep.subr.bf16.mxu0 0
      %3103 = vmatpush1.bf16.msra.mxu0 0
      %3104 = vmatprep.subr.bf16.mxu0 0
      %3105 = vmatpush1.bf16.msra.mxu0 0
      %3106 = vmatprep.subr.bf16.mxu0 0
      %3107 = vmatpush1.bf16.msra.mxu0 0
      %3108 = vmatprep.subr.bf16.mxu0 0
      %3109 = vmatpush1.bf16.msra.mxu0 0
      %3110 = vmatprep.subr.bf16.mxu0 0
      %3111 = vmatpush1.bf16.msra.mxu0 0
      %3112 = vmatprep.subr.bf16.mxu0 0
      %3113 = vmatpush1.bf16.msra.mxu0 0
      %3114 = vmatprep.mubr.bf16.mxu0 0
      %3115 = vmatmul.mubr.bf16.gmra.mrb[0].mxu0 %v3076
      %v3116 = vpop.f32.mrb[0].mxu0
      %v3117 = vadd.f32 %v3081, %v3116
      %v3118 = vpop.f32.mrb[0].mxu0
      %v3119 = vpop.f32.mrb[0].mxu0
      %v3120 = vadd.f32 %v3081, %v3119
      %v3121 = vpop.f32.mrb[0].mxu0
      %3122 = vmatprep.mubr.bf16.mxu0 0
      %3123 = vmatmul.mubr.bf16.gmra.mrb[0].mxu0 %v3077
      %v3124 = vpop.f32.mrb[0].mxu0
      %v3125 = vadd.f32 %v3081, %v3124
      %v3126 = vpop.f32.mrb[0].mxu0
      %v3127 = vpop.f32.mrb[0].mxu0
      %v3128 = vadd.f32 %v3081, %v3127
      %v3129 = vpop.f32.mrb[0].mxu0
      %3130 = vdwg.mxu0
      %v3131 = vadd.f32 %v2835, %v3117
      %v3132 = vadd.f32 %v2836, %v3120
      %v3133 = vadd.f32 %v2837, %v3125
      %v3134 = vadd.f32 %v2838, %v3128
      %v3135 = vld [vmem:[%s3 + $0x12] sm:$0x1]
      %v3136 = vld [vmem:[%s3 + $0x13] sm:$0x1]
      %v3137 = vsel %vm564, %v3131, 0.0
      %3138 = vadd.xlane.f32.xlu0 %v3137
      %v3139 = vpop.xlane.xlu0 %3138
      %v3140 = vsel %vm564, %v3132, 0.0
      %3141 = vadd.xlane.f32.xlu0 %v3140
      %v3142 = vpop.xlane.xlu0 %3141
      %v3143 = vsel %vm564, %v3133, 0.0
      %3144 = vadd.xlane.f32.xlu0 %v3143
      %v3145 = vpop.xlane.xlu0 %3144
      %v3146 = vsel %vm564, %v3134, 0.0
      %3147 = vadd.xlane.f32.xlu0 %v3146
      %v3148 = vpop.xlane.xlu0 %3147
      %v3149 = vmul.f32 %v3139, %v577
      %v3150 = vmul.f32 %v3142, %v577
      %v3151 = vmul.f32 %v3145, %v577
      %v3152 = vmul.f32 %v3148, %v577
      %v3153 = vsub.f32 %v3131, %v3149
      %v3154 = vsub.f32 %v3132, %v3150
      %v3155 = vsub.f32 %v3133, %v3151
      %v3156 = vsub.f32 %v3134, %v3152
      %v3157 = vmul.f32 %v3153, %v3153
      %v3158 = vmul.f32 %v3154, %v3154
      %v3159 = vmul.f32 %v3155, %v3155
      %v3160 = vmul.f32 %v3156, %v3156
      %v3161 = vsel %vm564, %v3157, 0.0
      %3162 = vadd.xlane.f32.xlu0 %v3161
      %v3163 = vpop.xlane.xlu0 %3162
      %v3164 = vsel %vm564, %v3158, 0.0
      %3165 = vadd.xlane.f32.xlu0 %v3164
      %v3166 = vpop.xlane.xlu0 %3165
      %v3167 = vsel %vm564, %v3159, 0.0
      %3168 = vadd.xlane.f32.xlu0 %v3167
      %v3169 = vpop.xlane.xlu0 %3168
      %v3170 = vsel %vm564, %v3160, 0.0
      %3171 = vadd.xlane.f32.xlu0 %v3170
      %v3172 = vpop.xlane.xlu0 %3171
      %v3173 = vmul.f32 %v3163, %v577
      %v3174 = vmul.f32 %v3166, %v577
      %v3175 = vmul.f32 %v3169, %v577
      %v3176 = vmul.f32 %v3172, %v577
      %v3177 = vadd.f32 %v3173, 1e-05
      %v3178 = vadd.f32 %v3174, 1e-05
      %v3179 = vadd.f32 %v3175, 1e-05
      %v3180 = vadd.f32 %v3176, 1e-05
      %v3181 = vrsqrt.pop %v3177
      %v3182 = vrsqrt.pop %v3178
      %v3183 = vrsqrt.pop %v3179
      %v3184 = vrsqrt.pop %v3180
      %v3185 = vmul.f32 %v3153, %v3181
      %v3186 = vmul.f32 %v3154, %v3182
      %v3187 = vmul.f32 %v3155, %v3183
      %v3188 = vmul.f32 %v3156, %v3184
      %v3189 = vlaneseq
      %v3190 = vshrl.u32 %v3189, 7
      %v3191 = vsub.s32 0, %v3190
      %v3192 = vrot.slane %v3135, %v3191
      %v3193 = vmul.f32 %v3185, %v3192
      %v3194 = vmul.f32 %v3186, %v3192
      %v3195 = vmul.f32 %v3187, %v3192
      %v3196 = vmul.f32 %v3188, %v3192
      %v3197 = vlaneseq
      %v3198 = vshrl.u32 %v3197, 7
      %v3199 = vsub.s32 0, %v3198
      %v3200 = vrot.slane %v3136, %v3199
      %v3201 = vadd.f32 %v3193, %v3200
      %v3202 = vadd.f32 %v3194, %v3200
      %v3203 = vadd.f32 %v3195, %v3200
      %v3204 = vadd.f32 %v3196, %v3200
      %v3205 = vld [vmem:[%s286] sm:$0xf]
      %v3206 = vld [vmem:[%s286 + $0x4] sm:$0xf]
      %v3207 = vld [vmem:[%s286 + $0x8] sm:$0xf]
      %v3208 = vld [vmem:[%s286 + $0xc] sm:$0xf]
      %v3209 = vld [vmem:[%s286 + $0x10] sm:$0xf]
      %v3210 = vld [vmem:[%s286 + $0x14] sm:$0xf]
      %v3211 = vld [vmem:[%s286 + $0x18] sm:$0xf]
      %v3212 = vld [vmem:[%s286 + $0x1c] sm:$0xf]
      %v3213 = vld [vmem:[%s286 + $0x20] sm:$0xf]
      %v3214 = vld [vmem:[%s286 + $0x24] sm:$0xf]
      %v3215 = vpack.c.bf16 %v3202, %v3201
      %v3216 = vpack.c.bf16 %v3204, %v3203
      %v3217 = vunpack.c.l.bf16 %v3205
      %v3218 = vunpack.c.l.bf16 %v3206
      %v3219 = vunpack.c.l.bf16 %v3207
      %v3220 = vunpack.c.l.bf16 %v3208
      %v3221 = vunpack.c.l.bf16 %v3209
      %v3222 = vunpack.c.l.bf16 %v3210
      %v3223 = vunpack.c.l.bf16 %v3211
      %v3224 = vunpack.c.l.bf16 %v3212
      %v3225 = vunpack.c.l.bf16 %v3213
      %v3226 = vunpack.c.l.bf16 %v3214
      %v3227 = vsel %vm564, %v3217, 0.0
      %3228 = vadd.xlane.f32.xlu0 %v3227
      %v3229 = vpop.xlane.xlu0 %3228
      %v3230 = vsel %vm564, %v3218, 0.0
      %3231 = vadd.xlane.f32.xlu0 %v3230
      %v3232 = vpop.xlane.xlu0 %3231
      %v3233 = vsel %vm564, %v3219, 0.0
      %3234 = vadd.xlane.f32.xlu0 %v3233
      %v3235 = vpop.xlane.xlu0 %3234
      %v3236 = vsel %vm564, %v3220, 0.0
      %3237 = vadd.xlane.f32.xlu0 %v3236
      %v3238 = vpop.xlane.xlu0 %3237
      %v3239 = vsel %vm564, %v3221, 0.0
      %3240 = vadd.xlane.f32.xlu0 %v3239
      %v3241 = vpop.xlane.xlu0 %3240
      %v3242 = vsel %vm564, %v3222, 0.0
      %3243 = vadd.xlane.f32.xlu0 %v3242
      %v3244 = vpop.xlane.xlu0 %3243
      %v3245 = vsel %vm564, %v3223, 0.0
      %3246 = vadd.xlane.f32.xlu0 %v3245
      %v3247 = vpop.xlane.xlu0 %3246
      %v3248 = vsel %vm564, %v3224, 0.0
      %3249 = vadd.xlane.f32.xlu0 %v3248
      %v3250 = vpop.xlane.xlu0 %3249
      %v3251 = vsel %vm564, %v3225, 0.0
      %3252 = vadd.xlane.f32.xlu0 %v3251
      %v3253 = vpop.xlane.xlu0 %3252
      %v3254 = vsel %vm564, %v3226, 0.0
      %3255 = vadd.xlane.f32.xlu0 %v3254
      %v3256 = vpop.xlane.xlu0 %3255
      %v3257 = vld [vmem:[%s3 + $0x14] sm:$0x1]
      %v3258 = vsub.f32 1.0, %v3229
      %v3259 = vsub.f32 1.0, %v3232
      %v3260 = vsub.f32 1.0, %v3235
      %v3261 = vsub.f32 1.0, %v3238
      %v3262 = vsub.f32 1.0, %v3241
      %v3263 = vsub.f32 1.0, %v3244
      %v3264 = vsub.f32 1.0, %v3247
      %v3265 = vsub.f32 1.0, %v3250
      %v3266 = vsub.f32 1.0, %v3253
      %v3267 = vsub.f32 1.0, %v3256
      %v3268 = vlaneseq
      %v3269 = vshrl.u32 %v3268, 7
      %v3270 = vsub.s32 0, %v3269
      %v3271 = vrot.slane %v3257, %v3270
      %v3272 = vmul.f32 %v3258, %v3271
      %v3273 = vmul.f32 %v3259, %v3271
      %v3274 = vmul.f32 %v3260, %v3271
      %v3275 = vmul.f32 %v3261, %v3271
      %v3276 = vmul.f32 %v3262, %v3271
      %v3277 = vmul.f32 %v3263, %v3271
      %v3278 = vmul.f32 %v3264, %v3271
      %v3279 = vmul.f32 %v3265, %v3271
      %v3280 = vmul.f32 %v3266, %v3271
      %v3281 = vmul.f32 %v3267, %v3271
      %v3292 = vunpack.c.l.b16 %v3205
      %v3293 = vunpack.c.l.b16 %v3206
      %v3294 = vunpack.c.l.b16 %v3207
      %v3295 = vunpack.c.l.b16 %v3208
      %v3296 = vunpack.c.l.b16 %v3209
      %v3297 = vunpack.c.l.b16 %v3210
      %v3298 = vunpack.c.l.b16 %v3211
      %v3299 = vunpack.c.l.b16 %v3212
      %v3300 = vunpack.c.l.b16 %v3213
      %v3301 = vunpack.c.l.b16 %v3214
      %v3302 = vpack.c.b16 %v3293, %v3292
      %v3303 = vpack.c.b16 %v3295, %v3294
      %v3304 = vpack.c.b16 %v3297, %v3296
      %v3305 = vpack.c.b16 %v3299, %v3298
      %v3306 = vpack.c.b16 %v3301, %v3300
      %v3308 = vsel %vm564, %v3302, 0
      %v3311 = vsel %vm564, %v3303, 0
      %v3314 = vsel %vm564, %v3304, 0
      %v3317 = vsel %vm564, %v3305, 0
      %v3320 = vsel %vm564, %v3306, 0
      %3322 = vmatprep.subr.bf16.mxu0 0
      %3323 = vmatpush1.bf16.msra.mxu0 %v3215
      %3324 = vmatprep.subr.bf16.mxu0 0
      %3325 = vmatpush1.bf16.msra.mxu0 %v3216
      %3326 = vmatprep.subr.bf16.mxu0 0
      %3327 = vmatpush1.bf16.msra.mxu0 0
      %3328 = vmatprep.subr.bf16.mxu0 0
      %3329 = vmatpush1.bf16.msra.mxu0 0
      %3330 = vmatprep.subr.bf16.mxu0 0
      %3331 = vmatpush1.bf16.msra.mxu0 0
      %3332 = vmatprep.subr.bf16.mxu0 0
      %3333 = vmatpush1.bf16.msra.mxu0 0
      %3334 = vmatprep.subr.bf16.mxu0 0
      %3335 = vmatpush1.bf16.msra.mxu0 0
      %3336 = vmatprep.subr.bf16.mxu0 0
      %3337 = vmatpush1.bf16.msra.mxu0 0
      %3338 = vmatprep.subr.bf16.mxu0 0
      %3339 = vmatpush1.bf16.msra.mxu0 0
      %3340 = vmatprep.subr.bf16.mxu0 0
      %3341 = vmatpush1.bf16.msra.mxu0 0
      %3342 = vmatprep.subr.bf16.mxu0 0
      %3343 = vmatpush1.bf16.msra.mxu0 0
      %3344 = vmatprep.subr.bf16.mxu0 0
      %3345 = vmatpush1.bf16.msra.mxu0 0
      %3346 = vmatprep.subr.bf16.mxu0 0
      %3347 = vmatpush1.bf16.msra.mxu0 0
      %3348 = vmatprep.subr.bf16.mxu0 0
      %3349 = vmatpush1.bf16.msra.mxu0 0
      %3350 = vmatprep.subr.bf16.mxu0 0
      %3351 = vmatpush1.bf16.msra.mxu0 0
      %3352 = vmatprep.subr.bf16.mxu0 0
      %3353 = vmatpush1.bf16.msra.mxu0 0
      %3354 = vmatprep.mubr.bf16.mxu0 0
      %3355 = vmatmul.mubr.bf16.gmra.mrb[0].mxu0 %v3308
      %v3356 = vpop.f32.mrb[0].mxu0
      %v3357 = vadd.f32 %v3272, %v3356
      %v3358 = vpop.f32.mrb[0].mxu0
      %v3359 = vpop.f32.mrb[0].mxu0
      %v3360 = vadd.f32 %v3273, %v3359
      %v3361 = vpop.f32.mrb[0].mxu0
      %3362 = vmatprep.mubr.bf16.mxu0 0
      %3363 = vmatmul.mubr.bf16.gmra.mrb[0].mxu0 %v3311
      %v3364 = vpop.f32.mrb[0].mxu0
      %v3365 = vadd.f32 %v3274, %v3364
      %v3366 = vpop.f32.mrb[0].mxu0
      %v3367 = vpop.f32.mrb[0].mxu0
      %v3368 = vadd.f32 %v3275, %v3367
      %v3369 = vpop.f32.mrb[0].mxu0
      %3370 = vmatprep.mubr.bf16.mxu0 0
      %3371 = vmatmul.mubr.bf16.gmra.mrb[0].mxu0 %v3314
      %v3372 = vpop.f32.mrb[0].mxu0
      %v3373 = vadd.f32 %v3276, %v3372
      %v3374 = vpop.f32.mrb[0].mxu0
      %v3375 = vpop.f32.mrb[0].mxu0
      %v3376 = vadd.f32 %v3277, %v3375
      %v3377 = vpop.f32.mrb[0].mxu0
      %3378 = vmatprep.mubr.bf16.mxu0 0
      %3379 = vmatmul.mubr.bf16.gmra.mrb[0].mxu0 %v3317
      %v3380 = vpop.f32.mrb[0].mxu0
      %v3381 = vadd.f32 %v3278, %v3380
      %v3382 = vpop.f32.mrb[0].mxu0
      %v3383 = vpop.f32.mrb[0].mxu0
      %v3384 = vadd.f32 %v3279, %v3383
      %v3385 = vpop.f32.mrb[0].mxu0
      %3386 = vmatprep.mubr.bf16.mxu0 0
      %3387 = vmatmul.mubr.bf16.gmra.mrb[0].mxu0 %v3320
      %v3388 = vpop.f32.mrb[0].mxu0
      %v3389 = vadd.f32 %v3280, %v3388
      %v3390 = vpop.f32.mrb[0].mxu0
      %v3391 = vpop.f32.mrb[0].mxu0
      %v3392 = vadd.f32 %v3281, %v3391
      %v3393 = vpop.f32.mrb[0].mxu0
      %3394 = vdwg.mxu0
      %v3395 = vld [vmem:[%s3 + $0x78] sm:$0xff]
      %v3396 = vld [vmem:[%s3 + $0x80] sm:$0xff]
      %v3397 = vld [vmem:[%s3 + $0x88] sm:$0xff]
      %v3398 = vld [vmem:[%s3 + $0x90] sm:$0xff]
      %v3399 = vld [vmem:[%s3 + $0x98] sm:$0xff]
      %v3400 = vld [vmem:[%s3 + $0xa0] sm:$0xff]
      %v3401 = vld [vmem:[%s3 + $0xa8] sm:$0xff]
      %v3402 = vld [vmem:[%s3 + $0xb0] sm:$0xff]
      %v3403 = vld [vmem:[%s3 + $0xb8] sm:$0xff]
      %v3404 = vld [vmem:[%s3 + $0xc0] sm:$0xff]
      %v3405 = vadd.f32 %v3357, %v3395
      %v3406 = vadd.f32 %v3360, %v3396
      %v3407 = vadd.f32 %v3365, %v3397
      %v3408 = vadd.f32 %v3368, %v3398
      %v3409 = vadd.f32 %v3373, %v3399
      %v3410 = vadd.f32 %v3376, %v3400
      %v3411 = vadd.f32 %v3381, %v3401
      %v3412 = vadd.f32 %v3384, %v3402
      %v3413 = vadd.f32 %v3389, %v3403
      %v3414 = vadd.f32 %v3392, %v3404
      %vm3415 = vcmp.lt.s32.totalorder %v512, 65
      %v3416 = vsel %vm3415, 0.0, -1e+30
      %v3417 = vld [vmem:[%s5] sm:$0x1]
      %v3418 = vld [vmem:[%s5 + $0x1] sm:$0x1]
      %v3419 = vld [vmem:[%s5 + $0x8] sm:$0xff]
      %v3420 = vld [vmem:[%s5 + $0x10] sm:$0xff]
      %v3421 = vld [vmem:[%s5 + $0x18] sm:$0xff]
      %v3422 = vld [vmem:[%s5 + $0x20] sm:$0xff]
      %v3423 = vpack.c.bf16 %v3420, %v3419
      %v3424 = vpack.c.bf16 %v3422, %v3421
      %v3425 = vld [vmem:[%s5 + $0x28] sm:$0xff]
      %v3426 = vld [vmem:[%s5 + $0x30] sm:$0xff]
      %v3427 = vld [vmem:[%s5 + $0x38] sm:$0xff]
      %v3428 = vld [vmem:[%s5 + $0x40] sm:$0xff]
      %v3429 = vpack.c.bf16 %v3426, %v3425
      %v3430 = vpack.c.bf16 %v3428, %v3427
      %v3431 = vld [vmem:[%s5 + $0x2] sm:$0x1]
      %v3432 = vld [vmem:[%s5 + $0x3] sm:$0x1]
      %v3433 = vld [vmem:[%s5 + $0x4] sm:$0x1]
      %v3434 = vld [vmem:[%s5 + $0x48] sm:$0xff]
      %v3435 = vld [vmem:[%s5 + $0x50] sm:$0xff]
      %v3436 = vld [vmem:[%s5 + $0x58] sm:$0xff]
      %v3437 = vld [vmem:[%s5 + $0x60] sm:$0xff]
      %v3438 = vpack.c.bf16 %v3435, %v3434
      %v3439 = vpack.c.bf16 %v3437, %v3436
      %v3440 = vld [vmem:[%s5 + $0x6] sm:$0x1]
      %v3441 = vld [vmem:[%s5 + $0x68] sm:$0xff]
      %v3442 = vld [vmem:[%s5 + $0x70] sm:$0xff]
      %v3443 = vld [vmem:[%s5 + $0x78] sm:$0xff]
      %v3444 = vld [vmem:[%s5 + $0x80] sm:$0xff]
      %v3445 = vld [vmem:[%s5 + $0x88] sm:$0xff]
      %v3446 = vld [vmem:[%s5 + $0x90] sm:$0xff]
      %v3447 = vld [vmem:[%s5 + $0x98] sm:$0xff]
      %v3448 = vld [vmem:[%s5 + $0xa0] sm:$0xff]
      %v3449 = vld [vmem:[%s5 + $0xa8] sm:$0xff]
      %v3450 = vld [vmem:[%s5 + $0xb0] sm:$0xff]
      %v3451 = vld [vmem:[%s5 + $0xb8] sm:$0xff]
      %v3452 = vld [vmem:[%s5 + $0xc0] sm:$0xff]
      %v3453 = vld [vmem:[%s5 + $0xc8] sm:$0xff]
      %v3454 = vld [vmem:[%s5 + $0xd0] sm:$0xff]
      %v3455 = vld [vmem:[%s5 + $0xd8] sm:$0xff]
      %v3456 = vld [vmem:[%s5 + $0xe0] sm:$0xff]
      %v3457 = vpack.c.bf16 %v3442, %v3441
      %v3458 = vpack.c.bf16 %v3444, %v3443
      %v3459 = vpack.c.bf16 %v3446, %v3445
      %v3460 = vpack.c.bf16 %v3448, %v3447
      %v3461 = vpack.c.bf16 %v3450, %v3449
      %v3462 = vpack.c.bf16 %v3452, %v3451
      %v3463 = vpack.c.bf16 %v3454, %v3453
      %v3464 = vpack.c.bf16 %v3456, %v3455
      %v3465 = vld [vmem:[%s5 + $0x5] sm:$0x1]
      %v3466 = vsel %vm564, %v3405, 0.0
      %3467 = vadd.xlane.f32.xlu0 %v3466
      %v3468 = vpop.xlane.xlu0 %3467
      %v3469 = vsel %vm564, %v3406, 0.0
      %3470 = vadd.xlane.f32.xlu0 %v3469
      %v3471 = vpop.xlane.xlu0 %3470
      %v3472 = vsel %vm564, %v3407, 0.0
      %3473 = vadd.xlane.f32.xlu0 %v3472
      %v3474 = vpop.xlane.xlu0 %3473
      %v3475 = vsel %vm564, %v3408, 0.0
      %3476 = vadd.xlane.f32.xlu0 %v3475
      %v3477 = vpop.xlane.xlu0 %3476
      %v3478 = vsel %vm564, %v3409, 0.0
      %3479 = vadd.xlane.f32.xlu0 %v3478
      %v3480 = vpop.xlane.xlu0 %3479
      %v3481 = vsel %vm564, %v3410, 0.0
      %3482 = vadd.xlane.f32.xlu0 %v3481
      %v3483 = vpop.xlane.xlu0 %3482
      %v3484 = vsel %vm564, %v3411, 0.0
      %3485 = vadd.xlane.f32.xlu0 %v3484
      %v3486 = vpop.xlane.xlu0 %3485
      %v3487 = vsel %vm564, %v3412, 0.0
      %3488 = vadd.xlane.f32.xlu0 %v3487
      %v3489 = vpop.xlane.xlu0 %3488
      %v3490 = vsel %vm564, %v3413, 0.0
      %3491 = vadd.xlane.f32.xlu0 %v3490
      %v3492 = vpop.xlane.xlu0 %3491
      %v3493 = vsel %vm564, %v3414, 0.0
      %3494 = vadd.xlane.f32.xlu0 %v3493
      %v3495 = vpop.xlane.xlu0 %3494
      %v3496 = vmul.f32 %v3468, %v577
      %v3497 = vmul.f32 %v3471, %v577
      %v3498 = vmul.f32 %v3474, %v577
      %v3499 = vmul.f32 %v3477, %v577
      %v3500 = vmul.f32 %v3480, %v577
      %v3501 = vmul.f32 %v3483, %v577
      %v3502 = vmul.f32 %v3486, %v577
      %v3503 = vmul.f32 %v3489, %v577
      %v3504 = vmul.f32 %v3492, %v577
      %v3505 = vmul.f32 %v3495, %v577
      %v3506 = vsub.f32 %v3405, %v3496
      %v3507 = vsub.f32 %v3406, %v3497
      %v3508 = vsub.f32 %v3407, %v3498
      %v3509 = vsub.f32 %v3408, %v3499
      %v3510 = vsub.f32 %v3409, %v3500
      %v3511 = vsub.f32 %v3410, %v3501
      %v3512 = vsub.f32 %v3411, %v3502
      %v3513 = vsub.f32 %v3412, %v3503
      %v3514 = vsub.f32 %v3413, %v3504
      %v3515 = vsub.f32 %v3414, %v3505
      %v3516 = vmul.f32 %v3506, %v3506
      %v3517 = vmul.f32 %v3507, %v3507
      %v3518 = vmul.f32 %v3508, %v3508
      %v3519 = vmul.f32 %v3509, %v3509
      %v3520 = vmul.f32 %v3510, %v3510
      %v3521 = vmul.f32 %v3511, %v3511
      %v3522 = vmul.f32 %v3512, %v3512
      %v3523 = vmul.f32 %v3513, %v3513
      %v3524 = vmul.f32 %v3514, %v3514
      %v3525 = vmul.f32 %v3515, %v3515
      %v3526 = vsel %vm564, %v3516, 0.0
      %3527 = vadd.xlane.f32.xlu0 %v3526
      %v3528 = vpop.xlane.xlu0 %3527
      %v3529 = vsel %vm564, %v3517, 0.0
      %3530 = vadd.xlane.f32.xlu0 %v3529
      %v3531 = vpop.xlane.xlu0 %3530
      %v3532 = vsel %vm564, %v3518, 0.0
      %3533 = vadd.xlane.f32.xlu0 %v3532
      %v3534 = vpop.xlane.xlu0 %3533
      %v3535 = vsel %vm564, %v3519, 0.0
      %3536 = vadd.xlane.f32.xlu0 %v3535
      %v3537 = vpop.xlane.xlu0 %3536
      %v3538 = vsel %vm564, %v3520, 0.0
      %3539 = vadd.xlane.f32.xlu0 %v3538
      %v3540 = vpop.xlane.xlu0 %3539
      %v3541 = vsel %vm564, %v3521, 0.0
      %3542 = vadd.xlane.f32.xlu0 %v3541
      %v3543 = vpop.xlane.xlu0 %3542
      %v3544 = vsel %vm564, %v3522, 0.0
      %3545 = vadd.xlane.f32.xlu0 %v3544
      %v3546 = vpop.xlane.xlu0 %3545
      %v3547 = vsel %vm564, %v3523, 0.0
      %3548 = vadd.xlane.f32.xlu0 %v3547
      %v3549 = vpop.xlane.xlu0 %3548
      %v3550 = vsel %vm564, %v3524, 0.0
      %3551 = vadd.xlane.f32.xlu0 %v3550
      %v3552 = vpop.xlane.xlu0 %3551
      %v3553 = vsel %vm564, %v3525, 0.0
      %3554 = vadd.xlane.f32.xlu0 %v3553
      %v3555 = vpop.xlane.xlu0 %3554
      %v3556 = vmul.f32 %v3528, %v577
      %v3557 = vmul.f32 %v3531, %v577
      %v3558 = vmul.f32 %v3534, %v577
      %v3559 = vmul.f32 %v3537, %v577
      %v3560 = vmul.f32 %v3540, %v577
      %v3561 = vmul.f32 %v3543, %v577
      %v3562 = vmul.f32 %v3546, %v577
      %v3563 = vmul.f32 %v3549, %v577
      %v3564 = vmul.f32 %v3552, %v577
      %v3565 = vmul.f32 %v3555, %v577
      %v3566 = vadd.f32 %v3556, 1e-05
      %v3567 = vadd.f32 %v3557, 1e-05
      %v3568 = vadd.f32 %v3558, 1e-05
      %v3569 = vadd.f32 %v3559, 1e-05
      %v3570 = vadd.f32 %v3560, 1e-05
      %v3571 = vadd.f32 %v3561, 1e-05
      %v3572 = vadd.f32 %v3562, 1e-05
      %v3573 = vadd.f32 %v3563, 1e-05
      %v3574 = vadd.f32 %v3564, 1e-05
      %v3575 = vadd.f32 %v3565, 1e-05
      %v3576 = vrsqrt.pop %v3566
      %v3577 = vrsqrt.pop %v3567
      %v3578 = vrsqrt.pop %v3568
      %v3579 = vrsqrt.pop %v3569
      %v3580 = vrsqrt.pop %v3570
      %v3581 = vrsqrt.pop %v3571
      %v3582 = vrsqrt.pop %v3572
      %v3583 = vrsqrt.pop %v3573
      %v3584 = vrsqrt.pop %v3574
      %v3585 = vrsqrt.pop %v3575
      %v3586 = vmul.f32 %v3506, %v3576
      %v3587 = vmul.f32 %v3507, %v3577
      %v3588 = vmul.f32 %v3508, %v3578
      %v3589 = vmul.f32 %v3509, %v3579
      %v3590 = vmul.f32 %v3510, %v3580
      %v3591 = vmul.f32 %v3511, %v3581
      %v3592 = vmul.f32 %v3512, %v3582
      %v3593 = vmul.f32 %v3513, %v3583
      %v3594 = vmul.f32 %v3514, %v3584
      %v3595 = vmul.f32 %v3515, %v3585
      %v3596 = vlaneseq
      %v3597 = vshrl.u32 %v3596, 7
      %v3598 = vsub.s32 0, %v3597
      %v3599 = vrot.slane %v3417, %v3598
      %v3600 = vmul.f32 %v3586, %v3599
      %v3601 = vmul.f32 %v3587, %v3599
      %v3602 = vmul.f32 %v3588, %v3599
      %v3603 = vmul.f32 %v3589, %v3599
      %v3604 = vmul.f32 %v3590, %v3599
      %v3605 = vmul.f32 %v3591, %v3599
      %v3606 = vmul.f32 %v3592, %v3599
      %v3607 = vmul.f32 %v3593, %v3599
      %v3608 = vmul.f32 %v3594, %v3599
      %v3609 = vmul.f32 %v3595, %v3599
      %v3610 = vlaneseq
      %v3611 = vshrl.u32 %v3610, 7
      %v3612 = vsub.s32 0, %v3611
      %v3613 = vrot.slane %v3418, %v3612
      %v3614 = vadd.f32 %v3600, %v3613
      %v3615 = vadd.f32 %v3601, %v3613
      %v3616 = vadd.f32 %v3602, %v3613
      %v3617 = vadd.f32 %v3603, %v3613
      %v3618 = vadd.f32 %v3604, %v3613
      %v3619 = vadd.f32 %v3605, %v3613
      %v3620 = vadd.f32 %v3606, %v3613
      %v3621 = vadd.f32 %v3607, %v3613
      %v3622 = vadd.f32 %v3608, %v3613
      %v3623 = vadd.f32 %v3609, %v3613
      %v3624 = vpack.c.bf16 %v3615, %v3614
      %v3625 = vpack.c.bf16 %v3617, %v3616
      %v3626 = vpack.c.bf16 %v3619, %v3618
      %v3627 = vpack.c.bf16 %v3621, %v3620
      %v3628 = vpack.c.bf16 %v3623, %v3622
      %v3630 = vsel %vm564, %v3624, 0
      %v3633 = vsel %vm564, %v3625, 0
      %v3636 = vsel %vm564, %v3626, 0
      %v3639 = vsel %vm564, %v3627, 0
      %v3642 = vsel %vm564, %v3628, 0
      %3644 = vmatprep.subr.bf16.mxu0 0
      %3645 = vmatpush1.bf16.msra.mxu0 %v3423
      %3646 = vmatprep.subr.bf16.mxu0 0
      %3647 = vmatpush1.bf16.msra.mxu0 %v3424
      %3648 = vmatprep.subr.bf16.mxu0 0
      %3649 = vmatpush1.bf16.msra.mxu0 0
      %3650 = vmatprep.subr.bf16.mxu0 0
      %3651 = vmatpush1.bf16.msra.mxu0 0
      %3652 = vmatprep.subr.bf16.mxu0 0
      %3653 = vmatpush1.bf16.msra.mxu0 0
      %3654 = vmatprep.subr.bf16.mxu0 0
      %3655 = vmatpush1.bf16.msra.mxu0 0
      %3656 = vmatprep.subr.bf16.mxu0 0
      %3657 = vmatpush1.bf16.msra.mxu0 0
      %3658 = vmatprep.subr.bf16.mxu0 0
      %3659 = vmatpush1.bf16.msra.mxu0 0
      %3660 = vmatprep.subr.bf16.mxu0 0
      %3661 = vmatpush1.bf16.msra.mxu0 0
      %3662 = vmatprep.subr.bf16.mxu0 0
      %3663 = vmatpush1.bf16.msra.mxu0 0
      %3664 = vmatprep.subr.bf16.mxu0 0
      %3665 = vmatpush1.bf16.msra.mxu0 0
      %3666 = vmatprep.subr.bf16.mxu0 0
      %3667 = vmatpush1.bf16.msra.mxu0 0
      %3668 = vmatprep.subr.bf16.mxu0 0
      %3669 = vmatpush1.bf16.msra.mxu0 0
      %3670 = vmatprep.subr.bf16.mxu0 0
      %3671 = vmatpush1.bf16.msra.mxu0 0
      %3672 = vmatprep.subr.bf16.mxu0 0
      %3673 = vmatpush1.bf16.msra.mxu0 0
      %3674 = vmatprep.subr.bf16.mxu0 0
      %3675 = vmatpush1.bf16.msra.mxu0 0
      %3676 = vmatprep.mubr.bf16.mxu0 0
      %3677 = vmatmul.mubr.bf16.gmra.mrb[0].mxu0 %v3630
      %v3678 = vpop.f32.mrb[0].mxu0
      %v3679 = vadd.f32 0.0, %v3678
      %v3680 = vpop.f32.mrb[0].mxu0
      %v3681 = vpop.f32.mrb[0].mxu0
      %v3682 = vadd.f32 0.0, %v3681
      %v3683 = vpop.f32.mrb[0].mxu0
      %3684 = vmatprep.mubr.bf16.mxu0 0
      %3685 = vmatmul.mubr.bf16.gmra.mrb[0].mxu0 %v3633
      %v3686 = vpop.f32.mrb[0].mxu0
      %v3687 = vadd.f32 0.0, %v3686
      %v3688 = vpop.f32.mrb[0].mxu0
      %v3689 = vpop.f32.mrb[0].mxu0
      %v3690 = vadd.f32 0.0, %v3689
      %v3691 = vpop.f32.mrb[0].mxu0
      %3692 = vmatprep.mubr.bf16.mxu0 0
      %3693 = vmatmul.mubr.bf16.gmra.mrb[0].mxu0 %v3636
      %v3694 = vpop.f32.mrb[0].mxu0
      %v3695 = vadd.f32 0.0, %v3694
      %v3696 = vpop.f32.mrb[0].mxu0
      %v3697 = vpop.f32.mrb[0].mxu0
      %v3698 = vadd.f32 0.0, %v3697
      %v3699 = vpop.f32.mrb[0].mxu0
      %3700 = vmatprep.mubr.bf16.mxu0 0
      %3701 = vmatmul.mubr.bf16.gmra.mrb[0].mxu0 %v3639
      %v3702 = vpop.f32.mrb[0].mxu0
      %v3703 = vadd.f32 0.0, %v3702
      %v3704 = vpop.f32.mrb[0].mxu0
      %v3705 = vpop.f32.mrb[0].mxu0
      %v3706 = vadd.f32 0.0, %v3705
      %v3707 = vpop.f32.mrb[0].mxu0
      %3708 = vmatprep.mubr.bf16.mxu0 0
      %3709 = vmatmul.mubr.bf16.gmra.mrb[0].mxu0 %v3642
      %v3710 = vpop.f32.mrb[0].mxu0
      %v3711 = vadd.f32 0.0, %v3710
      %v3712 = vpop.f32.mrb[0].mxu0
      %v3713 = vpop.f32.mrb[0].mxu0
      %v3714 = vadd.f32 0.0, %v3713
      %v3715 = vpop.f32.mrb[0].mxu0
      %3716 = vdwg.mxu0
      %v3717 = vmul.f32 %v3679, 0.35355338
      %v3718 = vmul.f32 %v3682, 0.35355338
      %v3719 = vmul.f32 %v3687, 0.35355338
      %v3720 = vmul.f32 %v3690, 0.35355338
      %v3721 = vmul.f32 %v3695, 0.35355338
      %v3722 = vmul.f32 %v3698, 0.35355338
      %v3723 = vmul.f32 %v3703, 0.35355338
      %v3724 = vmul.f32 %v3706, 0.35355338
      %v3725 = vmul.f32 %v3711, 0.35355338
      %v3726 = vmul.f32 %v3714, 0.35355338
      %v3727 = vpack.c.bf16 %v3718, %v3717
      %v3728 = vpack.c.bf16 %v3720, %v3719
      %v3729 = vpack.c.bf16 %v3722, %v3721
      %v3730 = vpack.c.bf16 %v3724, %v3723
      %v3731 = vpack.c.bf16 %v3726, %v3725
      %v3732 = vpack.c.bf16 %v3682, %v3679
      %v3733 = vpack.c.bf16 %v3690, %v3687
      %v3734 = vpack.c.bf16 %v3698, %v3695
      %v3735 = vpack.c.bf16 %v3706, %v3703
      %v3736 = vpack.c.bf16 %v3714, %v3711
      %3742 = vrot.lane.b32.xlu0 %v3732, 96
      %v3743 = vpop.permute.xlu0 %3742
      %3744 = vrot.lane.b32.xlu0 %v3733, 96
      %v3745 = vpop.permute.xlu0 %3744
      %3746 = vrot.lane.b32.xlu0 %v3734, 96
      %v3747 = vpop.permute.xlu0 %3746
      %3748 = vrot.lane.b32.xlu0 %v3735, 96
      %v3749 = vpop.permute.xlu0 %3748
      %3750 = vrot.lane.b32.xlu0 %v3736, 96
      %v3751 = vpop.permute.xlu0 %3750
      %v3753 = vsel %vm705, %v3727, 0
      %v3756 = vsel %vm705, %v3728, 0
      %v3759 = vsel %vm705, %v3729, 0
      %v3762 = vsel %vm705, %v3730, 0
      %v3765 = vsel %vm705, %v3731, 0
      %v3768 = vsel %vm705, %v3743, 0
      %v3771 = vsel %vm705, %v3745, 0
      %v3774 = vsel %vm705, %v3747, 0
      %v3777 = vsel %vm705, %v3749, 0
      %v3780 = vsel %vm705, %v3751, 0
      %3782 = vmatprep.subr.bf16.mxu0 0
      %3783 = vmatpush1.bf16.xpose.msra.mxu0 %v3768
      %3784 = vmatprep.subr.bf16.mxu0 0
      %3785 = vmatpush1.bf16.xpose.msra.mxu0 %v3771
      %3786 = vmatprep.subr.bf16.mxu0 0
      %3787 = vmatpush1.bf16.xpose.msra.mxu0 %v3774
      %3788 = vmatprep.subr.bf16.mxu0 0
      %3789 = vmatpush1.bf16.xpose.msra.mxu0 %v3777
      %3790 = vmatprep.subr.bf16.mxu0 0
      %3791 = vmatpush1.bf16.xpose.msra.mxu0 %v3780
      %3792 = vmatprep.subr.bf16.mxu0 0
      %3793 = vmatpush1.bf16.xpose.msra.mxu0 0
      %3794 = vmatprep.subr.bf16.mxu0 0
      %3795 = vmatpush1.bf16.xpose.msra.mxu0 0
      %3796 = vmatprep.subr.bf16.mxu0 0
      %3797 = vmatpush1.bf16.xpose.msra.mxu0 0
      %3798 = vmatprep.subr.bf16.mxu0 0
      %3799 = vmatpush1.bf16.xpose.msra.mxu0 0
      %3800 = vmatprep.subr.bf16.mxu0 0
      %3801 = vmatpush1.bf16.xpose.msra.mxu0 0
      %3802 = vmatprep.subr.bf16.mxu0 0
      %3803 = vmatpush1.bf16.xpose.msra.mxu0 0
      %3804 = vmatprep.subr.bf16.mxu0 0
      %3805 = vmatpush1.bf16.xpose.msra.mxu0 0
      %3806 = vmatprep.subr.bf16.mxu0 0
      %3807 = vmatpush1.bf16.xpose.msra.mxu0 0
      %3808 = vmatprep.subr.bf16.mxu0 0
      %3809 = vmatpush1.bf16.xpose.msra.mxu0 0
      %3810 = vmatprep.subr.bf16.mxu0 0
      %3811 = vmatpush1.bf16.xpose.msra.mxu0 0
      %3812 = vmatprep.subr.bf16.mxu0 0
      %3813 = vmatpush1.bf16.xpose.msra.mxu0 0
      %3814 = vmatprep.mubr.bf16.mxu0 0
      %3815 = vmatmul.mubr.bf16.gmra.mrb[0].mxu0 %v3753
      %v3816 = vpop.f32.mrb[0].mxu0
      %v3817 = vadd.f32 %v3416, %v3816
      %v3818 = vpop.f32.mrb[0].mxu0
      %v3819 = vpop.f32.mrb[0].mxu0
      %v3820 = vadd.f32 %v3416, %v3819
      %v3821 = vpop.f32.mrb[0].mxu0
      %3822 = vmatprep.mubr.bf16.mxu0 0
      %3823 = vmatmul.mubr.bf16.gmra.mrb[0].mxu0 %v3756
      %v3824 = vpop.f32.mrb[0].mxu0
      %v3825 = vadd.f32 %v3416, %v3824
      %v3826 = vpop.f32.mrb[0].mxu0
      %v3827 = vpop.f32.mrb[0].mxu0
      %v3828 = vadd.f32 %v3416, %v3827
      %v3829 = vpop.f32.mrb[0].mxu0
      %3830 = vmatprep.mubr.bf16.mxu0 0
      %3831 = vmatmul.mubr.bf16.gmra.mrb[0].mxu0 %v3759
      %v3832 = vpop.f32.mrb[0].mxu0
      %v3833 = vadd.f32 %v3416, %v3832
      %v3834 = vpop.f32.mrb[0].mxu0
      %v3835 = vpop.f32.mrb[0].mxu0
      %v3836 = vadd.f32 %v3416, %v3835
      %v3837 = vpop.f32.mrb[0].mxu0
      %3838 = vmatprep.mubr.bf16.mxu0 0
      %3839 = vmatmul.mubr.bf16.gmra.mrb[0].mxu0 %v3762
      %v3840 = vpop.f32.mrb[0].mxu0
      %v3841 = vadd.f32 %v3416, %v3840
      %v3842 = vpop.f32.mrb[0].mxu0
      %v3843 = vpop.f32.mrb[0].mxu0
      %v3844 = vadd.f32 %v3416, %v3843
      %v3845 = vpop.f32.mrb[0].mxu0
      %3846 = vmatprep.mubr.bf16.mxu0 0
      %3847 = vmatmul.mubr.bf16.gmra.mrb[0].mxu0 %v3765
      %v3848 = vpop.f32.mrb[0].mxu0
      %v3849 = vadd.f32 %v3416, %v3848
      %v3850 = vpop.f32.mrb[0].mxu0
      %v3851 = vpop.f32.mrb[0].mxu0
      %v3852 = vadd.f32 %v3416, %v3851
      %v3853 = vpop.f32.mrb[0].mxu0
      %3854 = vdwg.mxu0
      %vm3855 = vcmask 654336
      %v3856 = vsel %vm3855, %v3817, -inf
      %3857 = vmax.xlane.f32.xlu0 %v3856
      %v3858 = vpop.xlane.xlu0 %3857
      %v3859 = vsel %vm3855, %v3820, -inf
      %3860 = vmax.xlane.f32.xlu0 %v3859
      %v3861 = vpop.xlane.xlu0 %3860
      %v3862 = vsel %vm3855, %v3825, -inf
      %3863 = vmax.xlane.f32.xlu0 %v3862
      %v3864 = vpop.xlane.xlu0 %3863
      %v3865 = vsel %vm3855, %v3828, -inf
      %3866 = vmax.xlane.f32.xlu0 %v3865
      %v3867 = vpop.xlane.xlu0 %3866
      %v3868 = vsel %vm3855, %v3833, -inf
      %3869 = vmax.xlane.f32.xlu0 %v3868
      %v3870 = vpop.xlane.xlu0 %3869
      %v3871 = vsel %vm3855, %v3836, -inf
      %3872 = vmax.xlane.f32.xlu0 %v3871
      %v3873 = vpop.xlane.xlu0 %3872
      %v3874 = vsel %vm3855, %v3841, -inf
      %3875 = vmax.xlane.f32.xlu0 %v3874
      %v3876 = vpop.xlane.xlu0 %3875
      %v3877 = vsel %vm3855, %v3844, -inf
      %3878 = vmax.xlane.f32.xlu0 %v3877
      %v3879 = vpop.xlane.xlu0 %3878
      %v3880 = vsel %vm3855, %v3849, -inf
      %3881 = vmax.xlane.f32.xlu0 %v3880
      %v3882 = vpop.xlane.xlu0 %3881
      %v3883 = vsel %vm3855, %v3852, -inf
      %3884 = vmax.xlane.f32.xlu0 %v3883
      %v3885 = vpop.xlane.xlu0 %3884
      %v3886 = vsub.f32 %v3817, %v3858
      %v3887 = vsub.f32 %v3820, %v3861
      %v3888 = vsub.f32 %v3825, %v3864
      %v3889 = vsub.f32 %v3828, %v3867
      %v3890 = vsub.f32 %v3833, %v3870
      %v3891 = vsub.f32 %v3836, %v3873
      %v3892 = vsub.f32 %v3841, %v3876
      %v3893 = vsub.f32 %v3844, %v3879
      %v3894 = vsub.f32 %v3849, %v3882
      %v3895 = vsub.f32 %v3852, %v3885
      %v3896 = vmul.f32 %v3886, 1.442695
      %v3897 = vpow.pop %v3896
      %v3898 = vmul.f32 %v3887, 1.442695
      %v3899 = vpow.pop %v3898
      %v3900 = vmul.f32 %v3888, 1.442695
      %v3901 = vpow.pop %v3900
      %v3902 = vmul.f32 %v3889, 1.442695
      %v3903 = vpow.pop %v3902
      %v3904 = vmul.f32 %v3890, 1.442695
      %v3905 = vpow.pop %v3904
      %v3906 = vmul.f32 %v3891, 1.442695
      %v3907 = vpow.pop %v3906
      %v3908 = vmul.f32 %v3892, 1.442695
      %v3909 = vpow.pop %v3908
      %v3910 = vmul.f32 %v3893, 1.442695
      %v3911 = vpow.pop %v3910
      %v3912 = vmul.f32 %v3894, 1.442695
      %v3913 = vpow.pop %v3912
      %v3914 = vmul.f32 %v3895, 1.442695
      %v3915 = vpow.pop %v3914
      %v3916 = vsel %vm3855, %v3897, 0.0
      %3917 = vadd.xlane.f32.xlu0 %v3916
      %v3918 = vpop.xlane.xlu0 %3917
      %v3919 = vsel %vm3855, %v3899, 0.0
      %3920 = vadd.xlane.f32.xlu0 %v3919
      %v3921 = vpop.xlane.xlu0 %3920
      %v3922 = vsel %vm3855, %v3901, 0.0
      %3923 = vadd.xlane.f32.xlu0 %v3922
      %v3924 = vpop.xlane.xlu0 %3923
      %v3925 = vsel %vm3855, %v3903, 0.0
      %3926 = vadd.xlane.f32.xlu0 %v3925
      %v3927 = vpop.xlane.xlu0 %3926
      %v3928 = vsel %vm3855, %v3905, 0.0
      %3929 = vadd.xlane.f32.xlu0 %v3928
      %v3930 = vpop.xlane.xlu0 %3929
      %v3931 = vsel %vm3855, %v3907, 0.0
      %3932 = vadd.xlane.f32.xlu0 %v3931
      %v3933 = vpop.xlane.xlu0 %3932
      %v3934 = vsel %vm3855, %v3909, 0.0
      %3935 = vadd.xlane.f32.xlu0 %v3934
      %v3936 = vpop.xlane.xlu0 %3935
      %v3937 = vsel %vm3855, %v3911, 0.0
      %3938 = vadd.xlane.f32.xlu0 %v3937
      %v3939 = vpop.xlane.xlu0 %3938
      %v3940 = vsel %vm3855, %v3913, 0.0
      %3941 = vadd.xlane.f32.xlu0 %v3940
      %v3942 = vpop.xlane.xlu0 %3941
      %v3943 = vsel %vm3855, %v3915, 0.0
      %3944 = vadd.xlane.f32.xlu0 %v3943
      %v3945 = vpop.xlane.xlu0 %3944
      %v3946 = vrcp.pop %v3918
      %v3947 = vmul.f32 %v3897, %v3946
      %v3948 = vrcp.pop %v3921
      %v3949 = vmul.f32 %v3899, %v3948
      %v3950 = vrcp.pop %v3924
      %v3951 = vmul.f32 %v3901, %v3950
      %v3952 = vrcp.pop %v3927
      %v3953 = vmul.f32 %v3903, %v3952
      %v3954 = vrcp.pop %v3930
      %v3955 = vmul.f32 %v3905, %v3954
      %v3956 = vrcp.pop %v3933
      %v3957 = vmul.f32 %v3907, %v3956
      %v3958 = vrcp.pop %v3936
      %v3959 = vmul.f32 %v3909, %v3958
      %v3960 = vrcp.pop %v3939
      %v3961 = vmul.f32 %v3911, %v3960
      %v3962 = vrcp.pop %v3942
      %v3963 = vmul.f32 %v3913, %v3962
      %v3964 = vrcp.pop %v3945
      %v3965 = vmul.f32 %v3915, %v3964
      %v3966 = vpack.c.bf16 %v3949, %v3947
      %v3967 = vpack.c.bf16 %v3953, %v3951
      %v3968 = vpack.c.bf16 %v3957, %v3955
      %v3969 = vpack.c.bf16 %v3961, %v3959
      %v3970 = vpack.c.bf16 %v3965, %v3963
      %3971 = vrot.lane.b32.xlu0 %v3732, 64
      %v3972 = vpop.permute.xlu0 %3971
      %3973 = vrot.lane.b32.xlu0 %v3733, 64
      %v3974 = vpop.permute.xlu0 %3973
      %3975 = vrot.lane.b32.xlu0 %v3734, 64
      %v3976 = vpop.permute.xlu0 %3975
      %3977 = vrot.lane.b32.xlu0 %v3735, 64
      %v3978 = vpop.permute.xlu0 %3977
      %3979 = vrot.lane.b32.xlu0 %v3736, 64
      %v3980 = vpop.permute.xlu0 %3979
      %v3987 = vsel %vm3855, %v3966, 0
      %v3990 = vsel %vm3855, %v3967, 0
      %v3993 = vsel %vm3855, %v3968, 0
      %v3996 = vsel %vm3855, %v3969, 0
      %v3999 = vsel %vm3855, %v3970, 0
      %4001 = vmatprep.subr.bf16.mxu0 0
      %4002 = vmatpush1.bf16.msra.mxu0 %v3972
      %4003 = vmatprep.subr.bf16.mxu0 0
      %4004 = vmatpush1.bf16.msra.mxu0 %v3974
      %4005 = vmatprep.subr.bf16.mxu0 0
      %4006 = vmatpush1.bf16.msra.mxu0 %v3976
      %4007 = vmatprep.subr.bf16.mxu0 0
      %4008 = vmatpush1.bf16.msra.mxu0 %v3978
      %4009 = vmatprep.subr.bf16.mxu0 0
      %4010 = vmatpush1.bf16.msra.mxu0 %v3980
      %4011 = vmatprep.subr.bf16.mxu0 0
      %4012 = vmatpush1.bf16.msra.mxu0 0
      %4013 = vmatprep.subr.bf16.mxu0 0
      %4014 = vmatpush1.bf16.msra.mxu0 0
      %4015 = vmatprep.subr.bf16.mxu0 0
      %4016 = vmatpush1.bf16.msra.mxu0 0
      %4017 = vmatprep.subr.bf16.mxu0 0
      %4018 = vmatpush1.bf16.msra.mxu0 0
      %4019 = vmatprep.subr.bf16.mxu0 0
      %4020 = vmatpush1.bf16.msra.mxu0 0
      %4021 = vmatprep.subr.bf16.mxu0 0
      %4022 = vmatpush1.bf16.msra.mxu0 0
      %4023 = vmatprep.subr.bf16.mxu0 0
      %4024 = vmatpush1.bf16.msra.mxu0 0
      %4025 = vmatprep.subr.bf16.mxu0 0
      %4026 = vmatpush1.bf16.msra.mxu0 0
      %4027 = vmatprep.subr.bf16.mxu0 0
      %4028 = vmatpush1.bf16.msra.mxu0 0
      %4029 = vmatprep.subr.bf16.mxu0 0
      %4030 = vmatpush1.bf16.msra.mxu0 0
      %4031 = vmatprep.subr.bf16.mxu0 0
      %4032 = vmatpush1.bf16.msra.mxu0 0
      %4033 = vmatprep.mubr.bf16.mxu0 0
      %4034 = vmatmul.mubr.bf16.gmra.mrb[0].mxu0 %v3987
      %v4035 = vpop.f32.mrb[0].mxu0
      %v4036 = vadd.f32 0.0, %v4035
      %v4037 = vpop.f32.mrb[0].mxu0
      %v4038 = vpop.f32.mrb[0].mxu0
      %v4039 = vadd.f32 0.0, %v4038
      %v4040 = vpop.f32.mrb[0].mxu0
      %4041 = vmatprep.mubr.bf16.mxu0 0
      %4042 = vmatmul.mubr.bf16.gmra.mrb[0].mxu0 %v3990
      %v4043 = vpop.f32.mrb[0].mxu0
      %v4044 = vadd.f32 0.0, %v4043
      %v4045 = vpop.f32.mrb[0].mxu0
      %v4046 = vpop.f32.mrb[0].mxu0
      %v4047 = vadd.f32 0.0, %v4046
      %v4048 = vpop.f32.mrb[0].mxu0
      %4049 = vmatprep.mubr.bf16.mxu0 0
      %4050 = vmatmul.mubr.bf16.gmra.mrb[0].mxu0 %v3993
      %v4051 = vpop.f32.mrb[0].mxu0
      %v4052 = vadd.f32 0.0, %v4051
      %v4053 = vpop.f32.mrb[0].mxu0
      %v4054 = vpop.f32.mrb[0].mxu0
      %v4055 = vadd.f32 0.0, %v4054
      %v4056 = vpop.f32.mrb[0].mxu0
      %4057 = vmatprep.mubr.bf16.mxu0 0
      %4058 = vmatmul.mubr.bf16.gmra.mrb[0].mxu0 %v3996
      %v4059 = vpop.f32.mrb[0].mxu0
      %v4060 = vadd.f32 0.0, %v4059
      %v4061 = vpop.f32.mrb[0].mxu0
      %v4062 = vpop.f32.mrb[0].mxu0
      %v4063 = vadd.f32 0.0, %v4062
      %v4064 = vpop.f32.mrb[0].mxu0
      %4065 = vmatprep.mubr.bf16.mxu0 0
      %4066 = vmatmul.mubr.bf16.gmra.mrb[0].mxu0 %v3999
      %v4067 = vpop.f32.mrb[0].mxu0
      %v4068 = vadd.f32 0.0, %v4067
      %v4069 = vpop.f32.mrb[0].mxu0
      %v4070 = vpop.f32.mrb[0].mxu0
      %v4071 = vadd.f32 0.0, %v4070
      %v4072 = vpop.f32.mrb[0].mxu0
      %4073 = vdwg.mxu0
      %4079 = vrot.lane.b32.xlu0 %v3727, 120
      %v4080 = vpop.permute.xlu0 %4079
      %4081 = vrot.lane.b32.xlu0 %v3728, 120
      %v4082 = vpop.permute.xlu0 %4081
      %4083 = vrot.lane.b32.xlu0 %v3729, 120
      %v4084 = vpop.permute.xlu0 %4083
      %4085 = vrot.lane.b32.xlu0 %v3730, 120
      %v4086 = vpop.permute.xlu0 %4085
      %4087 = vrot.lane.b32.xlu0 %v3731, 120
      %v4088 = vpop.permute.xlu0 %4087
      %4089 = vrot.lane.b32.xlu0 %v3732, 88
      %v4090 = vpop.permute.xlu0 %4089
      %4091 = vrot.lane.b32.xlu0 %v3733, 88
      %v4092 = vpop.permute.xlu0 %4091
      %4093 = vrot.lane.b32.xlu0 %v3734, 88
      %v4094 = vpop.permute.xlu0 %4093
      %4095 = vrot.lane.b32.xlu0 %v3735, 88
      %v4096 = vpop.permute.xlu0 %4095
      %4097 = vrot.lane.b32.xlu0 %v3736, 88
      %v4098 = vpop.permute.xlu0 %4097
      %v4100 = vsel %vm705, %v4080, 0
      %v4103 = vsel %vm705, %v4082, 0
      %v4106 = vsel %vm705, %v4084, 0
      %v4109 = vsel %vm705, %v4086, 0
      %v4112 = vsel %vm705, %v4088, 0
      %v4115 = vsel %vm705, %v4090, 0
      %v4118 = vsel %vm705, %v4092, 0
      %v4121 = vsel %vm705, %v4094, 0
      %v4124 = vsel %vm705, %v4096, 0
      %v4127 = vsel %vm705, %v4098, 0
      %4129 = vmatprep.subr.bf16.mxu0 0
      %4130 = vmatpush1.bf16.xpose.msra.mxu0 %v4115
      %4131 = vmatprep.subr.bf16.mxu0 0
      %4132 = vmatpush1.bf16.xpose.msra.mxu0 %v4118
      %4133 = vmatprep.subr.bf16.mxu0 0
      %4134 = vmatpush1.bf16.xpose.msra.mxu0 %v4121
      %4135 = vmatprep.subr.bf16.mxu0 0
      %4136 = vmatpush1.bf16.xpose.msra.mxu0 %v4124
      %4137 = vmatprep.subr.bf16.mxu0 0
      %4138 = vmatpush1.bf16.xpose.msra.mxu0 %v4127
      %4139 = vmatprep.subr.bf16.mxu0 0
      %4140 = vmatpush1.bf16.xpose.msra.mxu0 0
      %4141 = vmatprep.subr.bf16.mxu0 0
      %4142 = vmatpush1.bf16.xpose.msra.mxu0 0
      %4143 = vmatprep.subr.bf16.mxu0 0
      %4144 = vmatpush1.bf16.xpose.msra.mxu0 0
      %4145 = vmatprep.subr.bf16.mxu0 0
      %4146 = vmatpush1.bf16.xpose.msra.mxu0 0
      %4147 = vmatprep.subr.bf16.mxu0 0
      %4148 = vmatpush1.bf16.xpose.msra.mxu0 0
      %4149 = vmatprep.subr.bf16.mxu0 0
      %4150 = vmatpush1.bf16.xpose.msra.mxu0 0
      %4151 = vmatprep.subr.bf16.mxu0 0
      %4152 = vmatpush1.bf16.xpose.msra.mxu0 0
      %4153 = vmatprep.subr.bf16.mxu0 0
      %4154 = vmatpush1.bf16.xpose.msra.mxu0 0
      %4155 = vmatprep.subr.bf16.mxu0 0
      %4156 = vmatpush1.bf16.xpose.msra.mxu0 0
      %4157 = vmatprep.subr.bf16.mxu0 0
      %4158 = vmatpush1.bf16.xpose.msra.mxu0 0
      %4159 = vmatprep.subr.bf16.mxu0 0
      %4160 = vmatpush1.bf16.xpose.msra.mxu0 0
      %4161 = vmatprep.mubr.bf16.mxu0 0
      %4162 = vmatmul.mubr.bf16.gmra.mrb[0].mxu0 %v4100
      %v4163 = vpop.f32.mrb[0].mxu0
      %v4164 = vadd.f32 %v3416, %v4163
      %v4165 = vpop.f32.mrb[0].mxu0
      %v4166 = vpop.f32.mrb[0].mxu0
      %v4167 = vadd.f32 %v3416, %v4166
      %v4168 = vpop.f32.mrb[0].mxu0
      %4169 = vmatprep.mubr.bf16.mxu0 0
      %4170 = vmatmul.mubr.bf16.gmra.mrb[0].mxu0 %v4103
      %v4171 = vpop.f32.mrb[0].mxu0
      %v4172 = vadd.f32 %v3416, %v4171
      %v4173 = vpop.f32.mrb[0].mxu0
      %v4174 = vpop.f32.mrb[0].mxu0
      %v4175 = vadd.f32 %v3416, %v4174
      %v4176 = vpop.f32.mrb[0].mxu0
      %4177 = vmatprep.mubr.bf16.mxu0 0
      %4178 = vmatmul.mubr.bf16.gmra.mrb[0].mxu0 %v4106
      %v4179 = vpop.f32.mrb[0].mxu0
      %v4180 = vadd.f32 %v3416, %v4179
      %v4181 = vpop.f32.mrb[0].mxu0
      %v4182 = vpop.f32.mrb[0].mxu0
      %v4183 = vadd.f32 %v3416, %v4182
      %v4184 = vpop.f32.mrb[0].mxu0
      %4185 = vmatprep.mubr.bf16.mxu0 0
      %4186 = vmatmul.mubr.bf16.gmra.mrb[0].mxu0 %v4109
      %v4187 = vpop.f32.mrb[0].mxu0
      %v4188 = vadd.f32 %v3416, %v4187
      %v4189 = vpop.f32.mrb[0].mxu0
      %v4190 = vpop.f32.mrb[0].mxu0
      %v4191 = vadd.f32 %v3416, %v4190
      %v4192 = vpop.f32.mrb[0].mxu0
      %4193 = vmatprep.mubr.bf16.mxu0 0
      %4194 = vmatmul.mubr.bf16.gmra.mrb[0].mxu0 %v4112
      %v4195 = vpop.f32.mrb[0].mxu0
      %v4196 = vadd.f32 %v3416, %v4195
      %v4197 = vpop.f32.mrb[0].mxu0
      %v4198 = vpop.f32.mrb[0].mxu0
      %v4199 = vadd.f32 %v3416, %v4198
      %v4200 = vpop.f32.mrb[0].mxu0
      %4201 = vdwg.mxu0
      %v4202 = vsel %vm3855, %v4164, -inf
      %4203 = vmax.xlane.f32.xlu0 %v4202
      %v4204 = vpop.xlane.xlu0 %4203
      %v4205 = vsel %vm3855, %v4167, -inf
      %4206 = vmax.xlane.f32.xlu0 %v4205
      %v4207 = vpop.xlane.xlu0 %4206
      %v4208 = vsel %vm3855, %v4172, -inf
      %4209 = vmax.xlane.f32.xlu0 %v4208
      %v4210 = vpop.xlane.xlu0 %4209
      %v4211 = vsel %vm3855, %v4175, -inf
      %4212 = vmax.xlane.f32.xlu0 %v4211
      %v4213 = vpop.xlane.xlu0 %4212
      %v4214 = vsel %vm3855, %v4180, -inf
      %4215 = vmax.xlane.f32.xlu0 %v4214
      %v4216 = vpop.xlane.xlu0 %4215
      %v4217 = vsel %vm3855, %v4183, -inf
      %4218 = vmax.xlane.f32.xlu0 %v4217
      %v4219 = vpop.xlane.xlu0 %4218
      %v4220 = vsel %vm3855, %v4188, -inf
      %4221 = vmax.xlane.f32.xlu0 %v4220
      %v4222 = vpop.xlane.xlu0 %4221
      %v4223 = vsel %vm3855, %v4191, -inf
      %4224 = vmax.xlane.f32.xlu0 %v4223
      %v4225 = vpop.xlane.xlu0 %4224
      %v4226 = vsel %vm3855, %v4196, -inf
      %4227 = vmax.xlane.f32.xlu0 %v4226
      %v4228 = vpop.xlane.xlu0 %4227
      %v4229 = vsel %vm3855, %v4199, -inf
      %4230 = vmax.xlane.f32.xlu0 %v4229
      %v4231 = vpop.xlane.xlu0 %4230
      %v4232 = vsub.f32 %v4164, %v4204
      %v4233 = vsub.f32 %v4167, %v4207
      %v4234 = vsub.f32 %v4172, %v4210
      %v4235 = vsub.f32 %v4175, %v4213
      %v4236 = vsub.f32 %v4180, %v4216
      %v4237 = vsub.f32 %v4183, %v4219
      %v4238 = vsub.f32 %v4188, %v4222
      %v4239 = vsub.f32 %v4191, %v4225
      %v4240 = vsub.f32 %v4196, %v4228
      %v4241 = vsub.f32 %v4199, %v4231
      %v4242 = vmul.f32 %v4232, 1.442695
      %v4243 = vpow.pop %v4242
      %v4244 = vmul.f32 %v4233, 1.442695
      %v4245 = vpow.pop %v4244
      %v4246 = vmul.f32 %v4234, 1.442695
      %v4247 = vpow.pop %v4246
      %v4248 = vmul.f32 %v4235, 1.442695
      %v4249 = vpow.pop %v4248
      %v4250 = vmul.f32 %v4236, 1.442695
      %v4251 = vpow.pop %v4250
      %v4252 = vmul.f32 %v4237, 1.442695
      %v4253 = vpow.pop %v4252
      %v4254 = vmul.f32 %v4238, 1.442695
      %v4255 = vpow.pop %v4254
      %v4256 = vmul.f32 %v4239, 1.442695
      %v4257 = vpow.pop %v4256
      %v4258 = vmul.f32 %v4240, 1.442695
      %v4259 = vpow.pop %v4258
      %v4260 = vmul.f32 %v4241, 1.442695
      %v4261 = vpow.pop %v4260
      %v4262 = vsel %vm3855, %v4243, 0.0
      %4263 = vadd.xlane.f32.xlu0 %v4262
      %v4264 = vpop.xlane.xlu0 %4263
      %v4265 = vsel %vm3855, %v4245, 0.0
      %4266 = vadd.xlane.f32.xlu0 %v4265
      %v4267 = vpop.xlane.xlu0 %4266
      %v4268 = vsel %vm3855, %v4247, 0.0
      %4269 = vadd.xlane.f32.xlu0 %v4268
      %v4270 = vpop.xlane.xlu0 %4269
      %v4271 = vsel %vm3855, %v4249, 0.0
      %4272 = vadd.xlane.f32.xlu0 %v4271
      %v4273 = vpop.xlane.xlu0 %4272
      %v4274 = vsel %vm3855, %v4251, 0.0
      %4275 = vadd.xlane.f32.xlu0 %v4274
      %v4276 = vpop.xlane.xlu0 %4275
      %v4277 = vsel %vm3855, %v4253, 0.0
      %4278 = vadd.xlane.f32.xlu0 %v4277
      %v4279 = vpop.xlane.xlu0 %4278
      %v4280 = vsel %vm3855, %v4255, 0.0
      %4281 = vadd.xlane.f32.xlu0 %v4280
      %v4282 = vpop.xlane.xlu0 %4281
      %v4283 = vsel %vm3855, %v4257, 0.0
      %4284 = vadd.xlane.f32.xlu0 %v4283
      %v4285 = vpop.xlane.xlu0 %4284
      %v4286 = vsel %vm3855, %v4259, 0.0
      %4287 = vadd.xlane.f32.xlu0 %v4286
      %v4288 = vpop.xlane.xlu0 %4287
      %v4289 = vsel %vm3855, %v4261, 0.0
      %4290 = vadd.xlane.f32.xlu0 %v4289
      %v4291 = vpop.xlane.xlu0 %4290
      %v4292 = vrcp.pop %v4264
      %v4293 = vmul.f32 %v4243, %v4292
      %v4294 = vrcp.pop %v4267
      %v4295 = vmul.f32 %v4245, %v4294
      %v4296 = vrcp.pop %v4270
      %v4297 = vmul.f32 %v4247, %v4296
      %v4298 = vrcp.pop %v4273
      %v4299 = vmul.f32 %v4249, %v4298
      %v4300 = vrcp.pop %v4276
      %v4301 = vmul.f32 %v4251, %v4300
      %v4302 = vrcp.pop %v4279
      %v4303 = vmul.f32 %v4253, %v4302
      %v4304 = vrcp.pop %v4282
      %v4305 = vmul.f32 %v4255, %v4304
      %v4306 = vrcp.pop %v4285
      %v4307 = vmul.f32 %v4257, %v4306
      %v4308 = vrcp.pop %v4288
      %v4309 = vmul.f32 %v4259, %v4308
      %v4310 = vrcp.pop %v4291
      %v4311 = vmul.f32 %v4261, %v4310
      %v4312 = vpack.c.bf16 %v4295, %v4293
      %v4313 = vpack.c.bf16 %v4299, %v4297
      %v4314 = vpack.c.bf16 %v4303, %v4301
      %v4315 = vpack.c.bf16 %v4307, %v4305
      %v4316 = vpack.c.bf16 %v4311, %v4309
      %4317 = vrot.lane.b32.xlu0 %v3732, 56
      %v4318 = vpop.permute.xlu0 %4317
      %4319 = vrot.lane.b32.xlu0 %v3733, 56
      %v4320 = vpop.permute.xlu0 %4319
      %4321 = vrot.lane.b32.xlu0 %v3734, 56
      %v4322 = vpop.permute.xlu0 %4321
      %4323 = vrot.lane.b32.xlu0 %v3735, 56
      %v4324 = vpop.permute.xlu0 %4323
      %4325 = vrot.lane.b32.xlu0 %v3736, 56
      %v4326 = vpop.permute.xlu0 %4325
      %v4333 = vsel %vm3855, %v4312, 0
      %v4336 = vsel %vm3855, %v4313, 0
      %v4339 = vsel %vm3855, %v4314, 0
      %v4342 = vsel %vm3855, %v4315, 0
      %v4345 = vsel %vm3855, %v4316, 0
      %4347 = vmatprep.subr.bf16.mxu0 0
      %4348 = vmatpush1.bf16.msra.mxu0 %v4318
      %4349 = vmatprep.subr.bf16.mxu0 0
      %4350 = vmatpush1.bf16.msra.mxu0 %v4320
      %4351 = vmatprep.subr.bf16.mxu0 0
      %4352 = vmatpush1.bf16.msra.mxu0 %v4322
      %4353 = vmatprep.subr.bf16.mxu0 0
      %4354 = vmatpush1.bf16.msra.mxu0 %v4324
      %4355 = vmatprep.subr.bf16.mxu0 0
      %4356 = vmatpush1.bf16.msra.mxu0 %v4326
      %4357 = vmatprep.subr.bf16.mxu0 0
      %4358 = vmatpush1.bf16.msra.mxu0 0
      %4359 = vmatprep.subr.bf16.mxu0 0
      %4360 = vmatpush1.bf16.msra.mxu0 0
      %4361 = vmatprep.subr.bf16.mxu0 0
      %4362 = vmatpush1.bf16.msra.mxu0 0
      %4363 = vmatprep.subr.bf16.mxu0 0
      %4364 = vmatpush1.bf16.msra.mxu0 0
      %4365 = vmatprep.subr.bf16.mxu0 0
      %4366 = vmatpush1.bf16.msra.mxu0 0
      %4367 = vmatprep.subr.bf16.mxu0 0
      %4368 = vmatpush1.bf16.msra.mxu0 0
      %4369 = vmatprep.subr.bf16.mxu0 0
      %4370 = vmatpush1.bf16.msra.mxu0 0
      %4371 = vmatprep.subr.bf16.mxu0 0
      %4372 = vmatpush1.bf16.msra.mxu0 0
      %4373 = vmatprep.subr.bf16.mxu0 0
      %4374 = vmatpush1.bf16.msra.mxu0 0
      %4375 = vmatprep.subr.bf16.mxu0 0
      %4376 = vmatpush1.bf16.msra.mxu0 0
      %4377 = vmatprep.subr.bf16.mxu0 0
      %4378 = vmatpush1.bf16.msra.mxu0 0
      %4379 = vmatprep.mubr.bf16.mxu0 0
      %4380 = vmatmul.mubr.bf16.gmra.mrb[0].mxu0 %v4333
      %v4381 = vpop.f32.mrb[0].mxu0
      %v4382 = vadd.f32 0.0, %v4381
      %v4383 = vpop.f32.mrb[0].mxu0
      %v4384 = vpop.f32.mrb[0].mxu0
      %v4385 = vadd.f32 0.0, %v4384
      %v4386 = vpop.f32.mrb[0].mxu0
      %4387 = vmatprep.mubr.bf16.mxu0 0
      %4388 = vmatmul.mubr.bf16.gmra.mrb[0].mxu0 %v4336
      %v4389 = vpop.f32.mrb[0].mxu0
      %v4390 = vadd.f32 0.0, %v4389
      %v4391 = vpop.f32.mrb[0].mxu0
      %v4392 = vpop.f32.mrb[0].mxu0
      %v4393 = vadd.f32 0.0, %v4392
      %v4394 = vpop.f32.mrb[0].mxu0
      %4395 = vmatprep.mubr.bf16.mxu0 0
      %4396 = vmatmul.mubr.bf16.gmra.mrb[0].mxu0 %v4339
      %v4397 = vpop.f32.mrb[0].mxu0
      %v4398 = vadd.f32 0.0, %v4397
      %v4399 = vpop.f32.mrb[0].mxu0
      %v4400 = vpop.f32.mrb[0].mxu0
      %v4401 = vadd.f32 0.0, %v4400
      %v4402 = vpop.f32.mrb[0].mxu0
      %4403 = vmatprep.mubr.bf16.mxu0 0
      %4404 = vmatmul.mubr.bf16.gmra.mrb[0].mxu0 %v4342
      %v4405 = vpop.f32.mrb[0].mxu0
      %v4406 = vadd.f32 0.0, %v4405
      %v4407 = vpop.f32.mrb[0].mxu0
      %v4408 = vpop.f32.mrb[0].mxu0
      %v4409 = vadd.f32 0.0, %v4408
      %v4410 = vpop.f32.mrb[0].mxu0
      %4411 = vmatprep.mubr.bf16.mxu0 0
      %4412 = vmatmul.mubr.bf16.gmra.mrb[0].mxu0 %v4345
      %v4413 = vpop.f32.mrb[0].mxu0
      %v4414 = vadd.f32 0.0, %v4413
      %v4415 = vpop.f32.mrb[0].mxu0
      %v4416 = vpop.f32.mrb[0].mxu0
      %v4417 = vadd.f32 0.0, %v4416
      %v4418 = vpop.f32.mrb[0].mxu0
      %4419 = vdwg.mxu0
      %4420 = vrot.lane.b32.xlu0 %v3727, 112
      %v4421 = vpop.permute.xlu0 %4420
      %4422 = vrot.lane.b32.xlu0 %v3728, 112
      %v4423 = vpop.permute.xlu0 %4422
      %4424 = vrot.lane.b32.xlu0 %v3729, 112
      %v4425 = vpop.permute.xlu0 %4424
      %4426 = vrot.lane.b32.xlu0 %v3730, 112
      %v4427 = vpop.permute.xlu0 %4426
      %4428 = vrot.lane.b32.xlu0 %v3731, 112
      %v4429 = vpop.permute.xlu0 %4428
      %4430 = vrot.lane.b32.xlu0 %v3732, 80
      %v4431 = vpop.permute.xlu0 %4430
      %4432 = vrot.lane.b32.xlu0 %v3733, 80
      %v4433 = vpop.permute.xlu0 %4432
      %4434 = vrot.lane.b32.xlu0 %v3734, 80
      %v4435 = vpop.permute.xlu0 %4434
      %4436 = vrot.lane.b32.xlu0 %v3735, 80
      %v4437 = vpop.permute.xlu0 %4436
      %4438 = vrot.lane.b32.xlu0 %v3736, 80
      %v4439 = vpop.permute.xlu0 %4438
      %v4441 = vsel %vm705, %v4421, 0
      %v4444 = vsel %vm705, %v4423, 0
      %v4447 = vsel %vm705, %v4425, 0
      %v4450 = vsel %vm705, %v4427, 0
      %v4453 = vsel %vm705, %v4429, 0
      %v4456 = vsel %vm705, %v4431, 0
      %v4459 = vsel %vm705, %v4433, 0
      %v4462 = vsel %vm705, %v4435, 0
      %v4465 = vsel %vm705, %v4437, 0
      %v4468 = vsel %vm705, %v4439, 0
      %4470 = vmatprep.subr.bf16.mxu0 0
      %4471 = vmatpush1.bf16.xpose.msra.mxu0 %v4456
      %4472 = vmatprep.subr.bf16.mxu0 0
      %4473 = vmatpush1.bf16.xpose.msra.mxu0 %v4459
      %4474 = vmatprep.subr.bf16.mxu0 0
      %4475 = vmatpush1.bf16.xpose.msra.mxu0 %v4462
      %4476 = vmatprep.subr.bf16.mxu0 0
      %4477 = vmatpush1.bf16.xpose.msra.mxu0 %v4465
      %4478 = vmatprep.subr.bf16.mxu0 0
      %4479 = vmatpush1.bf16.xpose.msra.mxu0 %v4468
      %4480 = vmatprep.subr.bf16.mxu0 0
      %4481 = vmatpush1.bf16.xpose.msra.mxu0 0
      %4482 = vmatprep.subr.bf16.mxu0 0
      %4483 = vmatpush1.bf16.xpose.msra.mxu0 0
      %4484 = vmatprep.subr.bf16.mxu0 0
      %4485 = vmatpush1.bf16.xpose.msra.mxu0 0
      %4486 = vmatprep.subr.bf16.mxu0 0
      %4487 = vmatpush1.bf16.xpose.msra.mxu0 0
      %4488 = vmatprep.subr.bf16.mxu0 0
      %4489 = vmatpush1.bf16.xpose.msra.mxu0 0
      %4490 = vmatprep.subr.bf16.mxu0 0
      %4491 = vmatpush1.bf16.xpose.msra.mxu0 0
      %4492 = vmatprep.subr.bf16.mxu0 0
      %4493 = vmatpush1.bf16.xpose.msra.mxu0 0
      %4494 = vmatprep.subr.bf16.mxu0 0
      %4495 = vmatpush1.bf16.xpose.msra.mxu0 0
      %4496 = vmatprep.subr.bf16.mxu0 0
      %4497 = vmatpush1.bf16.xpose.msra.mxu0 0
      %4498 = vmatprep.subr.bf16.mxu0 0
      %4499 = vmatpush1.bf16.xpose.msra.mxu0 0
      %4500 = vmatprep.subr.bf16.mxu0 0
      %4501 = vmatpush1.bf16.xpose.msra.mxu0 0
      %4502 = vmatprep.mubr.bf16.mxu0 0
      %4503 = vmatmul.mubr.bf16.gmra.mrb[0].mxu0 %v4441
      %v4504 = vpop.f32.mrb[0].mxu0
      %v4505 = vadd.f32 %v3416, %v4504
      %v4506 = vpop.f32.mrb[0].mxu0
      %v4507 = vpop.f32.mrb[0].mxu0
      %v4508 = vadd.f32 %v3416, %v4507
      %v4509 = vpop.f32.mrb[0].mxu0
      %4510 = vmatprep.mubr.bf16.mxu0 0
      %4511 = vmatmul.mubr.bf16.gmra.mrb[0].mxu0 %v4444
      %v4512 = vpop.f32.mrb[0].mxu0
      %v4513 = vadd.f32 %v3416, %v4512
      %v4514 = vpop.f32.mrb[0].mxu0
      %v4515 = vpop.f32.mrb[0].mxu0
      %v4516 = vadd.f32 %v3416, %v4515
      %v4517 = vpop.f32.mrb[0].mxu0
      %4518 = vmatprep.mubr.bf16.mxu0 0
      %4519 = vmatmul.mubr.bf16.gmra.mrb[0].mxu0 %v4447
      %v4520 = vpop.f32.mrb[0].mxu0
      %v4521 = vadd.f32 %v3416, %v4520
      %v4522 = vpop.f32.mrb[0].mxu0
      %v4523 = vpop.f32.mrb[0].mxu0
      %v4524 = vadd.f32 %v3416, %v4523
      %v4525 = vpop.f32.mrb[0].mxu0
      %4526 = vmatprep.mubr.bf16.mxu0 0
      %4527 = vmatmul.mubr.bf16.gmra.mrb[0].mxu0 %v4450
      %v4528 = vpop.f32.mrb[0].mxu0
      %v4529 = vadd.f32 %v3416, %v4528
      %v4530 = vpop.f32.mrb[0].mxu0
      %v4531 = vpop.f32.mrb[0].mxu0
      %v4532 = vadd.f32 %v3416, %v4531
      %v4533 = vpop.f32.mrb[0].mxu0
      %4534 = vmatprep.mubr.bf16.mxu0 0
      %4535 = vmatmul.mubr.bf16.gmra.mrb[0].mxu0 %v4453
      %v4536 = vpop.f32.mrb[0].mxu0
      %v4537 = vadd.f32 %v3416, %v4536
      %v4538 = vpop.f32.mrb[0].mxu0
      %v4539 = vpop.f32.mrb[0].mxu0
      %v4540 = vadd.f32 %v3416, %v4539
      %v4541 = vpop.f32.mrb[0].mxu0
      %4542 = vdwg.mxu0
      %v4543 = vsel %vm3855, %v4505, -inf
      %4544 = vmax.xlane.f32.xlu0 %v4543
      %v4545 = vpop.xlane.xlu0 %4544
      %v4546 = vsel %vm3855, %v4508, -inf
      %4547 = vmax.xlane.f32.xlu0 %v4546
      %v4548 = vpop.xlane.xlu0 %4547
      %v4549 = vsel %vm3855, %v4513, -inf
      %4550 = vmax.xlane.f32.xlu0 %v4549
      %v4551 = vpop.xlane.xlu0 %4550
      %v4552 = vsel %vm3855, %v4516, -inf
      %4553 = vmax.xlane.f32.xlu0 %v4552
      %v4554 = vpop.xlane.xlu0 %4553
      %v4555 = vsel %vm3855, %v4521, -inf
      %4556 = vmax.xlane.f32.xlu0 %v4555
      %v4557 = vpop.xlane.xlu0 %4556
      %v4558 = vsel %vm3855, %v4524, -inf
      %4559 = vmax.xlane.f32.xlu0 %v4558
      %v4560 = vpop.xlane.xlu0 %4559
      %v4561 = vsel %vm3855, %v4529, -inf
      %4562 = vmax.xlane.f32.xlu0 %v4561
      %v4563 = vpop.xlane.xlu0 %4562
      %v4564 = vsel %vm3855, %v4532, -inf
      %4565 = vmax.xlane.f32.xlu0 %v4564
      %v4566 = vpop.xlane.xlu0 %4565
      %v4567 = vsel %vm3855, %v4537, -inf
      %4568 = vmax.xlane.f32.xlu0 %v4567
      %v4569 = vpop.xlane.xlu0 %4568
      %v4570 = vsel %vm3855, %v4540, -inf
      %4571 = vmax.xlane.f32.xlu0 %v4570
      %v4572 = vpop.xlane.xlu0 %4571
      %v4573 = vsub.f32 %v4505, %v4545
      %v4574 = vsub.f32 %v4508, %v4548
      %v4575 = vsub.f32 %v4513, %v4551
      %v4576 = vsub.f32 %v4516, %v4554
      %v4577 = vsub.f32 %v4521, %v4557
      %v4578 = vsub.f32 %v4524, %v4560
      %v4579 = vsub.f32 %v4529, %v4563
      %v4580 = vsub.f32 %v4532, %v4566
      %v4581 = vsub.f32 %v4537, %v4569
      %v4582 = vsub.f32 %v4540, %v4572
      %v4583 = vmul.f32 %v4573, 1.442695
      %v4584 = vpow.pop %v4583
      %v4585 = vmul.f32 %v4574, 1.442695
      %v4586 = vpow.pop %v4585
      %v4587 = vmul.f32 %v4575, 1.442695
      %v4588 = vpow.pop %v4587
      %v4589 = vmul.f32 %v4576, 1.442695
      %v4590 = vpow.pop %v4589
      %v4591 = vmul.f32 %v4577, 1.442695
      %v4592 = vpow.pop %v4591
      %v4593 = vmul.f32 %v4578, 1.442695
      %v4594 = vpow.pop %v4593
      %v4595 = vmul.f32 %v4579, 1.442695
      %v4596 = vpow.pop %v4595
      %v4597 = vmul.f32 %v4580, 1.442695
      %v4598 = vpow.pop %v4597
      %v4599 = vmul.f32 %v4581, 1.442695
      %v4600 = vpow.pop %v4599
      %v4601 = vmul.f32 %v4582, 1.442695
      %v4602 = vpow.pop %v4601
      %v4603 = vsel %vm3855, %v4584, 0.0
      %4604 = vadd.xlane.f32.xlu0 %v4603
      %v4605 = vpop.xlane.xlu0 %4604
      %v4606 = vsel %vm3855, %v4586, 0.0
      %4607 = vadd.xlane.f32.xlu0 %v4606
      %v4608 = vpop.xlane.xlu0 %4607
      %v4609 = vsel %vm3855, %v4588, 0.0
      %4610 = vadd.xlane.f32.xlu0 %v4609
      %v4611 = vpop.xlane.xlu0 %4610
      %v4612 = vsel %vm3855, %v4590, 0.0
      %4613 = vadd.xlane.f32.xlu0 %v4612
      %v4614 = vpop.xlane.xlu0 %4613
      %v4615 = vsel %vm3855, %v4592, 0.0
      %4616 = vadd.xlane.f32.xlu0 %v4615
      %v4617 = vpop.xlane.xlu0 %4616
      %v4618 = vsel %vm3855, %v4594, 0.0
      %4619 = vadd.xlane.f32.xlu0 %v4618
      %v4620 = vpop.xlane.xlu0 %4619
      %v4621 = vsel %vm3855, %v4596, 0.0
      %4622 = vadd.xlane.f32.xlu0 %v4621
      %v4623 = vpop.xlane.xlu0 %4622
      %v4624 = vsel %vm3855, %v4598, 0.0
      %4625 = vadd.xlane.f32.xlu0 %v4624
      %v4626 = vpop.xlane.xlu0 %4625
      %v4627 = vsel %vm3855, %v4600, 0.0
      %4628 = vadd.xlane.f32.xlu0 %v4627
      %v4629 = vpop.xlane.xlu0 %4628
      %v4630 = vsel %vm3855, %v4602, 0.0
      %4631 = vadd.xlane.f32.xlu0 %v4630
      %v4632 = vpop.xlane.xlu0 %4631
      %v4633 = vrcp.pop %v4605
      %v4634 = vmul.f32 %v4584, %v4633
      %v4635 = vrcp.pop %v4608
      %v4636 = vmul.f32 %v4586, %v4635
      %v4637 = vrcp.pop %v4611
      %v4638 = vmul.f32 %v4588, %v4637
      %v4639 = vrcp.pop %v4614
      %v4640 = vmul.f32 %v4590, %v4639
      %v4641 = vrcp.pop %v4617
      %v4642 = vmul.f32 %v4592, %v4641
      %v4643 = vrcp.pop %v4620
      %v4644 = vmul.f32 %v4594, %v4643
      %v4645 = vrcp.pop %v4623
      %v4646 = vmul.f32 %v4596, %v4645
      %v4647 = vrcp.pop %v4626
      %v4648 = vmul.f32 %v4598, %v4647
      %v4649 = vrcp.pop %v4629
      %v4650 = vmul.f32 %v4600, %v4649
      %v4651 = vrcp.pop %v4632
      %v4652 = vmul.f32 %v4602, %v4651
      %v4653 = vpack.c.bf16 %v4636, %v4634
      %v4654 = vpack.c.bf16 %v4640, %v4638
      %v4655 = vpack.c.bf16 %v4644, %v4642
      %v4656 = vpack.c.bf16 %v4648, %v4646
      %v4657 = vpack.c.bf16 %v4652, %v4650
      %4658 = vrot.lane.b32.xlu0 %v3732, 48
      %v4659 = vpop.permute.xlu0 %4658
      %4660 = vrot.lane.b32.xlu0 %v3733, 48
      %v4661 = vpop.permute.xlu0 %4660
      %4662 = vrot.lane.b32.xlu0 %v3734, 48
      %v4663 = vpop.permute.xlu0 %4662
      %4664 = vrot.lane.b32.xlu0 %v3735, 48
      %v4665 = vpop.permute.xlu0 %4664
      %4666 = vrot.lane.b32.xlu0 %v3736, 48
      %v4667 = vpop.permute.xlu0 %4666
      %v4674 = vsel %vm3855, %v4653, 0
      %v4677 = vsel %vm3855, %v4654, 0
      %v4680 = vsel %vm3855, %v4655, 0
      %v4683 = vsel %vm3855, %v4656, 0
      %v4686 = vsel %vm3855, %v4657, 0
      %4688 = vmatprep.subr.bf16.mxu0 0
      %4689 = vmatpush1.bf16.msra.mxu0 %v4659
      %4690 = vmatprep.subr.bf16.mxu0 0
      %4691 = vmatpush1.bf16.msra.mxu0 %v4661
      %4692 = vmatprep.subr.bf16.mxu0 0
      %4693 = vmatpush1.bf16.msra.mxu0 %v4663
      %4694 = vmatprep.subr.bf16.mxu0 0
      %4695 = vmatpush1.bf16.msra.mxu0 %v4665
      %4696 = vmatprep.subr.bf16.mxu0 0
      %4697 = vmatpush1.bf16.msra.mxu0 %v4667
      %4698 = vmatprep.subr.bf16.mxu0 0
      %4699 = vmatpush1.bf16.msra.mxu0 0
      %4700 = vmatprep.subr.bf16.mxu0 0
      %4701 = vmatpush1.bf16.msra.mxu0 0
      %4702 = vmatprep.subr.bf16.mxu0 0
      %4703 = vmatpush1.bf16.msra.mxu0 0
      %4704 = vmatprep.subr.bf16.mxu0 0
      %4705 = vmatpush1.bf16.msra.mxu0 0
      %4706 = vmatprep.subr.bf16.mxu0 0
      %4707 = vmatpush1.bf16.msra.mxu0 0
      %4708 = vmatprep.subr.bf16.mxu0 0
      %4709 = vmatpush1.bf16.msra.mxu0 0
      %4710 = vmatprep.subr.bf16.mxu0 0
      %4711 = vmatpush1.bf16.msra.mxu0 0
      %4712 = vmatprep.subr.bf16.mxu0 0
      %4713 = vmatpush1.bf16.msra.mxu0 0
      %4714 = vmatprep.subr.bf16.mxu0 0
      %4715 = vmatpush1.bf16.msra.mxu0 0
      %4716 = vmatprep.subr.bf16.mxu0 0
      %4717 = vmatpush1.bf16.msra.mxu0 0
      %4718 = vmatprep.subr.bf16.mxu0 0
      %4719 = vmatpush1.bf16.msra.mxu0 0
      %4720 = vmatprep.mubr.bf16.mxu0 0
      %4721 = vmatmul.mubr.bf16.gmra.mrb[0].mxu0 %v4674
      %v4722 = vpop.f32.mrb[0].mxu0
      %v4723 = vadd.f32 0.0, %v4722
      %v4724 = vpop.f32.mrb[0].mxu0
      %v4725 = vpop.f32.mrb[0].mxu0
      %v4726 = vadd.f32 0.0, %v4725
      %v4727 = vpop.f32.mrb[0].mxu0
      %4728 = vmatprep.mubr.bf16.mxu0 0
      %4729 = vmatmul.mubr.bf16.gmra.mrb[0].mxu0 %v4677
      %v4730 = vpop.f32.mrb[0].mxu0
      %v4731 = vadd.f32 0.0, %v4730
      %v4732 = vpop.f32.mrb[0].mxu0
      %v4733 = vpop.f32.mrb[0].mxu0
      %v4734 = vadd.f32 0.0, %v4733
      %v4735 = vpop.f32.mrb[0].mxu0
      %4736 = vmatprep.mubr.bf16.mxu0 0
      %4737 = vmatmul.mubr.bf16.gmra.mrb[0].mxu0 %v4680
      %v4738 = vpop.f32.mrb[0].mxu0
      %v4739 = vadd.f32 0.0, %v4738
      %v4740 = vpop.f32.mrb[0].mxu0
      %v4741 = vpop.f32.mrb[0].mxu0
      %v4742 = vadd.f32 0.0, %v4741
      %v4743 = vpop.f32.mrb[0].mxu0
      %4744 = vmatprep.mubr.bf16.mxu0 0
      %4745 = vmatmul.mubr.bf16.gmra.mrb[0].mxu0 %v4683
      %v4746 = vpop.f32.mrb[0].mxu0
      %v4747 = vadd.f32 0.0, %v4746
      %v4748 = vpop.f32.mrb[0].mxu0
      %v4749 = vpop.f32.mrb[0].mxu0
      %v4750 = vadd.f32 0.0, %v4749
      %v4751 = vpop.f32.mrb[0].mxu0
      %4752 = vmatprep.mubr.bf16.mxu0 0
      %4753 = vmatmul.mubr.bf16.gmra.mrb[0].mxu0 %v4686
      %v4754 = vpop.f32.mrb[0].mxu0
      %v4755 = vadd.f32 0.0, %v4754
      %v4756 = vpop.f32.mrb[0].mxu0
      %v4757 = vpop.f32.mrb[0].mxu0
      %v4758 = vadd.f32 0.0, %v4757
      %v4759 = vpop.f32.mrb[0].mxu0
      %4760 = vdwg.mxu0
      %4761 = vrot.lane.b32.xlu0 %v3727, 104
      %v4762 = vpop.permute.xlu0 %4761
      %4763 = vrot.lane.b32.xlu0 %v3728, 104
      %v4764 = vpop.permute.xlu0 %4763
      %4765 = vrot.lane.b32.xlu0 %v3729, 104
      %v4766 = vpop.permute.xlu0 %4765
      %4767 = vrot.lane.b32.xlu0 %v3730, 104
      %v4768 = vpop.permute.xlu0 %4767
      %4769 = vrot.lane.b32.xlu0 %v3731, 104
      %v4770 = vpop.permute.xlu0 %4769
      %4771 = vrot.lane.b32.xlu0 %v3732, 72
      %v4772 = vpop.permute.xlu0 %4771
      %4773 = vrot.lane.b32.xlu0 %v3733, 72
      %v4774 = vpop.permute.xlu0 %4773
      %4775 = vrot.lane.b32.xlu0 %v3734, 72
      %v4776 = vpop.permute.xlu0 %4775
      %4777 = vrot.lane.b32.xlu0 %v3735, 72
      %v4778 = vpop.permute.xlu0 %4777
      %4779 = vrot.lane.b32.xlu0 %v3736, 72
      %v4780 = vpop.permute.xlu0 %4779
      %v4782 = vsel %vm705, %v4762, 0
      %v4785 = vsel %vm705, %v4764, 0
      %v4788 = vsel %vm705, %v4766, 0
      %v4791 = vsel %vm705, %v4768, 0
      %v4794 = vsel %vm705, %v4770, 0
      %v4797 = vsel %vm705, %v4772, 0
      %v4800 = vsel %vm705, %v4774, 0
      %v4803 = vsel %vm705, %v4776, 0
      %v4806 = vsel %vm705, %v4778, 0
      %v4809 = vsel %vm705, %v4780, 0
      %4811 = vmatprep.subr.bf16.mxu0 0
      %4812 = vmatpush1.bf16.xpose.msra.mxu0 %v4797
      %4813 = vmatprep.subr.bf16.mxu0 0
      %4814 = vmatpush1.bf16.xpose.msra.mxu0 %v4800
      %4815 = vmatprep.subr.bf16.mxu0 0
      %4816 = vmatpush1.bf16.xpose.msra.mxu0 %v4803
      %4817 = vmatprep.subr.bf16.mxu0 0
      %4818 = vmatpush1.bf16.xpose.msra.mxu0 %v4806
      %4819 = vmatprep.subr.bf16.mxu0 0
      %4820 = vmatpush1.bf16.xpose.msra.mxu0 %v4809
      %4821 = vmatprep.subr.bf16.mxu0 0
      %4822 = vmatpush1.bf16.xpose.msra.mxu0 0
      %4823 = vmatprep.subr.bf16.mxu0 0
      %4824 = vmatpush1.bf16.xpose.msra.mxu0 0
      %4825 = vmatprep.subr.bf16.mxu0 0
      %4826 = vmatpush1.bf16.xpose.msra.mxu0 0
      %4827 = vmatprep.subr.bf16.mxu0 0
      %4828 = vmatpush1.bf16.xpose.msra.mxu0 0
      %4829 = vmatprep.subr.bf16.mxu0 0
      %4830 = vmatpush1.bf16.xpose.msra.mxu0 0
      %4831 = vmatprep.subr.bf16.mxu0 0
      %4832 = vmatpush1.bf16.xpose.msra.mxu0 0
      %4833 = vmatprep.subr.bf16.mxu0 0
      %4834 = vmatpush1.bf16.xpose.msra.mxu0 0
      %4835 = vmatprep.subr.bf16.mxu0 0
      %4836 = vmatpush1.bf16.xpose.msra.mxu0 0
      %4837 = vmatprep.subr.bf16.mxu0 0
      %4838 = vmatpush1.bf16.xpose.msra.mxu0 0
      %4839 = vmatprep.subr.bf16.mxu0 0
      %4840 = vmatpush1.bf16.xpose.msra.mxu0 0
      %4841 = vmatprep.subr.bf16.mxu0 0
      %4842 = vmatpush1.bf16.xpose.msra.mxu0 0
      %4843 = vmatprep.mubr.bf16.mxu0 0
      %4844 = vmatmul.mubr.bf16.gmra.mrb[0].mxu0 %v4782
      %v4845 = vpop.f32.mrb[0].mxu0
      %v4846 = vadd.f32 %v3416, %v4845
      %v4847 = vpop.f32.mrb[0].mxu0
      %v4848 = vpop.f32.mrb[0].mxu0
      %v4849 = vadd.f32 %v3416, %v4848
      %v4850 = vpop.f32.mrb[0].mxu0
      %4851 = vmatprep.mubr.bf16.mxu0 0
      %4852 = vmatmul.mubr.bf16.gmra.mrb[0].mxu0 %v4785
      %v4853 = vpop.f32.mrb[0].mxu0
      %v4854 = vadd.f32 %v3416, %v4853
      %v4855 = vpop.f32.mrb[0].mxu0
      %v4856 = vpop.f32.mrb[0].mxu0
      %v4857 = vadd.f32 %v3416, %v4856
      %v4858 = vpop.f32.mrb[0].mxu0
      %4859 = vmatprep.mubr.bf16.mxu0 0
      %4860 = vmatmul.mubr.bf16.gmra.mrb[0].mxu0 %v4788
      %v4861 = vpop.f32.mrb[0].mxu0
      %v4862 = vadd.f32 %v3416, %v4861
      %v4863 = vpop.f32.mrb[0].mxu0
      %v4864 = vpop.f32.mrb[0].mxu0
      %v4865 = vadd.f32 %v3416, %v4864
      %v4866 = vpop.f32.mrb[0].mxu0
      %4867 = vmatprep.mubr.bf16.mxu0 0
      %4868 = vmatmul.mubr.bf16.gmra.mrb[0].mxu0 %v4791
      %v4869 = vpop.f32.mrb[0].mxu0
      %v4870 = vadd.f32 %v3416, %v4869
      %v4871 = vpop.f32.mrb[0].mxu0
      %v4872 = vpop.f32.mrb[0].mxu0
      %v4873 = vadd.f32 %v3416, %v4872
      %v4874 = vpop.f32.mrb[0].mxu0
      %4875 = vmatprep.mubr.bf16.mxu0 0
      %4876 = vmatmul.mubr.bf16.gmra.mrb[0].mxu0 %v4794
      %v4877 = vpop.f32.mrb[0].mxu0
      %v4878 = vadd.f32 %v3416, %v4877
      %v4879 = vpop.f32.mrb[0].mxu0
      %v4880 = vpop.f32.mrb[0].mxu0
      %v4881 = vadd.f32 %v3416, %v4880
      %v4882 = vpop.f32.mrb[0].mxu0
      %4883 = vdwg.mxu0
      %v4884 = vsel %vm3855, %v4846, -inf
      %4885 = vmax.xlane.f32.xlu0 %v4884
      %v4886 = vpop.xlane.xlu0 %4885
      %v4887 = vsel %vm3855, %v4849, -inf
      %4888 = vmax.xlane.f32.xlu0 %v4887
      %v4889 = vpop.xlane.xlu0 %4888
      %v4890 = vsel %vm3855, %v4854, -inf
      %4891 = vmax.xlane.f32.xlu0 %v4890
      %v4892 = vpop.xlane.xlu0 %4891
      %v4893 = vsel %vm3855, %v4857, -inf
      %4894 = vmax.xlane.f32.xlu0 %v4893
      %v4895 = vpop.xlane.xlu0 %4894
      %v4896 = vsel %vm3855, %v4862, -inf
      %4897 = vmax.xlane.f32.xlu0 %v4896
      %v4898 = vpop.xlane.xlu0 %4897
      %v4899 = vsel %vm3855, %v4865, -inf
      %4900 = vmax.xlane.f32.xlu0 %v4899
      %v4901 = vpop.xlane.xlu0 %4900
      %v4902 = vsel %vm3855, %v4870, -inf
      %4903 = vmax.xlane.f32.xlu0 %v4902
      %v4904 = vpop.xlane.xlu0 %4903
      %v4905 = vsel %vm3855, %v4873, -inf
      %4906 = vmax.xlane.f32.xlu0 %v4905
      %v4907 = vpop.xlane.xlu0 %4906
      %v4908 = vsel %vm3855, %v4878, -inf
      %4909 = vmax.xlane.f32.xlu0 %v4908
      %v4910 = vpop.xlane.xlu0 %4909
      %v4911 = vsel %vm3855, %v4881, -inf
      %4912 = vmax.xlane.f32.xlu0 %v4911
      %v4913 = vpop.xlane.xlu0 %4912
      %v4914 = vsub.f32 %v4846, %v4886
      %v4915 = vsub.f32 %v4849, %v4889
      %v4916 = vsub.f32 %v4854, %v4892
      %v4917 = vsub.f32 %v4857, %v4895
      %v4918 = vsub.f32 %v4862, %v4898
      %v4919 = vsub.f32 %v4865, %v4901
      %v4920 = vsub.f32 %v4870, %v4904
      %v4921 = vsub.f32 %v4873, %v4907
      %v4922 = vsub.f32 %v4878, %v4910
      %v4923 = vsub.f32 %v4881, %v4913
      %v4924 = vmul.f32 %v4914, 1.442695
      %v4925 = vpow.pop %v4924
      %v4926 = vmul.f32 %v4915, 1.442695
      %v4927 = vpow.pop %v4926
      %v4928 = vmul.f32 %v4916, 1.442695
      %v4929 = vpow.pop %v4928
      %v4930 = vmul.f32 %v4917, 1.442695
      %v4931 = vpow.pop %v4930
      %v4932 = vmul.f32 %v4918, 1.442695
      %v4933 = vpow.pop %v4932
      %v4934 = vmul.f32 %v4919, 1.442695
      %v4935 = vpow.pop %v4934
      %v4936 = vmul.f32 %v4920, 1.442695
      %v4937 = vpow.pop %v4936
      %v4938 = vmul.f32 %v4921, 1.442695
      %v4939 = vpow.pop %v4938
      %v4940 = vmul.f32 %v4922, 1.442695
      %v4941 = vpow.pop %v4940
      %v4942 = vmul.f32 %v4923, 1.442695
      %v4943 = vpow.pop %v4942
      %v4944 = vsel %vm3855, %v4925, 0.0
      %4945 = vadd.xlane.f32.xlu0 %v4944
      %v4946 = vpop.xlane.xlu0 %4945
      %v4947 = vsel %vm3855, %v4927, 0.0
      %4948 = vadd.xlane.f32.xlu0 %v4947
      %v4949 = vpop.xlane.xlu0 %4948
      %v4950 = vsel %vm3855, %v4929, 0.0
      %4951 = vadd.xlane.f32.xlu0 %v4950
      %v4952 = vpop.xlane.xlu0 %4951
      %v4953 = vsel %vm3855, %v4931, 0.0
      %4954 = vadd.xlane.f32.xlu0 %v4953
      %v4955 = vpop.xlane.xlu0 %4954
      %v4956 = vsel %vm3855, %v4933, 0.0
      %4957 = vadd.xlane.f32.xlu0 %v4956
      %v4958 = vpop.xlane.xlu0 %4957
      %v4959 = vsel %vm3855, %v4935, 0.0
      %4960 = vadd.xlane.f32.xlu0 %v4959
      %v4961 = vpop.xlane.xlu0 %4960
      %v4962 = vsel %vm3855, %v4937, 0.0
      %4963 = vadd.xlane.f32.xlu0 %v4962
      %v4964 = vpop.xlane.xlu0 %4963
      %v4965 = vsel %vm3855, %v4939, 0.0
      %4966 = vadd.xlane.f32.xlu0 %v4965
      %v4967 = vpop.xlane.xlu0 %4966
      %v4968 = vsel %vm3855, %v4941, 0.0
      %4969 = vadd.xlane.f32.xlu0 %v4968
      %v4970 = vpop.xlane.xlu0 %4969
      %v4971 = vsel %vm3855, %v4943, 0.0
      %4972 = vadd.xlane.f32.xlu0 %v4971
      %v4973 = vpop.xlane.xlu0 %4972
      %v4974 = vrcp.pop %v4946
      %v4975 = vmul.f32 %v4925, %v4974
      %v4976 = vrcp.pop %v4949
      %v4977 = vmul.f32 %v4927, %v4976
      %v4978 = vrcp.pop %v4952
      %v4979 = vmul.f32 %v4929, %v4978
      %v4980 = vrcp.pop %v4955
      %v4981 = vmul.f32 %v4931, %v4980
      %v4982 = vrcp.pop %v4958
      %v4983 = vmul.f32 %v4933, %v4982
      %v4984 = vrcp.pop %v4961
      %v4985 = vmul.f32 %v4935, %v4984
      %v4986 = vrcp.pop %v4964
      %v4987 = vmul.f32 %v4937, %v4986
      %v4988 = vrcp.pop %v4967
      %v4989 = vmul.f32 %v4939, %v4988
      %v4990 = vrcp.pop %v4970
      %v4991 = vmul.f32 %v4941, %v4990
      %v4992 = vrcp.pop %v4973
      %v4993 = vmul.f32 %v4943, %v4992
      %v4994 = vpack.c.bf16 %v4977, %v4975
      %v4995 = vpack.c.bf16 %v4981, %v4979
      %v4996 = vpack.c.bf16 %v4985, %v4983
      %v4997 = vpack.c.bf16 %v4989, %v4987
      %v4998 = vpack.c.bf16 %v4993, %v4991
      %4999 = vrot.lane.b32.xlu0 %v3732, 40
      %v5000 = vpop.permute.xlu0 %4999
      %5001 = vrot.lane.b32.xlu0 %v3733, 40
      %v5002 = vpop.permute.xlu0 %5001
      %5003 = vrot.lane.b32.xlu0 %v3734, 40
      %v5004 = vpop.permute.xlu0 %5003
      %5005 = vrot.lane.b32.xlu0 %v3735, 40
      %v5006 = vpop.permute.xlu0 %5005
      %5007 = vrot.lane.b32.xlu0 %v3736, 40
      %v5008 = vpop.permute.xlu0 %5007
      %v5015 = vsel %vm3855, %v4994, 0
      %v5018 = vsel %vm3855, %v4995, 0
      %v5021 = vsel %vm3855, %v4996, 0
      %v5024 = vsel %vm3855, %v4997, 0
      %v5027 = vsel %vm3855, %v4998, 0
      %5029 = vmatprep.subr.bf16.mxu0 0
      %5030 = vmatpush1.bf16.msra.mxu0 %v5000
      %5031 = vmatprep.subr.bf16.mxu0 0
      %5032 = vmatpush1.bf16.msra.mxu0 %v5002
      %5033 = vmatprep.subr.bf16.mxu0 0
      %5034 = vmatpush1.bf16.msra.mxu0 %v5004
      %5035 = vmatprep.subr.bf16.mxu0 0
      %5036 = vmatpush1.bf16.msra.mxu0 %v5006
      %5037 = vmatprep.subr.bf16.mxu0 0
      %5038 = vmatpush1.bf16.msra.mxu0 %v5008
      %5039 = vmatprep.subr.bf16.mxu0 0
      %5040 = vmatpush1.bf16.msra.mxu0 0
      %5041 = vmatprep.subr.bf16.mxu0 0
      %5042 = vmatpush1.bf16.msra.mxu0 0
      %5043 = vmatprep.subr.bf16.mxu0 0
      %5044 = vmatpush1.bf16.msra.mxu0 0
      %5045 = vmatprep.subr.bf16.mxu0 0
      %5046 = vmatpush1.bf16.msra.mxu0 0
      %5047 = vmatprep.subr.bf16.mxu0 0
      %5048 = vmatpush1.bf16.msra.mxu0 0
      %5049 = vmatprep.subr.bf16.mxu0 0
      %5050 = vmatpush1.bf16.msra.mxu0 0
      %5051 = vmatprep.subr.bf16.mxu0 0
      %5052 = vmatpush1.bf16.msra.mxu0 0
      %5053 = vmatprep.subr.bf16.mxu0 0
      %5054 = vmatpush1.bf16.msra.mxu0 0
      %5055 = vmatprep.subr.bf16.mxu0 0
      %5056 = vmatpush1.bf16.msra.mxu0 0
      %5057 = vmatprep.subr.bf16.mxu0 0
      %5058 = vmatpush1.bf16.msra.mxu0 0
      %5059 = vmatprep.subr.bf16.mxu0 0
      %5060 = vmatpush1.bf16.msra.mxu0 0
      %5061 = vmatprep.mubr.bf16.mxu0 0
      %5062 = vmatmul.mubr.bf16.gmra.mrb[0].mxu0 %v5015
      %v5063 = vpop.f32.mrb[0].mxu0
      %v5064 = vadd.f32 0.0, %v5063
      %v5065 = vpop.f32.mrb[0].mxu0
      %v5066 = vpop.f32.mrb[0].mxu0
      %v5067 = vadd.f32 0.0, %v5066
      %v5068 = vpop.f32.mrb[0].mxu0
      %5069 = vmatprep.mubr.bf16.mxu0 0
      %5070 = vmatmul.mubr.bf16.gmra.mrb[0].mxu0 %v5018
      %v5071 = vpop.f32.mrb[0].mxu0
      %v5072 = vadd.f32 0.0, %v5071
      %v5073 = vpop.f32.mrb[0].mxu0
      %v5074 = vpop.f32.mrb[0].mxu0
      %v5075 = vadd.f32 0.0, %v5074
      %v5076 = vpop.f32.mrb[0].mxu0
      %5077 = vmatprep.mubr.bf16.mxu0 0
      %5078 = vmatmul.mubr.bf16.gmra.mrb[0].mxu0 %v5021
      %v5079 = vpop.f32.mrb[0].mxu0
      %v5080 = vadd.f32 0.0, %v5079
      %v5081 = vpop.f32.mrb[0].mxu0
      %v5082 = vpop.f32.mrb[0].mxu0
      %v5083 = vadd.f32 0.0, %v5082
      %v5084 = vpop.f32.mrb[0].mxu0
      %5085 = vmatprep.mubr.bf16.mxu0 0
      %5086 = vmatmul.mubr.bf16.gmra.mrb[0].mxu0 %v5024
      %v5087 = vpop.f32.mrb[0].mxu0
      %v5088 = vadd.f32 0.0, %v5087
      %v5089 = vpop.f32.mrb[0].mxu0
      %v5090 = vpop.f32.mrb[0].mxu0
      %v5091 = vadd.f32 0.0, %v5090
      %v5092 = vpop.f32.mrb[0].mxu0
      %5093 = vmatprep.mubr.bf16.mxu0 0
      %5094 = vmatmul.mubr.bf16.gmra.mrb[0].mxu0 %v5027
      %v5095 = vpop.f32.mrb[0].mxu0
      %v5096 = vadd.f32 0.0, %v5095
      %v5097 = vpop.f32.mrb[0].mxu0
      %v5098 = vpop.f32.mrb[0].mxu0
      %v5099 = vadd.f32 0.0, %v5098
      %v5100 = vpop.f32.mrb[0].mxu0
      %5101 = vdwg.mxu0
      %5112 = vrot.lane.b32.xlu0 %v4382, 8
      %v5113 = vpop.permute.xlu0 %5112
      %5114 = vrot.lane.b32.xlu0 %v4385, 8
      %v5115 = vpop.permute.xlu0 %5114
      %5116 = vrot.lane.b32.xlu0 %v4390, 8
      %v5117 = vpop.permute.xlu0 %5116
      %5118 = vrot.lane.b32.xlu0 %v4393, 8
      %v5119 = vpop.permute.xlu0 %5118
      %5120 = vrot.lane.b32.xlu0 %v4398, 8
      %v5121 = vpop.permute.xlu0 %5120
      %5122 = vrot.lane.b32.xlu0 %v4401, 8
      %v5123 = vpop.permute.xlu0 %5122
      %5124 = vrot.lane.b32.xlu0 %v4406, 8
      %v5125 = vpop.permute.xlu0 %5124
      %5126 = vrot.lane.b32.xlu0 %v4409, 8
      %v5127 = vpop.permute.xlu0 %5126
      %5128 = vrot.lane.b32.xlu0 %v4414, 8
      %v5129 = vpop.permute.xlu0 %5128
      %5130 = vrot.lane.b32.xlu0 %v4417, 8
      %v5131 = vpop.permute.xlu0 %5130
      %5152 = vrot.lane.b32.xlu0 %v4723, 16
      %v5153 = vpop.permute.xlu0 %5152
      %5154 = vrot.lane.b32.xlu0 %v4726, 16
      %v5155 = vpop.permute.xlu0 %5154
      %5156 = vrot.lane.b32.xlu0 %v4731, 16
      %v5157 = vpop.permute.xlu0 %5156
      %5158 = vrot.lane.b32.xlu0 %v4734, 16
      %v5159 = vpop.permute.xlu0 %5158
      %5160 = vrot.lane.b32.xlu0 %v4739, 16
      %v5161 = vpop.permute.xlu0 %5160
      %5162 = vrot.lane.b32.xlu0 %v4742, 16
      %v5163 = vpop.permute.xlu0 %5162
      %5164 = vrot.lane.b32.xlu0 %v4747, 16
      %v5165 = vpop.permute.xlu0 %5164
      %5166 = vrot.lane.b32.xlu0 %v4750, 16
      %v5167 = vpop.permute.xlu0 %5166
      %5168 = vrot.lane.b32.xlu0 %v4755, 16
      %v5169 = vpop.permute.xlu0 %5168
      %5170 = vrot.lane.b32.xlu0 %v4758, 16
      %v5171 = vpop.permute.xlu0 %5170
      %5192 = vrot.lane.b32.xlu0 %v5064, 24
      %v5193 = vpop.permute.xlu0 %5192
      %5194 = vrot.lane.b32.xlu0 %v5067, 24
      %v5195 = vpop.permute.xlu0 %5194
      %5196 = vrot.lane.b32.xlu0 %v5072, 24
      %v5197 = vpop.permute.xlu0 %5196
      %5198 = vrot.lane.b32.xlu0 %v5075, 24
      %v5199 = vpop.permute.xlu0 %5198
      %5200 = vrot.lane.b32.xlu0 %v5080, 24
      %v5201 = vpop.permute.xlu0 %5200
      %5202 = vrot.lane.b32.xlu0 %v5083, 24
      %v5203 = vpop.permute.xlu0 %5202
      %5204 = vrot.lane.b32.xlu0 %v5088, 24
      %v5205 = vpop.permute.xlu0 %5204
      %5206 = vrot.lane.b32.xlu0 %v5091, 24
      %v5207 = vpop.permute.xlu0 %5206
      %5208 = vrot.lane.b32.xlu0 %v5096, 24
      %v5209 = vpop.permute.xlu0 %5208
      %5210 = vrot.lane.b32.xlu0 %v5099, 24
      %v5211 = vpop.permute.xlu0 %5210
      %v5222 = vsel %vm705, %v4036, %v5113
      %v5223 = vsel %vm705, %v4039, %v5115
      %v5224 = vsel %vm705, %v4044, %v5117
      %v5225 = vsel %vm705, %v4047, %v5119
      %v5226 = vsel %vm705, %v4052, %v5121
      %v5227 = vsel %vm705, %v4055, %v5123
      %v5228 = vsel %vm705, %v4060, %v5125
      %v5229 = vsel %vm705, %v4063, %v5127
      %v5230 = vsel %vm705, %v4068, %v5129
      %v5231 = vsel %vm705, %v4071, %v5131
      %v5232 = vsel %vm1456, %v5222, %v5153
      %v5233 = vsel %vm1456, %v5223, %v5155
      %v5234 = vsel %vm1456, %v5224, %v5157
      %v5235 = vsel %vm1456, %v5225, %v5159
      %v5236 = vsel %vm1456, %v5226, %v5161
      %v5237 = vsel %vm1456, %v5227, %v5163
      %v5238 = vsel %vm1456, %v5228, %v5165
      %v5239 = vsel %vm1456, %v5229, %v5167
      %v5240 = vsel %vm1456, %v5230, %v5169
      %v5241 = vsel %vm1456, %v5231, %v5171
      %v5242 = vsel %vm1461, %v5232, %v5193
      %v5243 = vsel %vm1461, %v5233, %v5195
      %v5244 = vsel %vm1461, %v5234, %v5197
      %v5245 = vsel %vm1461, %v5235, %v5199
      %v5246 = vsel %vm1461, %v5236, %v5201
      %v5247 = vsel %vm1461, %v5237, %v5203
      %v5248 = vsel %vm1461, %v5238, %v5205
      %v5249 = vsel %vm1461, %v5239, %v5207
      %v5250 = vsel %vm1461, %v5240, %v5209
      %v5251 = vsel %vm1461, %v5241, %v5211
      %v5252 = vpack.c.bf16 %v5243, %v5242
      %v5253 = vpack.c.bf16 %v5245, %v5244
      %v5254 = vpack.c.bf16 %v5247, %v5246
      %v5255 = vpack.c.bf16 %v5249, %v5248
      %v5256 = vpack.c.bf16 %v5251, %v5250
      %v5257 = vlaneseq
      %v5258 = vshrl.u32 %v5257, 7
      %v5259 = vsub.s32 0, %v5258
      %v5260 = vrot.slane %v3431, %v5259
      %v5262 = vsel %vm564, %v5252, 0
      %v5265 = vsel %vm564, %v5253, 0
      %v5268 = vsel %vm564, %v5254, 0
      %v5271 = vsel %vm564, %v5255, 0
      %v5274 = vsel %vm564, %v5256, 0
      %5276 = vmatprep.subr.bf16.mxu0 0
      %5277 = vmatpush1.bf16.msra.mxu0 %v3429
      %5278 = vmatprep.subr.bf16.mxu0 0
      %5279 = vmatpush1.bf16.msra.mxu0 %v3430
      %5280 = vmatprep.subr.bf16.mxu0 0
      %5281 = vmatpush1.bf16.msra.mxu0 0
      %5282 = vmatprep.subr.bf16.mxu0 0
      %5283 = vmatpush1.bf16.msra.mxu0 0
      %5284 = vmatprep.subr.bf16.mxu0 0
      %5285 = vmatpush1.bf16.msra.mxu0 0
      %5286 = vmatprep.subr.bf16.mxu0 0
      %5287 = vmatpush1.bf16.msra.mxu0 0
      %5288 = vmatprep.subr.bf16.mxu0 0
      %5289 = vmatpush1.bf16.msra.mxu0 0
      %5290 = vmatprep.subr.bf16.mxu0 0
      %5291 = vmatpush1.bf16.msra.mxu0 0
      %5292 = vmatprep.subr.bf16.mxu0 0
      %5293 = vmatpush1.bf16.msra.mxu0 0
      %5294 = vmatprep.subr.bf16.mxu0 0
      %5295 = vmatpush1.bf16.msra.mxu0 0
      %5296 = vmatprep.subr.bf16.mxu0 0
      %5297 = vmatpush1.bf16.msra.mxu0 0
      %5298 = vmatprep.subr.bf16.mxu0 0
      %5299 = vmatpush1.bf16.msra.mxu0 0
      %5300 = vmatprep.subr.bf16.mxu0 0
      %5301 = vmatpush1.bf16.msra.mxu0 0
      %5302 = vmatprep.subr.bf16.mxu0 0
      %5303 = vmatpush1.bf16.msra.mxu0 0
      %5304 = vmatprep.subr.bf16.mxu0 0
      %5305 = vmatpush1.bf16.msra.mxu0 0
      %5306 = vmatprep.subr.bf16.mxu0 0
      %5307 = vmatpush1.bf16.msra.mxu0 0
      %5308 = vmatprep.mubr.bf16.mxu0 0
      %5309 = vmatmul.mubr.bf16.gmra.mrb[0].mxu0 %v5262
      %v5310 = vpop.f32.mrb[0].mxu0
      %v5311 = vadd.f32 %v5260, %v5310
      %v5312 = vpop.f32.mrb[0].mxu0
      %v5313 = vpop.f32.mrb[0].mxu0
      %v5314 = vadd.f32 %v5260, %v5313
      %v5315 = vpop.f32.mrb[0].mxu0
      %5316 = vmatprep.mubr.bf16.mxu0 0
      %5317 = vmatmul.mubr.bf16.gmra.mrb[0].mxu0 %v5265
      %v5318 = vpop.f32.mrb[0].mxu0
      %v5319 = vadd.f32 %v5260, %v5318
      %v5320 = vpop.f32.mrb[0].mxu0
      %v5321 = vpop.f32.mrb[0].mxu0
      %v5322 = vadd.f32 %v5260, %v5321
      %v5323 = vpop.f32.mrb[0].mxu0
      %5324 = vmatprep.mubr.bf16.mxu0 0
      %5325 = vmatmul.mubr.bf16.gmra.mrb[0].mxu0 %v5268
      %v5326 = vpop.f32.mrb[0].mxu0
      %v5327 = vadd.f32 %v5260, %v5326
      %v5328 = vpop.f32.mrb[0].mxu0
      %v5329 = vpop.f32.mrb[0].mxu0
      %v5330 = vadd.f32 %v5260, %v5329
      %v5331 = vpop.f32.mrb[0].mxu0
      %5332 = vmatprep.mubr.bf16.mxu0 0
      %5333 = vmatmul.mubr.bf16.gmra.mrb[0].mxu0 %v5271
      %v5334 = vpop.f32.mrb[0].mxu0
      %v5335 = vadd.f32 %v5260, %v5334
      %v5336 = vpop.f32.mrb[0].mxu0
      %v5337 = vpop.f32.mrb[0].mxu0
      %v5338 = vadd.f32 %v5260, %v5337
      %v5339 = vpop.f32.mrb[0].mxu0
      %5340 = vmatprep.mubr.bf16.mxu0 0
      %5341 = vmatmul.mubr.bf16.gmra.mrb[0].mxu0 %v5274
      %v5342 = vpop.f32.mrb[0].mxu0
      %v5343 = vadd.f32 %v5260, %v5342
      %v5344 = vpop.f32.mrb[0].mxu0
      %v5345 = vpop.f32.mrb[0].mxu0
      %v5346 = vadd.f32 %v5260, %v5345
      %v5347 = vpop.f32.mrb[0].mxu0
      %5348 = vdwg.mxu0
      %v5349 = vadd.f32 %v3405, %v5311
      %v5350 = vadd.f32 %v3406, %v5314
      %v5351 = vadd.f32 %v3407, %v5319
      %v5352 = vadd.f32 %v3408, %v5322
      %v5353 = vadd.f32 %v3409, %v5327
      %v5354 = vadd.f32 %v3410, %v5330
      %v5355 = vadd.f32 %v3411, %v5335
      %v5356 = vadd.f32 %v3412, %v5338
      %v5357 = vadd.f32 %v3413, %v5343
      %v5358 = vadd.f32 %v3414, %v5346
      %v5359 = vsel %vm564, %v5349, 0.0
      %5360 = vadd.xlane.f32.xlu0 %v5359
      %v5361 = vpop.xlane.xlu0 %5360
      %v5362 = vsel %vm564, %v5350, 0.0
      %5363 = vadd.xlane.f32.xlu0 %v5362
      %v5364 = vpop.xlane.xlu0 %5363
      %v5365 = vsel %vm564, %v5351, 0.0
      %5366 = vadd.xlane.f32.xlu0 %v5365
      %v5367 = vpop.xlane.xlu0 %5366
      %v5368 = vsel %vm564, %v5352, 0.0
      %5369 = vadd.xlane.f32.xlu0 %v5368
      %v5370 = vpop.xlane.xlu0 %5369
      %v5371 = vsel %vm564, %v5353, 0.0
      %5372 = vadd.xlane.f32.xlu0 %v5371
      %v5373 = vpop.xlane.xlu0 %5372
      %v5374 = vsel %vm564, %v5354, 0.0
      %5375 = vadd.xlane.f32.xlu0 %v5374
      %v5376 = vpop.xlane.xlu0 %5375
      %v5377 = vsel %vm564, %v5355, 0.0
      %5378 = vadd.xlane.f32.xlu0 %v5377
      %v5379 = vpop.xlane.xlu0 %5378
      %v5380 = vsel %vm564, %v5356, 0.0
      %5381 = vadd.xlane.f32.xlu0 %v5380
      %v5382 = vpop.xlane.xlu0 %5381
      %v5383 = vsel %vm564, %v5357, 0.0
      %5384 = vadd.xlane.f32.xlu0 %v5383
      %v5385 = vpop.xlane.xlu0 %5384
      %v5386 = vsel %vm564, %v5358, 0.0
      %5387 = vadd.xlane.f32.xlu0 %v5386
      %v5388 = vpop.xlane.xlu0 %5387
      %v5389 = vmul.f32 %v5361, %v577
      %v5390 = vmul.f32 %v5364, %v577
      %v5391 = vmul.f32 %v5367, %v577
      %v5392 = vmul.f32 %v5370, %v577
      %v5393 = vmul.f32 %v5373, %v577
      %v5394 = vmul.f32 %v5376, %v577
      %v5395 = vmul.f32 %v5379, %v577
      %v5396 = vmul.f32 %v5382, %v577
      %v5397 = vmul.f32 %v5385, %v577
      %v5398 = vmul.f32 %v5388, %v577
      %v5399 = vsub.f32 %v5349, %v5389
      %v5400 = vsub.f32 %v5350, %v5390
      %v5401 = vsub.f32 %v5351, %v5391
      %v5402 = vsub.f32 %v5352, %v5392
      %v5403 = vsub.f32 %v5353, %v5393
      %v5404 = vsub.f32 %v5354, %v5394
      %v5405 = vsub.f32 %v5355, %v5395
      %v5406 = vsub.f32 %v5356, %v5396
      %v5407 = vsub.f32 %v5357, %v5397
      %v5408 = vsub.f32 %v5358, %v5398
      %v5409 = vmul.f32 %v5399, %v5399
      %v5410 = vmul.f32 %v5400, %v5400
      %v5411 = vmul.f32 %v5401, %v5401
      %v5412 = vmul.f32 %v5402, %v5402
      %v5413 = vmul.f32 %v5403, %v5403
      %v5414 = vmul.f32 %v5404, %v5404
      %v5415 = vmul.f32 %v5405, %v5405
      %v5416 = vmul.f32 %v5406, %v5406
      %v5417 = vmul.f32 %v5407, %v5407
      %v5418 = vmul.f32 %v5408, %v5408
      %v5419 = vsel %vm564, %v5409, 0.0
      %5420 = vadd.xlane.f32.xlu0 %v5419
      %v5421 = vpop.xlane.xlu0 %5420
      %v5422 = vsel %vm564, %v5410, 0.0
      %5423 = vadd.xlane.f32.xlu0 %v5422
      %v5424 = vpop.xlane.xlu0 %5423
      %v5425 = vsel %vm564, %v5411, 0.0
      %5426 = vadd.xlane.f32.xlu0 %v5425
      %v5427 = vpop.xlane.xlu0 %5426
      %v5428 = vsel %vm564, %v5412, 0.0
      %5429 = vadd.xlane.f32.xlu0 %v5428
      %v5430 = vpop.xlane.xlu0 %5429
      %v5431 = vsel %vm564, %v5413, 0.0
      %5432 = vadd.xlane.f32.xlu0 %v5431
      %v5433 = vpop.xlane.xlu0 %5432
      %v5434 = vsel %vm564, %v5414, 0.0
      %5435 = vadd.xlane.f32.xlu0 %v5434
      %v5436 = vpop.xlane.xlu0 %5435
      %v5437 = vsel %vm564, %v5415, 0.0
      %5438 = vadd.xlane.f32.xlu0 %v5437
      %v5439 = vpop.xlane.xlu0 %5438
      %v5440 = vsel %vm564, %v5416, 0.0
      %5441 = vadd.xlane.f32.xlu0 %v5440
      %v5442 = vpop.xlane.xlu0 %5441
      %v5443 = vsel %vm564, %v5417, 0.0
      %5444 = vadd.xlane.f32.xlu0 %v5443
      %v5445 = vpop.xlane.xlu0 %5444
      %v5446 = vsel %vm564, %v5418, 0.0
      %5447 = vadd.xlane.f32.xlu0 %v5446
      %v5448 = vpop.xlane.xlu0 %5447
      %v5449 = vmul.f32 %v5421, %v577
      %v5450 = vmul.f32 %v5424, %v577
      %v5451 = vmul.f32 %v5427, %v577
      %v5452 = vmul.f32 %v5430, %v577
      %v5453 = vmul.f32 %v5433, %v577
      %v5454 = vmul.f32 %v5436, %v577
      %v5455 = vmul.f32 %v5439, %v577
      %v5456 = vmul.f32 %v5442, %v577
      %v5457 = vmul.f32 %v5445, %v577
      %v5458 = vmul.f32 %v5448, %v577
      %v5459 = vadd.f32 %v5449, 1e-05
      %v5460 = vadd.f32 %v5450, 1e-05
      %v5461 = vadd.f32 %v5451, 1e-05
      %v5462 = vadd.f32 %v5452, 1e-05
      %v5463 = vadd.f32 %v5453, 1e-05
      %v5464 = vadd.f32 %v5454, 1e-05
      %v5465 = vadd.f32 %v5455, 1e-05
      %v5466 = vadd.f32 %v5456, 1e-05
      %v5467 = vadd.f32 %v5457, 1e-05
      %v5468 = vadd.f32 %v5458, 1e-05
      %v5469 = vrsqrt.pop %v5459
      %v5470 = vrsqrt.pop %v5460
      %v5471 = vrsqrt.pop %v5461
      %v5472 = vrsqrt.pop %v5462
      %v5473 = vrsqrt.pop %v5463
      %v5474 = vrsqrt.pop %v5464
      %v5475 = vrsqrt.pop %v5465
      %v5476 = vrsqrt.pop %v5466
      %v5477 = vrsqrt.pop %v5467
      %v5478 = vrsqrt.pop %v5468
      %v5479 = vmul.f32 %v5399, %v5469
      %v5480 = vmul.f32 %v5400, %v5470
      %v5481 = vmul.f32 %v5401, %v5471
      %v5482 = vmul.f32 %v5402, %v5472
      %v5483 = vmul.f32 %v5403, %v5473
      %v5484 = vmul.f32 %v5404, %v5474
      %v5485 = vmul.f32 %v5405, %v5475
      %v5486 = vmul.f32 %v5406, %v5476
      %v5487 = vmul.f32 %v5407, %v5477
      %v5488 = vmul.f32 %v5408, %v5478
      %v5489 = vlaneseq
      %v5490 = vshrl.u32 %v5489, 7
      %v5491 = vsub.s32 0, %v5490
      %v5492 = vrot.slane %v3432, %v5491
      %v5493 = vmul.f32 %v5479, %v5492
      %v5494 = vmul.f32 %v5480, %v5492
      %v5495 = vmul.f32 %v5481, %v5492
      %v5496 = vmul.f32 %v5482, %v5492
      %v5497 = vmul.f32 %v5483, %v5492
      %v5498 = vmul.f32 %v5484, %v5492
      %v5499 = vmul.f32 %v5485, %v5492
      %v5500 = vmul.f32 %v5486, %v5492
      %v5501 = vmul.f32 %v5487, %v5492
      %v5502 = vmul.f32 %v5488, %v5492
      %v5503 = vlaneseq
      %v5504 = vshrl.u32 %v5503, 7
      %v5505 = vsub.s32 0, %v5504
      %v5506 = vrot.slane %v3433, %v5505
      %v5507 = vadd.f32 %v5493, %v5506
      %v5508 = vadd.f32 %v5494, %v5506
      %v5509 = vadd.f32 %v5495, %v5506
      %v5510 = vadd.f32 %v5496, %v5506
      %v5511 = vadd.f32 %v5497, %v5506
      %v5512 = vadd.f32 %v5498, %v5506
      %v5513 = vadd.f32 %v5499, %v5506
      %v5514 = vadd.f32 %v5500, %v5506
      %v5515 = vadd.f32 %v5501, %v5506
      %v5516 = vadd.f32 %v5502, %v5506
      %v5517 = vpack.c.bf16 %v5508, %v5507
      %v5518 = vpack.c.bf16 %v5510, %v5509
      %v5519 = vpack.c.bf16 %v5512, %v5511
      %v5520 = vpack.c.bf16 %v5514, %v5513
      %v5521 = vpack.c.bf16 %v5516, %v5515
      %v5522 = vlaneseq
      %v5523 = vshrl.u32 %v5522, 7
      %v5524 = vsub.s32 0, %v5523
      %v5525 = vrot.slane %v3440, %v5524
      %v5527 = vsel %vm564, %v5517, 0
      %v5530 = vsel %vm564, %v5518, 0
      %v5533 = vsel %vm564, %v5519, 0
      %v5536 = vsel %vm564, %v5520, 0
      %v5539 = vsel %vm564, %v5521, 0
      %5541 = vmatprep.subr.bf16.mxu0 0
      %5542 = vmatpush1.bf16.msra.mxu0 %v3438
      %5543 = vmatprep.subr.bf16.mxu0 0
      %5544 = vmatpush1.bf16.msra.mxu0 %v3439
      %5545 = vmatprep.subr.bf16.mxu0 0
      %5546 = vmatpush1.bf16.msra.mxu0 0
      %5547 = vmatprep.subr.bf16.mxu0 0
      %5548 = vmatpush1.bf16.msra.mxu0 0
      %5549 = vmatprep.subr.bf16.mxu0 0
      %5550 = vmatpush1.bf16.msra.mxu0 0
      %5551 = vmatprep.subr.bf16.mxu0 0
      %5552 = vmatpush1.bf16.msra.mxu0 0
      %5553 = vmatprep.subr.bf16.mxu0 0
      %5554 = vmatpush1.bf16.msra.mxu0 0
      %5555 = vmatprep.subr.bf16.mxu0 0
      %5556 = vmatpush1.bf16.msra.mxu0 0
      %5557 = vmatprep.subr.bf16.mxu0 0
      %5558 = vmatpush1.bf16.msra.mxu0 0
      %5559 = vmatprep.subr.bf16.mxu0 0
      %5560 = vmatpush1.bf16.msra.mxu0 0
      %5561 = vmatprep.subr.bf16.mxu0 0
      %5562 = vmatpush1.bf16.msra.mxu0 0
      %5563 = vmatprep.subr.bf16.mxu0 0
      %5564 = vmatpush1.bf16.msra.mxu0 0
      %5565 = vmatprep.subr.bf16.mxu0 0
      %5566 = vmatpush1.bf16.msra.mxu0 0
      %5567 = vmatprep.subr.bf16.mxu0 0
      %5568 = vmatpush1.bf16.msra.mxu0 0
      %5569 = vmatprep.subr.bf16.mxu0 0
      %5570 = vmatpush1.bf16.msra.mxu0 0
      %5571 = vmatprep.subr.bf16.mxu0 0
      %5572 = vmatpush1.bf16.msra.mxu0 0
      %5573 = vmatprep.mubr.bf16.mxu0 0
      %5574 = vmatmul.mubr.bf16.gmra.mrb[0].mxu0 %v5527
      %v5575 = vpop.f32.mrb[0].mxu0
      %v5576 = vadd.f32 %v5525, %v5575
      %v5577 = vpop.f32.mrb[0].mxu0
      %v5578 = vpop.f32.mrb[0].mxu0
      %v5579 = vadd.f32 %v5525, %v5578
      %v5580 = vpop.f32.mrb[0].mxu0
      %5581 = vmatprep.mubr.bf16.mxu0 0
      %5582 = vmatmul.mubr.bf16.gmra.mrb[0].mxu0 %v5530
      %v5583 = vpop.f32.mrb[0].mxu0
      %v5584 = vadd.f32 %v5525, %v5583
      %v5585 = vpop.f32.mrb[0].mxu0
      %v5586 = vpop.f32.mrb[0].mxu0
      %v5587 = vadd.f32 %v5525, %v5586
      %v5588 = vpop.f32.mrb[0].mxu0
      %5589 = vmatprep.mubr.bf16.mxu0 0
      %5590 = vmatmul.mubr.bf16.gmra.mrb[0].mxu0 %v5533
      %v5591 = vpop.f32.mrb[0].mxu0
      %v5592 = vadd.f32 %v5525, %v5591
      %v5593 = vpop.f32.mrb[0].mxu0
      %v5594 = vpop.f32.mrb[0].mxu0
      %v5595 = vadd.f32 %v5525, %v5594
      %v5596 = vpop.f32.mrb[0].mxu0
      %5597 = vmatprep.mubr.bf16.mxu0 0
      %5598 = vmatmul.mubr.bf16.gmra.mrb[0].mxu0 %v5536
      %v5599 = vpop.f32.mrb[0].mxu0
      %v5600 = vadd.f32 %v5525, %v5599
      %v5601 = vpop.f32.mrb[0].mxu0
      %v5602 = vpop.f32.mrb[0].mxu0
      %v5603 = vadd.f32 %v5525, %v5602
      %v5604 = vpop.f32.mrb[0].mxu0
      %5605 = vmatprep.mubr.bf16.mxu0 0
      %5606 = vmatmul.mubr.bf16.gmra.mrb[0].mxu0 %v5539
      %v5607 = vpop.f32.mrb[0].mxu0
      %v5608 = vadd.f32 %v5525, %v5607
      %v5609 = vpop.f32.mrb[0].mxu0
      %v5610 = vpop.f32.mrb[0].mxu0
      %v5611 = vadd.f32 %v5525, %v5610
      %v5612 = vpop.f32.mrb[0].mxu0
      %5613 = vdwg.mxu0
      %v5614 = vmul.f32 %v5576, 0.5
      %v5615 = vmul.f32 %v5579, 0.5
      %v5616 = vmul.f32 %v5584, 0.5
      %v5617 = vmul.f32 %v5587, 0.5
      %v5618 = vmul.f32 %v5592, 0.5
      %v5619 = vmul.f32 %v5595, 0.5
      %v5620 = vmul.f32 %v5600, 0.5
      %v5621 = vmul.f32 %v5603, 0.5
      %v5622 = vmul.f32 %v5608, 0.5
      %v5623 = vmul.f32 %v5611, 0.5
      %v5624 = vmul.f32 %v5576, 0.70710677
      %v5625 = vmul.f32 %v5579, 0.70710677
      %v5626 = vmul.f32 %v5584, 0.70710677
      %v5627 = vmul.f32 %v5587, 0.70710677
      %v5628 = vmul.f32 %v5592, 0.70710677
      %v5629 = vmul.f32 %v5595, 0.70710677
      %v5630 = vmul.f32 %v5600, 0.70710677
      %v5631 = vmul.f32 %v5603, 0.70710677
      %v5632 = vmul.f32 %v5608, 0.70710677
      %v5633 = vmul.f32 %v5611, 0.70710677
      %vm5634 = vcmp.ge.f32.partialorder %v5624, 0.0
      %vm5635 = vcmp.ge.f32.partialorder %v5625, 0.0
      %vm5636 = vcmp.ge.f32.partialorder %v5626, 0.0
      %vm5637 = vcmp.ge.f32.partialorder %v5627, 0.0
      %vm5638 = vcmp.ge.f32.partialorder %v5628, 0.0
      %vm5639 = vcmp.ge.f32.partialorder %v5629, 0.0
      %vm5640 = vcmp.ge.f32.partialorder %v5630, 0.0
      %vm5641 = vcmp.ge.f32.partialorder %v5631, 0.0
      %vm5642 = vcmp.ge.f32.partialorder %v5632, 0.0
      %vm5643 = vcmp.ge.f32.partialorder %v5633, 0.0
      %v5644 = vsel %vm5634, 1.0, -1.0
      %v5645 = vsel %vm5635, 1.0, -1.0
      %v5646 = vsel %vm5636, 1.0, -1.0
      %v5647 = vsel %vm5637, 1.0, -1.0
      %v5648 = vsel %vm5638, 1.0, -1.0
      %v5649 = vsel %vm5639, 1.0, -1.0
      %v5650 = vsel %vm5640, 1.0, -1.0
      %v5651 = vsel %vm5641, 1.0, -1.0
      %v5652 = vsel %vm5642, 1.0, -1.0
      %v5653 = vsel %vm5643, 1.0, -1.0
      %v5654 = vand.u32 2147483647, %v5624
      %v5655 = vand.u32 2147483647, %v5625
      %v5656 = vand.u32 2147483647, %v5626
      %v5657 = vand.u32 2147483647, %v5627
      %v5658 = vand.u32 2147483647, %v5628
      %v5659 = vand.u32 2147483647, %v5629
      %v5660 = vand.u32 2147483647, %v5630
      %v5661 = vand.u32 2147483647, %v5631
      %v5662 = vand.u32 2147483647, %v5632
      %v5663 = vand.u32 2147483647, %v5633
      %v5664 = vmul.f32 %v5654, 0.3275911
      %v5665 = vmul.f32 %v5655, 0.3275911
      %v5666 = vmul.f32 %v5656, 0.3275911
      %v5667 = vmul.f32 %v5657, 0.3275911
      %v5668 = vmul.f32 %v5658, 0.3275911
      %v5669 = vmul.f32 %v5659, 0.3275911
      %v5670 = vmul.f32 %v5660, 0.3275911
      %v5671 = vmul.f32 %v5661, 0.3275911
      %v5672 = vmul.f32 %v5662, 0.3275911
      %v5673 = vmul.f32 %v5663, 0.3275911
      %v5674 = vadd.f32 %v5664, 1.0
      %v5675 = vadd.f32 %v5665, 1.0
      %v5676 = vadd.f32 %v5666, 1.0
      %v5677 = vadd.f32 %v5667, 1.0
      %v5678 = vadd.f32 %v5668, 1.0
      %v5679 = vadd.f32 %v5669, 1.0
      %v5680 = vadd.f32 %v5670, 1.0
      %v5681 = vadd.f32 %v5671, 1.0
      %v5682 = vadd.f32 %v5672, 1.0
      %v5683 = vadd.f32 %v5673, 1.0
      %v5684 = vrcp.pop %v5674
      %v5685 = vmul.f32 1.0, %v5684
      %v5686 = vrcp.pop %v5675
      %v5687 = vmul.f32 1.0, %v5686
      %v5688 = vrcp.pop %v5676
      %v5689 = vmul.f32 1.0, %v5688
      %v5690 = vrcp.pop %v5677
      %v5691 = vmul.f32 1.0, %v5690
      %v5692 = vrcp.pop %v5678
      %v5693 = vmul.f32 1.0, %v5692
      %v5694 = vrcp.pop %v5679
      %v5695 = vmul.f32 1.0, %v5694
      %v5696 = vrcp.pop %v5680
      %v5697 = vmul.f32 1.0, %v5696
      %v5698 = vrcp.pop %v5681
      %v5699 = vmul.f32 1.0, %v5698
      %v5700 = vrcp.pop %v5682
      %v5701 = vmul.f32 1.0, %v5700
      %v5702 = vrcp.pop %v5683
      %v5703 = vmul.f32 1.0, %v5702
      %v5704 = vmul.f32 %v5685, 1.0614054
      %v5705 = vmul.f32 %v5687, 1.0614054
      %v5706 = vmul.f32 %v5689, 1.0614054
      %v5707 = vmul.f32 %v5691, 1.0614054
      %v5708 = vmul.f32 %v5693, 1.0614054
      %v5709 = vmul.f32 %v5695, 1.0614054
      %v5710 = vmul.f32 %v5697, 1.0614054
      %v5711 = vmul.f32 %v5699, 1.0614054
      %v5712 = vmul.f32 %v5701, 1.0614054
      %v5713 = vmul.f32 %v5703, 1.0614054
      %v5714 = vadd.f32 %v5704, -1.4531521
      %v5715 = vadd.f32 %v5705, -1.4531521
      %v5716 = vadd.f32 %v5706, -1.4531521
      %v5717 = vadd.f32 %v5707, -1.4531521
      %v5718 = vadd.f32 %v5708, -1.4531521
      %v5719 = vadd.f32 %v5709, -1.4531521
      %v5720 = vadd.f32 %v5710, -1.4531521
      %v5721 = vadd.f32 %v5711, -1.4531521
      %v5722 = vadd.f32 %v5712, -1.4531521
      %v5723 = vadd.f32 %v5713, -1.4531521
      %v5724 = vmul.f32 %v5714, %v5685
      %v5725 = vmul.f32 %v5715, %v5687
      %v5726 = vmul.f32 %v5716, %v5689
      %v5727 = vmul.f32 %v5717, %v5691
      %v5728 = vmul.f32 %v5718, %v5693
      %v5729 = vmul.f32 %v5719, %v5695
      %v5730 = vmul.f32 %v5720, %v5697
      %v5731 = vmul.f32 %v5721, %v5699
      %v5732 = vmul.f32 %v5722, %v5701
      %v5733 = vmul.f32 %v5723, %v5703
      %v5734 = vadd.f32 %v5724, 1.4214138
      %v5735 = vadd.f32 %v5725, 1.4214138
      %v5736 = vadd.f32 %v5726, 1.4214138
      %v5737 = vadd.f32 %v5727, 1.4214138
      %v5738 = vadd.f32 %v5728, 1.4214138
      %v5739 = vadd.f32 %v5729, 1.4214138
      %v5740 = vadd.f32 %v5730, 1.4214138
      %v5741 = vadd.f32 %v5731, 1.4214138
      %v5742 = vadd.f32 %v5732, 1.4214138
      %v5743 = vadd.f32 %v5733, 1.4214138
      %v5744 = vmul.f32 %v5734, %v5685
      %v5745 = vmul.f32 %v5735, %v5687
      %v5746 = vmul.f32 %v5736, %v5689
      %v5747 = vmul.f32 %v5737, %v5691
      %v5748 = vmul.f32 %v5738, %v5693
      %v5749 = vmul.f32 %v5739, %v5695
      %v5750 = vmul.f32 %v5740, %v5697
      %v5751 = vmul.f32 %v5741, %v5699
      %v5752 = vmul.f32 %v5742, %v5701
      %v5753 = vmul.f32 %v5743, %v5703
      %v5754 = vadd.f32 %v5744, -0.28449672
      %v5755 = vadd.f32 %v5745, -0.28449672
      %v5756 = vadd.f32 %v5746, -0.28449672
      %v5757 = vadd.f32 %v5747, -0.28449672
      %v5758 = vadd.f32 %v5748, -0.28449672
      %v5759 = vadd.f32 %v5749, -0.28449672
      %v5760 = vadd.f32 %v5750, -0.28449672
      %v5761 = vadd.f32 %v5751, -0.28449672
      %v5762 = vadd.f32 %v5752, -0.28449672
      %v5763 = vadd.f32 %v5753, -0.28449672
      %v5764 = vmul.f32 %v5754, %v5685
      %v5765 = vmul.f32 %v5755, %v5687
      %v5766 = vmul.f32 %v5756, %v5689
      %v5767 = vmul.f32 %v5757, %v5691
      %v5768 = vmul.f32 %v5758, %v5693
      %v5769 = vmul.f32 %v5759, %v5695
      %v5770 = vmul.f32 %v5760, %v5697
      %v5771 = vmul.f32 %v5761, %v5699
      %v5772 = vmul.f32 %v5762, %v5701
      %v5773 = vmul.f32 %v5763, %v5703
      %v5774 = vadd.f32 %v5764, 0.2548296
      %v5775 = vadd.f32 %v5765, 0.2548296
      %v5776 = vadd.f32 %v5766, 0.2548296
      %v5777 = vadd.f32 %v5767, 0.2548296
      %v5778 = vadd.f32 %v5768, 0.2548296
      %v5779 = vadd.f32 %v5769, 0.2548296
      %v5780 = vadd.f32 %v5770, 0.2548296
      %v5781 = vadd.f32 %v5771, 0.2548296
      %v5782 = vadd.f32 %v5772, 0.2548296
      %v5783 = vadd.f32 %v5773, 0.2548296
      %v5784 = vmul.f32 %v5774, %v5685
      %v5785 = vmul.f32 %v5775, %v5687
      %v5786 = vmul.f32 %v5776, %v5689
      %v5787 = vmul.f32 %v5777, %v5691
      %v5788 = vmul.f32 %v5778, %v5693
      %v5789 = vmul.f32 %v5779, %v5695
      %v5790 = vmul.f32 %v5780, %v5697
      %v5791 = vmul.f32 %v5781, %v5699
      %v5792 = vmul.f32 %v5782, %v5701
      %v5793 = vmul.f32 %v5783, %v5703
      %v5794 = vsub.f32 0.0, %v5654
      %v5795 = vsub.f32 0.0, %v5655
      %v5796 = vsub.f32 0.0, %v5656
      %v5797 = vsub.f32 0.0, %v5657
      %v5798 = vsub.f32 0.0, %v5658
      %v5799 = vsub.f32 0.0, %v5659
      %v5800 = vsub.f32 0.0, %v5660
      %v5801 = vsub.f32 0.0, %v5661
      %v5802 = vsub.f32 0.0, %v5662
      %v5803 = vsub.f32 0.0, %v5663
      %v5804 = vmul.f32 %v5794, %v5654
      %v5805 = vmul.f32 %v5795, %v5655
      %v5806 = vmul.f32 %v5796, %v5656
      %v5807 = vmul.f32 %v5797, %v5657
      %v5808 = vmul.f32 %v5798, %v5658
      %v5809 = vmul.f32 %v5799, %v5659
      %v5810 = vmul.f32 %v5800, %v5660
      %v5811 = vmul.f32 %v5801, %v5661
      %v5812 = vmul.f32 %v5802, %v5662
      %v5813 = vmul.f32 %v5803, %v5663
      %v5814 = vmul.f32 %v5804, 1.442695
      %v5815 = vpow.pop %v5814
      %v5816 = vmul.f32 %v5805, 1.442695
      %v5817 = vpow.pop %v5816
      %v5818 = vmul.f32 %v5806, 1.442695
      %v5819 = vpow.pop %v5818
      %v5820 = vmul.f32 %v5807, 1.442695
      %v5821 = vpow.pop %v5820
      %v5822 = vmul.f32 %v5808, 1.442695
      %v5823 = vpow.pop %v5822
      %v5824 = vmul.f32 %v5809, 1.442695
      %v5825 = vpow.pop %v5824
      %v5826 = vmul.f32 %v5810, 1.442695
      %v5827 = vpow.pop %v5826
      %v5828 = vmul.f32 %v5811, 1.442695
      %v5829 = vpow.pop %v5828
      %v5830 = vmul.f32 %v5812, 1.442695
      %v5831 = vpow.pop %v5830
      %v5832 = vmul.f32 %v5813, 1.442695
      %v5833 = vpow.pop %v5832
      %v5834 = vmul.f32 %v5784, %v5815
      %v5835 = vmul.f32 %v5785, %v5817
      %v5836 = vmul.f32 %v5786, %v5819
      %v5837 = vmul.f32 %v5787, %v5821
      %v5838 = vmul.f32 %v5788, %v5823
      %v5839 = vmul.f32 %v5789, %v5825
      %v5840 = vmul.f32 %v5790, %v5827
      %v5841 = vmul.f32 %v5791, %v5829
      %v5842 = vmul.f32 %v5792, %v5831
      %v5843 = vmul.f32 %v5793, %v5833
      %v5844 = vsub.f32 1.0, %v5834
      %v5845 = vsub.f32 1.0, %v5835
      %v5846 = vsub.f32 1.0, %v5836
      %v5847 = vsub.f32 1.0, %v5837
      %v5848 = vsub.f32 1.0, %v5838
      %v5849 = vsub.f32 1.0, %v5839
      %v5850 = vsub.f32 1.0, %v5840
      %v5851 = vsub.f32 1.0, %v5841
      %v5852 = vsub.f32 1.0, %v5842
      %v5853 = vsub.f32 1.0, %v5843
      %v5854 = vmul.f32 %v5644, %v5844
      %v5855 = vmul.f32 %v5645, %v5845
      %v5856 = vmul.f32 %v5646, %v5846
      %v5857 = vmul.f32 %v5647, %v5847
      %v5858 = vmul.f32 %v5648, %v5848
      %v5859 = vmul.f32 %v5649, %v5849
      %v5860 = vmul.f32 %v5650, %v5850
      %v5861 = vmul.f32 %v5651, %v5851
      %v5862 = vmul.f32 %v5652, %v5852
      %v5863 = vmul.f32 %v5653, %v5853
      %v5864 = vadd.f32 %v5854, 1.0
      %v5865 = vadd.f32 %v5855, 1.0
      %v5866 = vadd.f32 %v5856, 1.0
      %v5867 = vadd.f32 %v5857, 1.0
      %v5868 = vadd.f32 %v5858, 1.0
      %v5869 = vadd.f32 %v5859, 1.0
      %v5870 = vadd.f32 %v5860, 1.0
      %v5871 = vadd.f32 %v5861, 1.0
      %v5872 = vadd.f32 %v5862, 1.0
      %v5873 = vadd.f32 %v5863, 1.0
      %v5874 = vmul.f32 %v5614, %v5864
      %v5875 = vmul.f32 %v5615, %v5865
      %v5876 = vmul.f32 %v5616, %v5866
      %v5877 = vmul.f32 %v5617, %v5867
      %v5878 = vmul.f32 %v5618, %v5868
      %v5879 = vmul.f32 %v5619, %v5869
      %v5880 = vmul.f32 %v5620, %v5870
      %v5881 = vmul.f32 %v5621, %v5871
      %v5882 = vmul.f32 %v5622, %v5872
      %v5883 = vmul.f32 %v5623, %v5873
      %v5884 = vpack.c.bf16 %v5875, %v5874
      %v5885 = vpack.c.bf16 %v5877, %v5876
      %v5886 = vpack.c.bf16 %v5879, %v5878
      %v5887 = vpack.c.bf16 %v5881, %v5880
      %v5888 = vpack.c.bf16 %v5883, %v5882
      %v5889 = vlaneseq
      %v5890 = vshrl.u32 %v5889, 7
      %v5891 = vsub.s32 0, %v5890
      %v5892 = vrot.slane %v3465, %v5891
      %5893 = vmatprep.subr.bf16.mxu0 0
      %5894 = vmatpush1.bf16.msra.mxu0 %v3457
      %5895 = vmatprep.subr.bf16.mxu0 0
      %5896 = vmatpush1.bf16.msra.mxu0 %v3458
      %5897 = vmatprep.subr.bf16.mxu0 0
      %5898 = vmatpush1.bf16.msra.mxu0 %v3459
      %5899 = vmatprep.subr.bf16.mxu0 0
      %5900 = vmatpush1.bf16.msra.mxu0 %v3460
      %5901 = vmatprep.subr.bf16.mxu0 0
      %5902 = vmatpush1.bf16.msra.mxu0 %v3461
      %5903 = vmatprep.subr.bf16.mxu0 0
      %5904 = vmatpush1.bf16.msra.mxu0 %v3462
      %5905 = vmatprep.subr.bf16.mxu0 0
      %5906 = vmatpush1.bf16.msra.mxu0 %v3463
      %5907 = vmatprep.subr.bf16.mxu0 0
      %5908 = vmatpush1.bf16.msra.mxu0 %v3464
      %5909 = vmatprep.subr.bf16.mxu0 0
      %5910 = vmatpush1.bf16.msra.mxu0 0
      %5911 = vmatprep.subr.bf16.mxu0 0
      %5912 = vmatpush1.bf16.msra.mxu0 0
      %5913 = vmatprep.subr.bf16.mxu0 0
      %5914 = vmatpush1.bf16.msra.mxu0 0
      %5915 = vmatprep.subr.bf16.mxu0 0
      %5916 = vmatpush1.bf16.msra.mxu0 0
      %5917 = vmatprep.subr.bf16.mxu0 0
      %5918 = vmatpush1.bf16.msra.mxu0 0
      %5919 = vmatprep.subr.bf16.mxu0 0
      %5920 = vmatpush1.bf16.msra.mxu0 0
      %5921 = vmatprep.subr.bf16.mxu0 0
      %5922 = vmatpush1.bf16.msra.mxu0 0
      %5923 = vmatprep.subr.bf16.mxu0 0
      %5924 = vmatpush1.bf16.msra.mxu0 0
      %5925 = vmatprep.mubr.bf16.mxu0 0
      %5926 = vmatmul.mubr.bf16.gmra.mrb[0].mxu0 %v5884
      %v5927 = vpop.f32.mrb[0].mxu0
      %v5928 = vadd.f32 %v5892, %v5927
      %v5929 = vpop.f32.mrb[0].mxu0
      %v5930 = vpop.f32.mrb[0].mxu0
      %v5931 = vadd.f32 %v5892, %v5930
      %v5932 = vpop.f32.mrb[0].mxu0
      %5933 = vmatprep.mubr.bf16.mxu0 0
      %5934 = vmatmul.mubr.bf16.gmra.mrb[0].mxu0 %v5885
      %v5935 = vpop.f32.mrb[0].mxu0
      %v5936 = vadd.f32 %v5892, %v5935
      %v5937 = vpop.f32.mrb[0].mxu0
      %v5938 = vpop.f32.mrb[0].mxu0
      %v5939 = vadd.f32 %v5892, %v5938
      %v5940 = vpop.f32.mrb[0].mxu0
      %5941 = vmatprep.mubr.bf16.mxu0 0
      %5942 = vmatmul.mubr.bf16.gmra.mrb[0].mxu0 %v5886
      %v5943 = vpop.f32.mrb[0].mxu0
      %v5944 = vadd.f32 %v5892, %v5943
      %v5945 = vpop.f32.mrb[0].mxu0
      %v5946 = vpop.f32.mrb[0].mxu0
      %v5947 = vadd.f32 %v5892, %v5946
      %v5948 = vpop.f32.mrb[0].mxu0
      %5949 = vmatprep.mubr.bf16.mxu0 0
      %5950 = vmatmul.mubr.bf16.gmra.mrb[0].mxu0 %v5887
      %v5951 = vpop.f32.mrb[0].mxu0
      %v5952 = vadd.f32 %v5892, %v5951
      %v5953 = vpop.f32.mrb[0].mxu0
      %v5954 = vpop.f32.mrb[0].mxu0
      %v5955 = vadd.f32 %v5892, %v5954
      %v5956 = vpop.f32.mrb[0].mxu0
      %5957 = vmatprep.mubr.bf16.mxu0 0
      %5958 = vmatmul.mubr.bf16.gmra.mrb[0].mxu0 %v5888
      %v5959 = vpop.f32.mrb[0].mxu0
      %v5960 = vadd.f32 %v5892, %v5959
      %v5961 = vpop.f32.mrb[0].mxu0
      %v5962 = vpop.f32.mrb[0].mxu0
      %v5963 = vadd.f32 %v5892, %v5962
      %v5964 = vpop.f32.mrb[0].mxu0
      %5965 = vdwg.mxu0
      %v5966 = vadd.f32 %v5349, %v5928
      %v5967 = vadd.f32 %v5350, %v5931
      %v5968 = vadd.f32 %v5351, %v5936
      %v5969 = vadd.f32 %v5352, %v5939
      %v5970 = vadd.f32 %v5353, %v5944
      %v5971 = vadd.f32 %v5354, %v5947
      %v5972 = vadd.f32 %v5355, %v5952
      %v5973 = vadd.f32 %v5356, %v5955
      %v5974 = vadd.f32 %v5357, %v5960
      %v5975 = vadd.f32 %v5358, %v5963
      %s5976 = scalar_lea.vmem %s5, 232
      %v5977 = vld [vmem:[%s5976] sm:$0x1]
      %v5978 = vld [vmem:[%s5976 + $0x1] sm:$0x1]
      %v5979 = vld [vmem:[%s5976 + $0x8] sm:$0xff]
      %v5980 = vld [vmem:[%s5976 + $0x10] sm:$0xff]
      %v5981 = vld [vmem:[%s5976 + $0x18] sm:$0xff]
      %v5982 = vld [vmem:[%s5976 + $0x20] sm:$0xff]
      %v5983 = vpack.c.bf16 %v5980, %v5979
      %v5984 = vpack.c.bf16 %v5982, %v5981
      %v5985 = vld [vmem:[%s5976 + $0x28] sm:$0xff]
      %v5986 = vld [vmem:[%s5976 + $0x30] sm:$0xff]
      %v5987 = vld [vmem:[%s5976 + $0x38] sm:$0xff]
      %v5988 = vld [vmem:[%s5976 + $0x40] sm:$0xff]
      %v5989 = vpack.c.bf16 %v5986, %v5985
      %v5990 = vpack.c.bf16 %v5988, %v5987
      %v5991 = vld [vmem:[%s5976 + $0x2] sm:$0x1]
      %v5992 = vld [vmem:[%s5976 + $0x3] sm:$0x1]
      %v5993 = vld [vmem:[%s5976 + $0x4] sm:$0x1]
      %v5994 = vld [vmem:[%s5976 + $0x48] sm:$0xff]
      %v5995 = vld [vmem:[%s5976 + $0x50] sm:$0xff]
      %v5996 = vld [vmem:[%s5976 + $0x58] sm:$0xff]
      %v5997 = vld [vmem:[%s5976 + $0x60] sm:$0xff]
      %v5998 = vpack.c.bf16 %v5995, %v5994
      %v5999 = vpack.c.bf16 %v5997, %v5996
      %v6000 = vld [vmem:[%s5976 + $0x6] sm:$0x1]
      %v6001 = vld [vmem:[%s5976 + $0x68] sm:$0xff]
      %v6002 = vld [vmem:[%s5976 + $0x70] sm:$0xff]
      %v6003 = vld [vmem:[%s5976 + $0x78] sm:$0xff]
      %v6004 = vld [vmem:[%s5976 + $0x80] sm:$0xff]
      %v6005 = vld [vmem:[%s5976 + $0x88] sm:$0xff]
      %v6006 = vld [vmem:[%s5976 + $0x90] sm:$0xff]
      %v6007 = vld [vmem:[%s5976 + $0x98] sm:$0xff]
      %v6008 = vld [vmem:[%s5976 + $0xa0] sm:$0xff]
      %v6009 = vld [vmem:[%s5976 + $0xa8] sm:$0xff]
      %v6010 = vld [vmem:[%s5976 + $0xb0] sm:$0xff]
      %v6011 = vld [vmem:[%s5976 + $0xb8] sm:$0xff]
      %v6012 = vld [vmem:[%s5976 + $0xc0] sm:$0xff]
      %v6013 = vld [vmem:[%s5976 + $0xc8] sm:$0xff]
      %v6014 = vld [vmem:[%s5976 + $0xd0] sm:$0xff]
      %v6015 = vld [vmem:[%s5976 + $0xd8] sm:$0xff]
      %v6016 = vld [vmem:[%s5976 + $0xe0] sm:$0xff]
      %v6017 = vpack.c.bf16 %v6002, %v6001
      %v6018 = vpack.c.bf16 %v6004, %v6003
      %v6019 = vpack.c.bf16 %v6006, %v6005
      %v6020 = vpack.c.bf16 %v6008, %v6007
      %v6021 = vpack.c.bf16 %v6010, %v6009
      %v6022 = vpack.c.bf16 %v6012, %v6011
      %v6023 = vpack.c.bf16 %v6014, %v6013
      %v6024 = vpack.c.bf16 %v6016, %v6015
      %v6025 = vld [vmem:[%s5976 + $0x5] sm:$0x1]
      %v6026 = vsel %vm564, %v5966, 0.0
      %6027 = vadd.xlane.f32.xlu0 %v6026
      %v6028 = vpop.xlane.xlu0 %6027
      %v6029 = vsel %vm564, %v5967, 0.0
      %6030 = vadd.xlane.f32.xlu0 %v6029
      %v6031 = vpop.xlane.xlu0 %6030
      %v6032 = vsel %vm564, %v5968, 0.0
      %6033 = vadd.xlane.f32.xlu0 %v6032
      %v6034 = vpop.xlane.xlu0 %6033
      %v6035 = vsel %vm564, %v5969, 0.0
      %6036 = vadd.xlane.f32.xlu0 %v6035
      %v6037 = vpop.xlane.xlu0 %6036
      %v6038 = vsel %vm564, %v5970, 0.0
      %6039 = vadd.xlane.f32.xlu0 %v6038
      %v6040 = vpop.xlane.xlu0 %6039
      %v6041 = vsel %vm564, %v5971, 0.0
      %6042 = vadd.xlane.f32.xlu0 %v6041
      %v6043 = vpop.xlane.xlu0 %6042
      %v6044 = vsel %vm564, %v5972, 0.0
      %6045 = vadd.xlane.f32.xlu0 %v6044
      %v6046 = vpop.xlane.xlu0 %6045
      %v6047 = vsel %vm564, %v5973, 0.0
      %6048 = vadd.xlane.f32.xlu0 %v6047
      %v6049 = vpop.xlane.xlu0 %6048
      %v6050 = vsel %vm564, %v5974, 0.0
      %6051 = vadd.xlane.f32.xlu0 %v6050
      %v6052 = vpop.xlane.xlu0 %6051
      %v6053 = vsel %vm564, %v5975, 0.0
      %6054 = vadd.xlane.f32.xlu0 %v6053
      %v6055 = vpop.xlane.xlu0 %6054
      %v6056 = vmul.f32 %v6028, %v577
      %v6057 = vmul.f32 %v6031, %v577
      %v6058 = vmul.f32 %v6034, %v577
      %v6059 = vmul.f32 %v6037, %v577
      %v6060 = vmul.f32 %v6040, %v577
      %v6061 = vmul.f32 %v6043, %v577
      %v6062 = vmul.f32 %v6046, %v577
      %v6063 = vmul.f32 %v6049, %v577
      %v6064 = vmul.f32 %v6052, %v577
      %v6065 = vmul.f32 %v6055, %v577
      %v6066 = vsub.f32 %v5966, %v6056
      %v6067 = vsub.f32 %v5967, %v6057
      %v6068 = vsub.f32 %v5968, %v6058
      %v6069 = vsub.f32 %v5969, %v6059
      %v6070 = vsub.f32 %v5970, %v6060
      %v6071 = vsub.f32 %v5971, %v6061
      %v6072 = vsub.f32 %v5972, %v6062
      %v6073 = vsub.f32 %v5973, %v6063
      %v6074 = vsub.f32 %v5974, %v6064
      %v6075 = vsub.f32 %v5975, %v6065
      %v6076 = vmul.f32 %v6066, %v6066
      %v6077 = vmul.f32 %v6067, %v6067
      %v6078 = vmul.f32 %v6068, %v6068
      %v6079 = vmul.f32 %v6069, %v6069
      %v6080 = vmul.f32 %v6070, %v6070
      %v6081 = vmul.f32 %v6071, %v6071
      %v6082 = vmul.f32 %v6072, %v6072
      %v6083 = vmul.f32 %v6073, %v6073
      %v6084 = vmul.f32 %v6074, %v6074
      %v6085 = vmul.f32 %v6075, %v6075
      %v6086 = vsel %vm564, %v6076, 0.0
      %6087 = vadd.xlane.f32.xlu0 %v6086
      %v6088 = vpop.xlane.xlu0 %6087
      %v6089 = vsel %vm564, %v6077, 0.0
      %6090 = vadd.xlane.f32.xlu0 %v6089
      %v6091 = vpop.xlane.xlu0 %6090
      %v6092 = vsel %vm564, %v6078, 0.0
      %6093 = vadd.xlane.f32.xlu0 %v6092
      %v6094 = vpop.xlane.xlu0 %6093
      %v6095 = vsel %vm564, %v6079, 0.0
      %6096 = vadd.xlane.f32.xlu0 %v6095
      %v6097 = vpop.xlane.xlu0 %6096
      %v6098 = vsel %vm564, %v6080, 0.0
      %6099 = vadd.xlane.f32.xlu0 %v6098
      %v6100 = vpop.xlane.xlu0 %6099
      %v6101 = vsel %vm564, %v6081, 0.0
      %6102 = vadd.xlane.f32.xlu0 %v6101
      %v6103 = vpop.xlane.xlu0 %6102
      %v6104 = vsel %vm564, %v6082, 0.0
      %6105 = vadd.xlane.f32.xlu0 %v6104
      %v6106 = vpop.xlane.xlu0 %6105
      %v6107 = vsel %vm564, %v6083, 0.0
      %6108 = vadd.xlane.f32.xlu0 %v6107
      %v6109 = vpop.xlane.xlu0 %6108
      %v6110 = vsel %vm564, %v6084, 0.0
      %6111 = vadd.xlane.f32.xlu0 %v6110
      %v6112 = vpop.xlane.xlu0 %6111
      %v6113 = vsel %vm564, %v6085, 0.0
      %6114 = vadd.xlane.f32.xlu0 %v6113
      %v6115 = vpop.xlane.xlu0 %6114
      %v6116 = vmul.f32 %v6088, %v577
      %v6117 = vmul.f32 %v6091, %v577
      %v6118 = vmul.f32 %v6094, %v577
      %v6119 = vmul.f32 %v6097, %v577
      %v6120 = vmul.f32 %v6100, %v577
      %v6121 = vmul.f32 %v6103, %v577
      %v6122 = vmul.f32 %v6106, %v577
      %v6123 = vmul.f32 %v6109, %v577
      %v6124 = vmul.f32 %v6112, %v577
      %v6125 = vmul.f32 %v6115, %v577
      %v6126 = vadd.f32 %v6116, 1e-05
      %v6127 = vadd.f32 %v6117, 1e-05
      %v6128 = vadd.f32 %v6118, 1e-05
      %v6129 = vadd.f32 %v6119, 1e-05
      %v6130 = vadd.f32 %v6120, 1e-05
      %v6131 = vadd.f32 %v6121, 1e-05
      %v6132 = vadd.f32 %v6122, 1e-05
      %v6133 = vadd.f32 %v6123, 1e-05
      %v6134 = vadd.f32 %v6124, 1e-05
      %v6135 = vadd.f32 %v6125, 1e-05
      %v6136 = vrsqrt.pop %v6126
      %v6137 = vrsqrt.pop %v6127
      %v6138 = vrsqrt.pop %v6128
      %v6139 = vrsqrt.pop %v6129
      %v6140 = vrsqrt.pop %v6130
      %v6141 = vrsqrt.pop %v6131
      %v6142 = vrsqrt.pop %v6132
      %v6143 = vrsqrt.pop %v6133
      %v6144 = vrsqrt.pop %v6134
      %v6145 = vrsqrt.pop %v6135
      %v6146 = vmul.f32 %v6066, %v6136
      %v6147 = vmul.f32 %v6067, %v6137
      %v6148 = vmul.f32 %v6068, %v6138
      %v6149 = vmul.f32 %v6069, %v6139
      %v6150 = vmul.f32 %v6070, %v6140
      %v6151 = vmul.f32 %v6071, %v6141
      %v6152 = vmul.f32 %v6072, %v6142
      %v6153 = vmul.f32 %v6073, %v6143
      %v6154 = vmul.f32 %v6074, %v6144
      %v6155 = vmul.f32 %v6075, %v6145
      %v6156 = vlaneseq
      %v6157 = vshrl.u32 %v6156, 7
      %v6158 = vsub.s32 0, %v6157
      %v6159 = vrot.slane %v5977, %v6158
      %v6160 = vmul.f32 %v6146, %v6159
      %v6161 = vmul.f32 %v6147, %v6159
      %v6162 = vmul.f32 %v6148, %v6159
      %v6163 = vmul.f32 %v6149, %v6159
      %v6164 = vmul.f32 %v6150, %v6159
      %v6165 = vmul.f32 %v6151, %v6159
      %v6166 = vmul.f32 %v6152, %v6159
      %v6167 = vmul.f32 %v6153, %v6159
      %v6168 = vmul.f32 %v6154, %v6159
      %v6169 = vmul.f32 %v6155, %v6159
      %v6170 = vlaneseq
      %v6171 = vshrl.u32 %v6170, 7
      %v6172 = vsub.s32 0, %v6171
      %v6173 = vrot.slane %v5978, %v6172
      %v6174 = vadd.f32 %v6160, %v6173
      %v6175 = vadd.f32 %v6161, %v6173
      %v6176 = vadd.f32 %v6162, %v6173
      %v6177 = vadd.f32 %v6163, %v6173
      %v6178 = vadd.f32 %v6164, %v6173
      %v6179 = vadd.f32 %v6165, %v6173
      %v6180 = vadd.f32 %v6166, %v6173
      %v6181 = vadd.f32 %v6167, %v6173
      %v6182 = vadd.f32 %v6168, %v6173
      %v6183 = vadd.f32 %v6169, %v6173
      %v6184 = vpack.c.bf16 %v6175, %v6174
      %v6185 = vpack.c.bf16 %v6177, %v6176
      %v6186 = vpack.c.bf16 %v6179, %v6178
      %v6187 = vpack.c.bf16 %v6181, %v6180
      %v6188 = vpack.c.bf16 %v6183, %v6182
      %v6190 = vsel %vm564, %v6184, 0
      %v6193 = vsel %vm564, %v6185, 0
      %v6196 = vsel %vm564, %v6186, 0
      %v6199 = vsel %vm564, %v6187, 0
      %v6202 = vsel %vm564, %v6188, 0
      %6204 = vmatprep.subr.bf16.mxu0 0
      %6205 = vmatpush1.bf16.msra.mxu0 %v5983
      %6206 = vmatprep.subr.bf16.mxu0 0
      %6207 = vmatpush1.bf16.msra.mxu0 %v5984
      %6208 = vmatprep.subr.bf16.mxu0 0
      %6209 = vmatpush1.bf16.msra.mxu0 0
      %6210 = vmatprep.subr.bf16.mxu0 0
      %6211 = vmatpush1.bf16.msra.mxu0 0
      %6212 = vmatprep.subr.bf16.mxu0 0
      %6213 = vmatpush1.bf16.msra.mxu0 0
      %6214 = vmatprep.subr.bf16.mxu0 0
      %6215 = vmatpush1.bf16.msra.mxu0 0
      %6216 = vmatprep.subr.bf16.mxu0 0
      %6217 = vmatpush1.bf16.msra.mxu0 0
      %6218 = vmatprep.subr.bf16.mxu0 0
      %6219 = vmatpush1.bf16.msra.mxu0 0
      %6220 = vmatprep.subr.bf16.mxu0 0
      %6221 = vmatpush1.bf16.msra.mxu0 0
      %6222 = vmatprep.subr.bf16.mxu0 0
      %6223 = vmatpush1.bf16.msra.mxu0 0
      %6224 = vmatprep.subr.bf16.mxu0 0
      %6225 = vmatpush1.bf16.msra.mxu0 0
      %6226 = vmatprep.subr.bf16.mxu0 0
      %6227 = vmatpush1.bf16.msra.mxu0 0
      %6228 = vmatprep.subr.bf16.mxu0 0
      %6229 = vmatpush1.bf16.msra.mxu0 0
      %6230 = vmatprep.subr.bf16.mxu0 0
      %6231 = vmatpush1.bf16.msra.mxu0 0
      %6232 = vmatprep.subr.bf16.mxu0 0
      %6233 = vmatpush1.bf16.msra.mxu0 0
      %6234 = vmatprep.subr.bf16.mxu0 0
      %6235 = vmatpush1.bf16.msra.mxu0 0
      %6236 = vmatprep.mubr.bf16.mxu0 0
      %6237 = vmatmul.mubr.bf16.gmra.mrb[0].mxu0 %v6190
      %v6238 = vpop.f32.mrb[0].mxu0
      %v6239 = vadd.f32 0.0, %v6238
      %v6240 = vpop.f32.mrb[0].mxu0
      %v6241 = vpop.f32.mrb[0].mxu0
      %v6242 = vadd.f32 0.0, %v6241
      %v6243 = vpop.f32.mrb[0].mxu0
      %6244 = vmatprep.mubr.bf16.mxu0 0
      %6245 = vmatmul.mubr.bf16.gmra.mrb[0].mxu0 %v6193
      %v6246 = vpop.f32.mrb[0].mxu0
      %v6247 = vadd.f32 0.0, %v6246
      %v6248 = vpop.f32.mrb[0].mxu0
      %v6249 = vpop.f32.mrb[0].mxu0
      %v6250 = vadd.f32 0.0, %v6249
      %v6251 = vpop.f32.mrb[0].mxu0
      %6252 = vmatprep.mubr.bf16.mxu0 0
      %6253 = vmatmul.mubr.bf16.gmra.mrb[0].mxu0 %v6196
      %v6254 = vpop.f32.mrb[0].mxu0
      %v6255 = vadd.f32 0.0, %v6254
      %v6256 = vpop.f32.mrb[0].mxu0
      %v6257 = vpop.f32.mrb[0].mxu0
      %v6258 = vadd.f32 0.0, %v6257
      %v6259 = vpop.f32.mrb[0].mxu0
      %6260 = vmatprep.mubr.bf16.mxu0 0
      %6261 = vmatmul.mubr.bf16.gmra.mrb[0].mxu0 %v6199
      %v6262 = vpop.f32.mrb[0].mxu0
      %v6263 = vadd.f32 0.0, %v6262
      %v6264 = vpop.f32.mrb[0].mxu0
      %v6265 = vpop.f32.mrb[0].mxu0
      %v6266 = vadd.f32 0.0, %v6265
      %v6267 = vpop.f32.mrb[0].mxu0
      %6268 = vmatprep.mubr.bf16.mxu0 0
      %6269 = vmatmul.mubr.bf16.gmra.mrb[0].mxu0 %v6202
      %v6270 = vpop.f32.mrb[0].mxu0
      %v6271 = vadd.f32 0.0, %v6270
      %v6272 = vpop.f32.mrb[0].mxu0
      %v6273 = vpop.f32.mrb[0].mxu0
      %v6274 = vadd.f32 0.0, %v6273
      %v6275 = vpop.f32.mrb[0].mxu0
      %6276 = vdwg.mxu0
      %v6277 = vmul.f32 %v6239, 0.35355338
      %v6278 = vmul.f32 %v6242, 0.35355338
      %v6279 = vmul.f32 %v6247, 0.35355338
      %v6280 = vmul.f32 %v6250, 0.35355338
      %v6281 = vmul.f32 %v6255, 0.35355338
      %v6282 = vmul.f32 %v6258, 0.35355338
      %v6283 = vmul.f32 %v6263, 0.35355338
      %v6284 = vmul.f32 %v6266, 0.35355338
      %v6285 = vmul.f32 %v6271, 0.35355338
      %v6286 = vmul.f32 %v6274, 0.35355338
      %v6287 = vpack.c.bf16 %v6278, %v6277
      %v6288 = vpack.c.bf16 %v6280, %v6279
      %v6289 = vpack.c.bf16 %v6282, %v6281
      %v6290 = vpack.c.bf16 %v6284, %v6283
      %v6291 = vpack.c.bf16 %v6286, %v6285
      %v6292 = vpack.c.bf16 %v6242, %v6239
      %v6293 = vpack.c.bf16 %v6250, %v6247
      %v6294 = vpack.c.bf16 %v6258, %v6255
      %v6295 = vpack.c.bf16 %v6266, %v6263
      %v6296 = vpack.c.bf16 %v6274, %v6271
      %6302 = vrot.lane.b32.xlu0 %v6292, 96
      %v6303 = vpop.permute.xlu0 %6302
      %6304 = vrot.lane.b32.xlu0 %v6293, 96
      %v6305 = vpop.permute.xlu0 %6304
      %6306 = vrot.lane.b32.xlu0 %v6294, 96
      %v6307 = vpop.permute.xlu0 %6306
      %6308 = vrot.lane.b32.xlu0 %v6295, 96
      %v6309 = vpop.permute.xlu0 %6308
      %6310 = vrot.lane.b32.xlu0 %v6296, 96
      %v6311 = vpop.permute.xlu0 %6310
      %v6313 = vsel %vm705, %v6287, 0
      %v6316 = vsel %vm705, %v6288, 0
      %v6319 = vsel %vm705, %v6289, 0
      %v6322 = vsel %vm705, %v6290, 0
      %v6325 = vsel %vm705, %v6291, 0
      %v6328 = vsel %vm705, %v6303, 0
      %v6331 = vsel %vm705, %v6305, 0
      %v6334 = vsel %vm705, %v6307, 0
      %v6337 = vsel %vm705, %v6309, 0
      %v6340 = vsel %vm705, %v6311, 0
      %6342 = vmatprep.subr.bf16.mxu0 0
      %6343 = vmatpush1.bf16.xpose.msra.mxu0 %v6328
      %6344 = vmatprep.subr.bf16.mxu0 0
      %6345 = vmatpush1.bf16.xpose.msra.mxu0 %v6331
      %6346 = vmatprep.subr.bf16.mxu0 0
      %6347 = vmatpush1.bf16.xpose.msra.mxu0 %v6334
      %6348 = vmatprep.subr.bf16.mxu0 0
      %6349 = vmatpush1.bf16.xpose.msra.mxu0 %v6337
      %6350 = vmatprep.subr.bf16.mxu0 0
      %6351 = vmatpush1.bf16.xpose.msra.mxu0 %v6340
      %6352 = vmatprep.subr.bf16.mxu0 0
      %6353 = vmatpush1.bf16.xpose.msra.mxu0 0
      %6354 = vmatprep.subr.bf16.mxu0 0
      %6355 = vmatpush1.bf16.xpose.msra.mxu0 0
      %6356 = vmatprep.subr.bf16.mxu0 0
      %6357 = vmatpush1.bf16.xpose.msra.mxu0 0
      %6358 = vmatprep.subr.bf16.mxu0 0
      %6359 = vmatpush1.bf16.xpose.msra.mxu0 0
      %6360 = vmatprep.subr.bf16.mxu0 0
      %6361 = vmatpush1.bf16.xpose.msra.mxu0 0
      %6362 = vmatprep.subr.bf16.mxu0 0
      %6363 = vmatpush1.bf16.xpose.msra.mxu0 0
      %6364 = vmatprep.subr.bf16.mxu0 0
      %6365 = vmatpush1.bf16.xpose.msra.mxu0 0
      %6366 = vmatprep.subr.bf16.mxu0 0
      %6367 = vmatpush1.bf16.xpose.msra.mxu0 0
      %6368 = vmatprep.subr.bf16.mxu0 0
      %6369 = vmatpush1.bf16.xpose.msra.mxu0 0
      %6370 = vmatprep.subr.bf16.mxu0 0
      %6371 = vmatpush1.bf16.xpose.msra.mxu0 0
      %6372 = vmatprep.subr.bf16.mxu0 0
      %6373 = vmatpush1.bf16.xpose.msra.mxu0 0
      %6374 = vmatprep.mubr.bf16.mxu0 0
      %6375 = vmatmul.mubr.bf16.gmra.mrb[0].mxu0 %v6313
      %v6376 = vpop.f32.mrb[0].mxu0
      %v6377 = vadd.f32 %v3416, %v6376
      %v6378 = vpop.f32.mrb[0].mxu0
      %v6379 = vpop.f32.mrb[0].mxu0
      %v6380 = vadd.f32 %v3416, %v6379
      %v6381 = vpop.f32.mrb[0].mxu0
      %6382 = vmatprep.mubr.bf16.mxu0 0
      %6383 = vmatmul.mubr.bf16.gmra.mrb[0].mxu0 %v6316
      %v6384 = vpop.f32.mrb[0].mxu0
      %v6385 = vadd.f32 %v3416, %v6384
      %v6386 = vpop.f32.mrb[0].mxu0
      %v6387 = vpop.f32.mrb[0].mxu0
      %v6388 = vadd.f32 %v3416, %v6387
      %v6389 = vpop.f32.mrb[0].mxu0
      %6390 = vmatprep.mubr.bf16.mxu0 0
      %6391 = vmatmul.mubr.bf16.gmra.mrb[0].mxu0 %v6319
      %v6392 = vpop.f32.mrb[0].mxu0
      %v6393 = vadd.f32 %v3416, %v6392
      %v6394 = vpop.f32.mrb[0].mxu0
      %v6395 = vpop.f32.mrb[0].mxu0
      %v6396 = vadd.f32 %v3416, %v6395
      %v6397 = vpop.f32.mrb[0].mxu0
      %6398 = vmatprep.mubr.bf16.mxu0 0
      %6399 = vmatmul.mubr.bf16.gmra.mrb[0].mxu0 %v6322
      %v6400 = vpop.f32.mrb[0].mxu0
      %v6401 = vadd.f32 %v3416, %v6400
      %v6402 = vpop.f32.mrb[0].mxu0
      %v6403 = vpop.f32.mrb[0].mxu0
      %v6404 = vadd.f32 %v3416, %v6403
      %v6405 = vpop.f32.mrb[0].mxu0
      %6406 = vmatprep.mubr.bf16.mxu0 0
      %6407 = vmatmul.mubr.bf16.gmra.mrb[0].mxu0 %v6325
      %v6408 = vpop.f32.mrb[0].mxu0
      %v6409 = vadd.f32 %v3416, %v6408
      %v6410 = vpop.f32.mrb[0].mxu0
      %v6411 = vpop.f32.mrb[0].mxu0
      %v6412 = vadd.f32 %v3416, %v6411
      %v6413 = vpop.f32.mrb[0].mxu0
      %6414 = vdwg.mxu0
      %v6415 = vsel %vm3855, %v6377, -inf
      %6416 = vmax.xlane.f32.xlu0 %v6415
      %v6417 = vpop.xlane.xlu0 %6416
      %v6418 = vsel %vm3855, %v6380, -inf
      %6419 = vmax.xlane.f32.xlu0 %v6418
      %v6420 = vpop.xlane.xlu0 %6419
      %v6421 = vsel %vm3855, %v6385, -inf
      %6422 = vmax.xlane.f32.xlu0 %v6421
      %v6423 = vpop.xlane.xlu0 %6422
      %v6424 = vsel %vm3855, %v6388, -inf
      %6425 = vmax.xlane.f32.xlu0 %v6424
      %v6426 = vpop.xlane.xlu0 %6425
      %v6427 = vsel %vm3855, %v6393, -inf
      %6428 = vmax.xlane.f32.xlu0 %v6427
      %v6429 = vpop.xlane.xlu0 %6428
      %v6430 = vsel %vm3855, %v6396, -inf
      %6431 = vmax.xlane.f32.xlu0 %v6430
      %v6432 = vpop.xlane.xlu0 %6431
      %v6433 = vsel %vm3855, %v6401, -inf
      %6434 = vmax.xlane.f32.xlu0 %v6433
      %v6435 = vpop.xlane.xlu0 %6434
      %v6436 = vsel %vm3855, %v6404, -inf
      %6437 = vmax.xlane.f32.xlu0 %v6436
      %v6438 = vpop.xlane.xlu0 %6437
      %v6439 = vsel %vm3855, %v6409, -inf
      %6440 = vmax.xlane.f32.xlu0 %v6439
      %v6441 = vpop.xlane.xlu0 %6440
      %v6442 = vsel %vm3855, %v6412, -inf
      %6443 = vmax.xlane.f32.xlu0 %v6442
      %v6444 = vpop.xlane.xlu0 %6443
      %v6445 = vsub.f32 %v6377, %v6417
      %v6446 = vsub.f32 %v6380, %v6420
      %v6447 = vsub.f32 %v6385, %v6423
      %v6448 = vsub.f32 %v6388, %v6426
      %v6449 = vsub.f32 %v6393, %v6429
      %v6450 = vsub.f32 %v6396, %v6432
      %v6451 = vsub.f32 %v6401, %v6435
      %v6452 = vsub.f32 %v6404, %v6438
      %v6453 = vsub.f32 %v6409, %v6441
      %v6454 = vsub.f32 %v6412, %v6444
      %v6455 = vmul.f32 %v6445, 1.442695
      %v6456 = vpow.pop %v6455
      %v6457 = vmul.f32 %v6446, 1.442695
      %v6458 = vpow.pop %v6457
      %v6459 = vmul.f32 %v6447, 1.442695
      %v6460 = vpow.pop %v6459
      %v6461 = vmul.f32 %v6448, 1.442695
      %v6462 = vpow.pop %v6461
      %v6463 = vmul.f32 %v6449, 1.442695
      %v6464 = vpow.pop %v6463
      %v6465 = vmul.f32 %v6450, 1.442695
      %v6466 = vpow.pop %v6465
      %v6467 = vmul.f32 %v6451, 1.442695
      %v6468 = vpow.pop %v6467
      %v6469 = vmul.f32 %v6452, 1.442695
      %v6470 = vpow.pop %v6469
      %v6471 = vmul.f32 %v6453, 1.442695
      %v6472 = vpow.pop %v6471
      %v6473 = vmul.f32 %v6454, 1.442695
      %v6474 = vpow.pop %v6473
      %v6475 = vsel %vm3855, %v6456, 0.0
      %6476 = vadd.xlane.f32.xlu0 %v6475
      %v6477 = vpop.xlane.xlu0 %6476
      %v6478 = vsel %vm3855, %v6458, 0.0
      %6479 = vadd.xlane.f32.xlu0 %v6478
      %v6480 = vpop.xlane.xlu0 %6479
      %v6481 = vsel %vm3855, %v6460, 0.0
      %6482 = vadd.xlane.f32.xlu0 %v6481
      %v6483 = vpop.xlane.xlu0 %6482
      %v6484 = vsel %vm3855, %v6462, 0.0
      %6485 = vadd.xlane.f32.xlu0 %v6484
      %v6486 = vpop.xlane.xlu0 %6485
      %v6487 = vsel %vm3855, %v6464, 0.0
      %6488 = vadd.xlane.f32.xlu0 %v6487
      %v6489 = vpop.xlane.xlu0 %6488
      %v6490 = vsel %vm3855, %v6466, 0.0
      %6491 = vadd.xlane.f32.xlu0 %v6490
      %v6492 = vpop.xlane.xlu0 %6491
      %v6493 = vsel %vm3855, %v6468, 0.0
      %6494 = vadd.xlane.f32.xlu0 %v6493
      %v6495 = vpop.xlane.xlu0 %6494
      %v6496 = vsel %vm3855, %v6470, 0.0
      %6497 = vadd.xlane.f32.xlu0 %v6496
      %v6498 = vpop.xlane.xlu0 %6497
      %v6499 = vsel %vm3855, %v6472, 0.0
      %6500 = vadd.xlane.f32.xlu0 %v6499
      %v6501 = vpop.xlane.xlu0 %6500
      %v6502 = vsel %vm3855, %v6474, 0.0
      %6503 = vadd.xlane.f32.xlu0 %v6502
      %v6504 = vpop.xlane.xlu0 %6503
      %v6505 = vrcp.pop %v6477
      %v6506 = vmul.f32 %v6456, %v6505
      %v6507 = vrcp.pop %v6480
      %v6508 = vmul.f32 %v6458, %v6507
      %v6509 = vrcp.pop %v6483
      %v6510 = vmul.f32 %v6460, %v6509
      %v6511 = vrcp.pop %v6486
      %v6512 = vmul.f32 %v6462, %v6511
      %v6513 = vrcp.pop %v6489
      %v6514 = vmul.f32 %v6464, %v6513
      %v6515 = vrcp.pop %v6492
      %v6516 = vmul.f32 %v6466, %v6515
      %v6517 = vrcp.pop %v6495
      %v6518 = vmul.f32 %v6468, %v6517
      %v6519 = vrcp.pop %v6498
      %v6520 = vmul.f32 %v6470, %v6519
      %v6521 = vrcp.pop %v6501
      %v6522 = vmul.f32 %v6472, %v6521
      %v6523 = vrcp.pop %v6504
      %v6524 = vmul.f32 %v6474, %v6523
      %v6525 = vpack.c.bf16 %v6508, %v6506
      %v6526 = vpack.c.bf16 %v6512, %v6510
      %v6527 = vpack.c.bf16 %v6516, %v6514
      %v6528 = vpack.c.bf16 %v6520, %v6518
      %v6529 = vpack.c.bf16 %v6524, %v6522
      %6530 = vrot.lane.b32.xlu0 %v6292, 64
      %v6531 = vpop.permute.xlu0 %6530
      %6532 = vrot.lane.b32.xlu0 %v6293, 64
      %v6533 = vpop.permute.xlu0 %6532
      %6534 = vrot.lane.b32.xlu0 %v6294, 64
      %v6535 = vpop.permute.xlu0 %6534
      %6536 = vrot.lane.b32.xlu0 %v6295, 64
      %v6537 = vpop.permute.xlu0 %6536
      %6538 = vrot.lane.b32.xlu0 %v6296, 64
      %v6539 = vpop.permute.xlu0 %6538
      %v6546 = vsel %vm3855, %v6525, 0
      %v6549 = vsel %vm3855, %v6526, 0
      %v6552 = vsel %vm3855, %v6527, 0
      %v6555 = vsel %vm3855, %v6528, 0
      %v6558 = vsel %vm3855, %v6529, 0
      %6560 = vmatprep.subr.bf16.mxu0 0
      %6561 = vmatpush1.bf16.msra.mxu0 %v6531
      %6562 = vmatprep.subr.bf16.mxu0 0
      %6563 = vmatpush1.bf16.msra.mxu0 %v6533
      %6564 = vmatprep.subr.bf16.mxu0 0
      %6565 = vmatpush1.bf16.msra.mxu0 %v6535
      %6566 = vmatprep.subr.bf16.mxu0 0
      %6567 = vmatpush1.bf16.msra.mxu0 %v6537
      %6568 = vmatprep.subr.bf16.mxu0 0
      %6569 = vmatpush1.bf16.msra.mxu0 %v6539
      %6570 = vmatprep.subr.bf16.mxu0 0
      %6571 = vmatpush1.bf16.msra.mxu0 0
      %6572 = vmatprep.subr.bf16.mxu0 0
      %6573 = vmatpush1.bf16.msra.mxu0 0
      %6574 = vmatprep.subr.bf16.mxu0 0
      %6575 = vmatpush1.bf16.msra.mxu0 0
      %6576 = vmatprep.subr.bf16.mxu0 0
      %6577 = vmatpush1.bf16.msra.mxu0 0
      %6578 = vmatprep.subr.bf16.mxu0 0
      %6579 = vmatpush1.bf16.msra.mxu0 0
      %6580 = vmatprep.subr.bf16.mxu0 0
      %6581 = vmatpush1.bf16.msra.mxu0 0
      %6582 = vmatprep.subr.bf16.mxu0 0
      %6583 = vmatpush1.bf16.msra.mxu0 0
      %6584 = vmatprep.subr.bf16.mxu0 0
      %6585 = vmatpush1.bf16.msra.mxu0 0
      %6586 = vmatprep.subr.bf16.mxu0 0
      %6587 = vmatpush1.bf16.msra.mxu0 0
      %6588 = vmatprep.subr.bf16.mxu0 0
      %6589 = vmatpush1.bf16.msra.mxu0 0
      %6590 = vmatprep.subr.bf16.mxu0 0
      %6591 = vmatpush1.bf16.msra.mxu0 0
      %6592 = vmatprep.mubr.bf16.mxu0 0
      %6593 = vmatmul.mubr.bf16.gmra.mrb[0].mxu0 %v6546
      %v6594 = vpop.f32.mrb[0].mxu0
      %v6595 = vadd.f32 0.0, %v6594
      %v6596 = vpop.f32.mrb[0].mxu0
      %v6597 = vpop.f32.mrb[0].mxu0
      %v6598 = vadd.f32 0.0, %v6597
      %v6599 = vpop.f32.mrb[0].mxu0
      %6600 = vmatprep.mubr.bf16.mxu0 0
      %6601 = vmatmul.mubr.bf16.gmra.mrb[0].mxu0 %v6549
      %v6602 = vpop.f32.mrb[0].mxu0
      %v6603 = vadd.f32 0.0, %v6602
      %v6604 = vpop.f32.mrb[0].mxu0
      %v6605 = vpop.f32.mrb[0].mxu0
      %v6606 = vadd.f32 0.0, %v6605
      %v6607 = vpop.f32.mrb[0].mxu0
      %6608 = vmatprep.mubr.bf16.mxu0 0
      %6609 = vmatmul.mubr.bf16.gmra.mrb[0].mxu0 %v6552
      %v6610 = vpop.f32.mrb[0].mxu0
      %v6611 = vadd.f32 0.0, %v6610
      %v6612 = vpop.f32.mrb[0].mxu0
      %v6613 = vpop.f32.mrb[0].mxu0
      %v6614 = vadd.f32 0.0, %v6613
      %v6615 = vpop.f32.mrb[0].mxu0
      %6616 = vmatprep.mubr.bf16.mxu0 0
      %6617 = vmatmul.mubr.bf16.gmra.mrb[0].mxu0 %v6555
      %v6618 = vpop.f32.mrb[0].mxu0
      %v6619 = vadd.f32 0.0, %v6618
      %v6620 = vpop.f32.mrb[0].mxu0
      %v6621 = vpop.f32.mrb[0].mxu0
      %v6622 = vadd.f32 0.0, %v6621
      %v6623 = vpop.f32.mrb[0].mxu0
      %6624 = vmatprep.mubr.bf16.mxu0 0
      %6625 = vmatmul.mubr.bf16.gmra.mrb[0].mxu0 %v6558
      %v6626 = vpop.f32.mrb[0].mxu0
      %v6627 = vadd.f32 0.0, %v6626
      %v6628 = vpop.f32.mrb[0].mxu0
      %v6629 = vpop.f32.mrb[0].mxu0
      %v6630 = vadd.f32 0.0, %v6629
      %v6631 = vpop.f32.mrb[0].mxu0
      %6632 = vdwg.mxu0
      %6638 = vrot.lane.b32.xlu0 %v6287, 120
      %v6639 = vpop.permute.xlu0 %6638
      %6640 = vrot.lane.b32.xlu0 %v6288, 120
      %v6641 = vpop.permute.xlu0 %6640
      %6642 = vrot.lane.b32.xlu0 %v6289, 120
      %v6643 = vpop.permute.xlu0 %6642
      %6644 = vrot.lane.b32.xlu0 %v6290, 120
      %v6645 = vpop.permute.xlu0 %6644
      %6646 = vrot.lane.b32.xlu0 %v6291, 120
      %v6647 = vpop.permute.xlu0 %6646
      %6648 = vrot.lane.b32.xlu0 %v6292, 88
      %v6649 = vpop.permute.xlu0 %6648
      %6650 = vrot.lane.b32.xlu0 %v6293, 88
      %v6651 = vpop.permute.xlu0 %6650
      %6652 = vrot.lane.b32.xlu0 %v6294, 88
      %v6653 = vpop.permute.xlu0 %6652
      %6654 = vrot.lane.b32.xlu0 %v6295, 88
      %v6655 = vpop.permute.xlu0 %6654
      %6656 = vrot.lane.b32.xlu0 %v6296, 88
      %v6657 = vpop.permute.xlu0 %6656
      %v6659 = vsel %vm705, %v6639, 0
      %v6662 = vsel %vm705, %v6641, 0
      %v6665 = vsel %vm705, %v6643, 0
      %v6668 = vsel %vm705, %v6645, 0
      %v6671 = vsel %vm705, %v6647, 0
      %v6674 = vsel %vm705, %v6649, 0
      %v6677 = vsel %vm705, %v6651, 0
      %v6680 = vsel %vm705, %v6653, 0
      %v6683 = vsel %vm705, %v6655, 0
      %v6686 = vsel %vm705, %v6657, 0
      %6688 = vmatprep.subr.bf16.mxu0 0
      %6689 = vmatpush1.bf16.xpose.msra.mxu0 %v6674
      %6690 = vmatprep.subr.bf16.mxu0 0
      %6691 = vmatpush1.bf16.xpose.msra.mxu0 %v6677
      %6692 = vmatprep.subr.bf16.mxu0 0
      %6693 = vmatpush1.bf16.xpose.msra.mxu0 %v6680
      %6694 = vmatprep.subr.bf16.mxu0 0
      %6695 = vmatpush1.bf16.xpose.msra.mxu0 %v6683
      %6696 = vmatprep.subr.bf16.mxu0 0
      %6697 = vmatpush1.bf16.xpose.msra.mxu0 %v6686
      %6698 = vmatprep.subr.bf16.mxu0 0
      %6699 = vmatpush1.bf16.xpose.msra.mxu0 0
      %6700 = vmatprep.subr.bf16.mxu0 0
      %6701 = vmatpush1.bf16.xpose.msra.mxu0 0
      %6702 = vmatprep.subr.bf16.mxu0 0
      %6703 = vmatpush1.bf16.xpose.msra.mxu0 0
      %6704 = vmatprep.subr.bf16.mxu0 0
      %6705 = vmatpush1.bf16.xpose.msra.mxu0 0
      %6706 = vmatprep.subr.bf16.mxu0 0
      %6707 = vmatpush1.bf16.xpose.msra.mxu0 0
      %6708 = vmatprep.subr.bf16.mxu0 0
      %6709 = vmatpush1.bf16.xpose.msra.mxu0 0
      %6710 = vmatprep.subr.bf16.mxu0 0
      %6711 = vmatpush1.bf16.xpose.msra.mxu0 0
      %6712 = vmatprep.subr.bf16.mxu0 0
      %6713 = vmatpush1.bf16.xpose.msra.mxu0 0
      %6714 = vmatprep.subr.bf16.mxu0 0
      %6715 = vmatpush1.bf16.xpose.msra.mxu0 0
      %6716 = vmatprep.subr.bf16.mxu0 0
      %6717 = vmatpush1.bf16.xpose.msra.mxu0 0
      %6718 = vmatprep.subr.bf16.mxu0 0
      %6719 = vmatpush1.bf16.xpose.msra.mxu0 0
      %6720 = vmatprep.mubr.bf16.mxu0 0
      %6721 = vmatmul.mubr.bf16.gmra.mrb[0].mxu0 %v6659
      %v6722 = vpop.f32.mrb[0].mxu0
      %v6723 = vadd.f32 %v3416, %v6722
      %v6724 = vpop.f32.mrb[0].mxu0
      %v6725 = vpop.f32.mrb[0].mxu0
      %v6726 = vadd.f32 %v3416, %v6725
      %v6727 = vpop.f32.mrb[0].mxu0
      %6728 = vmatprep.mubr.bf16.mxu0 0
      %6729 = vmatmul.mubr.bf16.gmra.mrb[0].mxu0 %v6662
      %v6730 = vpop.f32.mrb[0].mxu0
      %v6731 = vadd.f32 %v3416, %v6730
      %v6732 = vpop.f32.mrb[0].mxu0
      %v6733 = vpop.f32.mrb[0].mxu0
      %v6734 = vadd.f32 %v3416, %v6733
      %v6735 = vpop.f32.mrb[0].mxu0
      %6736 = vmatprep.mubr.bf16.mxu0 0
      %6737 = vmatmul.mubr.bf16.gmra.mrb[0].mxu0 %v6665
      %v6738 = vpop.f32.mrb[0].mxu0
      %v6739 = vadd.f32 %v3416, %v6738
      %v6740 = vpop.f32.mrb[0].mxu0
      %v6741 = vpop.f32.mrb[0].mxu0
      %v6742 = vadd.f32 %v3416, %v6741
      %v6743 = vpop.f32.mrb[0].mxu0
      %6744 = vmatprep.mubr.bf16.mxu0 0
      %6745 = vmatmul.mubr.bf16.gmra.mrb[0].mxu0 %v6668
      %v6746 = vpop.f32.mrb[0].mxu0
      %v6747 = vadd.f32 %v3416, %v6746
      %v6748 = vpop.f32.mrb[0].mxu0
      %v6749 = vpop.f32.mrb[0].mxu0
      %v6750 = vadd.f32 %v3416, %v6749
      %v6751 = vpop.f32.mrb[0].mxu0
      %6752 = vmatprep.mubr.bf16.mxu0 0
      %6753 = vmatmul.mubr.bf16.gmra.mrb[0].mxu0 %v6671
      %v6754 = vpop.f32.mrb[0].mxu0
      %v6755 = vadd.f32 %v3416, %v6754
      %v6756 = vpop.f32.mrb[0].mxu0
      %v6757 = vpop.f32.mrb[0].mxu0
      %v6758 = vadd.f32 %v3416, %v6757
      %v6759 = vpop.f32.mrb[0].mxu0
      %6760 = vdwg.mxu0
      %v6761 = vsel %vm3855, %v6723, -inf
      %6762 = vmax.xlane.f32.xlu0 %v6761
      %v6763 = vpop.xlane.xlu0 %6762
      %v6764 = vsel %vm3855, %v6726, -inf
      %6765 = vmax.xlane.f32.xlu0 %v6764
      %v6766 = vpop.xlane.xlu0 %6765
      %v6767 = vsel %vm3855, %v6731, -inf
      %6768 = vmax.xlane.f32.xlu0 %v6767
      %v6769 = vpop.xlane.xlu0 %6768
      %v6770 = vsel %vm3855, %v6734, -inf
      %6771 = vmax.xlane.f32.xlu0 %v6770
      %v6772 = vpop.xlane.xlu0 %6771
      %v6773 = vsel %vm3855, %v6739, -inf
      %6774 = vmax.xlane.f32.xlu0 %v6773
      %v6775 = vpop.xlane.xlu0 %6774
      %v6776 = vsel %vm3855, %v6742, -inf
      %6777 = vmax.xlane.f32.xlu0 %v6776
      %v6778 = vpop.xlane.xlu0 %6777
      %v6779 = vsel %vm3855, %v6747, -inf
      %6780 = vmax.xlane.f32.xlu0 %v6779
      %v6781 = vpop.xlane.xlu0 %6780
      %v6782 = vsel %vm3855, %v6750, -inf
      %6783 = vmax.xlane.f32.xlu0 %v6782
      %v6784 = vpop.xlane.xlu0 %6783
      %v6785 = vsel %vm3855, %v6755, -inf
      %6786 = vmax.xlane.f32.xlu0 %v6785
      %v6787 = vpop.xlane.xlu0 %6786
      %v6788 = vsel %vm3855, %v6758, -inf
      %6789 = vmax.xlane.f32.xlu0 %v6788
      %v6790 = vpop.xlane.xlu0 %6789
      %v6791 = vsub.f32 %v6723, %v6763
      %v6792 = vsub.f32 %v6726, %v6766
      %v6793 = vsub.f32 %v6731, %v6769
      %v6794 = vsub.f32 %v6734, %v6772
      %v6795 = vsub.f32 %v6739, %v6775
      %v6796 = vsub.f32 %v6742, %v6778
      %v6797 = vsub.f32 %v6747, %v6781
      %v6798 = vsub.f32 %v6750, %v6784
      %v6799 = vsub.f32 %v6755, %v6787
      %v6800 = vsub.f32 %v6758, %v6790
      %v6801 = vmul.f32 %v6791, 1.442695
      %v6802 = vpow.pop %v6801
      %v6803 = vmul.f32 %v6792, 1.442695
      %v6804 = vpow.pop %v6803
      %v6805 = vmul.f32 %v6793, 1.442695
      %v6806 = vpow.pop %v6805
      %v6807 = vmul.f32 %v6794, 1.442695
      %v6808 = vpow.pop %v6807
      %v6809 = vmul.f32 %v6795, 1.442695
      %v6810 = vpow.pop %v6809
      %v6811 = vmul.f32 %v6796, 1.442695
      %v6812 = vpow.pop %v6811
      %v6813 = vmul.f32 %v6797, 1.442695
      %v6814 = vpow.pop %v6813
      %v6815 = vmul.f32 %v6798, 1.442695
      %v6816 = vpow.pop %v6815
      %v6817 = vmul.f32 %v6799, 1.442695
      %v6818 = vpow.pop %v6817
      %v6819 = vmul.f32 %v6800, 1.442695
      %v6820 = vpow.pop %v6819
      %v6821 = vsel %vm3855, %v6802, 0.0
      %6822 = vadd.xlane.f32.xlu0 %v6821
      %v6823 = vpop.xlane.xlu0 %6822
      %v6824 = vsel %vm3855, %v6804, 0.0
      %6825 = vadd.xlane.f32.xlu0 %v6824
      %v6826 = vpop.xlane.xlu0 %6825
      %v6827 = vsel %vm3855, %v6806, 0.0
      %6828 = vadd.xlane.f32.xlu0 %v6827
      %v6829 = vpop.xlane.xlu0 %6828
      %v6830 = vsel %vm3855, %v6808, 0.0
      %6831 = vadd.xlane.f32.xlu0 %v6830
      %v6832 = vpop.xlane.xlu0 %6831
      %v6833 = vsel %vm3855, %v6810, 0.0
      %6834 = vadd.xlane.f32.xlu0 %v6833
      %v6835 = vpop.xlane.xlu0 %6834
      %v6836 = vsel %vm3855, %v6812, 0.0
      %6837 = vadd.xlane.f32.xlu0 %v6836
      %v6838 = vpop.xlane.xlu0 %6837
      %v6839 = vsel %vm3855, %v6814, 0.0
      %6840 = vadd.xlane.f32.xlu0 %v6839
      %v6841 = vpop.xlane.xlu0 %6840
      %v6842 = vsel %vm3855, %v6816, 0.0
      %6843 = vadd.xlane.f32.xlu0 %v6842
      %v6844 = vpop.xlane.xlu0 %6843
      %v6845 = vsel %vm3855, %v6818, 0.0
      %6846 = vadd.xlane.f32.xlu0 %v6845
      %v6847 = vpop.xlane.xlu0 %6846
      %v6848 = vsel %vm3855, %v6820, 0.0
      %6849 = vadd.xlane.f32.xlu0 %v6848
      %v6850 = vpop.xlane.xlu0 %6849
      %v6851 = vrcp.pop %v6823
      %v6852 = vmul.f32 %v6802, %v6851
      %v6853 = vrcp.pop %v6826
      %v6854 = vmul.f32 %v6804, %v6853
      %v6855 = vrcp.pop %v6829
      %v6856 = vmul.f32 %v6806, %v6855
      %v6857 = vrcp.pop %v6832
      %v6858 = vmul.f32 %v6808, %v6857
      %v6859 = vrcp.pop %v6835
      %v6860 = vmul.f32 %v6810, %v6859
      %v6861 = vrcp.pop %v6838
      %v6862 = vmul.f32 %v6812, %v6861
      %v6863 = vrcp.pop %v6841
      %v6864 = vmul.f32 %v6814, %v6863
      %v6865 = vrcp.pop %v6844
      %v6866 = vmul.f32 %v6816, %v6865
      %v6867 = vrcp.pop %v6847
      %v6868 = vmul.f32 %v6818, %v6867
      %v6869 = vrcp.pop %v6850
      %v6870 = vmul.f32 %v6820, %v6869
      %v6871 = vpack.c.bf16 %v6854, %v6852
      %v6872 = vpack.c.bf16 %v6858, %v6856
      %v6873 = vpack.c.bf16 %v6862, %v6860
      %v6874 = vpack.c.bf16 %v6866, %v6864
      %v6875 = vpack.c.bf16 %v6870, %v6868
      %6876 = vrot.lane.b32.xlu0 %v6292, 56
      %v6877 = vpop.permute.xlu0 %6876
      %6878 = vrot.lane.b32.xlu0 %v6293, 56
      %v6879 = vpop.permute.xlu0 %6878
      %6880 = vrot.lane.b32.xlu0 %v6294, 56
      %v6881 = vpop.permute.xlu0 %6880
      %6882 = vrot.lane.b32.xlu0 %v6295, 56
      %v6883 = vpop.permute.xlu0 %6882
      %6884 = vrot.lane.b32.xlu0 %v6296, 56
      %v6885 = vpop.permute.xlu0 %6884
      %v6892 = vsel %vm3855, %v6871, 0
      %v6895 = vsel %vm3855, %v6872, 0
      %v6898 = vsel %vm3855, %v6873, 0
      %v6901 = vsel %vm3855, %v6874, 0
      %v6904 = vsel %vm3855, %v6875, 0
      %6906 = vmatprep.subr.bf16.mxu0 0
      %6907 = vmatpush1.bf16.msra.mxu0 %v6877
      %6908 = vmatprep.subr.bf16.mxu0 0
      %6909 = vmatpush1.bf16.msra.mxu0 %v6879
      %6910 = vmatprep.subr.bf16.mxu0 0
      %6911 = vmatpush1.bf16.msra.mxu0 %v6881
      %6912 = vmatprep.subr.bf16.mxu0 0
      %6913 = vmatpush1.bf16.msra.mxu0 %v6883
      %6914 = vmatprep.subr.bf16.mxu0 0
      %6915 = vmatpush1.bf16.msra.mxu0 %v6885
      %6916 = vmatprep.subr.bf16.mxu0 0
      %6917 = vmatpush1.bf16.msra.mxu0 0
      %6918 = vmatprep.subr.bf16.mxu0 0
      %6919 = vmatpush1.bf16.msra.mxu0 0
      %6920 = vmatprep.subr.bf16.mxu0 0
      %6921 = vmatpush1.bf16.msra.mxu0 0
      %6922 = vmatprep.subr.bf16.mxu0 0
      %6923 = vmatpush1.bf16.msra.mxu0 0
      %6924 = vmatprep.subr.bf16.mxu0 0
      %6925 = vmatpush1.bf16.msra.mxu0 0
      %6926 = vmatprep.subr.bf16.mxu0 0
      %6927 = vmatpush1.bf16.msra.mxu0 0
      %6928 = vmatprep.subr.bf16.mxu0 0
      %6929 = vmatpush1.bf16.msra.mxu0 0
      %6930 = vmatprep.subr.bf16.mxu0 0
      %6931 = vmatpush1.bf16.msra.mxu0 0
      %6932 = vmatprep.subr.bf16.mxu0 0
      %6933 = vmatpush1.bf16.msra.mxu0 0
      %6934 = vmatprep.subr.bf16.mxu0 0
      %6935 = vmatpush1.bf16.msra.mxu0 0
      %6936 = vmatprep.subr.bf16.mxu0 0
      %6937 = vmatpush1.bf16.msra.mxu0 0
      %6938 = vmatprep.mubr.bf16.mxu0 0
      %6939 = vmatmul.mubr.bf16.gmra.mrb[0].mxu0 %v6892
      %v6940 = vpop.f32.mrb[0].mxu0
      %v6941 = vadd.f32 0.0, %v6940
      %v6942 = vpop.f32.mrb[0].mxu0
      %v6943 = vpop.f32.mrb[0].mxu0
      %v6944 = vadd.f32 0.0, %v6943
      %v6945 = vpop.f32.mrb[0].mxu0
      %6946 = vmatprep.mubr.bf16.mxu0 0
      %6947 = vmatmul.mubr.bf16.gmra.mrb[0].mxu0 %v6895
      %v6948 = vpop.f32.mrb[0].mxu0
      %v6949 = vadd.f32 0.0, %v6948
      %v6950 = vpop.f32.mrb[0].mxu0
      %v6951 = vpop.f32.mrb[0].mxu0
      %v6952 = vadd.f32 0.0, %v6951
      %v6953 = vpop.f32.mrb[0].mxu0
      %6954 = vmatprep.mubr.bf16.mxu0 0
      %6955 = vmatmul.mubr.bf16.gmra.mrb[0].mxu0 %v6898
      %v6956 = vpop.f32.mrb[0].mxu0
      %v6957 = vadd.f32 0.0, %v6956
      %v6958 = vpop.f32.mrb[0].mxu0
      %v6959 = vpop.f32.mrb[0].mxu0
      %v6960 = vadd.f32 0.0, %v6959
      %v6961 = vpop.f32.mrb[0].mxu0
      %6962 = vmatprep.mubr.bf16.mxu0 0
      %6963 = vmatmul.mubr.bf16.gmra.mrb[0].mxu0 %v6901
      %v6964 = vpop.f32.mrb[0].mxu0
      %v6965 = vadd.f32 0.0, %v6964
      %v6966 = vpop.f32.mrb[0].mxu0
      %v6967 = vpop.f32.mrb[0].mxu0
      %v6968 = vadd.f32 0.0, %v6967
      %v6969 = vpop.f32.mrb[0].mxu0
      %6970 = vmatprep.mubr.bf16.mxu0 0
      %6971 = vmatmul.mubr.bf16.gmra.mrb[0].mxu0 %v6904
      %v6972 = vpop.f32.mrb[0].mxu0
      %v6973 = vadd.f32 0.0, %v6972
      %v6974 = vpop.f32.mrb[0].mxu0
      %v6975 = vpop.f32.mrb[0].mxu0
      %v6976 = vadd.f32 0.0, %v6975
      %v6977 = vpop.f32.mrb[0].mxu0
      %6978 = vdwg.mxu0
      %6979 = vrot.lane.b32.xlu0 %v6287, 112
      %v6980 = vpop.permute.xlu0 %6979
      %6981 = vrot.lane.b32.xlu0 %v6288, 112
      %v6982 = vpop.permute.xlu0 %6981
      %6983 = vrot.lane.b32.xlu0 %v6289, 112
      %v6984 = vpop.permute.xlu0 %6983
      %6985 = vrot.lane.b32.xlu0 %v6290, 112
      %v6986 = vpop.permute.xlu0 %6985
      %6987 = vrot.lane.b32.xlu0 %v6291, 112
      %v6988 = vpop.permute.xlu0 %6987
      %6989 = vrot.lane.b32.xlu0 %v6292, 80
      %v6990 = vpop.permute.xlu0 %6989
      %6991 = vrot.lane.b32.xlu0 %v6293, 80
      %v6992 = vpop.permute.xlu0 %6991
      %6993 = vrot.lane.b32.xlu0 %v6294, 80
      %v6994 = vpop.permute.xlu0 %6993
      %6995 = vrot.lane.b32.xlu0 %v6295, 80
      %v6996 = vpop.permute.xlu0 %6995
      %6997 = vrot.lane.b32.xlu0 %v6296, 80
      %v6998 = vpop.permute.xlu0 %6997
      %v7000 = vsel %vm705, %v6980, 0
      %v7003 = vsel %vm705, %v6982, 0
      %v7006 = vsel %vm705, %v6984, 0
      %v7009 = vsel %vm705, %v6986, 0
      %v7012 = vsel %vm705, %v6988, 0
      %v7015 = vsel %vm705, %v6990, 0
      %v7018 = vsel %vm705, %v6992, 0
      %v7021 = vsel %vm705, %v6994, 0
      %v7024 = vsel %vm705, %v6996, 0
      %v7027 = vsel %vm705, %v6998, 0
      %7029 = vmatprep.subr.bf16.mxu0 0
      %7030 = vmatpush1.bf16.xpose.msra.mxu0 %v7015
      %7031 = vmatprep.subr.bf16.mxu0 0
      %7032 = vmatpush1.bf16.xpose.msra.mxu0 %v7018
      %7033 = vmatprep.subr.bf16.mxu0 0
      %7034 = vmatpush1.bf16.xpose.msra.mxu0 %v7021
      %7035 = vmatprep.subr.bf16.mxu0 0
      %7036 = vmatpush1.bf16.xpose.msra.mxu0 %v7024
      %7037 = vmatprep.subr.bf16.mxu0 0
      %7038 = vmatpush1.bf16.xpose.msra.mxu0 %v7027
      %7039 = vmatprep.subr.bf16.mxu0 0
      %7040 = vmatpush1.bf16.xpose.msra.mxu0 0
      %7041 = vmatprep.subr.bf16.mxu0 0
      %7042 = vmatpush1.bf16.xpose.msra.mxu0 0
      %7043 = vmatprep.subr.bf16.mxu0 0
      %7044 = vmatpush1.bf16.xpose.msra.mxu0 0
      %7045 = vmatprep.subr.bf16.mxu0 0
      %7046 = vmatpush1.bf16.xpose.msra.mxu0 0
      %7047 = vmatprep.subr.bf16.mxu0 0
      %7048 = vmatpush1.bf16.xpose.msra.mxu0 0
      %7049 = vmatprep.subr.bf16.mxu0 0
      %7050 = vmatpush1.bf16.xpose.msra.mxu0 0
      %7051 = vmatprep.subr.bf16.mxu0 0
      %7052 = vmatpush1.bf16.xpose.msra.mxu0 0
      %7053 = vmatprep.subr.bf16.mxu0 0
      %7054 = vmatpush1.bf16.xpose.msra.mxu0 0
      %7055 = vmatprep.subr.bf16.mxu0 0
      %7056 = vmatpush1.bf16.xpose.msra.mxu0 0
      %7057 = vmatprep.subr.bf16.mxu0 0
      %7058 = vmatpush1.bf16.xpose.msra.mxu0 0
      %7059 = vmatprep.subr.bf16.mxu0 0
      %7060 = vmatpush1.bf16.xpose.msra.mxu0 0
      %7061 = vmatprep.mubr.bf16.mxu0 0
      %7062 = vmatmul.mubr.bf16.gmra.mrb[0].mxu0 %v7000
      %v7063 = vpop.f32.mrb[0].mxu0
      %v7064 = vadd.f32 %v3416, %v7063
      %v7065 = vpop.f32.mrb[0].mxu0
      %v7066 = vpop.f32.mrb[0].mxu0
      %v7067 = vadd.f32 %v3416, %v7066
      %v7068 = vpop.f32.mrb[0].mxu0
      %7069 = vmatprep.mubr.bf16.mxu0 0
      %7070 = vmatmul.mubr.bf16.gmra.mrb[0].mxu0 %v7003
      %v7071 = vpop.f32.mrb[0].mxu0
      %v7072 = vadd.f32 %v3416, %v7071
      %v7073 = vpop.f32.mrb[0].mxu0
      %v7074 = vpop.f32.mrb[0].mxu0
      %v7075 = vadd.f32 %v3416, %v7074
      %v7076 = vpop.f32.mrb[0].mxu0
      %7077 = vmatprep.mubr.bf16.mxu0 0
      %7078 = vmatmul.mubr.bf16.gmra.mrb[0].mxu0 %v7006
      %v7079 = vpop.f32.mrb[0].mxu0
      %v7080 = vadd.f32 %v3416, %v7079
      %v7081 = vpop.f32.mrb[0].mxu0
      %v7082 = vpop.f32.mrb[0].mxu0
      %v7083 = vadd.f32 %v3416, %v7082
      %v7084 = vpop.f32.mrb[0].mxu0
      %7085 = vmatprep.mubr.bf16.mxu0 0
      %7086 = vmatmul.mubr.bf16.gmra.mrb[0].mxu0 %v7009
      %v7087 = vpop.f32.mrb[0].mxu0
      %v7088 = vadd.f32 %v3416, %v7087
      %v7089 = vpop.f32.mrb[0].mxu0
      %v7090 = vpop.f32.mrb[0].mxu0
      %v7091 = vadd.f32 %v3416, %v7090
      %v7092 = vpop.f32.mrb[0].mxu0
      %7093 = vmatprep.mubr.bf16.mxu0 0
      %7094 = vmatmul.mubr.bf16.gmra.mrb[0].mxu0 %v7012
      %v7095 = vpop.f32.mrb[0].mxu0
      %v7096 = vadd.f32 %v3416, %v7095
      %v7097 = vpop.f32.mrb[0].mxu0
      %v7098 = vpop.f32.mrb[0].mxu0
      %v7099 = vadd.f32 %v3416, %v7098
      %v7100 = vpop.f32.mrb[0].mxu0
      %7101 = vdwg.mxu0
      %v7102 = vsel %vm3855, %v7064, -inf
      %7103 = vmax.xlane.f32.xlu0 %v7102
      %v7104 = vpop.xlane.xlu0 %7103
      %v7105 = vsel %vm3855, %v7067, -inf
      %7106 = vmax.xlane.f32.xlu0 %v7105
      %v7107 = vpop.xlane.xlu0 %7106
      %v7108 = vsel %vm3855, %v7072, -inf
      %7109 = vmax.xlane.f32.xlu0 %v7108
      %v7110 = vpop.xlane.xlu0 %7109
      %v7111 = vsel %vm3855, %v7075, -inf
      %7112 = vmax.xlane.f32.xlu0 %v7111
      %v7113 = vpop.xlane.xlu0 %7112
      %v7114 = vsel %vm3855, %v7080, -inf
      %7115 = vmax.xlane.f32.xlu0 %v7114
      %v7116 = vpop.xlane.xlu0 %7115
      %v7117 = vsel %vm3855, %v7083, -inf
      %7118 = vmax.xlane.f32.xlu0 %v7117
      %v7119 = vpop.xlane.xlu0 %7118
      %v7120 = vsel %vm3855, %v7088, -inf
      %7121 = vmax.xlane.f32.xlu0 %v7120
      %v7122 = vpop.xlane.xlu0 %7121
      %v7123 = vsel %vm3855, %v7091, -inf
      %7124 = vmax.xlane.f32.xlu0 %v7123
      %v7125 = vpop.xlane.xlu0 %7124
      %v7126 = vsel %vm3855, %v7096, -inf
      %7127 = vmax.xlane.f32.xlu0 %v7126
      %v7128 = vpop.xlane.xlu0 %7127
      %v7129 = vsel %vm3855, %v7099, -inf
      %7130 = vmax.xlane.f32.xlu0 %v7129
      %v7131 = vpop.xlane.xlu0 %7130
      %v7132 = vsub.f32 %v7064, %v7104
      %v7133 = vsub.f32 %v7067, %v7107
      %v7134 = vsub.f32 %v7072, %v7110
      %v7135 = vsub.f32 %v7075, %v7113
      %v7136 = vsub.f32 %v7080, %v7116
      %v7137 = vsub.f32 %v7083, %v7119
      %v7138 = vsub.f32 %v7088, %v7122
      %v7139 = vsub.f32 %v7091, %v7125
      %v7140 = vsub.f32 %v7096, %v7128
      %v7141 = vsub.f32 %v7099, %v7131
      %v7142 = vmul.f32 %v7132, 1.442695
      %v7143 = vpow.pop %v7142
      %v7144 = vmul.f32 %v7133, 1.442695
      %v7145 = vpow.pop %v7144
      %v7146 = vmul.f32 %v7134, 1.442695
      %v7147 = vpow.pop %v7146
      %v7148 = vmul.f32 %v7135, 1.442695
      %v7149 = vpow.pop %v7148
      %v7150 = vmul.f32 %v7136, 1.442695
      %v7151 = vpow.pop %v7150
      %v7152 = vmul.f32 %v7137, 1.442695
      %v7153 = vpow.pop %v7152
      %v7154 = vmul.f32 %v7138, 1.442695
      %v7155 = vpow.pop %v7154
      %v7156 = vmul.f32 %v7139, 1.442695
      %v7157 = vpow.pop %v7156
      %v7158 = vmul.f32 %v7140, 1.442695
      %v7159 = vpow.pop %v7158
      %v7160 = vmul.f32 %v7141, 1.442695
      %v7161 = vpow.pop %v7160
      %v7162 = vsel %vm3855, %v7143, 0.0
      %7163 = vadd.xlane.f32.xlu0 %v7162
      %v7164 = vpop.xlane.xlu0 %7163
      %v7165 = vsel %vm3855, %v7145, 0.0
      %7166 = vadd.xlane.f32.xlu0 %v7165
      %v7167 = vpop.xlane.xlu0 %7166
      %v7168 = vsel %vm3855, %v7147, 0.0
      %7169 = vadd.xlane.f32.xlu0 %v7168
      %v7170 = vpop.xlane.xlu0 %7169
      %v7171 = vsel %vm3855, %v7149, 0.0
      %7172 = vadd.xlane.f32.xlu0 %v7171
      %v7173 = vpop.xlane.xlu0 %7172
      %v7174 = vsel %vm3855, %v7151, 0.0
      %7175 = vadd.xlane.f32.xlu0 %v7174
      %v7176 = vpop.xlane.xlu0 %7175
      %v7177 = vsel %vm3855, %v7153, 0.0
      %7178 = vadd.xlane.f32.xlu0 %v7177
      %v7179 = vpop.xlane.xlu0 %7178
      %v7180 = vsel %vm3855, %v7155, 0.0
      %7181 = vadd.xlane.f32.xlu0 %v7180
      %v7182 = vpop.xlane.xlu0 %7181
      %v7183 = vsel %vm3855, %v7157, 0.0
      %7184 = vadd.xlane.f32.xlu0 %v7183
      %v7185 = vpop.xlane.xlu0 %7184
      %v7186 = vsel %vm3855, %v7159, 0.0
      %7187 = vadd.xlane.f32.xlu0 %v7186
      %v7188 = vpop.xlane.xlu0 %7187
      %v7189 = vsel %vm3855, %v7161, 0.0
      %7190 = vadd.xlane.f32.xlu0 %v7189
      %v7191 = vpop.xlane.xlu0 %7190
      %v7192 = vrcp.pop %v7164
      %v7193 = vmul.f32 %v7143, %v7192
      %v7194 = vrcp.pop %v7167
      %v7195 = vmul.f32 %v7145, %v7194
      %v7196 = vrcp.pop %v7170
      %v7197 = vmul.f32 %v7147, %v7196
      %v7198 = vrcp.pop %v7173
      %v7199 = vmul.f32 %v7149, %v7198
      %v7200 = vrcp.pop %v7176
      %v7201 = vmul.f32 %v7151, %v7200
      %v7202 = vrcp.pop %v7179
      %v7203 = vmul.f32 %v7153, %v7202
      %v7204 = vrcp.pop %v7182
      %v7205 = vmul.f32 %v7155, %v7204
      %v7206 = vrcp.pop %v7185
      %v7207 = vmul.f32 %v7157, %v7206
      %v7208 = vrcp.pop %v7188
      %v7209 = vmul.f32 %v7159, %v7208
      %v7210 = vrcp.pop %v7191
      %v7211 = vmul.f32 %v7161, %v7210
      %v7212 = vpack.c.bf16 %v7195, %v7193
      %v7213 = vpack.c.bf16 %v7199, %v7197
      %v7214 = vpack.c.bf16 %v7203, %v7201
      %v7215 = vpack.c.bf16 %v7207, %v7205
      %v7216 = vpack.c.bf16 %v7211, %v7209
      %7217 = vrot.lane.b32.xlu0 %v6292, 48
      %v7218 = vpop.permute.xlu0 %7217
      %7219 = vrot.lane.b32.xlu0 %v6293, 48
      %v7220 = vpop.permute.xlu0 %7219
      %7221 = vrot.lane.b32.xlu0 %v6294, 48
      %v7222 = vpop.permute.xlu0 %7221
      %7223 = vrot.lane.b32.xlu0 %v6295, 48
      %v7224 = vpop.permute.xlu0 %7223
      %7225 = vrot.lane.b32.xlu0 %v6296, 48
      %v7226 = vpop.permute.xlu0 %7225
      %v7233 = vsel %vm3855, %v7212, 0
      %v7236 = vsel %vm3855, %v7213, 0
      %v7239 = vsel %vm3855, %v7214, 0
      %v7242 = vsel %vm3855, %v7215, 0
      %v7245 = vsel %vm3855, %v7216, 0
      %7247 = vmatprep.subr.bf16.mxu0 0
      %7248 = vmatpush1.bf16.msra.mxu0 %v7218
      %7249 = vmatprep.subr.bf16.mxu0 0
      %7250 = vmatpush1.bf16.msra.mxu0 %v7220
      %7251 = vmatprep.subr.bf16.mxu0 0
      %7252 = vmatpush1.bf16.msra.mxu0 %v7222
      %7253 = vmatprep.subr.bf16.mxu0 0
      %7254 = vmatpush1.bf16.msra.mxu0 %v7224
      %7255 = vmatprep.subr.bf16.mxu0 0
      %7256 = vmatpush1.bf16.msra.mxu0 %v7226
      %7257 = vmatprep.subr.bf16.mxu0 0
      %7258 = vmatpush1.bf16.msra.mxu0 0
      %7259 = vmatprep.subr.bf16.mxu0 0
      %7260 = vmatpush1.bf16.msra.mxu0 0
      %7261 = vmatprep.subr.bf16.mxu0 0
      %7262 = vmatpush1.bf16.msra.mxu0 0
      %7263 = vmatprep.subr.bf16.mxu0 0
      %7264 = vmatpush1.bf16.msra.mxu0 0
      %7265 = vmatprep.subr.bf16.mxu0 0
      %7266 = vmatpush1.bf16.msra.mxu0 0
      %7267 = vmatprep.subr.bf16.mxu0 0
      %7268 = vmatpush1.bf16.msra.mxu0 0
      %7269 = vmatprep.subr.bf16.mxu0 0
      %7270 = vmatpush1.bf16.msra.mxu0 0
      %7271 = vmatprep.subr.bf16.mxu0 0
      %7272 = vmatpush1.bf16.msra.mxu0 0
      %7273 = vmatprep.subr.bf16.mxu0 0
      %7274 = vmatpush1.bf16.msra.mxu0 0
      %7275 = vmatprep.subr.bf16.mxu0 0
      %7276 = vmatpush1.bf16.msra.mxu0 0
      %7277 = vmatprep.subr.bf16.mxu0 0
      %7278 = vmatpush1.bf16.msra.mxu0 0
      %7279 = vmatprep.mubr.bf16.mxu0 0
      %7280 = vmatmul.mubr.bf16.gmra.mrb[0].mxu0 %v7233
      %v7281 = vpop.f32.mrb[0].mxu0
      %v7282 = vadd.f32 0.0, %v7281
      %v7283 = vpop.f32.mrb[0].mxu0
      %v7284 = vpop.f32.mrb[0].mxu0
      %v7285 = vadd.f32 0.0, %v7284
      %v7286 = vpop.f32.mrb[0].mxu0
      %7287 = vmatprep.mubr.bf16.mxu0 0
      %7288 = vmatmul.mubr.bf16.gmra.mrb[0].mxu0 %v7236
      %v7289 = vpop.f32.mrb[0].mxu0
      %v7290 = vadd.f32 0.0, %v7289
      %v7291 = vpop.f32.mrb[0].mxu0
      %v7292 = vpop.f32.mrb[0].mxu0
      %v7293 = vadd.f32 0.0, %v7292
      %v7294 = vpop.f32.mrb[0].mxu0
      %7295 = vmatprep.mubr.bf16.mxu0 0
      %7296 = vmatmul.mubr.bf16.gmra.mrb[0].mxu0 %v7239
      %v7297 = vpop.f32.mrb[0].mxu0
      %v7298 = vadd.f32 0.0, %v7297
      %v7299 = vpop.f32.mrb[0].mxu0
      %v7300 = vpop.f32.mrb[0].mxu0
      %v7301 = vadd.f32 0.0, %v7300
      %v7302 = vpop.f32.mrb[0].mxu0
      %7303 = vmatprep.mubr.bf16.mxu0 0
      %7304 = vmatmul.mubr.bf16.gmra.mrb[0].mxu0 %v7242
      %v7305 = vpop.f32.mrb[0].mxu0
      %v7306 = vadd.f32 0.0, %v7305
      %v7307 = vpop.f32.mrb[0].mxu0
      %v7308 = vpop.f32.mrb[0].mxu0
      %v7309 = vadd.f32 0.0, %v7308
      %v7310 = vpop.f32.mrb[0].mxu0
      %7311 = vmatprep.mubr.bf16.mxu0 0
      %7312 = vmatmul.mubr.bf16.gmra.mrb[0].mxu0 %v7245
      %v7313 = vpop.f32.mrb[0].mxu0
      %v7314 = vadd.f32 0.0, %v7313
      %v7315 = vpop.f32.mrb[0].mxu0
      %v7316 = vpop.f32.mrb[0].mxu0
      %v7317 = vadd.f32 0.0, %v7316
      %v7318 = vpop.f32.mrb[0].mxu0
      %7319 = vdwg.mxu0
      %7320 = vrot.lane.b32.xlu0 %v6287, 104
      %v7321 = vpop.permute.xlu0 %7320
      %7322 = vrot.lane.b32.xlu0 %v6288, 104
      %v7323 = vpop.permute.xlu0 %7322
      %7324 = vrot.lane.b32.xlu0 %v6289, 104
      %v7325 = vpop.permute.xlu0 %7324
      %7326 = vrot.lane.b32.xlu0 %v6290, 104
      %v7327 = vpop.permute.xlu0 %7326
      %7328 = vrot.lane.b32.xlu0 %v6291, 104
      %v7329 = vpop.permute.xlu0 %7328
      %7330 = vrot.lane.b32.xlu0 %v6292, 72
      %v7331 = vpop.permute.xlu0 %7330
      %7332 = vrot.lane.b32.xlu0 %v6293, 72
      %v7333 = vpop.permute.xlu0 %7332
      %7334 = vrot.lane.b32.xlu0 %v6294, 72
      %v7335 = vpop.permute.xlu0 %7334
      %7336 = vrot.lane.b32.xlu0 %v6295, 72
      %v7337 = vpop.permute.xlu0 %7336
      %7338 = vrot.lane.b32.xlu0 %v6296, 72
      %v7339 = vpop.permute.xlu0 %7338
      %v7341 = vsel %vm705, %v7321, 0
      %v7344 = vsel %vm705, %v7323, 0
      %v7347 = vsel %vm705, %v7325, 0
      %v7350 = vsel %vm705, %v7327, 0
      %v7353 = vsel %vm705, %v7329, 0
      %v7356 = vsel %vm705, %v7331, 0
      %v7359 = vsel %vm705, %v7333, 0
      %v7362 = vsel %vm705, %v7335, 0
      %v7365 = vsel %vm705, %v7337, 0
      %v7368 = vsel %vm705, %v7339, 0
      %7370 = vmatprep.subr.bf16.mxu0 0
      %7371 = vmatpush1.bf16.xpose.msra.mxu0 %v7356
      %7372 = vmatprep.subr.bf16.mxu0 0
      %7373 = vmatpush1.bf16.xpose.msra.mxu0 %v7359
      %7374 = vmatprep.subr.bf16.mxu0 0
      %7375 = vmatpush1.bf16.xpose.msra.mxu0 %v7362
      %7376 = vmatprep.subr.bf16.mxu0 0
      %7377 = vmatpush1.bf16.xpose.msra.mxu0 %v7365
      %7378 = vmatprep.subr.bf16.mxu0 0
      %7379 = vmatpush1.bf16.xpose.msra.mxu0 %v7368
      %7380 = vmatprep.subr.bf16.mxu0 0
      %7381 = vmatpush1.bf16.xpose.msra.mxu0 0
      %7382 = vmatprep.subr.bf16.mxu0 0
      %7383 = vmatpush1.bf16.xpose.msra.mxu0 0
      %7384 = vmatprep.subr.bf16.mxu0 0
      %7385 = vmatpush1.bf16.xpose.msra.mxu0 0
      %7386 = vmatprep.subr.bf16.mxu0 0
      %7387 = vmatpush1.bf16.xpose.msra.mxu0 0
      %7388 = vmatprep.subr.bf16.mxu0 0
      %7389 = vmatpush1.bf16.xpose.msra.mxu0 0
      %7390 = vmatprep.subr.bf16.mxu0 0
      %7391 = vmatpush1.bf16.xpose.msra.mxu0 0
      %7392 = vmatprep.subr.bf16.mxu0 0
      %7393 = vmatpush1.bf16.xpose.msra.mxu0 0
      %7394 = vmatprep.subr.bf16.mxu0 0
      %7395 = vmatpush1.bf16.xpose.msra.mxu0 0
      %7396 = vmatprep.subr.bf16.mxu0 0
      %7397 = vmatpush1.bf16.xpose.msra.mxu0 0
      %7398 = vmatprep.subr.bf16.mxu0 0
      %7399 = vmatpush1.bf16.xpose.msra.mxu0 0
      %7400 = vmatprep.subr.bf16.mxu0 0
      %7401 = vmatpush1.bf16.xpose.msra.mxu0 0
      %7402 = vmatprep.mubr.bf16.mxu0 0
      %7403 = vmatmul.mubr.bf16.gmra.mrb[0].mxu0 %v7341
      %v7404 = vpop.f32.mrb[0].mxu0
      %v7405 = vadd.f32 %v3416, %v7404
      %v7406 = vpop.f32.mrb[0].mxu0
      %v7407 = vpop.f32.mrb[0].mxu0
      %v7408 = vadd.f32 %v3416, %v7407
      %v7409 = vpop.f32.mrb[0].mxu0
      %7410 = vmatprep.mubr.bf16.mxu0 0
      %7411 = vmatmul.mubr.bf16.gmra.mrb[0].mxu0 %v7344
      %v7412 = vpop.f32.mrb[0].mxu0
      %v7413 = vadd.f32 %v3416, %v7412
      %v7414 = vpop.f32.mrb[0].mxu0
      %v7415 = vpop.f32.mrb[0].mxu0
      %v7416 = vadd.f32 %v3416, %v7415
      %v7417 = vpop.f32.mrb[0].mxu0
      %7418 = vmatprep.mubr.bf16.mxu0 0
      %7419 = vmatmul.mubr.bf16.gmra.mrb[0].mxu0 %v7347
      %v7420 = vpop.f32.mrb[0].mxu0
      %v7421 = vadd.f32 %v3416, %v7420
      %v7422 = vpop.f32.mrb[0].mxu0
      %v7423 = vpop.f32.mrb[0].mxu0
      %v7424 = vadd.f32 %v3416, %v7423
      %v7425 = vpop.f32.mrb[0].mxu0
      %7426 = vmatprep.mubr.bf16.mxu0 0
      %7427 = vmatmul.mubr.bf16.gmra.mrb[0].mxu0 %v7350
      %v7428 = vpop.f32.mrb[0].mxu0
      %v7429 = vadd.f32 %v3416, %v7428
      %v7430 = vpop.f32.mrb[0].mxu0
      %v7431 = vpop.f32.mrb[0].mxu0
      %v7432 = vadd.f32 %v3416, %v7431
      %v7433 = vpop.f32.mrb[0].mxu0
      %7434 = vmatprep.mubr.bf16.mxu0 0
      %7435 = vmatmul.mubr.bf16.gmra.mrb[0].mxu0 %v7353
      %v7436 = vpop.f32.mrb[0].mxu0
      %v7437 = vadd.f32 %v3416, %v7436
      %v7438 = vpop.f32.mrb[0].mxu0
      %v7439 = vpop.f32.mrb[0].mxu0
      %v7440 = vadd.f32 %v3416, %v7439
      %v7441 = vpop.f32.mrb[0].mxu0
      %7442 = vdwg.mxu0
      %v7443 = vsel %vm3855, %v7405, -inf
      %7444 = vmax.xlane.f32.xlu0 %v7443
      %v7445 = vpop.xlane.xlu0 %7444
      %v7446 = vsel %vm3855, %v7408, -inf
      %7447 = vmax.xlane.f32.xlu0 %v7446
      %v7448 = vpop.xlane.xlu0 %7447
      %v7449 = vsel %vm3855, %v7413, -inf
      %7450 = vmax.xlane.f32.xlu0 %v7449
      %v7451 = vpop.xlane.xlu0 %7450
      %v7452 = vsel %vm3855, %v7416, -inf
      %7453 = vmax.xlane.f32.xlu0 %v7452
      %v7454 = vpop.xlane.xlu0 %7453
      %v7455 = vsel %vm3855, %v7421, -inf
      %7456 = vmax.xlane.f32.xlu0 %v7455
      %v7457 = vpop.xlane.xlu0 %7456
      %v7458 = vsel %vm3855, %v7424, -inf
      %7459 = vmax.xlane.f32.xlu0 %v7458
      %v7460 = vpop.xlane.xlu0 %7459
      %v7461 = vsel %vm3855, %v7429, -inf
      %7462 = vmax.xlane.f32.xlu0 %v7461
      %v7463 = vpop.xlane.xlu0 %7462
      %v7464 = vsel %vm3855, %v7432, -inf
      %7465 = vmax.xlane.f32.xlu0 %v7464
      %v7466 = vpop.xlane.xlu0 %7465
      %v7467 = vsel %vm3855, %v7437, -inf
      %7468 = vmax.xlane.f32.xlu0 %v7467
      %v7469 = vpop.xlane.xlu0 %7468
      %v7470 = vsel %vm3855, %v7440, -inf
      %7471 = vmax.xlane.f32.xlu0 %v7470
      %v7472 = vpop.xlane.xlu0 %7471
      %v7473 = vsub.f32 %v7405, %v7445
      %v7474 = vsub.f32 %v7408, %v7448
      %v7475 = vsub.f32 %v7413, %v7451
      %v7476 = vsub.f32 %v7416, %v7454
      %v7477 = vsub.f32 %v7421, %v7457
      %v7478 = vsub.f32 %v7424, %v7460
      %v7479 = vsub.f32 %v7429, %v7463
      %v7480 = vsub.f32 %v7432, %v7466
      %v7481 = vsub.f32 %v7437, %v7469
      %v7482 = vsub.f32 %v7440, %v7472
      %v7483 = vmul.f32 %v7473, 1.442695
      %v7484 = vpow.pop %v7483
      %v7485 = vmul.f32 %v7474, 1.442695
      %v7486 = vpow.pop %v7485
      %v7487 = vmul.f32 %v7475, 1.442695
      %v7488 = vpow.pop %v7487
      %v7489 = vmul.f32 %v7476, 1.442695
      %v7490 = vpow.pop %v7489
      %v7491 = vmul.f32 %v7477, 1.442695
      %v7492 = vpow.pop %v7491
      %v7493 = vmul.f32 %v7478, 1.442695
      %v7494 = vpow.pop %v7493
      %v7495 = vmul.f32 %v7479, 1.442695
      %v7496 = vpow.pop %v7495
      %v7497 = vmul.f32 %v7480, 1.442695
      %v7498 = vpow.pop %v7497
      %v7499 = vmul.f32 %v7481, 1.442695
      %v7500 = vpow.pop %v7499
      %v7501 = vmul.f32 %v7482, 1.442695
      %v7502 = vpow.pop %v7501
      %v7503 = vsel %vm3855, %v7484, 0.0
      %7504 = vadd.xlane.f32.xlu0 %v7503
      %v7505 = vpop.xlane.xlu0 %7504
      %v7506 = vsel %vm3855, %v7486, 0.0
      %7507 = vadd.xlane.f32.xlu0 %v7506
      %v7508 = vpop.xlane.xlu0 %7507
      %v7509 = vsel %vm3855, %v7488, 0.0
      %7510 = vadd.xlane.f32.xlu0 %v7509
      %v7511 = vpop.xlane.xlu0 %7510
      %v7512 = vsel %vm3855, %v7490, 0.0
      %7513 = vadd.xlane.f32.xlu0 %v7512
      %v7514 = vpop.xlane.xlu0 %7513
      %v7515 = vsel %vm3855, %v7492, 0.0
      %7516 = vadd.xlane.f32.xlu0 %v7515
      %v7517 = vpop.xlane.xlu0 %7516
      %v7518 = vsel %vm3855, %v7494, 0.0
      %7519 = vadd.xlane.f32.xlu0 %v7518
      %v7520 = vpop.xlane.xlu0 %7519
      %v7521 = vsel %vm3855, %v7496, 0.0
      %7522 = vadd.xlane.f32.xlu0 %v7521
      %v7523 = vpop.xlane.xlu0 %7522
      %v7524 = vsel %vm3855, %v7498, 0.0
      %7525 = vadd.xlane.f32.xlu0 %v7524
      %v7526 = vpop.xlane.xlu0 %7525
      %v7527 = vsel %vm3855, %v7500, 0.0
      %7528 = vadd.xlane.f32.xlu0 %v7527
      %v7529 = vpop.xlane.xlu0 %7528
      %v7530 = vsel %vm3855, %v7502, 0.0
      %7531 = vadd.xlane.f32.xlu0 %v7530
      %v7532 = vpop.xlane.xlu0 %7531
      %v7533 = vrcp.pop %v7505
      %v7534 = vmul.f32 %v7484, %v7533
      %v7535 = vrcp.pop %v7508
      %v7536 = vmul.f32 %v7486, %v7535
      %v7537 = vrcp.pop %v7511
      %v7538 = vmul.f32 %v7488, %v7537
      %v7539 = vrcp.pop %v7514
      %v7540 = vmul.f32 %v7490, %v7539
      %v7541 = vrcp.pop %v7517
      %v7542 = vmul.f32 %v7492, %v7541
      %v7543 = vrcp.pop %v7520
      %v7544 = vmul.f32 %v7494, %v7543
      %v7545 = vrcp.pop %v7523
      %v7546 = vmul.f32 %v7496, %v7545
      %v7547 = vrcp.pop %v7526
      %v7548 = vmul.f32 %v7498, %v7547
      %v7549 = vrcp.pop %v7529
      %v7550 = vmul.f32 %v7500, %v7549
      %v7551 = vrcp.pop %v7532
      %v7552 = vmul.f32 %v7502, %v7551
      %v7553 = vpack.c.bf16 %v7536, %v7534
      %v7554 = vpack.c.bf16 %v7540, %v7538
      %v7555 = vpack.c.bf16 %v7544, %v7542
      %v7556 = vpack.c.bf16 %v7548, %v7546
      %v7557 = vpack.c.bf16 %v7552, %v7550
      %7558 = vrot.lane.b32.xlu0 %v6292, 40
      %v7559 = vpop.permute.xlu0 %7558
      %7560 = vrot.lane.b32.xlu0 %v6293, 40
      %v7561 = vpop.permute.xlu0 %7560
      %7562 = vrot.lane.b32.xlu0 %v6294, 40
      %v7563 = vpop.permute.xlu0 %7562
      %7564 = vrot.lane.b32.xlu0 %v6295, 40
      %v7565 = vpop.permute.xlu0 %7564
      %7566 = vrot.lane.b32.xlu0 %v6296, 40
      %v7567 = vpop.permute.xlu0 %7566
      %v7574 = vsel %vm3855, %v7553, 0
      %v7577 = vsel %vm3855, %v7554, 0
      %v7580 = vsel %vm3855, %v7555, 0
      %v7583 = vsel %vm3855, %v7556, 0
      %v7586 = vsel %vm3855, %v7557, 0
      %7588 = vmatprep.subr.bf16.mxu0 0
      %7589 = vmatpush1.bf16.msra.mxu0 %v7559
      %7590 = vmatprep.subr.bf16.mxu0 0
      %7591 = vmatpush1.bf16.msra.mxu0 %v7561
      %7592 = vmatprep.subr.bf16.mxu0 0
      %7593 = vmatpush1.bf16.msra.mxu0 %v7563
      %7594 = vmatprep.subr.bf16.mxu0 0
      %7595 = vmatpush1.bf16.msra.mxu0 %v7565
      %7596 = vmatprep.subr.bf16.mxu0 0
      %7597 = vmatpush1.bf16.msra.mxu0 %v7567
      %7598 = vmatprep.subr.bf16.mxu0 0
      %7599 = vmatpush1.bf16.msra.mxu0 0
      %7600 = vmatprep.subr.bf16.mxu0 0
      %7601 = vmatpush1.bf16.msra.mxu0 0
      %7602 = vmatprep.subr.bf16.mxu0 0
      %7603 = vmatpush1.bf16.msra.mxu0 0
      %7604 = vmatprep.subr.bf16.mxu0 0
      %7605 = vmatpush1.bf16.msra.mxu0 0
      %7606 = vmatprep.subr.bf16.mxu0 0
      %7607 = vmatpush1.bf16.msra.mxu0 0
      %7608 = vmatprep.subr.bf16.mxu0 0
      %7609 = vmatpush1.bf16.msra.mxu0 0
      %7610 = vmatprep.subr.bf16.mxu0 0
      %7611 = vmatpush1.bf16.msra.mxu0 0
      %7612 = vmatprep.subr.bf16.mxu0 0
      %7613 = vmatpush1.bf16.msra.mxu0 0
      %7614 = vmatprep.subr.bf16.mxu0 0
      %7615 = vmatpush1.bf16.msra.mxu0 0
      %7616 = vmatprep.subr.bf16.mxu0 0
      %7617 = vmatpush1.bf16.msra.mxu0 0
      %7618 = vmatprep.subr.bf16.mxu0 0
      %7619 = vmatpush1.bf16.msra.mxu0 0
      %7620 = vmatprep.mubr.bf16.mxu0 0
      %7621 = vmatmul.mubr.bf16.gmra.mrb[0].mxu0 %v7574
      %v7622 = vpop.f32.mrb[0].mxu0
      %v7623 = vadd.f32 0.0, %v7622
      %v7624 = vpop.f32.mrb[0].mxu0
      %v7625 = vpop.f32.mrb[0].mxu0
      %v7626 = vadd.f32 0.0, %v7625
      %v7627 = vpop.f32.mrb[0].mxu0
      %7628 = vmatprep.mubr.bf16.mxu0 0
      %7629 = vmatmul.mubr.bf16.gmra.mrb[0].mxu0 %v7577
      %v7630 = vpop.f32.mrb[0].mxu0
      %v7631 = vadd.f32 0.0, %v7630
      %v7632 = vpop.f32.mrb[0].mxu0
      %v7633 = vpop.f32.mrb[0].mxu0
      %v7634 = vadd.f32 0.0, %v7633
      %v7635 = vpop.f32.mrb[0].mxu0
      %7636 = vmatprep.mubr.bf16.mxu0 0
      %7637 = vmatmul.mubr.bf16.gmra.mrb[0].mxu0 %v7580
      %v7638 = vpop.f32.mrb[0].mxu0
      %v7639 = vadd.f32 0.0, %v7638
      %v7640 = vpop.f32.mrb[0].mxu0
      %v7641 = vpop.f32.mrb[0].mxu0
      %v7642 = vadd.f32 0.0, %v7641
      %v7643 = vpop.f32.mrb[0].mxu0
      %7644 = vmatprep.mubr.bf16.mxu0 0
      %7645 = vmatmul.mubr.bf16.gmra.mrb[0].mxu0 %v7583
      %v7646 = vpop.f32.mrb[0].mxu0
      %v7647 = vadd.f32 0.0, %v7646
      %v7648 = vpop.f32.mrb[0].mxu0
      %v7649 = vpop.f32.mrb[0].mxu0
      %v7650 = vadd.f32 0.0, %v7649
      %v7651 = vpop.f32.mrb[0].mxu0
      %7652 = vmatprep.mubr.bf16.mxu0 0
      %7653 = vmatmul.mubr.bf16.gmra.mrb[0].mxu0 %v7586
      %v7654 = vpop.f32.mrb[0].mxu0
      %v7655 = vadd.f32 0.0, %v7654
      %v7656 = vpop.f32.mrb[0].mxu0
      %v7657 = vpop.f32.mrb[0].mxu0
      %v7658 = vadd.f32 0.0, %v7657
      %v7659 = vpop.f32.mrb[0].mxu0
      %7660 = vdwg.mxu0
      %7671 = vrot.lane.b32.xlu0 %v6941, 8
      %v7672 = vpop.permute.xlu0 %7671
      %7673 = vrot.lane.b32.xlu0 %v6944, 8
      %v7674 = vpop.permute.xlu0 %7673
      %7675 = vrot.lane.b32.xlu0 %v6949, 8
      %v7676 = vpop.permute.xlu0 %7675
      %7677 = vrot.lane.b32.xlu0 %v6952, 8
      %v7678 = vpop.permute.xlu0 %7677
      %7679 = vrot.lane.b32.xlu0 %v6957, 8
      %v7680 = vpop.permute.xlu0 %7679
      %7681 = vrot.lane.b32.xlu0 %v6960, 8
      %v7682 = vpop.permute.xlu0 %7681
      %7683 = vrot.lane.b32.xlu0 %v6965, 8
      %v7684 = vpop.permute.xlu0 %7683
      %7685 = vrot.lane.b32.xlu0 %v6968, 8
      %v7686 = vpop.permute.xlu0 %7685
      %7687 = vrot.lane.b32.xlu0 %v6973, 8
      %v7688 = vpop.permute.xlu0 %7687
      %7689 = vrot.lane.b32.xlu0 %v6976, 8
      %v7690 = vpop.permute.xlu0 %7689
      %7711 = vrot.lane.b32.xlu0 %v7282, 16
      %v7712 = vpop.permute.xlu0 %7711
      %7713 = vrot.lane.b32.xlu0 %v7285, 16
      %v7714 = vpop.permute.xlu0 %7713
      %7715 = vrot.lane.b32.xlu0 %v7290, 16
      %v7716 = vpop.permute.xlu0 %7715
      %7717 = vrot.lane.b32.xlu0 %v7293, 16
      %v7718 = vpop.permute.xlu0 %7717
      %7719 = vrot.lane.b32.xlu0 %v7298, 16
      %v7720 = vpop.permute.xlu0 %7719
      %7721 = vrot.lane.b32.xlu0 %v7301, 16
      %v7722 = vpop.permute.xlu0 %7721
      %7723 = vrot.lane.b32.xlu0 %v7306, 16
      %v7724 = vpop.permute.xlu0 %7723
      %7725 = vrot.lane.b32.xlu0 %v7309, 16
      %v7726 = vpop.permute.xlu0 %7725
      %7727 = vrot.lane.b32.xlu0 %v7314, 16
      %v7728 = vpop.permute.xlu0 %7727
      %7729 = vrot.lane.b32.xlu0 %v7317, 16
      %v7730 = vpop.permute.xlu0 %7729
      %7751 = vrot.lane.b32.xlu0 %v7623, 24
      %v7752 = vpop.permute.xlu0 %7751
      %7753 = vrot.lane.b32.xlu0 %v7626, 24
      %v7754 = vpop.permute.xlu0 %7753
      %7755 = vrot.lane.b32.xlu0 %v7631, 24
      %v7756 = vpop.permute.xlu0 %7755
      %7757 = vrot.lane.b32.xlu0 %v7634, 24
      %v7758 = vpop.permute.xlu0 %7757
      %7759 = vrot.lane.b32.xlu0 %v7639, 24
      %v7760 = vpop.permute.xlu0 %7759
      %7761 = vrot.lane.b32.xlu0 %v7642, 24
      %v7762 = vpop.permute.xlu0 %7761
      %7763 = vrot.lane.b32.xlu0 %v7647, 24
      %v7764 = vpop.permute.xlu0 %7763
      %7765 = vrot.lane.b32.xlu0 %v7650, 24
      %v7766 = vpop.permute.xlu0 %7765
      %7767 = vrot.lane.b32.xlu0 %v7655, 24
      %v7768 = vpop.permute.xlu0 %7767
      %7769 = vrot.lane.b32.xlu0 %v7658, 24
      %v7770 = vpop.permute.xlu0 %7769
      %v7781 = vsel %vm705, %v6595, %v7672
      %v7782 = vsel %vm705, %v6598, %v7674
      %v7783 = vsel %vm705, %v6603, %v7676
      %v7784 = vsel %vm705, %v6606, %v7678
      %v7785 = vsel %vm705, %v6611, %v7680
      %v7786 = vsel %vm705, %v6614, %v7682
      %v7787 = vsel %vm705, %v6619, %v7684
      %v7788 = vsel %vm705, %v6622, %v7686
      %v7789 = vsel %vm705, %v6627, %v7688
      %v7790 = vsel %vm705, %v6630, %v7690
      %v7791 = vsel %vm1456, %v7781, %v7712
      %v7792 = vsel %vm1456, %v7782, %v7714
      %v7793 = vsel %vm1456, %v7783, %v7716
      %v7794 = vsel %vm1456, %v7784, %v7718
      %v7795 = vsel %vm1456, %v7785, %v7720
      %v7796 = vsel %vm1456, %v7786, %v7722
      %v7797 = vsel %vm1456, %v7787, %v7724
      %v7798 = vsel %vm1456, %v7788, %v7726
      %v7799 = vsel %vm1456, %v7789, %v7728
      %v7800 = vsel %vm1456, %v7790, %v7730
      %v7801 = vsel %vm1461, %v7791, %v7752
      %v7802 = vsel %vm1461, %v7792, %v7754
      %v7803 = vsel %vm1461, %v7793, %v7756
      %v7804 = vsel %vm1461, %v7794, %v7758
      %v7805 = vsel %vm1461, %v7795, %v7760
      %v7806 = vsel %vm1461, %v7796, %v7762
      %v7807 = vsel %vm1461, %v7797, %v7764
      %v7808 = vsel %vm1461, %v7798, %v7766
      %v7809 = vsel %vm1461, %v7799, %v7768
      %v7810 = vsel %vm1461, %v7800, %v7770
      %v7811 = vpack.c.bf16 %v7802, %v7801
      %v7812 = vpack.c.bf16 %v7804, %v7803
      %v7813 = vpack.c.bf16 %v7806, %v7805
      %v7814 = vpack.c.bf16 %v7808, %v7807
      %v7815 = vpack.c.bf16 %v7810, %v7809
      %v7816 = vlaneseq
      %v7817 = vshrl.u32 %v7816, 7
      %v7818 = vsub.s32 0, %v7817
      %v7819 = vrot.slane %v5991, %v7818
      %v7821 = vsel %vm564, %v7811, 0
      %v7824 = vsel %vm564, %v7812, 0
      %v7827 = vsel %vm564, %v7813, 0
      %v7830 = vsel %vm564, %v7814, 0
      %v7833 = vsel %vm564, %v7815, 0
      %7835 = vmatprep.subr.bf16.mxu0 0
      %7836 = vmatpush1.bf16.msra.mxu0 %v5989
      %7837 = vmatprep.subr.bf16.mxu0 0
      %7838 = vmatpush1.bf16.msra.mxu0 %v5990
      %7839 = vmatprep.subr.bf16.mxu0 0
      %7840 = vmatpush1.bf16.msra.mxu0 0
      %7841 = vmatprep.subr.bf16.mxu0 0
      %7842 = vmatpush1.bf16.msra.mxu0 0
      %7843 = vmatprep.subr.bf16.mxu0 0
      %7844 = vmatpush1.bf16.msra.mxu0 0
      %7845 = vmatprep.subr.bf16.mxu0 0
      %7846 = vmatpush1.bf16.msra.mxu0 0
      %7847 = vmatprep.subr.bf16.mxu0 0
      %7848 = vmatpush1.bf16.msra.mxu0 0
      %7849 = vmatprep.subr.bf16.mxu0 0
      %7850 = vmatpush1.bf16.msra.mxu0 0
      %7851 = vmatprep.subr.bf16.mxu0 0
      %7852 = vmatpush1.bf16.msra.mxu0 0
      %7853 = vmatprep.subr.bf16.mxu0 0
      %7854 = vmatpush1.bf16.msra.mxu0 0
      %7855 = vmatprep.subr.bf16.mxu0 0
      %7856 = vmatpush1.bf16.msra.mxu0 0
      %7857 = vmatprep.subr.bf16.mxu0 0
      %7858 = vmatpush1.bf16.msra.mxu0 0
      %7859 = vmatprep.subr.bf16.mxu0 0
      %7860 = vmatpush1.bf16.msra.mxu0 0
      %7861 = vmatprep.subr.bf16.mxu0 0
      %7862 = vmatpush1.bf16.msra.mxu0 0
      %7863 = vmatprep.subr.bf16.mxu0 0
      %7864 = vmatpush1.bf16.msra.mxu0 0
      %7865 = vmatprep.subr.bf16.mxu0 0
      %7866 = vmatpush1.bf16.msra.mxu0 0
      %7867 = vmatprep.mubr.bf16.mxu0 0
      %7868 = vmatmul.mubr.bf16.gmra.mrb[0].mxu0 %v7821
      %v7869 = vpop.f32.mrb[0].mxu0
      %v7870 = vadd.f32 %v7819, %v7869
      %v7871 = vpop.f32.mrb[0].mxu0
      %v7872 = vpop.f32.mrb[0].mxu0
      %v7873 = vadd.f32 %v7819, %v7872
      %v7874 = vpop.f32.mrb[0].mxu0
      %7875 = vmatprep.mubr.bf16.mxu0 0
      %7876 = vmatmul.mubr.bf16.gmra.mrb[0].mxu0 %v7824
      %v7877 = vpop.f32.mrb[0].mxu0
      %v7878 = vadd.f32 %v7819, %v7877
      %v7879 = vpop.f32.mrb[0].mxu0
      %v7880 = vpop.f32.mrb[0].mxu0
      %v7881 = vadd.f32 %v7819, %v7880
      %v7882 = vpop.f32.mrb[0].mxu0
      %7883 = vmatprep.mubr.bf16.mxu0 0
      %7884 = vmatmul.mubr.bf16.gmra.mrb[0].mxu0 %v7827
      %v7885 = vpop.f32.mrb[0].mxu0
      %v7886 = vadd.f32 %v7819, %v7885
      %v7887 = vpop.f32.mrb[0].mxu0
      %v7888 = vpop.f32.mrb[0].mxu0
      %v7889 = vadd.f32 %v7819, %v7888
      %v7890 = vpop.f32.mrb[0].mxu0
      %7891 = vmatprep.mubr.bf16.mxu0 0
      %7892 = vmatmul.mubr.bf16.gmra.mrb[0].mxu0 %v7830
      %v7893 = vpop.f32.mrb[0].mxu0
      %v7894 = vadd.f32 %v7819, %v7893
      %v7895 = vpop.f32.mrb[0].mxu0
      %v7896 = vpop.f32.mrb[0].mxu0
      %v7897 = vadd.f32 %v7819, %v7896
      %v7898 = vpop.f32.mrb[0].mxu0
      %7899 = vmatprep.mubr.bf16.mxu0 0
      %7900 = vmatmul.mubr.bf16.gmra.mrb[0].mxu0 %v7833
      %v7901 = vpop.f32.mrb[0].mxu0
      %v7902 = vadd.f32 %v7819, %v7901
      %v7903 = vpop.f32.mrb[0].mxu0
      %v7904 = vpop.f32.mrb[0].mxu0
      %v7905 = vadd.f32 %v7819, %v7904
      %v7906 = vpop.f32.mrb[0].mxu0
      %7907 = vdwg.mxu0
      %v7908 = vadd.f32 %v5966, %v7870
      %v7909 = vadd.f32 %v5967, %v7873
      %v7910 = vadd.f32 %v5968, %v7878
      %v7911 = vadd.f32 %v5969, %v7881
      %v7912 = vadd.f32 %v5970, %v7886
      %v7913 = vadd.f32 %v5971, %v7889
      %v7914 = vadd.f32 %v5972, %v7894
      %v7915 = vadd.f32 %v5973, %v7897
      %v7916 = vadd.f32 %v5974, %v7902
      %v7917 = vadd.f32 %v5975, %v7905
      %v7918 = vsel %vm564, %v7908, 0.0
      %7919 = vadd.xlane.f32.xlu0 %v7918
      %v7920 = vpop.xlane.xlu0 %7919
      %v7921 = vsel %vm564, %v7909, 0.0
      %7922 = vadd.xlane.f32.xlu0 %v7921
      %v7923 = vpop.xlane.xlu0 %7922
      %v7924 = vsel %vm564, %v7910, 0.0
      %7925 = vadd.xlane.f32.xlu0 %v7924
      %v7926 = vpop.xlane.xlu0 %7925
      %v7927 = vsel %vm564, %v7911, 0.0
      %7928 = vadd.xlane.f32.xlu0 %v7927
      %v7929 = vpop.xlane.xlu0 %7928
      %v7930 = vsel %vm564, %v7912, 0.0
      %7931 = vadd.xlane.f32.xlu0 %v7930
      %v7932 = vpop.xlane.xlu0 %7931
      %v7933 = vsel %vm564, %v7913, 0.0
      %7934 = vadd.xlane.f32.xlu0 %v7933
      %v7935 = vpop.xlane.xlu0 %7934
      %v7936 = vsel %vm564, %v7914, 0.0
      %7937 = vadd.xlane.f32.xlu0 %v7936
      %v7938 = vpop.xlane.xlu0 %7937
      %v7939 = vsel %vm564, %v7915, 0.0
      %7940 = vadd.xlane.f32.xlu0 %v7939
      %v7941 = vpop.xlane.xlu0 %7940
      %v7942 = vsel %vm564, %v7916, 0.0
      %7943 = vadd.xlane.f32.xlu0 %v7942
      %v7944 = vpop.xlane.xlu0 %7943
      %v7945 = vsel %vm564, %v7917, 0.0
      %7946 = vadd.xlane.f32.xlu0 %v7945
      %v7947 = vpop.xlane.xlu0 %7946
      %v7948 = vmul.f32 %v7920, %v577
      %v7949 = vmul.f32 %v7923, %v577
      %v7950 = vmul.f32 %v7926, %v577
      %v7951 = vmul.f32 %v7929, %v577
      %v7952 = vmul.f32 %v7932, %v577
      %v7953 = vmul.f32 %v7935, %v577
      %v7954 = vmul.f32 %v7938, %v577
      %v7955 = vmul.f32 %v7941, %v577
      %v7956 = vmul.f32 %v7944, %v577
      %v7957 = vmul.f32 %v7947, %v577
      %v7958 = vsub.f32 %v7908, %v7948
      %v7959 = vsub.f32 %v7909, %v7949
      %v7960 = vsub.f32 %v7910, %v7950
      %v7961 = vsub.f32 %v7911, %v7951
      %v7962 = vsub.f32 %v7912, %v7952
      %v7963 = vsub.f32 %v7913, %v7953
      %v7964 = vsub.f32 %v7914, %v7954
      %v7965 = vsub.f32 %v7915, %v7955
      %v7966 = vsub.f32 %v7916, %v7956
      %v7967 = vsub.f32 %v7917, %v7957
      %v7968 = vmul.f32 %v7958, %v7958
      %v7969 = vmul.f32 %v7959, %v7959
      %v7970 = vmul.f32 %v7960, %v7960
      %v7971 = vmul.f32 %v7961, %v7961
      %v7972 = vmul.f32 %v7962, %v7962
      %v7973 = vmul.f32 %v7963, %v7963
      %v7974 = vmul.f32 %v7964, %v7964
      %v7975 = vmul.f32 %v7965, %v7965
      %v7976 = vmul.f32 %v7966, %v7966
      %v7977 = vmul.f32 %v7967, %v7967
      %v7978 = vsel %vm564, %v7968, 0.0
      %7979 = vadd.xlane.f32.xlu0 %v7978
      %v7980 = vpop.xlane.xlu0 %7979
      %v7981 = vsel %vm564, %v7969, 0.0
      %7982 = vadd.xlane.f32.xlu0 %v7981
      %v7983 = vpop.xlane.xlu0 %7982
      %v7984 = vsel %vm564, %v7970, 0.0
      %7985 = vadd.xlane.f32.xlu0 %v7984
      %v7986 = vpop.xlane.xlu0 %7985
      %v7987 = vsel %vm564, %v7971, 0.0
      %7988 = vadd.xlane.f32.xlu0 %v7987
      %v7989 = vpop.xlane.xlu0 %7988
      %v7990 = vsel %vm564, %v7972, 0.0
      %7991 = vadd.xlane.f32.xlu0 %v7990
      %v7992 = vpop.xlane.xlu0 %7991
      %v7993 = vsel %vm564, %v7973, 0.0
      %7994 = vadd.xlane.f32.xlu0 %v7993
      %v7995 = vpop.xlane.xlu0 %7994
      %v7996 = vsel %vm564, %v7974, 0.0
      %7997 = vadd.xlane.f32.xlu0 %v7996
      %v7998 = vpop.xlane.xlu0 %7997
      %v7999 = vsel %vm564, %v7975, 0.0
      %8000 = vadd.xlane.f32.xlu0 %v7999
      %v8001 = vpop.xlane.xlu0 %8000
      %v8002 = vsel %vm564, %v7976, 0.0
      %8003 = vadd.xlane.f32.xlu0 %v8002
      %v8004 = vpop.xlane.xlu0 %8003
      %v8005 = vsel %vm564, %v7977, 0.0
      %8006 = vadd.xlane.f32.xlu0 %v8005
      %v8007 = vpop.xlane.xlu0 %8006
      %v8008 = vmul.f32 %v7980, %v577
      %v8009 = vmul.f32 %v7983, %v577
      %v8010 = vmul.f32 %v7986, %v577
      %v8011 = vmul.f32 %v7989, %v577
      %v8012 = vmul.f32 %v7992, %v577
      %v8013 = vmul.f32 %v7995, %v577
      %v8014 = vmul.f32 %v7998, %v577
      %v8015 = vmul.f32 %v8001, %v577
      %v8016 = vmul.f32 %v8004, %v577
      %v8017 = vmul.f32 %v8007, %v577
      %v8018 = vadd.f32 %v8008, 1e-05
      %v8019 = vadd.f32 %v8009, 1e-05
      %v8020 = vadd.f32 %v8010, 1e-05
      %v8021 = vadd.f32 %v8011, 1e-05
      %v8022 = vadd.f32 %v8012, 1e-05
      %v8023 = vadd.f32 %v8013, 1e-05
      %v8024 = vadd.f32 %v8014, 1e-05
      %v8025 = vadd.f32 %v8015, 1e-05
      %v8026 = vadd.f32 %v8016, 1e-05
      %v8027 = vadd.f32 %v8017, 1e-05
      %v8028 = vrsqrt.pop %v8018
      %v8029 = vrsqrt.pop %v8019
      %v8030 = vrsqrt.pop %v8020
      %v8031 = vrsqrt.pop %v8021
      %v8032 = vrsqrt.pop %v8022
      %v8033 = vrsqrt.pop %v8023
      %v8034 = vrsqrt.pop %v8024
      %v8035 = vrsqrt.pop %v8025
      %v8036 = vrsqrt.pop %v8026
      %v8037 = vrsqrt.pop %v8027
      %v8038 = vmul.f32 %v7958, %v8028
      %v8039 = vmul.f32 %v7959, %v8029
      %v8040 = vmul.f32 %v7960, %v8030
      %v8041 = vmul.f32 %v7961, %v8031
      %v8042 = vmul.f32 %v7962, %v8032
      %v8043 = vmul.f32 %v7963, %v8033
      %v8044 = vmul.f32 %v7964, %v8034
      %v8045 = vmul.f32 %v7965, %v8035
      %v8046 = vmul.f32 %v7966, %v8036
      %v8047 = vmul.f32 %v7967, %v8037
      %v8048 = vlaneseq
      %v8049 = vshrl.u32 %v8048, 7
      %v8050 = vsub.s32 0, %v8049
      %v8051 = vrot.slane %v5992, %v8050
      %v8052 = vmul.f32 %v8038, %v8051
      %v8053 = vmul.f32 %v8039, %v8051
      %v8054 = vmul.f32 %v8040, %v8051
      %v8055 = vmul.f32 %v8041, %v8051
      %v8056 = vmul.f32 %v8042, %v8051
      %v8057 = vmul.f32 %v8043, %v8051
      %v8058 = vmul.f32 %v8044, %v8051
      %v8059 = vmul.f32 %v8045, %v8051
      %v8060 = vmul.f32 %v8046, %v8051
      %v8061 = vmul.f32 %v8047, %v8051
      %v8062 = vlaneseq
      %v8063 = vshrl.u32 %v8062, 7
      %v8064 = vsub.s32 0, %v8063
      %v8065 = vrot.slane %v5993, %v8064
      %v8066 = vadd.f32 %v8052, %v8065
      %v8067 = vadd.f32 %v8053, %v8065
      %v8068 = vadd.f32 %v8054, %v8065
      %v8069 = vadd.f32 %v8055, %v8065
      %v8070 = vadd.f32 %v8056, %v8065
      %v8071 = vadd.f32 %v8057, %v8065
      %v8072 = vadd.f32 %v8058, %v8065
      %v8073 = vadd.f32 %v8059, %v8065
      %v8074 = vadd.f32 %v8060, %v8065
      %v8075 = vadd.f32 %v8061, %v8065
      %v8076 = vpack.c.bf16 %v8067, %v8066
      %v8077 = vpack.c.bf16 %v8069, %v8068
      %v8078 = vpack.c.bf16 %v8071, %v8070
      %v8079 = vpack.c.bf16 %v8073, %v8072
      %v8080 = vpack.c.bf16 %v8075, %v8074
      %v8081 = vlaneseq
      %v8082 = vshrl.u32 %v8081, 7
      %v8083 = vsub.s32 0, %v8082
      %v8084 = vrot.slane %v6000, %v8083
      %v8086 = vsel %vm564, %v8076, 0
      %v8089 = vsel %vm564, %v8077, 0
      %v8092 = vsel %vm564, %v8078, 0
      %v8095 = vsel %vm564, %v8079, 0
      %v8098 = vsel %vm564, %v8080, 0
      %8100 = vmatprep.subr.bf16.mxu0 0
      %8101 = vmatpush1.bf16.msra.mxu0 %v5998
      %8102 = vmatprep.subr.bf16.mxu0 0
      %8103 = vmatpush1.bf16.msra.mxu0 %v5999
      %8104 = vmatprep.subr.bf16.mxu0 0
      %8105 = vmatpush1.bf16.msra.mxu0 0
      %8106 = vmatprep.subr.bf16.mxu0 0
      %8107 = vmatpush1.bf16.msra.mxu0 0
      %8108 = vmatprep.subr.bf16.mxu0 0
      %8109 = vmatpush1.bf16.msra.mxu0 0
      %8110 = vmatprep.subr.bf16.mxu0 0
      %8111 = vmatpush1.bf16.msra.mxu0 0
      %8112 = vmatprep.subr.bf16.mxu0 0
      %8113 = vmatpush1.bf16.msra.mxu0 0
      %8114 = vmatprep.subr.bf16.mxu0 0
      %8115 = vmatpush1.bf16.msra.mxu0 0
      %8116 = vmatprep.subr.bf16.mxu0 0
      %8117 = vmatpush1.bf16.msra.mxu0 0
      %8118 = vmatprep.subr.bf16.mxu0 0
      %8119 = vmatpush1.bf16.msra.mxu0 0
      %8120 = vmatprep.subr.bf16.mxu0 0
      %8121 = vmatpush1.bf16.msra.mxu0 0
      %8122 = vmatprep.subr.bf16.mxu0 0
      %8123 = vmatpush1.bf16.msra.mxu0 0
      %8124 = vmatprep.subr.bf16.mxu0 0
      %8125 = vmatpush1.bf16.msra.mxu0 0
      %8126 = vmatprep.subr.bf16.mxu0 0
      %8127 = vmatpush1.bf16.msra.mxu0 0
      %8128 = vmatprep.subr.bf16.mxu0 0
      %8129 = vmatpush1.bf16.msra.mxu0 0
      %8130 = vmatprep.subr.bf16.mxu0 0
      %8131 = vmatpush1.bf16.msra.mxu0 0
      %8132 = vmatprep.mubr.bf16.mxu0 0
      %8133 = vmatmul.mubr.bf16.gmra.mrb[0].mxu0 %v8086
      %v8134 = vpop.f32.mrb[0].mxu0
      %v8135 = vadd.f32 %v8084, %v8134
      %v8136 = vpop.f32.mrb[0].mxu0
      %v8137 = vpop.f32.mrb[0].mxu0
      %v8138 = vadd.f32 %v8084, %v8137
      %v8139 = vpop.f32.mrb[0].mxu0
      %8140 = vmatprep.mubr.bf16.mxu0 0
      %8141 = vmatmul.mubr.bf16.gmra.mrb[0].mxu0 %v8089
      %v8142 = vpop.f32.mrb[0].mxu0
      %v8143 = vadd.f32 %v8084, %v8142
      %v8144 = vpop.f32.mrb[0].mxu0
      %v8145 = vpop.f32.mrb[0].mxu0
      %v8146 = vadd.f32 %v8084, %v8145
      %v8147 = vpop.f32.mrb[0].mxu0
      %8148 = vmatprep.mubr.bf16.mxu0 0
      %8149 = vmatmul.mubr.bf16.gmra.mrb[0].mxu0 %v8092
      %v8150 = vpop.f32.mrb[0].mxu0
      %v8151 = vadd.f32 %v8084, %v8150
      %v8152 = vpop.f32.mrb[0].mxu0
      %v8153 = vpop.f32.mrb[0].mxu0
      %v8154 = vadd.f32 %v8084, %v8153
      %v8155 = vpop.f32.mrb[0].mxu0
      %8156 = vmatprep.mubr.bf16.mxu0 0
      %8157 = vmatmul.mubr.bf16.gmra.mrb[0].mxu0 %v8095
      %v8158 = vpop.f32.mrb[0].mxu0
      %v8159 = vadd.f32 %v8084, %v8158
      %v8160 = vpop.f32.mrb[0].mxu0
      %v8161 = vpop.f32.mrb[0].mxu0
      %v8162 = vadd.f32 %v8084, %v8161
      %v8163 = vpop.f32.mrb[0].mxu0
      %8164 = vmatprep.mubr.bf16.mxu0 0
      %8165 = vmatmul.mubr.bf16.gmra.mrb[0].mxu0 %v8098
      %v8166 = vpop.f32.mrb[0].mxu0
      %v8167 = vadd.f32 %v8084, %v8166
      %v8168 = vpop.f32.mrb[0].mxu0
      %v8169 = vpop.f32.mrb[0].mxu0
      %v8170 = vadd.f32 %v8084, %v8169
      %v8171 = vpop.f32.mrb[0].mxu0
      %8172 = vdwg.mxu0
      %v8173 = vmul.f32 %v8135, 0.5
      %v8174 = vmul.f32 %v8138, 0.5
      %v8175 = vmul.f32 %v8143, 0.5
      %v8176 = vmul.f32 %v8146, 0.5
      %v8177 = vmul.f32 %v8151, 0.5
      %v8178 = vmul.f32 %v8154, 0.5
      %v8179 = vmul.f32 %v8159, 0.5
      %v8180 = vmul.f32 %v8162, 0.5
      %v8181 = vmul.f32 %v8167, 0.5
      %v8182 = vmul.f32 %v8170, 0.5
      %v8183 = vmul.f32 %v8135, 0.70710677
      %v8184 = vmul.f32 %v8138, 0.70710677
      %v8185 = vmul.f32 %v8143, 0.70710677
      %v8186 = vmul.f32 %v8146, 0.70710677
      %v8187 = vmul.f32 %v8151, 0.70710677
      %v8188 = vmul.f32 %v8154, 0.70710677
      %v8189 = vmul.f32 %v8159, 0.70710677
      %v8190 = vmul.f32 %v8162, 0.70710677
      %v8191 = vmul.f32 %v8167, 0.70710677
      %v8192 = vmul.f32 %v8170, 0.70710677
      %vm8193 = vcmp.ge.f32.partialorder %v8183, 0.0
      %vm8194 = vcmp.ge.f32.partialorder %v8184, 0.0
      %vm8195 = vcmp.ge.f32.partialorder %v8185, 0.0
      %vm8196 = vcmp.ge.f32.partialorder %v8186, 0.0
      %vm8197 = vcmp.ge.f32.partialorder %v8187, 0.0
      %vm8198 = vcmp.ge.f32.partialorder %v8188, 0.0
      %vm8199 = vcmp.ge.f32.partialorder %v8189, 0.0
      %vm8200 = vcmp.ge.f32.partialorder %v8190, 0.0
      %vm8201 = vcmp.ge.f32.partialorder %v8191, 0.0
      %vm8202 = vcmp.ge.f32.partialorder %v8192, 0.0
      %v8203 = vsel %vm8193, 1.0, -1.0
      %v8204 = vsel %vm8194, 1.0, -1.0
      %v8205 = vsel %vm8195, 1.0, -1.0
      %v8206 = vsel %vm8196, 1.0, -1.0
      %v8207 = vsel %vm8197, 1.0, -1.0
      %v8208 = vsel %vm8198, 1.0, -1.0
      %v8209 = vsel %vm8199, 1.0, -1.0
      %v8210 = vsel %vm8200, 1.0, -1.0
      %v8211 = vsel %vm8201, 1.0, -1.0
      %v8212 = vsel %vm8202, 1.0, -1.0
      %v8213 = vand.u32 2147483647, %v8183
      %v8214 = vand.u32 2147483647, %v8184
      %v8215 = vand.u32 2147483647, %v8185
      %v8216 = vand.u32 2147483647, %v8186
      %v8217 = vand.u32 2147483647, %v8187
      %v8218 = vand.u32 2147483647, %v8188
      %v8219 = vand.u32 2147483647, %v8189
      %v8220 = vand.u32 2147483647, %v8190
      %v8221 = vand.u32 2147483647, %v8191
      %v8222 = vand.u32 2147483647, %v8192
      %v8223 = vmul.f32 %v8213, 0.3275911
      %v8224 = vmul.f32 %v8214, 0.3275911
      %v8225 = vmul.f32 %v8215, 0.3275911
      %v8226 = vmul.f32 %v8216, 0.3275911
      %v8227 = vmul.f32 %v8217, 0.3275911
      %v8228 = vmul.f32 %v8218, 0.3275911
      %v8229 = vmul.f32 %v8219, 0.3275911
      %v8230 = vmul.f32 %v8220, 0.3275911
      %v8231 = vmul.f32 %v8221, 0.3275911
      %v8232 = vmul.f32 %v8222, 0.3275911
      %v8233 = vadd.f32 %v8223, 1.0
      %v8234 = vadd.f32 %v8224, 1.0
      %v8235 = vadd.f32 %v8225, 1.0
      %v8236 = vadd.f32 %v8226, 1.0
      %v8237 = vadd.f32 %v8227, 1.0
      %v8238 = vadd.f32 %v8228, 1.0
      %v8239 = vadd.f32 %v8229, 1.0
      %v8240 = vadd.f32 %v8230, 1.0
      %v8241 = vadd.f32 %v8231, 1.0
      %v8242 = vadd.f32 %v8232, 1.0
      %v8243 = vrcp.pop %v8233
      %v8244 = vmul.f32 1.0, %v8243
      %v8245 = vrcp.pop %v8234
      %v8246 = vmul.f32 1.0, %v8245
      %v8247 = vrcp.pop %v8235
      %v8248 = vmul.f32 1.0, %v8247
      %v8249 = vrcp.pop %v8236
      %v8250 = vmul.f32 1.0, %v8249
      %v8251 = vrcp.pop %v8237
      %v8252 = vmul.f32 1.0, %v8251
      %v8253 = vrcp.pop %v8238
      %v8254 = vmul.f32 1.0, %v8253
      %v8255 = vrcp.pop %v8239
      %v8256 = vmul.f32 1.0, %v8255
      %v8257 = vrcp.pop %v8240
      %v8258 = vmul.f32 1.0, %v8257
      %v8259 = vrcp.pop %v8241
      %v8260 = vmul.f32 1.0, %v8259
      %v8261 = vrcp.pop %v8242
      %v8262 = vmul.f32 1.0, %v8261
      %v8263 = vmul.f32 %v8244, 1.0614054
      %v8264 = vmul.f32 %v8246, 1.0614054
      %v8265 = vmul.f32 %v8248, 1.0614054
      %v8266 = vmul.f32 %v8250, 1.0614054
      %v8267 = vmul.f32 %v8252, 1.0614054
      %v8268 = vmul.f32 %v8254, 1.0614054
      %v8269 = vmul.f32 %v8256, 1.0614054
      %v8270 = vmul.f32 %v8258, 1.0614054
      %v8271 = vmul.f32 %v8260, 1.0614054
      %v8272 = vmul.f32 %v8262, 1.0614054
      %v8273 = vadd.f32 %v8263, -1.4531521
      %v8274 = vadd.f32 %v8264, -1.4531521
      %v8275 = vadd.f32 %v8265, -1.4531521
      %v8276 = vadd.f32 %v8266, -1.4531521
      %v8277 = vadd.f32 %v8267, -1.4531521
      %v8278 = vadd.f32 %v8268, -1.4531521
      %v8279 = vadd.f32 %v8269, -1.4531521
      %v8280 = vadd.f32 %v8270, -1.4531521
      %v8281 = vadd.f32 %v8271, -1.4531521
      %v8282 = vadd.f32 %v8272, -1.4531521
      %v8283 = vmul.f32 %v8273, %v8244
      %v8284 = vmul.f32 %v8274, %v8246
      %v8285 = vmul.f32 %v8275, %v8248
      %v8286 = vmul.f32 %v8276, %v8250
      %v8287 = vmul.f32 %v8277, %v8252
      %v8288 = vmul.f32 %v8278, %v8254
      %v8289 = vmul.f32 %v8279, %v8256
      %v8290 = vmul.f32 %v8280, %v8258
      %v8291 = vmul.f32 %v8281, %v8260
      %v8292 = vmul.f32 %v8282, %v8262
      %v8293 = vadd.f32 %v8283, 1.4214138
      %v8294 = vadd.f32 %v8284, 1.4214138
      %v8295 = vadd.f32 %v8285, 1.4214138
      %v8296 = vadd.f32 %v8286, 1.4214138
      %v8297 = vadd.f32 %v8287, 1.4214138
      %v8298 = vadd.f32 %v8288, 1.4214138
      %v8299 = vadd.f32 %v8289, 1.4214138
      %v8300 = vadd.f32 %v8290, 1.4214138
      %v8301 = vadd.f32 %v8291, 1.4214138
      %v8302 = vadd.f32 %v8292, 1.4214138
      %v8303 = vmul.f32 %v8293, %v8244
      %v8304 = vmul.f32 %v8294, %v8246
      %v8305 = vmul.f32 %v8295, %v8248
      %v8306 = vmul.f32 %v8296, %v8250
      %v8307 = vmul.f32 %v8297, %v8252
      %v8308 = vmul.f32 %v8298, %v8254
      %v8309 = vmul.f32 %v8299, %v8256
      %v8310 = vmul.f32 %v8300, %v8258
      %v8311 = vmul.f32 %v8301, %v8260
      %v8312 = vmul.f32 %v8302, %v8262
      %v8313 = vadd.f32 %v8303, -0.28449672
      %v8314 = vadd.f32 %v8304, -0.28449672
      %v8315 = vadd.f32 %v8305, -0.28449672
      %v8316 = vadd.f32 %v8306, -0.28449672
      %v8317 = vadd.f32 %v8307, -0.28449672
      %v8318 = vadd.f32 %v8308, -0.28449672
      %v8319 = vadd.f32 %v8309, -0.28449672
      %v8320 = vadd.f32 %v8310, -0.28449672
      %v8321 = vadd.f32 %v8311, -0.28449672
      %v8322 = vadd.f32 %v8312, -0.28449672
      %v8323 = vmul.f32 %v8313, %v8244
      %v8324 = vmul.f32 %v8314, %v8246
      %v8325 = vmul.f32 %v8315, %v8248
      %v8326 = vmul.f32 %v8316, %v8250
      %v8327 = vmul.f32 %v8317, %v8252
      %v8328 = vmul.f32 %v8318, %v8254
      %v8329 = vmul.f32 %v8319, %v8256
      %v8330 = vmul.f32 %v8320, %v8258
      %v8331 = vmul.f32 %v8321, %v8260
      %v8332 = vmul.f32 %v8322, %v8262
      %v8333 = vadd.f32 %v8323, 0.2548296
      %v8334 = vadd.f32 %v8324, 0.2548296
      %v8335 = vadd.f32 %v8325, 0.2548296
      %v8336 = vadd.f32 %v8326, 0.2548296
      %v8337 = vadd.f32 %v8327, 0.2548296
      %v8338 = vadd.f32 %v8328, 0.2548296
      %v8339 = vadd.f32 %v8329, 0.2548296
      %v8340 = vadd.f32 %v8330, 0.2548296
      %v8341 = vadd.f32 %v8331, 0.2548296
      %v8342 = vadd.f32 %v8332, 0.2548296
      %v8343 = vmul.f32 %v8333, %v8244
      %v8344 = vmul.f32 %v8334, %v8246
      %v8345 = vmul.f32 %v8335, %v8248
      %v8346 = vmul.f32 %v8336, %v8250
      %v8347 = vmul.f32 %v8337, %v8252
      %v8348 = vmul.f32 %v8338, %v8254
      %v8349 = vmul.f32 %v8339, %v8256
      %v8350 = vmul.f32 %v8340, %v8258
      %v8351 = vmul.f32 %v8341, %v8260
      %v8352 = vmul.f32 %v8342, %v8262
      %v8353 = vsub.f32 0.0, %v8213
      %v8354 = vsub.f32 0.0, %v8214
      %v8355 = vsub.f32 0.0, %v8215
      %v8356 = vsub.f32 0.0, %v8216
      %v8357 = vsub.f32 0.0, %v8217
      %v8358 = vsub.f32 0.0, %v8218
      %v8359 = vsub.f32 0.0, %v8219
      %v8360 = vsub.f32 0.0, %v8220
      %v8361 = vsub.f32 0.0, %v8221
      %v8362 = vsub.f32 0.0, %v8222
      %v8363 = vmul.f32 %v8353, %v8213
      %v8364 = vmul.f32 %v8354, %v8214
      %v8365 = vmul.f32 %v8355, %v8215
      %v8366 = vmul.f32 %v8356, %v8216
      %v8367 = vmul.f32 %v8357, %v8217
      %v8368 = vmul.f32 %v8358, %v8218
      %v8369 = vmul.f32 %v8359, %v8219
      %v8370 = vmul.f32 %v8360, %v8220
      %v8371 = vmul.f32 %v8361, %v8221
      %v8372 = vmul.f32 %v8362, %v8222
      %v8373 = vmul.f32 %v8363, 1.442695
      %v8374 = vpow.pop %v8373
      %v8375 = vmul.f32 %v8364, 1.442695
      %v8376 = vpow.pop %v8375
      %v8377 = vmul.f32 %v8365, 1.442695
      %v8378 = vpow.pop %v8377
      %v8379 = vmul.f32 %v8366, 1.442695
      %v8380 = vpow.pop %v8379
      %v8381 = vmul.f32 %v8367, 1.442695
      %v8382 = vpow.pop %v8381
      %v8383 = vmul.f32 %v8368, 1.442695
      %v8384 = vpow.pop %v8383
      %v8385 = vmul.f32 %v8369, 1.442695
      %v8386 = vpow.pop %v8385
      %v8387 = vmul.f32 %v8370, 1.442695
      %v8388 = vpow.pop %v8387
      %v8389 = vmul.f32 %v8371, 1.442695
      %v8390 = vpow.pop %v8389
      %v8391 = vmul.f32 %v8372, 1.442695
      %v8392 = vpow.pop %v8391
      %v8393 = vmul.f32 %v8343, %v8374
      %v8394 = vmul.f32 %v8344, %v8376
      %v8395 = vmul.f32 %v8345, %v8378
      %v8396 = vmul.f32 %v8346, %v8380
      %v8397 = vmul.f32 %v8347, %v8382
      %v8398 = vmul.f32 %v8348, %v8384
      %v8399 = vmul.f32 %v8349, %v8386
      %v8400 = vmul.f32 %v8350, %v8388
      %v8401 = vmul.f32 %v8351, %v8390
      %v8402 = vmul.f32 %v8352, %v8392
      %v8403 = vsub.f32 1.0, %v8393
      %v8404 = vsub.f32 1.0, %v8394
      %v8405 = vsub.f32 1.0, %v8395
      %v8406 = vsub.f32 1.0, %v8396
      %v8407 = vsub.f32 1.0, %v8397
      %v8408 = vsub.f32 1.0, %v8398
      %v8409 = vsub.f32 1.0, %v8399
      %v8410 = vsub.f32 1.0, %v8400
      %v8411 = vsub.f32 1.0, %v8401
      %v8412 = vsub.f32 1.0, %v8402
      %v8413 = vmul.f32 %v8203, %v8403
      %v8414 = vmul.f32 %v8204, %v8404
      %v8415 = vmul.f32 %v8205, %v8405
      %v8416 = vmul.f32 %v8206, %v8406
      %v8417 = vmul.f32 %v8207, %v8407
      %v8418 = vmul.f32 %v8208, %v8408
      %v8419 = vmul.f32 %v8209, %v8409
      %v8420 = vmul.f32 %v8210, %v8410
      %v8421 = vmul.f32 %v8211, %v8411
      %v8422 = vmul.f32 %v8212, %v8412
      %v8423 = vadd.f32 %v8413, 1.0
      %v8424 = vadd.f32 %v8414, 1.0
      %v8425 = vadd.f32 %v8415, 1.0
      %v8426 = vadd.f32 %v8416, 1.0
      %v8427 = vadd.f32 %v8417, 1.0
      %v8428 = vadd.f32 %v8418, 1.0
      %v8429 = vadd.f32 %v8419, 1.0
      %v8430 = vadd.f32 %v8420, 1.0
      %v8431 = vadd.f32 %v8421, 1.0
      %v8432 = vadd.f32 %v8422, 1.0
      %v8433 = vmul.f32 %v8173, %v8423
      %v8434 = vmul.f32 %v8174, %v8424
      %v8435 = vmul.f32 %v8175, %v8425
      %v8436 = vmul.f32 %v8176, %v8426
      %v8437 = vmul.f32 %v8177, %v8427
      %v8438 = vmul.f32 %v8178, %v8428
      %v8439 = vmul.f32 %v8179, %v8429
      %v8440 = vmul.f32 %v8180, %v8430
      %v8441 = vmul.f32 %v8181, %v8431
      %v8442 = vmul.f32 %v8182, %v8432
      %v8443 = vpack.c.bf16 %v8434, %v8433
      %v8444 = vpack.c.bf16 %v8436, %v8435
      %v8445 = vpack.c.bf16 %v8438, %v8437
      %v8446 = vpack.c.bf16 %v8440, %v8439
      %v8447 = vpack.c.bf16 %v8442, %v8441
      %v8448 = vlaneseq
      %v8449 = vshrl.u32 %v8448, 7
      %v8450 = vsub.s32 0, %v8449
      %v8451 = vrot.slane %v6025, %v8450
      %8452 = vmatprep.subr.bf16.mxu0 0
      %8453 = vmatpush1.bf16.msra.mxu0 %v6017
      %8454 = vmatprep.subr.bf16.mxu0 0
      %8455 = vmatpush1.bf16.msra.mxu0 %v6018
      %8456 = vmatprep.subr.bf16.mxu0 0
      %8457 = vmatpush1.bf16.msra.mxu0 %v6019
      %8458 = vmatprep.subr.bf16.mxu0 0
      %8459 = vmatpush1.bf16.msra.mxu0 %v6020
      %8460 = vmatprep.subr.bf16.mxu0 0
      %8461 = vmatpush1.bf16.msra.mxu0 %v6021
      %8462 = vmatprep.subr.bf16.mxu0 0
      %8463 = vmatpush1.bf16.msra.mxu0 %v6022
      %8464 = vmatprep.subr.bf16.mxu0 0
      %8465 = vmatpush1.bf16.msra.mxu0 %v6023
      %8466 = vmatprep.subr.bf16.mxu0 0
      %8467 = vmatpush1.bf16.msra.mxu0 %v6024
      %8468 = vmatprep.subr.bf16.mxu0 0
      %8469 = vmatpush1.bf16.msra.mxu0 0
      %8470 = vmatprep.subr.bf16.mxu0 0
      %8471 = vmatpush1.bf16.msra.mxu0 0
      %8472 = vmatprep.subr.bf16.mxu0 0
      %8473 = vmatpush1.bf16.msra.mxu0 0
      %8474 = vmatprep.subr.bf16.mxu0 0
      %8475 = vmatpush1.bf16.msra.mxu0 0
      %8476 = vmatprep.subr.bf16.mxu0 0
      %8477 = vmatpush1.bf16.msra.mxu0 0
      %8478 = vmatprep.subr.bf16.mxu0 0
      %8479 = vmatpush1.bf16.msra.mxu0 0
      %8480 = vmatprep.subr.bf16.mxu0 0
      %8481 = vmatpush1.bf16.msra.mxu0 0
      %8482 = vmatprep.subr.bf16.mxu0 0
      %8483 = vmatpush1.bf16.msra.mxu0 0
      %8484 = vmatprep.mubr.bf16.mxu0 0
      %8485 = vmatmul.mubr.bf16.gmra.mrb[0].mxu0 %v8443
      %v8486 = vpop.f32.mrb[0].mxu0
      %v8487 = vadd.f32 %v8451, %v8486
      %v8488 = vpop.f32.mrb[0].mxu0
      %v8489 = vpop.f32.mrb[0].mxu0
      %v8490 = vadd.f32 %v8451, %v8489
      %v8491 = vpop.f32.mrb[0].mxu0
      %8492 = vmatprep.mubr.bf16.mxu0 0
      %8493 = vmatmul.mubr.bf16.gmra.mrb[0].mxu0 %v8444
      %v8494 = vpop.f32.mrb[0].mxu0
      %v8495 = vadd.f32 %v8451, %v8494
      %v8496 = vpop.f32.mrb[0].mxu0
      %v8497 = vpop.f32.mrb[0].mxu0
      %v8498 = vadd.f32 %v8451, %v8497
      %v8499 = vpop.f32.mrb[0].mxu0
      %8500 = vmatprep.mubr.bf16.mxu0 0
      %8501 = vmatmul.mubr.bf16.gmra.mrb[0].mxu0 %v8445
      %v8502 = vpop.f32.mrb[0].mxu0
      %v8503 = vadd.f32 %v8451, %v8502
      %v8504 = vpop.f32.mrb[0].mxu0
      %v8505 = vpop.f32.mrb[0].mxu0
      %v8506 = vadd.f32 %v8451, %v8505
      %v8507 = vpop.f32.mrb[0].mxu0
      %8508 = vmatprep.mubr.bf16.mxu0 0
      %8509 = vmatmul.mubr.bf16.gmra.mrb[0].mxu0 %v8446
      %v8510 = vpop.f32.mrb[0].mxu0
      %v8511 = vadd.f32 %v8451, %v8510
      %v8512 = vpop.f32.mrb[0].mxu0
      %v8513 = vpop.f32.mrb[0].mxu0
      %v8514 = vadd.f32 %v8451, %v8513
      %v8515 = vpop.f32.mrb[0].mxu0
      %8516 = vmatprep.mubr.bf16.mxu0 0
      %8517 = vmatmul.mubr.bf16.gmra.mrb[0].mxu0 %v8447
      %v8518 = vpop.f32.mrb[0].mxu0
      %v8519 = vadd.f32 %v8451, %v8518
      %v8520 = vpop.f32.mrb[0].mxu0
      %v8521 = vpop.f32.mrb[0].mxu0
      %v8522 = vpop.f32.mrb[0].mxu0
      %8523 = vdwg.mxu0
      %v8524 = vadd.f32 %v7908, %v8487
      %v8525 = vadd.f32 %v7909, %v8490
      %v8526 = vadd.f32 %v7910, %v8495
      %v8527 = vadd.f32 %v7911, %v8498
      %v8528 = vadd.f32 %v7912, %v8503
      %v8529 = vadd.f32 %v7913, %v8506
      %v8530 = vadd.f32 %v7914, %v8511
      %v8531 = vadd.f32 %v7915, %v8514
      %v8532 = vadd.f32 %v7916, %v8519
      %v8533 = vld [vmem:[%s3 + $0x18] sm:$0xff]
      %v8534 = vld [vmem:[%s3 + $0x20] sm:$0xff]
      %v8535 = vld [vmem:[%s3 + $0x28] sm:$0xff]
      %v8536 = vld [vmem:[%s3 + $0x30] sm:$0xff]
      %v8537 = vpack.c.bf16 %v8534, %v8533
      %v8538 = vpack.c.bf16 %v8536, %v8535
      %v8539 = vld [vmem:[%s3 + $0x15] sm:$0x1]
      %v8540 = vpack.c.bf16 %v8525, %v8524
      %v8541 = vpack.c.bf16 %v8527, %v8526
      %v8542 = vpack.c.bf16 %v8529, %v8528
      %v8543 = vpack.c.bf16 %v8531, %v8530
      %v8544 = vpack.c.bf16 %v8532, %v8532
      %v8545 = vlaneseq
      %v8546 = vshrl.u32 %v8545, 7
      %v8547 = vsub.s32 0, %v8546
      %v8548 = vrot.slane %v8539, %v8547
      %vm8549 = vsmask.f32 7424
      %v8551 = vshrl.u32 %v8540, 16
      %v8553 = vshll.u32 %v8540, 16
      %v8555 = vrot.slane %v8553, 1
      %v8556 = vor.u32 %v8551, %v8555
      %v8558 = vshll.u32 %v8541, 16
      %v8560 = vrot.slane %v8558, 1
      %v8561 = vsel %vm8549, %v8556, %v8560
      %v8562 = vshrl.u32 %v8541, 16
      %v8564 = vor.u32 %v8562, %v8560
      %v8566 = vshll.u32 %v8542, 16
      %v8568 = vrot.slane %v8566, 1
      %v8569 = vsel %vm8549, %v8564, %v8568
      %v8570 = vshrl.u32 %v8542, 16
      %v8572 = vor.u32 %v8570, %v8568
      %v8574 = vshll.u32 %v8543, 16
      %v8576 = vrot.slane %v8574, 1
      %v8577 = vsel %vm8549, %v8572, %v8576
      %v8578 = vshrl.u32 %v8543, 16
      %v8580 = vor.u32 %v8578, %v8576
      %v8582 = vshll.u32 %v8544, 16
      %v8584 = vrot.slane %v8582, 1
      %v8585 = vsel %vm8549, %v8580, %v8584
      %v8587 = vsel %vm564, %v8561, 0
      %v8590 = vsel %vm564, %v8569, 0
      %v8593 = vsel %vm564, %v8577, 0
      %v8596 = vsel %vm564, %v8585, 0
      %8598 = vmatprep.subr.bf16.mxu0 0
      %8599 = vmatpush1.bf16.msra.mxu0 %v8537
      %8600 = vmatprep.subr.bf16.mxu0 0
      %8601 = vmatpush1.bf16.msra.mxu0 %v8538
      %8602 = vmatprep.subr.bf16.mxu0 0
      %8603 = vmatpush1.bf16.msra.mxu0 0
      %8604 = vmatprep.subr.bf16.mxu0 0
      %8605 = vmatpush1.bf16.msra.mxu0 0
      %8606 = vmatprep.subr.bf16.mxu0 0
      %8607 = vmatpush1.bf16.msra.mxu0 0
      %8608 = vmatprep.subr.bf16.mxu0 0
      %8609 = vmatpush1.bf16.msra.mxu0 0
      %8610 = vmatprep.subr.bf16.mxu0 0
      %8611 = vmatpush1.bf16.msra.mxu0 0
      %8612 = vmatprep.subr.bf16.mxu0 0
      %8613 = vmatpush1.bf16.msra.mxu0 0
      %8614 = vmatprep.subr.bf16.mxu0 0
      %8615 = vmatpush1.bf16.msra.mxu0 0
      %8616 = vmatprep.subr.bf16.mxu0 0
      %8617 = vmatpush1.bf16.msra.mxu0 0
      %8618 = vmatprep.subr.bf16.mxu0 0
      %8619 = vmatpush1.bf16.msra.mxu0 0
      %8620 = vmatprep.subr.bf16.mxu0 0
      %8621 = vmatpush1.bf16.msra.mxu0 0
      %8622 = vmatprep.subr.bf16.mxu0 0
      %8623 = vmatpush1.bf16.msra.mxu0 0
      %8624 = vmatprep.subr.bf16.mxu0 0
      %8625 = vmatpush1.bf16.msra.mxu0 0
      %8626 = vmatprep.subr.bf16.mxu0 0
      %8627 = vmatpush1.bf16.msra.mxu0 0
      %8628 = vmatprep.subr.bf16.mxu0 0
      %8629 = vmatpush1.bf16.msra.mxu0 0
      %8630 = vmatprep.mubr.bf16.mxu0 0
      %8631 = vmatmul.mubr.bf16.gmra.mrb[0].mxu0 %v8587
      %v8632 = vpop.f32.mrb[0].mxu0
      %v8633 = vadd.f32 %v8548, %v8632
      %v8634 = vpop.f32.mrb[0].mxu0
      %v8635 = vpop.f32.mrb[0].mxu0
      %v8636 = vadd.f32 %v8548, %v8635
      %v8637 = vpop.f32.mrb[0].mxu0
      %8638 = vmatprep.mubr.bf16.mxu0 0
      %8639 = vmatmul.mubr.bf16.gmra.mrb[0].mxu0 %v8590
      %v8640 = vpop.f32.mrb[0].mxu0
      %v8641 = vadd.f32 %v8548, %v8640
      %v8642 = vpop.f32.mrb[0].mxu0
      %v8643 = vpop.f32.mrb[0].mxu0
      %v8644 = vadd.f32 %v8548, %v8643
      %v8645 = vpop.f32.mrb[0].mxu0
      %8646 = vmatprep.mubr.bf16.mxu0 0
      %8647 = vmatmul.mubr.bf16.gmra.mrb[0].mxu0 %v8593
      %v8648 = vpop.f32.mrb[0].mxu0
      %v8649 = vadd.f32 %v8548, %v8648
      %v8650 = vpop.f32.mrb[0].mxu0
      %v8651 = vpop.f32.mrb[0].mxu0
      %v8652 = vadd.f32 %v8548, %v8651
      %v8653 = vpop.f32.mrb[0].mxu0
      %8654 = vmatprep.mubr.bf16.mxu0 0
      %8655 = vmatmul.mubr.bf16.gmra.mrb[0].mxu0 %v8596
      %v8656 = vpop.f32.mrb[0].mxu0
      %v8657 = vadd.f32 %v8548, %v8656
      %v8658 = vpop.f32.mrb[0].mxu0
      %v8659 = vpop.f32.mrb[0].mxu0
      %v8660 = vadd.f32 %v8548, %v8659
      %v8661 = vpop.f32.mrb[0].mxu0
      %8662 = vdwg.mxu0
      %8663 = vst [vmem:[%s291] sm:$0xff] %v8633
      %8664 = vst [vmem:[%s291 + $0x8] sm:$0xff] %v8636
      %8665 = vst [vmem:[%s291 + $0x10] sm:$0xff] %v8641
      %8666 = vst [vmem:[%s291 + $0x18] sm:$0xff] %v8644
      %8667 = vst [vmem:[%s291 + $0x20] sm:$0xff] %v8649
      %8668 = vst [vmem:[%s291 + $0x28] sm:$0xff] %v8652
      %8669 = vst [vmem:[%s291 + $0x30] sm:$0xff] %v8657
      %8670 = vst [vmem:[%s291 + $0x38] sm:$0xff] %v8660
      %p8671 = scmp.lt.s32.totalorder %s17, 1
      %s8672 = scalar_select %p8671, %s17, 1
      %s8673 = smul.addr %s8672, 8
      %s8674 = smul.addr %s8673, 8
      %s8675 = scalar_lea.vmem %s6, %s8674
      // Predicated region
      $region45: #{mae_forward.1} parent=43 // pred_check
        %p8676 = pneg %p176
      $region46: #{mae_forward.1} parent=43 // pred_check_branch
        %8678 = sbr.rel (%p8676) target = $region48
      $region47: #{mae_forward.1} parent=43 // pred_region
        _
      $region48: #{mae_forward.1} parent=43 // pred_fallthru
        _
    $region44: #{mae_forward.1} parent=5 // pred_fallthru
      _
    %p8679 = scmp.le.s32.totalorder 2, %s12
    // Predicated region
    $region49: #{mae_forward.1} parent=5 // pred_check
      %p8680 = pneg %p8679
    $region50: #{mae_forward.1} parent=5 // pred_check_branch
      %8682 = sbr.rel (%p8680) target = $region52
    $region51: #{mae_forward.1} parent=5 // pred_region
      %s8683 = ssub.s32 %s12, 2
      // Predicated region
      $region53: #{mae_forward.1} parent=51 // pred_check
        %p8684 = pneg %p182
      $region54: #{mae_forward.1} parent=51 // pred_check_branch
        %8686 = sbr.rel (%p8684) target = $region56
      $region55: #{mae_forward.1} parent=51 // pred_region
        %p8687 = scmp.lt.s32.totalorder %s18, 1
        %s8688 = scalar_select %p8687, %s18, 1
        %s8689 = smul.addr %s8688, 8
        %s8690 = smul.addr %s8689, 8
        %s8691 = scalar_lea.vmem %s6, %s8690
      $region56: #{mae_forward.1} parent=51 // pred_fallthru
        _
    $region52: #{mae_forward.1} parent=5 // pred_fallthru
      _
  $region6: #{mae_forward.1} parent=0 // loop_footer
    %s16 = sadd.s32 1, %s12
  $region7: #{mae_forward.1} parent=0 // loop_footer_branch
    %11 = sbr.rel target = $region3
  $region8: #{mae_forward.1} parent=0 // loop_exit
    _

</llo_original>
